<compile_context>
chip_gen: v6e
topology: v6e:2x2x1
jax: 0.10.0
libtpu: 0.0.40
codegen_flags: <defaults>
</compile_context>

<pallas_src>
import numpy as np
import jax
import jax.numpy as jnp
from jax.experimental import pallas as pl
from jax.experimental.pallas import tpu as pltpu


# ----------------------------------------------------------------------------
# Pass 1: sub-pixel (4-phase) transposed conv + per-channel partial stats
# ----------------------------------------------------------------------------
def _phase_conv_kernel(xc_ref, xn_ref, w_ref, y_ref, stat_ref):
    """One (batch, row-tile) step of ConvTranspose2d(k=3, s=2, p=1, op=1).

    xc_ref:   (1, TH, W+1, Cin)    input rows [r0, r0+TH), one zero col appended
    xn_ref:   (1, TH, W+1, Cin)    same rows shifted down by one (row halo)
    w_ref:    (9*Cin, Cout)        phase-packed weights (see _pack_phase_weights)
    y_ref:    (1, 2*TH, 2*W, Cout) un-normalized conv output (f32)
    stat_ref: (1, 1, 2, Cout)      per-channel [sum, sum-of-squares] of the tile
    """
    _, th, wp1, cin = xc_ref.shape
    w_in = wp1 - 1
    cout = y_ref.shape[3]
    n = th * w_in

    xc = xc_ref[0]                 # (TH, W+1, Cin)
    xn = xn_ref[0]
    w_all = w_ref[...]             # (9*Cin, Cout)

    # The four shifted input views as 2-D (spatial, Cin) matrices.
    a_cc = xc[:, :w_in, :].reshape(n, cin)   # x[i,   j]
    a_cr = xc[:, 1:, :].reshape(n, cin)      # x[i,   j+1]
    a_rc = xn[:, :w_in, :].reshape(n, cin)   # x[i+1, j]
    a_rr = xn[:, 1:, :].reshape(n, cin)      # x[i+1, j+1]

    # Fold the taps of each output phase into the matmul K dimension
    # (K = Cin / 2*Cin / 2*Cin / 4*Cin) -> 4 MXU matmuls per tile instead of 9.
    a_full = jnp.concatenate([a_rc, a_cc, a_cr, a_rr], axis=1)   # (n, 4*Cin)

    def mm(a, wm):
        return jnp.dot(a, wm, preferred_element_type=jnp.float32)

    y_ee = mm(a_cc, w_all[0:cin])                               # out[2i,   2j  ]
    y_oe = mm(a_full[:, :2 * cin], w_all[cin:3 * cin])          # out[2i+1, 2j  ]
    y_eo = mm(a_full[:, cin:3 * cin], w_all[3 * cin:5 * cin])   # out[2i,   2j+1]
    y_oo = mm(a_full, w_all[5 * cin:9 * cin])                   # out[2i+1, 2j+1]

    # Partial InstanceNorm statistics (global reduction happens in the wrapper).
    psum = (jnp.sum(y_ee, axis=0, keepdims=True) +
            jnp.sum(y_eo, axis=0, keepdims=True) +
            jnp.sum(y_oe, axis=0, keepdims=True) +
            jnp.sum(y_oo, axis=0, keepdims=True))
    psq = (jnp.sum(y_ee * y_ee, axis=0, keepdims=True) +
           jnp.sum(y_eo * y_eo, axis=0, keepdims=True) +
           jnp.sum(y_oe * y_oe, axis=0, keepdims=True) +
           jnp.sum(y_oo * y_oo, axis=0, keepdims=True))
    stat_ref[0, 0] = jnp.concatenate([psum, psq], axis=0)        # (2, Cout)

    # Pixel-shuffle the four phases into the (2*TH, 2*W, Cout) output tile.
    # (Channels stay on the lane axis throughout; only leading dims move.)
    y_ee = y_ee.reshape(th, w_in, cout)
    y_eo = y_eo.reshape(th, w_in, cout)
    y_oe = y_oe.reshape(th, w_in, cout)
    y_oo = y_oo.reshape(th, w_in, cout)
    row_e = jnp.stack([y_ee, y_eo], axis=2).reshape(th, 2 * w_in, cout)
    row_o = jnp.stack([y_oe, y_oo], axis=2).reshape(th, 2 * w_in, cout)
    y_ref[0] = jnp.stack([row_e, row_o], axis=1).reshape(2 * th, 2 * w_in, cout)


# ----------------------------------------------------------------------------
# Pass 2: InstanceNorm (with precomputed global stats) + ReLU
# ----------------------------------------------------------------------------
def _norm_relu_kernel(y_ref, mu_ref, rs_ref, o_ref):
    # y_ref: (1, TOH, Wo, Cout) f32;  mu_ref/rs_ref: (1, 1, 1, Cout) f32
    z = (y_ref[...] - mu_ref[...]) * rs_ref[...]
    o_ref[...] = jnp.maximum(z, 0.0).astype(o_ref.dtype)


def _pick_tile(extent, per_row_bytes, budget_bytes):
    t = int(extent)
    while t > 1 and t % 2 == 0 and t * per_row_bytes > budget_bytes:
        t //= 2
    return t


def deconv_in_relu(x, w_packed, *, out_dtype):
    """One Decoder layer: ConvTranspose2d(3, s=2, p=1, op=1) + InstanceNorm + ReLU.

    x:        (B, H, W, Cin)   NHWC activations (bf16 or f32)
    w_packed: (9*Cin, Cout)    phase-packed ConvTranspose2d weight
    returns   (B, 2H, 2W, Cout) in out_dtype
    """
    B, H, W, Cin = x.shape
    Cout = w_packed.shape[1]
    Ho, Wo = 2 * H, 2 * W
    isz = np.dtype(x.dtype).itemsize
    osz = np.dtype(out_dtype).itemsize

    # Pad one zero row/col; build row-aligned "current" and "next-row" inputs so
    # every spatial tile already carries its one-row halo (no overlapping blocks
    # needed in the BlockSpecs).
    x_pad = jnp.pad(x, ((0, 0), (0, 1), (0, 1), (0, 0)))
    x_cur = x_pad[:, :H]      # x[i,   :]
    x_nxt = x_pad[:, 1:]      # x[i+1, :]  (last row is the zero pad)

    budget = 3 * 1024 * 1024  # per-block bytes; double-buffering adds ~2-3x on top
    conv_row_bytes = (2 * (W + 1) * Cin * isz      # the two input blocks
                      + 4 * W * Cin * isz          # in-register K-folded LHS
                      + 4 * Wo * Cout * 4)         # f32 output rows + phase accs
    tile_h = _pick_tile(H, conv_row_bytes, budget)
    n_h = H // tile_h

    y, stats = pl.pallas_call(
        _phase_conv_kernel,
        grid=(B, n_h),
        in_specs=[
            pl.BlockSpec((1, tile_h, W + 1, Cin), lambda b, t: (b, t, 0, 0)),
            pl.BlockSpec((1, tile_h, W + 1, Cin), lambda b, t: (b, t, 0, 0)),
            pl.BlockSpec((9 * Cin, Cout), lambda b, t: (0, 0)),
        ],
        out_specs=[
            pl.BlockSpec((1, 2 * tile_h, Wo, Cout), lambda b, t: (b, t, 0, 0)),
            pl.BlockSpec((1, 1, 2, Cout), lambda b, t: (b, t, 0, 0)),
        ],
        out_shape=[
            jax.ShapeDtypeStruct((B, Ho, Wo, Cout), jnp.float32),
            jax.ShapeDtypeStruct((B, n_h, 2, Cout), jnp.float32),
        ],
        compiler_params=pltpu.CompilerParams(
            dimension_semantics=("parallel", "parallel")),
    )(x_cur, x_nxt, w_packed)

    # Finish the two-pass InstanceNorm: reduce the tiny per-tile stats in XLA.
    s = jnp.sum(stats, axis=1)                       # (B, 2, Cout)
    npix = float(Ho * Wo)
    mean = s[:, 0, :] / npix
    var = jnp.maximum(s[:, 1, :] / npix - mean * mean, 0.0)
    rstd = jax.lax.rsqrt(var + 1e-5)                 # eps matches nn.InstanceNorm2d
    mu = mean[:, None, None, :]
    rs = rstd[:, None, None, :]

    norm_row_bytes = Wo * Cout * (4 + osz)
    tile_oh = _pick_tile(Ho, norm_row_bytes, budget)
    n_oh = Ho // tile_oh

    out = pl.pallas_call(
        _norm_relu_kernel,
        grid=(B, n_oh),
        in_specs=[
            pl.BlockSpec((1, tile_oh, Wo, Cout), lambda b, t: (b, t, 0, 0)),
            pl.BlockSpec((1, 1, 1, Cout), lambda b, t: (b, 0, 0, 0)),
            pl.BlockSpec((1, 1, 1, Cout), lambda b, t: (b, 0, 0, 0)),
        ],
        out_specs=pl.BlockSpec((1, tile_oh, Wo, Cout), lambda b, t: (b, t, 0, 0)),
        out_shape=jax.ShapeDtypeStruct((B, Ho, Wo, Cout), out_dtype),
        compiler_params=pltpu.CompilerParams(
            dimension_semantics=("parallel", "parallel")),
    )(y, mu, rs)
    return out


# ----------------------------------------------------------------------------
# Weight packing (hoisted out of the forward pass)
# ----------------------------------------------------------------------------
def _pack_phase_weights(w, dtype):
    """Pack a PyTorch-layout ConvTranspose2d weight (Cin, Cout, 3, 3) into the
    (9*Cin, Cout) phase layout consumed by _phase_conv_kernel.

    The LHS K-block order is [x[i+1,j], x[i,j], x[i,j+1], x[i+1,j+1]]:
      rows [0:Cin]      phase (even,even): w[1,1]
      rows [Cin:3Cin]   phase (odd, even): [w[0,1]; w[2,1]]
      rows [3Cin:5Cin]  phase (even,odd ): [w[1,2]; w[1,0]]
      rows [5Cin:9Cin]  phase (odd, odd ): [w[0,2]; w[2,2]; w[2,0]; w[0,0]]
    """
    t = lambda ky, kx: w[:, :, ky, kx]               # (Cin, Cout)
    w_ee = t(1, 1)
    w_oe = jnp.concatenate([t(0, 1), t(2, 1)], axis=0)
    w_eo = jnp.concatenate([t(1, 2), t(1, 0)], axis=0)
    w_oo = jnp.concatenate([t(0, 2), t(2, 2), t(2, 0), t(0, 0)], axis=0)
    return jnp.concatenate([w_ee, w_oe, w_eo, w_oo], axis=0).astype(dtype)


# ----------------------------------------------------------------------------
# Decoder: channel schedule + parameters + forward
# ----------------------------------------------------------------------------
def make_clist(iSize, fLen, mChannel, eChannel):
    sChannel = pow(2, np.around(np.log2(fLen)))
    layers = int(np.log2(iSize))
    cList = []
    for i in range(layers):
        channel = np.minimum(pow(2, i) * sChannel if i != 0 else fLen,
                             pow(2, layers - i - 1) * eChannel)
        channel = int(np.minimum(channel, mChannel))
        cList.append(channel if i != 0 else fLen)
    cList.append(3)
    return cList


class PallasDecoder:
    """Pallas/TPU forward pass of Modules/Common.py::Decoder."""

    def __init__(self, key, iSize=512, fLen=64, mChannel=256, eChannel=32,
                 compute_dtype=jnp.bfloat16):
        self.fLen = fLen
        self.compute_dtype = compute_dtype
        self.cList = make_clist(iSize, fLen, mChannel, eChannel)
        self.params = []           # PyTorch-layout (weight, bias) for reference use
        self.packed_weights = []   # pre-packed phase weights
        for i in range(1, len(self.cList)):
            cin, cout = self.cList[i - 1], self.cList[i]
            key, kw, kb = jax.random.split(key, 3)
            scale = 1.0 / np.sqrt(cin * 9)
            w = jax.random.normal(kw, (cin, cout, 3, 3), jnp.float32) * scale
            b = jax.random.normal(kb, (cout,), jnp.float32) * scale
            self.params.append((w, b))
            # Bias is dropped in the kernel path: a per-channel constant added
            # before InstanceNorm2d(affine=False) is an exact no-op.
            self.packed_weights.append(_pack_phase_weights(w, compute_dtype))

    def __call__(self, x):
        assert x.shape[1] == self.fLen, (
            "Length of the Feature Mismatched %s - %s" % (x.shape[1], self.fLen))
        if x.ndim == 2:
            x = x[:, :, None, None]                      # (B, C) -> (B, C, 1, 1)
        x = jnp.transpose(x, (0, 2, 3, 1)).astype(self.compute_dtype)   # -> NHWC
        n_layers = len(self.packed_weights)
        for li, w_packed in enumerate(self.packed_weights):
            last = li == n_layers - 1
            x = deconv_in_relu(
                x, w_packed,
                out_dtype=jnp.float32 if last else self.compute_dtype)
        # TODO(synk): fuse this NHWC->NCHW transpose of the Cout=3 final layer
        # into the normalize kernel (emit (B,3,Ho,Wo) directly, lane-dense on Wo).
        return jnp.transpose(x, (0, 3, 1, 2))            # NHWC -> NCHW


# ----------------------------------------------------------------------------
# Pure-JAX reference (lax.conv_general_dilated) for verification.  It applies
# the same dtype roundings as the Pallas path (weights/activations cast to
# compute_dtype at each layer boundary; f32 accumulation & normalization).
# ----------------------------------------------------------------------------
def reference_decoder(x, params, compute_dtype=jnp.float32):
    if x.ndim == 2:
        x = x[:, :, None, None]
    x = x.astype(jnp.float32)
    for (w, b) in params:
        xr = x.astype(compute_dtype).astype(jnp.float32)
        wr = w.astype(compute_dtype).astype(jnp.float32)
        w_oihw = jnp.flip(wr, (2, 3)).transpose(1, 0, 2, 3)
        y = jax.lax.conv_general_dilated(
            xr, w_oihw,
            window_strides=(1, 1),
            padding=[(1, 2), (1, 2)],
            lhs_dilation=(2, 2),
            dimension_numbers=("NCHW", "OIHW", "NCHW"),
            precision=jax.lax.Precision.HIGHEST)
        y = y + b[None, :, None, None]
        mean = jnp.mean(y, axis=(2, 3), keepdims=True)
        var = jnp.mean((y - mean) ** 2, axis=(2, 3), keepdims=True)
        y = (y - mean) * jax.lax.rsqrt(var + 1e-5)
        x = jnp.maximum(y, 0.0)
    return x


if __name__ == "__main__":
    # Small configuration consistent with the module's constructor logic:
    # iSize=16, fLen=8, mChannel=16, eChannel=8 -> cList = [8, 16, 16, 8, 3]
    # input (B, fLen) = (2, 8) -> output (2, 3, 16, 16)
    key = jax.random.PRNGKey(0)
    kp, kx = jax.random.split(key)
    x = jax.random.normal(kx, (2, 8), jnp.float32)

    # 1) f32 compute path: tight check of the phase-decomposed transposed conv,
    #    the two-pass InstanceNorm and the pixel-shuffle.
    dec32 = PallasDecoder(kp, iSize=16, fLen=8, mChannel=16, eChannel=8,
                          compute_dtype=jnp.float32)
    out32 = jax.block_until_ready(jax.jit(dec32.__call__)(x))
    ref32 = jax.block_until_ready(
        reference_decoder(x, dec32.params, jnp.float32))
    assert out32.shape == (2, 3, 16, 16), out32.shape
    np.testing.assert_allclose(np.asarray(out32), np.asarray(ref32),
                               rtol=5e-3, atol=5e-3)

    # 2) bf16 compute path (default / performance config).  The reference
    #    applies the same bf16 roundings, so only accumulation-order noise
    #    (amplified by the per-layer normalization) remains.
    dec16 = PallasDecoder(kp, iSize=16, fLen=8, mChannel=16, eChannel=8,
                          compute_dtype=jnp.bfloat16)
    out16 = jax.block_until_ready(jax.jit(dec16.__call__)(x))
    ref16 = jax.block_until_ready(
        reference_decoder(x, dec16.params, jnp.bfloat16))
    assert out16.shape == (2, 3, 16, 16), out16.shape
    np.testing.assert_allclose(np.asarray(out16), np.asarray(ref16),
                               rtol=5e-2, atol=5e-2)

    print("KERNEL_OK")
</pallas_src>

<mosaic_0001>
module attributes {stable_mosaic.version = 11 : i64} {
  func.func @_phase_conv_kernel(%arg0: i32, %arg1: i32, %arg2: memref<1x1x2x8xf32, #tpu.memory_space<vmem>>, %arg3: memref<1x1x2x8xf32, #tpu.memory_space<vmem>>, %arg4: memref<72x16xf32, #tpu.memory_space<vmem>>, %arg5: memref<1x2x2x16xf32, #tpu.memory_space<vmem>>, %arg6: memref<1x1x2x16xf32, #tpu.memory_space<vmem>>) attributes {dimension_semantics = [#tpu.dimension_semantics<parallel>, #tpu.dimension_semantics<parallel>], iteration_bounds = array<i64: 2, 1>, scalar_prefetch = 0 : i64, scratch_operands = 0 : i64, tpu.core_type = #tpu.core_type<tc>, window_params = [{transform_indices = @transform_0, window_bounds = array<i64: 1, 1, 2, 8>}, {transform_indices = @transform_1, window_bounds = array<i64: 1, 1, 2, 8>}, {pipeline_mode = #tpu.pipeline_mode<synchronous>, transform_indices = @transform_2, window_bounds = array<i64: 72, 16>}, {transform_indices = @transform_3, window_bounds = array<i64: 1, 2, 2, 16>}, {transform_indices = @transform_4, window_bounds = array<i64: 1, 1, 2, 16>}]} {
    %c0 = arith.constant 0 : index
    %c0_0 = arith.constant 0 : index
    %c0_1 = arith.constant 0 : index
    %c0_2 = arith.constant 0 : index
    %0 = vector.load %arg2[%c0, %c0_0, %c0_1, %c0_2] : memref<1x1x2x8xf32, #tpu.memory_space<vmem>>, vector<1x1x2x8xf32>
    %1 = vector.shape_cast %0 : vector<1x1x2x8xf32> to vector<1x2x8xf32>
    %c0_3 = arith.constant 0 : index
    %c0_4 = arith.constant 0 : index
    %c0_5 = arith.constant 0 : index
    %c0_6 = arith.constant 0 : index
    %2 = vector.load %arg3[%c0_3, %c0_4, %c0_5, %c0_6] : memref<1x1x2x8xf32, #tpu.memory_space<vmem>>, vector<1x1x2x8xf32>
    %3 = vector.shape_cast %2 : vector<1x1x2x8xf32> to vector<1x2x8xf32>
    %c0_7 = arith.constant 0 : index
    %c0_8 = arith.constant 0 : index
    %4 = vector.load %arg4[%c0_7, %c0_8] : memref<72x16xf32, #tpu.memory_space<vmem>>, vector<72x16xf32>
    %5 = vector.extract_strided_slice %1 {offsets = [0, 0, 0], sizes = [1, 1, 8], strides = [1, 1, 1]} : vector<1x2x8xf32> to vector<1x1x8xf32>
    %6 = vector.shape_cast %5 : vector<1x1x8xf32> to vector<1x8xf32>
    %7 = vector.extract_strided_slice %1 {offsets = [0, 1, 0], sizes = [1, 1, 8], strides = [1, 1, 1]} : vector<1x2x8xf32> to vector<1x1x8xf32>
    %8 = vector.shape_cast %7 : vector<1x1x8xf32> to vector<1x8xf32>
    %9 = vector.extract_strided_slice %3 {offsets = [0, 0, 0], sizes = [1, 1, 8], strides = [1, 1, 1]} : vector<1x2x8xf32> to vector<1x1x8xf32>
    %10 = vector.shape_cast %9 : vector<1x1x8xf32> to vector<1x8xf32>
    %11 = vector.extract_strided_slice %3 {offsets = [0, 1, 0], sizes = [1, 1, 8], strides = [1, 1, 1]} : vector<1x2x8xf32> to vector<1x1x8xf32>
    %12 = vector.shape_cast %11 : vector<1x1x8xf32> to vector<1x8xf32>
    %13 = tpu.concatenate %10, %6, %8, %12 in 1 : vector<1x8xf32>, vector<1x8xf32>, vector<1x8xf32>, vector<1x8xf32> -> vector<1x32xf32>
    %14 = vector.extract_strided_slice %4 {offsets = [0, 0], sizes = [8, 16], strides = [1, 1]} : vector<72x16xf32> to vector<8x16xf32>
    %cst = arith.constant dense<0.000000e+00> : vector<1x16xf32>
    %15 = tpu.matmul %6, %14, %cst {dimension_numbers = #tpu.dot_dimension_numbers<[1], [0], [0], [1], [0, 0, 1, 1], [], []>} : vector<1x8xf32>, vector<8x16xf32>, vector<1x16xf32> -> vector<1x16xf32>
    %16 = vector.extract_strided_slice %13 {offsets = [0, 0], sizes = [1, 16], strides = [1, 1]} : vector<1x32xf32> to vector<1x16xf32>
    %17 = vector.extract_strided_slice %4 {offsets = [8, 0], sizes = [16, 16], strides = [1, 1]} : vector<72x16xf32> to vector<16x16xf32>
    %cst_9 = arith.constant dense<0.000000e+00> : vector<1x16xf32>
    %18 = tpu.matmul %16, %17, %cst_9 {dimension_numbers = #tpu.dot_dimension_numbers<[1], [0], [0], [1], [0, 0, 1, 1], [], []>} : vector<1x16xf32>, vector<16x16xf32>, vector<1x16xf32> -> vector<1x16xf32>
    %19 = vector.extract_strided_slice %13 {offsets = [0, 8], sizes = [1, 16], strides = [1, 1]} : vector<1x32xf32> to vector<1x16xf32>
    %20 = vector.extract_strided_slice %4 {offsets = [24, 0], sizes = [16, 16], strides = [1, 1]} : vector<72x16xf32> to vector<16x16xf32>
    %cst_10 = arith.constant dense<0.000000e+00> : vector<1x16xf32>
    %21 = tpu.matmul %19, %20, %cst_10 {dimension_numbers = #tpu.dot_dimension_numbers<[1], [0], [0], [1], [0, 0, 1, 1], [], []>} : vector<1x16xf32>, vector<16x16xf32>, vector<1x16xf32> -> vector<1x16xf32>
    %22 = vector.extract_strided_slice %4 {offsets = [40, 0], sizes = [32, 16], strides = [1, 1]} : vector<72x16xf32> to vector<32x16xf32>
    %cst_11 = arith.constant dense<0.000000e+00> : vector<1x16xf32>
    %23 = tpu.matmul %13, %22, %cst_11 {dimension_numbers = #tpu.dot_dimension_numbers<[1], [0], [0], [1], [0, 0, 1, 1], [], []>} : vector<1x32xf32>, vector<32x16xf32>, vector<1x16xf32> -> vector<1x16xf32>
    %cst_12 = arith.constant dense<0.000000e+00> : vector<16xf32>
    %24 = vector.multi_reduction <add>, %15, %cst_12 [0] : vector<1x16xf32> to vector<16xf32>
    %25 = vector.shape_cast %24 : vector<16xf32> to vector<1x16xf32>
    %cst_13 = arith.constant dense<0.000000e+00> : vector<16xf32>
    %26 = vector.multi_reduction <add>, %21, %cst_13 [0] : vector<1x16xf32> to vector<16xf32>
    %27 = vector.shape_cast %26 : vector<16xf32> to vector<1x16xf32>
    %28 = arith.addf %25, %27 : vector<1x16xf32>
    %cst_14 = arith.constant dense<0.000000e+00> : vector<16xf32>
    %29 = vector.multi_reduction <add>, %18, %cst_14 [0] : vector<1x16xf32> to vector<16xf32>
    %30 = vector.shape_cast %29 : vector<16xf32> to vector<1x16xf32>
    %31 = arith.addf %28, %30 : vector<1x16xf32>
    %cst_15 = arith.constant dense<0.000000e+00> : vector<16xf32>
    %32 = vector.multi_reduction <add>, %23, %cst_15 [0] : vector<1x16xf32> to vector<16xf32>
    %33 = vector.shape_cast %32 : vector<16xf32> to vector<1x16xf32>
    %34 = arith.addf %31, %33 : vector<1x16xf32>
    %35 = arith.mulf %15, %15 : vector<1x16xf32>
    %cst_16 = arith.constant dense<0.000000e+00> : vector<16xf32>
    %36 = vector.multi_reduction <add>, %35, %cst_16 [0] : vector<1x16xf32> to vector<16xf32>
    %37 = vector.shape_cast %36 : vector<16xf32> to vector<1x16xf32>
    %38 = arith.mulf %21, %21 : vector<1x16xf32>
    %cst_17 = arith.constant dense<0.000000e+00> : vector<16xf32>
    %39 = vector.multi_reduction <add>, %38, %cst_17 [0] : vector<1x16xf32> to vector<16xf32>
    %40 = vector.shape_cast %39 : vector<16xf32> to vector<1x16xf32>
    %41 = arith.addf %37, %40 : vector<1x16xf32>
    %42 = arith.mulf %18, %18 : vector<1x16xf32>
    %cst_18 = arith.constant dense<0.000000e+00> : vector<16xf32>
    %43 = vector.multi_reduction <add>, %42, %cst_18 [0] : vector<1x16xf32> to vector<16xf32>
    %44 = vector.shape_cast %43 : vector<16xf32> to vector<1x16xf32>
    %45 = arith.addf %41, %44 : vector<1x16xf32>
    %46 = arith.mulf %23, %23 : vector<1x16xf32>
    %cst_19 = arith.constant dense<0.000000e+00> : vector<16xf32>
    %47 = vector.multi_reduction <add>, %46, %cst_19 [0] : vector<1x16xf32> to vector<16xf32>
    %48 = vector.shape_cast %47 : vector<16xf32> to vector<1x16xf32>
    %49 = arith.addf %45, %48 : vector<1x16xf32>
    %50 = tpu.concatenate %34, %49 in 0 : vector<1x16xf32>, vector<1x16xf32> -> vector<2x16xf32>
    %c0_20 = arith.constant 0 : index
    %c0_21 = arith.constant 0 : index
    %c0_22 = arith.constant 0 : index
    %c0_23 = arith.constant 0 : index
    %51 = vector.load %arg6[%c0_20, %c0_21, %c0_22, %c0_23] : memref<1x1x2x16xf32, #tpu.memory_space<vmem>>, vector<1x1x2x16xf32>
    %52 = vector.shape_cast %51 : vector<1x1x2x16xf32> to vector<2x16xf32>
    %53 = vector.shape_cast %50 : vector<2x16xf32> to vector<1x1x2x16xf32>
    tpu.vector_store %arg6[%c0_20, %c0_21, %c0_22, %c0_23], %53 {strides = array<i32>} : memref<1x1x2x16xf32, #tpu.memory_space<vmem>>, vector<1x1x2x16xf32>,
    %54 = vector.shape_cast %15 : vector<1x16xf32> to vector<1x1x16xf32>
    %55 = vector.shape_cast %21 : vector<1x16xf32> to vector<1x1x16xf32>
    %56 = vector.shape_cast %18 : vector<1x16xf32> to vector<1x1x16xf32>
    %57 = vector.shape_cast %23 : vector<1x16xf32> to vector<1x1x16xf32>
    %58 = vector.shape_cast %54 : vector<1x1x16xf32> to vector<1x1x1x16xf32>
    %59 = vector.shape_cast %55 : vector<1x1x16xf32> to vector<1x1x1x16xf32>
    %60 = tpu.concatenate %58, %59 in 2 : vector<1x1x1x16xf32>, vector<1x1x1x16xf32> -> vector<1x1x2x16xf32>
    %61 = vector.shape_cast %60 : vector<1x1x2x16xf32> to vector<1x2x16xf32>
    %62 = vector.shape_cast %56 : vector<1x1x16xf32> to vector<1x1x1x16xf32>
    %63 = vector.shape_cast %57 : vector<1x1x16xf32> to vector<1x1x1x16xf32>
    %64 = tpu.concatenate %62, %63 in 2 : vector<1x1x1x16xf32>, vector<1x1x1x16xf32> -> vector<1x1x2x16xf32>
    %65 = vector.shape_cast %64 : vector<1x1x2x16xf32> to vector<1x2x16xf32>
    %66 = vector.shape_cast %61 : vector<1x2x16xf32> to vector<1x1x2x16xf32>
    %67 = vector.shape_cast %65 : vector<1x2x16xf32> to vector<1x1x2x16xf32>
    %68 = tpu.concatenate %66, %67 in 1 : vector<1x1x2x16xf32>, vector<1x1x2x16xf32> -> vector<1x2x2x16xf32>
    %69 = vector.shape_cast %68 : vector<1x2x2x16xf32> to vector<2x2x16xf32>
    %c0_24 = arith.constant 0 : index
    %c0_25 = arith.constant 0 : index
    %c0_26 = arith.constant 0 : index
    %c0_27 = arith.constant 0 : index
    %70 = vector.load %arg5[%c0_24, %c0_25, %c0_26, %c0_27] : memref<1x2x2x16xf32, #tpu.memory_space<vmem>>, vector<1x2x2x16xf32>
    %71 = vector.shape_cast %70 : vector<1x2x2x16xf32> to vector<2x2x16xf32>
    %72 = vector.shape_cast %69 : vector<2x2x16xf32> to vector<1x2x2x16xf32>
    tpu.vector_store %arg5[%c0_24, %c0_25, %c0_26, %c0_27], %72 {strides = array<i32>} : memref<1x2x2x16xf32, #tpu.memory_space<vmem>>, vector<1x2x2x16xf32>,
    return
  }
  func.func @transform_0(%arg0: i32, %arg1: i32) -> (i32, i32, i32, i32) {
    %c0_i32 = arith.constant 0 : i32
    %c0_i32_0 = arith.constant 0 : i32
    %c0_i32_1 = arith.constant 0 : i32
    return %arg0, %arg1, %c0_i32, %c0_i32_0 : i32, i32, i32, i32
  }
  func.func @transform_1(%arg0: i32, %arg1: i32) -> (i32, i32, i32, i32) {
    %c0_i32 = arith.constant 0 : i32
    %c0_i32_0 = arith.constant 0 : i32
    %c0_i32_1 = arith.constant 0 : i32
    return %arg0, %arg1, %c0_i32, %c0_i32_0 : i32, i32, i32, i32
  }
  func.func @transform_2(%arg0: i32, %arg1: i32) -> (i32, i32) {
    %c0_i32 = arith.constant 0 : i32
    %c0_i32_0 = arith.constant 0 : i32
    %c0_i32_1 = arith.constant 0 : i32
    return %c0_i32, %c0_i32_0 : i32, i32
  }
  func.func @transform_3(%arg0: i32, %arg1: i32) -> (i32, i32, i32, i32) {
    %c0_i32 = arith.constant 0 : i32
    %c0_i32_0 = arith.constant 0 : i32
    %c0_i32_1 = arith.constant 0 : i32
    return %arg0, %arg1, %c0_i32, %c0_i32_0 : i32, i32, i32, i32
  }
  func.func @transform_4(%arg0: i32, %arg1: i32) -> (i32, i32, i32, i32) {
    %c0_i32 = arith.constant 0 : i32
    %c0_i32_0 = arith.constant 0 : i32
    %c0_i32_1 = arith.constant 0 : i32
    return %arg0, %arg1, %c0_i32, %c0_i32_0 : i32, i32, i32, i32
  }
}

module attributes {stable_mosaic.version = 11 : i64} {
  func.func @_norm_relu_kernel(%arg0: i32, %arg1: i32, %arg2: memref<1x2x2x16xf32, #tpu.memory_space<vmem>>, %arg3: memref<1x1x1x16xf32, #tpu.memory_space<vmem>>, %arg4: memref<1x1x1x16xf32, #tpu.memory_space<vmem>>, %arg5: memref<1x2x2x16xf32, #tpu.memory_space<vmem>>) attributes {dimension_semantics = [#tpu.dimension_semantics<parallel>, #tpu.dimension_semantics<parallel>], iteration_bounds = array<i64: 2, 1>, scalar_prefetch = 0 : i64, scratch_operands = 0 : i64, tpu.core_type = #tpu.core_type<tc>, window_params = [{transform_indices = @transform_0, window_bounds = array<i64: 1, 2, 2, 16>}, {transform_indices = @transform_1, window_bounds = array<i64: 1, 1, 1, 16>}, {transform_indices = @transform_2, window_bounds = array<i64: 1, 1, 1, 16>}, {transform_indices = @transform_3, window_bounds = array<i64: 1, 2, 2, 16>}]} {
    %c0 = arith.constant 0 : index
    %c0_0 = arith.constant 0 : index
    %c0_1 = arith.constant 0 : index
    %c0_2 = arith.constant 0 : index
    %0 = vector.load %arg2[%c0, %c0_0, %c0_1, %c0_2] : memref<1x2x2x16xf32, #tpu.memory_space<vmem>>, vector<1x2x2x16xf32>
    %c0_3 = arith.constant 0 : index
    %c0_4 = arith.constant 0 : index
    %c0_5 = arith.constant 0 : index
    %c0_6 = arith.constant 0 : index
    %1 = vector.load %arg3[%c0_3, %c0_4, %c0_5, %c0_6] : memref<1x1x1x16xf32, #tpu.memory_space<vmem>>, vector<1x1x1x16xf32>
    %2 = vector.broadcast %1 : vector<1x1x1x16xf32> to vector<1x2x2x16xf32>
    %3 = arith.subf %0, %2 : vector<1x2x2x16xf32>
    %c0_7 = arith.constant 0 : index
    %c0_8 = arith.constant 0 : index
    %c0_9 = arith.constant 0 : index
    %c0_10 = arith.constant 0 : index
    %4 = vector.load %arg4[%c0_7, %c0_8, %c0_9, %c0_10] : memref<1x1x1x16xf32, #tpu.memory_space<vmem>>, vector<1x1x1x16xf32>
    %5 = vector.broadcast %4 : vector<1x1x1x16xf32> to vector<1x2x2x16xf32>
    %6 = arith.mulf %3, %5 : vector<1x2x2x16xf32>
    %cst = arith.constant 0.000000e+00 : f32
    %7 = vector.broadcast %cst : f32 to vector<1x2x2x16xf32>
    %8 = arith.maximumf %6, %7 : vector<1x2x2x16xf32>
    %c0_11 = arith.constant 0 : index
    %c0_12 = arith.constant 0 : index
    %c0_13 = arith.constant 0 : index
    %c0_14 = arith.constant 0 : index
    %9 = vector.load %arg5[%c0_11, %c0_12, %c0_13, %c0_14] : memref<1x2x2x16xf32, #tpu.memory_space<vmem>>, vector<1x2x2x16xf32>
    tpu.vector_store %arg5[%c0_11, %c0_12, %c0_13, %c0_14], %8 {strides = array<i32>} : memref<1x2x2x16xf32, #tpu.memory_space<vmem>>, vector<1x2x2x16xf32>,
    return
  }
  func.func @transform_0(%arg0: i32, %arg1: i32) -> (i32, i32, i32, i32) {
    %c0_i32 = arith.constant 0 : i32
    %c0_i32_0 = arith.constant 0 : i32
    %c0_i32_1 = arith.constant 0 : i32
    return %arg0, %arg1, %c0_i32, %c0_i32_0 : i32, i32, i32, i32
  }
  func.func @transform_1(%arg0: i32, %arg1: i32) -> (i32, i32, i32, i32) {
    %c0_i32 = arith.constant 0 : i32
    %c0_i32_0 = arith.constant 0 : i32
    %c0_i32_1 = arith.constant 0 : i32
    %c0_i32_2 = arith.constant 0 : i32
    return %arg0, %c0_i32, %c0_i32_0, %c0_i32_1 : i32, i32, i32, i32
  }
  func.func @transform_2(%arg0: i32, %arg1: i32) -> (i32, i32, i32, i32) {
    %c0_i32 = arith.constant 0 : i32
    %c0_i32_0 = arith.constant 0 : i32
    %c0_i32_1 = arith.constant 0 : i32
    %c0_i32_2 = arith.constant 0 : i32
    return %arg0, %c0_i32, %c0_i32_0, %c0_i32_1 : i32, i32, i32, i32
  }
  func.func @transform_3(%arg0: i32, %arg1: i32) -> (i32, i32, i32, i32) {
    %c0_i32 = arith.constant 0 : i32
    %c0_i32_0 = arith.constant 0 : i32
    %c0_i32_1 = arith.constant 0 : i32
    return %arg0, %arg1, %c0_i32, %c0_i32_0 : i32, i32, i32, i32
  }
}

module attributes {stable_mosaic.version = 11 : i64} {
  func.func @_phase_conv_kernel(%arg0: i32, %arg1: i32, %arg2: memref<1x2x3x16xf32, #tpu.memory_space<vmem>>, %arg3: memref<1x2x3x16xf32, #tpu.memory_space<vmem>>, %arg4: memref<144x16xf32, #tpu.memory_space<vmem>>, %arg5: memref<1x4x4x16xf32, #tpu.memory_space<vmem>>, %arg6: memref<1x1x2x16xf32, #tpu.memory_space<vmem>>) attributes {dimension_semantics = [#tpu.dimension_semantics<parallel>, #tpu.dimension_semantics<parallel>], iteration_bounds = array<i64: 2, 1>, scalar_prefetch = 0 : i64, scratch_operands = 0 : i64, tpu.core_type = #tpu.core_type<tc>, window_params = [{transform_indices = @transform_0, window_bounds = array<i64: 1, 2, 3, 16>}, {transform_indices = @transform_1, window_bounds = array<i64: 1, 2, 3, 16>}, {pipeline_mode = #tpu.pipeline_mode<synchronous>, transform_indices = @transform_2, window_bounds = array<i64: 144, 16>}, {transform_indices = @transform_3, window_bounds = array<i64: 1, 4, 4, 16>}, {transform_indices = @transform_4, window_bounds = array<i64: 1, 1, 2, 16>}]} {
    %c0 = arith.constant 0 : index
    %c0_0 = arith.constant 0 : index
    %c0_1 = arith.constant 0 : index
    %c0_2 = arith.constant 0 : index
    %0 = vector.load %arg2[%c0, %c0_0, %c0_1, %c0_2] : memref<1x2x3x16xf32, #tpu.memory_space<vmem>>, vector<1x2x3x16xf32>
    %1 = vector.shape_cast %0 : vector<1x2x3x16xf32> to vector<2x3x16xf32>
    %c0_3 = arith.constant 0 : index
    %c0_4 = arith.constant 0 : index
    %c0_5 = arith.constant 0 : index
    %c0_6 = arith.constant 0 : index
    %2 = vector.load %arg3[%c0_3, %c0_4, %c0_5, %c0_6] : memref<1x2x3x16xf32, #tpu.memory_space<vmem>>, vector<1x2x3x16xf32>
    %3 = vector.shape_cast %2 : vector<1x2x3x16xf32> to vector<2x3x16xf32>
    %c0_7 = arith.constant 0 : index
    %c0_8 = arith.constant 0 : index
    %4 = vector.load %arg4[%c0_7, %c0_8] : memref<144x16xf32, #tpu.memory_space<vmem>>, vector<144x16xf32>
    %5 = vector.extract_strided_slice %1 {offsets = [0, 0, 0], sizes = [2, 2, 16], strides = [1, 1, 1]} : vector<2x3x16xf32> to vector<2x2x16xf32>
    %6 = vector.shape_cast %5 : vector<2x2x16xf32> to vector<4x16xf32>
    %7 = vector.extract_strided_slice %1 {offsets = [0, 1, 0], sizes = [2, 2, 16], strides = [1, 1, 1]} : vector<2x3x16xf32> to vector<2x2x16xf32>
    %8 = vector.shape_cast %7 : vector<2x2x16xf32> to vector<4x16xf32>
    %9 = vector.extract_strided_slice %3 {offsets = [0, 0, 0], sizes = [2, 2, 16], strides = [1, 1, 1]} : vector<2x3x16xf32> to vector<2x2x16xf32>
    %10 = vector.shape_cast %9 : vector<2x2x16xf32> to vector<4x16xf32>
    %11 = vector.extract_strided_slice %3 {offsets = [0, 1, 0], sizes = [2, 2, 16], strides = [1, 1, 1]} : vector<2x3x16xf32> to vector<2x2x16xf32>
    %12 = vector.shape_cast %11 : vector<2x2x16xf32> to vector<4x16xf32>
    %13 = tpu.concatenate %10, %6, %8, %12 in 1 : vector<4x16xf32>, vector<4x16xf32>, vector<4x16xf32>, vector<4x16xf32> -> vector<4x64xf32>
    %14 = vector.extract_strided_slice %4 {offsets = [0, 0], sizes = [16, 16], strides = [1, 1]} : vector<144x16xf32> to vector<16x16xf32>
    %cst = arith.constant dense<0.000000e+00> : vector<4x16xf32>
    %15 = tpu.matmul %6, %14, %cst {dimension_numbers = #tpu.dot_dimension_numbers<[1], [0], [0], [1], [0, 0, 1, 1], [], []>} : vector<4x16xf32>, vector<16x16xf32>, vector<4x16xf32> -> vector<4x16xf32>
    %16 = vector.extract_strided_slice %13 {offsets = [0, 0], sizes = [4, 32], strides = [1, 1]} : vector<4x64xf32> to vector<4x32xf32>
    %17 = vector.extract_strided_slice %4 {offsets = [16, 0], sizes = [32, 16], strides = [1, 1]} : vector<144x16xf32> to vector<32x16xf32>
    %cst_9 = arith.constant dense<0.000000e+00> : vector<4x16xf32>
    %18 = tpu.matmul %16, %17, %cst_9 {dimension_numbers = #tpu.dot_dimension_numbers<[1], [0], [0], [1], [0, 0, 1, 1], [], []>} : vector<4x32xf32>, vector<32x16xf32>, vector<4x16xf32> -> vector<4x16xf32>
    %19 = vector.extract_strided_slice %13 {offsets = [0, 16], sizes = [4, 32], strides = [1, 1]} : vector<4x64xf32> to vector<4x32xf32>
    %20 = vector.extract_strided_slice %4 {offsets = [48, 0], sizes = [32, 16], strides = [1, 1]} : vector<144x16xf32> to vector<32x16xf32>
    %cst_10 = arith.constant dense<0.000000e+00> : vector<4x16xf32>
    %21 = tpu.matmul %19, %20, %cst_10 {dimension_numbers = #tpu.dot_dimension_numbers<[1], [0], [0], [1], [0, 0, 1, 1], [], []>} : vector<4x32xf32>, vector<32x16xf32>, vector<4x16xf32> -> vector<4x16xf32>
    %22 = vector.extract_strided_slice %4 {offsets = [80, 0], sizes = [64, 16], strides = [1, 1]} : vector<144x16xf32> to vector<64x16xf32>
    %cst_11 = arith.constant dense<0.000000e+00> : vector<4x16xf32>
    %23 = tpu.matmul %13, %22, %cst_11 {dimension_numbers = #tpu.dot_dimension_numbers<[1], [0], [0], [1], [0, 0, 1, 1], [], []>} : vector<4x64xf32>, vector<64x16xf32>, vector<4x16xf32> -> vector<4x16xf32>
    %cst_12 = arith.constant dense<0.000000e+00> : vector<16xf32>
    %24 = vector.multi_reduction <add>, %15, %cst_12 [0] : vector<4x16xf32> to vector<16xf32>
    %25 = vector.shape_cast %24 : vector<16xf32> to vector<1x16xf32>
    %cst_13 = arith.constant dense<0.000000e+00> : vector<16xf32>
    %26 = vector.multi_reduction <add>, %21, %cst_13 [0] : vector<4x16xf32> to vector<16xf32>
    %27 = vector.shape_cast %26 : vector<16xf32> to vector<1x16xf32>
    %28 = arith.addf %25, %27 : vector<1x16xf32>
    %cst_14 = arith.constant dense<0.000000e+00> : vector<16xf32>
    %29 = vector.multi_reduction <add>, %18, %cst_14 [0] : vector<4x16xf32> to vector<16xf32>
    %30 = vector.shape_cast %29 : vector<16xf32> to vector<1x16xf32>
    %31 = arith.addf %28, %30 : vector<1x16xf32>
    %cst_15 = arith.constant dense<0.000000e+00> : vector<16xf32>
    %32 = vector.multi_reduction <add>, %23, %cst_15 [0] : vector<4x16xf32> to vector<16xf32>
    %33 = vector.shape_cast %32 : vector<16xf32> to vector<1x16xf32>
    %34 = arith.addf %31, %33 : vector<1x16xf32>
    %35 = arith.mulf %15, %15 : vector<4x16xf32>
    %cst_16 = arith.constant dense<0.000000e+00> : vector<16xf32>
    %36 = vector.multi_reduction <add>, %35, %cst_16 [0] : vector<4x16xf32> to vector<16xf32>
    %37 = vector.shape_cast %36 : vector<16xf32> to vector<1x16xf32>
    %38 = arith.mulf %21, %21 : vector<4x16xf32>
    %cst_17 = arith.constant dense<0.000000e+00> : vector<16xf32>
    %39 = vector.multi_reduction <add>, %38, %cst_17 [0] : vector<4x16xf32> to vector<16xf32>
    %40 = vector.shape_cast %39 : vector<16xf32> to vector<1x16xf32>
    %41 = arith.addf %37, %40 : vector<1x16xf32>
    %42 = arith.mulf %18, %18 : vector<4x16xf32>
    %cst_18 = arith.constant dense<0.000000e+00> : vector<16xf32>
    %43 = vector.multi_reduction <add>, %42, %cst_18 [0] : vector<4x16xf32> to vector<16xf32>
    %44 = vector.shape_cast %43 : vector<16xf32> to vector<1x16xf32>
    %45 = arith.addf %41, %44 : vector<1x16xf32>
    %46 = arith.mulf %23, %23 : vector<4x16xf32>
    %cst_19 = arith.constant dense<0.000000e+00> : vector<16xf32>
    %47 = vector.multi_reduction <add>, %46, %cst_19 [0] : vector<4x16xf32> to vector<16xf32>
    %48 = vector.shape_cast %47 : vector<16xf32> to vector<1x16xf32>
    %49 = arith.addf %45, %48 : vector<1x16xf32>
    %50 = tpu.concatenate %34, %49 in 0 : vector<1x16xf32>, vector<1x16xf32> -> vector<2x16xf32>
    %c0_20 = arith.constant 0 : index
    %c0_21 = arith.constant 0 : index
    %c0_22 = arith.constant 0 : index
    %c0_23 = arith.constant 0 : index
    %51 = vector.load %arg6[%c0_20, %c0_21, %c0_22, %c0_23] : memref<1x1x2x16xf32, #tpu.memory_space<vmem>>, vector<1x1x2x16xf32>
    %52 = vector.shape_cast %51 : vector<1x1x2x16xf32> to vector<2x16xf32>
    %53 = vector.shape_cast %50 : vector<2x16xf32> to vector<1x1x2x16xf32>
    tpu.vector_store %arg6[%c0_20, %c0_21, %c0_22, %c0_23], %53 {strides = array<i32>} : memref<1x1x2x16xf32, #tpu.memory_space<vmem>>, vector<1x1x2x16xf32>,
    %54 = vector.shape_cast %15 : vector<4x16xf32> to vector<2x2x16xf32>
    %55 = vector.shape_cast %21 : vector<4x16xf32> to vector<2x2x16xf32>
    %56 = vector.shape_cast %18 : vector<4x16xf32> to vector<2x2x16xf32>
    %57 = vector.shape_cast %23 : vector<4x16xf32> to vector<2x2x16xf32>
    %58 = vector.shape_cast %54 : vector<2x2x16xf32> to vector<2x2x1x16xf32>
    %59 = vector.shape_cast %55 : vector<2x2x16xf32> to vector<2x2x1x16xf32>
    %60 = tpu.concatenate %58, %59 in 2 : vector<2x2x1x16xf32>, vector<2x2x1x16xf32> -> vector<2x2x2x16xf32>
    %61 = vector.shape_cast %60 : vector<2x2x2x16xf32> to vector<2x4x16xf32>
    %62 = vector.shape_cast %56 : vector<2x2x16xf32> to vector<2x2x1x16xf32>
    %63 = vector.shape_cast %57 : vector<2x2x16xf32> to vector<2x2x1x16xf32>
    %64 = tpu.concatenate %62, %63 in 2 : vector<2x2x1x16xf32>, vector<2x2x1x16xf32> -> vector<2x2x2x16xf32>
    %65 = vector.shape_cast %64 : vector<2x2x2x16xf32> to vector<2x4x16xf32>
    %66 = vector.shape_cast %61 : vector<2x4x16xf32> to vector<2x1x4x16xf32>
    %67 = vector.shape_cast %65 : vector<2x4x16xf32> to vector<2x1x4x16xf32>
    %68 = tpu.concatenate %66, %67 in 1 : vector<2x1x4x16xf32>, vector<2x1x4x16xf32> -> vector<2x2x4x16xf32>
    %69 = vector.shape_cast %68 : vector<2x2x4x16xf32> to vector<4x4x16xf32>
    %c0_24 = arith.constant 0 : index
    %c0_25 = arith.constant 0 : index
    %c0_26 = arith.constant 0 : index
    %c0_27 = arith.constant 0 : index
    %70 = vector.load %arg5[%c0_24, %c0_25, %c0_26, %c0_27] : memref<1x4x4x16xf32, #tpu.memory_space<vmem>>, vector<1x4x4x16xf32>
    %71 = vector.shape_cast %70 : vector<1x4x4x16xf32> to vector<4x4x16xf32>
    %72 = vector.shape_cast %69 : vector<4x4x16xf32> to vector<1x4x4x16xf32>
    tpu.vector_store %arg5[%c0_24, %c0_25, %c0_26, %c0_27], %72 {strides = array<i32>} : memref<1x4x4x16xf32, #tpu.memory_space<vmem>>, vector<1x4x4x16xf32>,
    return
  }
  func.func @transform_0(%arg0: i32, %arg1: i32) -> (i32, i32, i32, i32) {
    %c0_i32 = arith.constant 0 : i32
    %c0_i32_0 = arith.constant 0 : i32
    %c0_i32_1 = arith.constant 0 : i32
    return %arg0, %arg1, %c0_i32, %c0_i32_0 : i32, i32, i32, i32
  }
  func.func @transform_1(%arg0: i32, %arg1: i32) -> (i32, i32, i32, i32) {
    %c0_i32 = arith.constant 0 : i32
    %c0_i32_0 = arith.constant 0 : i32
    %c0_i32_1 = arith.constant 0 : i32
    return %arg0, %arg1, %c0_i32, %c0_i32_0 : i32, i32, i32, i32
  }
  func.func @transform_2(%arg0: i32, %arg1: i32) -> (i32, i32) {
    %c0_i32 = arith.constant 0 : i32
    %c0_i32_0 = arith.constant 0 : i32
    %c0_i32_1 = arith.constant 0 : i32
    return %c0_i32, %c0_i32_0 : i32, i32
  }
  func.func @transform_3(%arg0: i32, %arg1: i32) -> (i32, i32, i32, i32) {
    %c0_i32 = arith.constant 0 : i32
    %c0_i32_0 = arith.constant 0 : i32
    %c0_i32_1 = arith.constant 0 : i32
    return %arg0, %arg1, %c0_i32, %c0_i32_0 : i32, i32, i32, i32
  }
  func.func @transform_4(%arg0: i32, %arg1: i32) -> (i32, i32, i32, i32) {
    %c0_i32 = arith.constant 0 : i32
    %c0_i32_0 = arith.constant 0 : i32
    %c0_i32_1 = arith.constant 0 : i32
    return %arg0, %arg1, %c0_i32, %c0_i32_0 : i32, i32, i32, i32
  }
}

module attributes {stable_mosaic.version = 11 : i64} {
  func.func @_norm_relu_kernel(%arg0: i32, %arg1: i32, %arg2: memref<1x4x4x16xf32, #tpu.memory_space<vmem>>, %arg3: memref<1x1x1x16xf32, #tpu.memory_space<vmem>>, %arg4: memref<1x1x1x16xf32, #tpu.memory_space<vmem>>, %arg5: memref<1x4x4x16xf32, #tpu.memory_space<vmem>>) attributes {dimension_semantics = [#tpu.dimension_semantics<parallel>, #tpu.dimension_semantics<parallel>], iteration_bounds = array<i64: 2, 1>, scalar_prefetch = 0 : i64, scratch_operands = 0 : i64, tpu.core_type = #tpu.core_type<tc>, window_params = [{transform_indices = @transform_0, window_bounds = array<i64: 1, 4, 4, 16>}, {transform_indices = @transform_1, window_bounds = array<i64: 1, 1, 1, 16>}, {transform_indices = @transform_2, window_bounds = array<i64: 1, 1, 1, 16>}, {transform_indices = @transform_3, window_bounds = array<i64: 1, 4, 4, 16>}]} {
    %c0 = arith.constant 0 : index
    %c0_0 = arith.constant 0 : index
    %c0_1 = arith.constant 0 : index
    %c0_2 = arith.constant 0 : index
    %0 = vector.load %arg2[%c0, %c0_0, %c0_1, %c0_2] : memref<1x4x4x16xf32, #tpu.memory_space<vmem>>, vector<1x4x4x16xf32>
    %c0_3 = arith.constant 0 : index
    %c0_4 = arith.constant 0 : index
    %c0_5 = arith.constant 0 : index
    %c0_6 = arith.constant 0 : index
    %1 = vector.load %arg3[%c0_3, %c0_4, %c0_5, %c0_6] : memref<1x1x1x16xf32, #tpu.memory_space<vmem>>, vector<1x1x1x16xf32>
    %2 = vector.broadcast %1 : vector<1x1x1x16xf32> to vector<1x4x4x16xf32>
    %3 = arith.subf %0, %2 : vector<1x4x4x16xf32>
    %c0_7 = arith.constant 0 : index
    %c0_8 = arith.constant 0 : index
    %c0_9 = arith.constant 0 : index
    %c0_10 = arith.constant 0 : index
    %4 = vector.load %arg4[%c0_7, %c0_8, %c0_9, %c0_10] : memref<1x1x1x16xf32, #tpu.memory_space<vmem>>, vector<1x1x1x16xf32>
    %5 = vector.broadcast %4 : vector<1x1x1x16xf32> to vector<1x4x4x16xf32>
    %6 = arith.mulf %3, %5 : vector<1x4x4x16xf32>
    %cst = arith.constant 0.000000e+00 : f32
    %7 = vector.broadcast %cst : f32 to vector<1x4x4x16xf32>
    %8 = arith.maximumf %6, %7 : vector<1x4x4x16xf32>
    %c0_11 = arith.constant 0 : index
    %c0_12 = arith.constant 0 : index
    %c0_13 = arith.constant 0 : index
    %c0_14 = arith.constant 0 : index
    %9 = vector.load %arg5[%c0_11, %c0_12, %c0_13, %c0_14] : memref<1x4x4x16xf32, #tpu.memory_space<vmem>>, vector<1x4x4x16xf32>
    tpu.vector_store %arg5[%c0_11, %c0_12, %c0_13, %c0_14], %8 {strides = array<i32>} : memref<1x4x4x16xf32, #tpu.memory_space<vmem>>, vector<1x4x4x16xf32>,
    return
  }
  func.func @transform_0(%arg0: i32, %arg1: i32) -> (i32, i32, i32, i32) {
    %c0_i32 = arith.constant 0 : i32
    %c0_i32_0 = arith.constant 0 : i32
    %c0_i32_1 = arith.constant 0 : i32
    return %arg0, %arg1, %c0_i32, %c0_i32_0 : i32, i32, i32, i32
  }
  func.func @transform_1(%arg0: i32, %arg1: i32) -> (i32, i32, i32, i32) {
    %c0_i32 = arith.constant 0 : i32
    %c0_i32_0 = arith.constant 0 : i32
    %c0_i32_1 = arith.constant 0 : i32
    %c0_i32_2 = arith.constant 0 : i32
    return %arg0, %c0_i32, %c0_i32_0, %c0_i32_1 : i32, i32, i32, i32
  }
  func.func @transform_2(%arg0: i32, %arg1: i32) -> (i32, i32, i32, i32) {
    %c0_i32 = arith.constant 0 : i32
    %c0_i32_0 = arith.constant 0 : i32
    %c0_i32_1 = arith.constant 0 : i32
    %c0_i32_2 = arith.constant 0 : i32
    return %arg0, %c0_i32, %c0_i32_0, %c0_i32_1 : i32, i32, i32, i32
  }
  func.func @transform_3(%arg0: i32, %arg1: i32) -> (i32, i32, i32, i32) {
    %c0_i32 = arith.constant 0 : i32
    %c0_i32_0 = arith.constant 0 : i32
    %c0_i32_1 = arith.constant 0 : i32
    return %arg0, %arg1, %c0_i32, %c0_i32_0 : i32, i32, i32, i32
  }
}

module attributes {stable_mosaic.version = 11 : i64} {
  func.func @_phase_conv_kernel(%arg0: i32, %arg1: i32, %arg2: memref<1x4x5x16xf32, #tpu.memory_space<vmem>>, %arg3: memref<1x4x5x16xf32, #tpu.memory_space<vmem>>, %arg4: memref<144x8xf32, #tpu.memory_space<vmem>>, %arg5: memref<1x8x8x8xf32, #tpu.memory_space<vmem>>, %arg6: memref<1x1x2x8xf32, #tpu.memory_space<vmem>>) attributes {dimension_semantics = [#tpu.dimension_semantics<parallel>, #tpu.dimension_semantics<parallel>], iteration_bounds = array<i64: 2, 1>, scalar_prefetch = 0 : i64, scratch_operands = 0 : i64, tpu.core_type = #tpu.core_type<tc>, window_params = [{transform_indices = @transform_0, window_bounds = array<i64: 1, 4, 5, 16>}, {transform_indices = @transform_1, window_bounds = array<i64: 1, 4, 5, 16>}, {pipeline_mode = #tpu.pipeline_mode<synchronous>, transform_indices = @transform_2, window_bounds = array<i64: 144, 8>}, {transform_indices = @transform_3, window_bounds = array<i64: 1, 8, 8, 8>}, {transform_indices = @transform_4, window_bounds = array<i64: 1, 1, 2, 8>}]} {
    %c0 = arith.constant 0 : index
    %c0_0 = arith.constant 0 : index
    %c0_1 = arith.constant 0 : index
    %c0_2 = arith.constant 0 : index
    %0 = vector.load %arg2[%c0, %c0_0, %c0_1, %c0_2] : memref<1x4x5x16xf32, #tpu.memory_space<vmem>>, vector<1x4x5x16xf32>
    %1 = vector.shape_cast %0 : vector<1x4x5x16xf32> to vector<4x5x16xf32>
    %c0_3 = arith.constant 0 : index
    %c0_4 = arith.constant 0 : index
    %c0_5 = arith.constant 0 : index
    %c0_6 = arith.constant 0 : index
    %2 = vector.load %arg3[%c0_3, %c0_4, %c0_5, %c0_6] : memref<1x4x5x16xf32, #tpu.memory_space<vmem>>, vector<1x4x5x16xf32>
    %3 = vector.shape_cast %2 : vector<1x4x5x16xf32> to vector<4x5x16xf32>
    %c0_7 = arith.constant 0 : index
    %c0_8 = arith.constant 0 : index
    %4 = vector.load %arg4[%c0_7, %c0_8] : memref<144x8xf32, #tpu.memory_space<vmem>>, vector<144x8xf32>
    %5 = vector.extract_strided_slice %1 {offsets = [0, 0, 0], sizes = [4, 4, 16], strides = [1, 1, 1]} : vector<4x5x16xf32> to vector<4x4x16xf32>
    %6 = vector.shape_cast %5 : vector<4x4x16xf32> to vector<16x16xf32>
    %7 = vector.extract_strided_slice %1 {offsets = [0, 1, 0], sizes = [4, 4, 16], strides = [1, 1, 1]} : vector<4x5x16xf32> to vector<4x4x16xf32>
    %8 = vector.shape_cast %7 : vector<4x4x16xf32> to vector<16x16xf32>
    %9 = vector.extract_strided_slice %3 {offsets = [0, 0, 0], sizes = [4, 4, 16], strides = [1, 1, 1]} : vector<4x5x16xf32> to vector<4x4x16xf32>
    %10 = vector.shape_cast %9 : vector<4x4x16xf32> to vector<16x16xf32>
    %11 = vector.extract_strided_slice %3 {offsets = [0, 1, 0], sizes = [4, 4, 16], strides = [1, 1, 1]} : vector<4x5x16xf32> to vector<4x4x16xf32>
    %12 = vector.shape_cast %11 : vector<4x4x16xf32> to vector<16x16xf32>
    %13 = tpu.concatenate %10, %6, %8, %12 in 1 : vector<16x16xf32>, vector<16x16xf32>, vector<16x16xf32>, vector<16x16xf32> -> vector<16x64xf32>
    %14 = vector.extract_strided_slice %4 {offsets = [0, 0], sizes = [16, 8], strides = [1, 1]} : vector<144x8xf32> to vector<16x8xf32>
    %cst = arith.constant dense<0.000000e+00> : vector<16x8xf32>
    %15 = tpu.matmul %6, %14, %cst {dimension_numbers = #tpu.dot_dimension_numbers<[1], [0], [0], [1], [0, 0, 1, 1], [], []>} : vector<16x16xf32>, vector<16x8xf32>, vector<16x8xf32> -> vector<16x8xf32>
    %16 = vector.extract_strided_slice %13 {offsets = [0, 0], sizes = [16, 32], strides = [1, 1]} : vector<16x64xf32> to vector<16x32xf32>
    %17 = vector.extract_strided_slice %4 {offsets = [16, 0], sizes = [32, 8], strides = [1, 1]} : vector<144x8xf32> to vector<32x8xf32>
    %cst_9 = arith.constant dense<0.000000e+00> : vector<16x8xf32>
    %18 = tpu.matmul %16, %17, %cst_9 {dimension_numbers = #tpu.dot_dimension_numbers<[1], [0], [0], [1], [0, 0, 1, 1], [], []>} : vector<16x32xf32>, vector<32x8xf32>, vector<16x8xf32> -> vector<16x8xf32>
    %19 = vector.extract_strided_slice %13 {offsets = [0, 16], sizes = [16, 32], strides = [1, 1]} : vector<16x64xf32> to vector<16x32xf32>
    %20 = vector.extract_strided_slice %4 {offsets = [48, 0], sizes = [32, 8], strides = [1, 1]} : vector<144x8xf32> to vector<32x8xf32>
    %cst_10 = arith.constant dense<0.000000e+00> : vector<16x8xf32>
    %21 = tpu.matmul %19, %20, %cst_10 {dimension_numbers = #tpu.dot_dimension_numbers<[1], [0], [0], [1], [0, 0, 1, 1], [], []>} : vector<16x32xf32>, vector<32x8xf32>, vector<16x8xf32> -> vector<16x8xf32>
    %22 = vector.extract_strided_slice %4 {offsets = [80, 0], sizes = [64, 8], strides = [1, 1]} : vector<144x8xf32> to vector<64x8xf32>
    %cst_11 = arith.constant dense<0.000000e+00> : vector<16x8xf32>
    %23 = tpu.matmul %13, %22, %cst_11 {dimension_numbers = #tpu.dot_dimension_numbers<[1], [0], [0], [1], [0, 0, 1, 1], [], []>} : vector<16x64xf32>, vector<64x8xf32>, vector<16x8xf32> -> vector<16x8xf32>
    %cst_12 = arith.constant dense<0.000000e+00> : vector<8xf32>
    %24 = vector.multi_reduction <add>, %15, %cst_12 [0] : vector<16x8xf32> to vector<8xf32>
    %25 = vector.shape_cast %24 : vector<8xf32> to vector<1x8xf32>
    %cst_13 = arith.constant dense<0.000000e+00> : vector<8xf32>
    %26 = vector.multi_reduction <add>, %21, %cst_13 [0] : vector<16x8xf32> to vector<8xf32>
    %27 = vector.shape_cast %26 : vector<8xf32> to vector<1x8xf32>
    %28 = arith.addf %25, %27 : vector<1x8xf32>
    %cst_14 = arith.constant dense<0.000000e+00> : vector<8xf32>
    %29 = vector.multi_reduction <add>, %18, %cst_14 [0] : vector<16x8xf32> to vector<8xf32>
    %30 = vector.shape_cast %29 : vector<8xf32> to vector<1x8xf32>
    %31 = arith.addf %28, %30 : vector<1x8xf32>
    %cst_15 = arith.constant dense<0.000000e+00> : vector<8xf32>
    %32 = vector.multi_reduction <add>, %23, %cst_15 [0] : vector<16x8xf32> to vector<8xf32>
    %33 = vector.shape_cast %32 : vector<8xf32> to vector<1x8xf32>
    %34 = arith.addf %31, %33 : vector<1x8xf32>
    %35 = arith.mulf %15, %15 : vector<16x8xf32>
    %cst_16 = arith.constant dense<0.000000e+00> : vector<8xf32>
    %36 = vector.multi_reduction <add>, %35, %cst_16 [0] : vector<16x8xf32> to vector<8xf32>
    %37 = vector.shape_cast %36 : vector<8xf32> to vector<1x8xf32>
    %38 = arith.mulf %21, %21 : vector<16x8xf32>
    %cst_17 = arith.constant dense<0.000000e+00> : vector<8xf32>
    %39 = vector.multi_reduction <add>, %38, %cst_17 [0] : vector<16x8xf32> to vector<8xf32>
    %40 = vector.shape_cast %39 : vector<8xf32> to vector<1x8xf32>
    %41 = arith.addf %37, %40 : vector<1x8xf32>
    %42 = arith.mulf %18, %18 : vector<16x8xf32>
    %cst_18 = arith.constant dense<0.000000e+00> : vector<8xf32>
    %43 = vector.multi_reduction <add>, %42, %cst_18 [0] : vector<16x8xf32> to vector<8xf32>
    %44 = vector.shape_cast %43 : vector<8xf32> to vector<1x8xf32>
    %45 = arith.addf %41, %44 : vector<1x8xf32>
    %46 = arith.mulf %23, %23 : vector<16x8xf32>
    %cst_19 = arith.constant dense<0.000000e+00> : vector<8xf32>
    %47 = vector.multi_reduction <add>, %46, %cst_19 [0] : vector<16x8xf32> to vector<8xf32>
    %48 = vector.shape_cast %47 : vector<8xf32> to vector<1x8xf32>
    %49 = arith.addf %45, %48 : vector<1x8xf32>
    %50 = tpu.concatenate %34, %49 in 0 : vector<1x8xf32>, vector<1x8xf32> -> vector<2x8xf32>
    %c0_20 = arith.constant 0 : index
    %c0_21 = arith.constant 0 : index
    %c0_22 = arith.constant 0 : index
    %c0_23 = arith.constant 0 : index
    %51 = vector.load %arg6[%c0_20, %c0_21, %c0_22, %c0_23] : memref<1x1x2x8xf32, #tpu.memory_space<vmem>>, vector<1x1x2x8xf32>
    %52 = vector.shape_cast %51 : vector<1x1x2x8xf32> to vector<2x8xf32>
    %53 = vector.shape_cast %50 : vector<2x8xf32> to vector<1x1x2x8xf32>
    tpu.vector_store %arg6[%c0_20, %c0_21, %c0_22, %c0_23], %53 {strides = array<i32>} : memref<1x1x2x8xf32, #tpu.memory_space<vmem>>, vector<1x1x2x8xf32>,
    %54 = vector.shape_cast %15 : vector<16x8xf32> to vector<4x4x8xf32>
    %55 = vector.shape_cast %21 : vector<16x8xf32> to vector<4x4x8xf32>
    %56 = vector.shape_cast %18 : vector<16x8xf32> to vector<4x4x8xf32>
    %57 = vector.shape_cast %23 : vector<16x8xf32> to vector<4x4x8xf32>
    %58 = vector.shape_cast %54 : vector<4x4x8xf32> to vector<4x4x1x8xf32>
    %59 = vector.shape_cast %55 : vector<4x4x8xf32> to vector<4x4x1x8xf32>
    %60 = tpu.concatenate %58, %59 in 2 : vector<4x4x1x8xf32>, vector<4x4x1x8xf32> -> vector<4x4x2x8xf32>
    %61 = vector.shape_cast %60 : vector<4x4x2x8xf32> to vector<4x8x8xf32>
    %62 = vector.shape_cast %56 : vector<4x4x8xf32> to vector<4x4x1x8xf32>
    %63 = vector.shape_cast %57 : vector<4x4x8xf32> to vector<4x4x1x8xf32>
    %64 = tpu.concatenate %62, %63 in 2 : vector<4x4x1x8xf32>, vector<4x4x1x8xf32> -> vector<4x4x2x8xf32>
    %65 = vector.shape_cast %64 : vector<4x4x2x8xf32> to vector<4x8x8xf32>
    %66 = vector.shape_cast %61 : vector<4x8x8xf32> to vector<4x1x8x8xf32>
    %67 = vector.shape_cast %65 : vector<4x8x8xf32> to vector<4x1x8x8xf32>
    %68 = tpu.concatenate %66, %67 in 1 : vector<4x1x8x8xf32>, vector<4x1x8x8xf32> -> vector<4x2x8x8xf32>
    %69 = vector.shape_cast %68 : vector<4x2x8x8xf32> to vector<8x8x8xf32>
    %c0_24 = arith.constant 0 : index
    %c0_25 = arith.constant 0 : index
    %c0_26 = arith.constant 0 : index
    %c0_27 = arith.constant 0 : index
    %70 = vector.load %arg5[%c0_24, %c0_25, %c0_26, %c0_27] : memref<1x8x8x8xf32, #tpu.memory_space<vmem>>, vector<1x8x8x8xf32>
    %71 = vector.shape_cast %70 : vector<1x8x8x8xf32> to vector<8x8x8xf32>
    %72 = vector.shape_cast %69 : vector<8x8x8xf32> to vector<1x8x8x8xf32>
    tpu.vector_store %arg5[%c0_24, %c0_25, %c0_26, %c0_27], %72 {strides = array<i32>} : memref<1x8x8x8xf32, #tpu.memory_space<vmem>>, vector<1x8x8x8xf32>,
    return
  }
  func.func @transform_0(%arg0: i32, %arg1: i32) -> (i32, i32, i32, i32) {
    %c0_i32 = arith.constant 0 : i32
    %c0_i32_0 = arith.constant 0 : i32
    %c0_i32_1 = arith.constant 0 : i32
    return %arg0, %arg1, %c0_i32, %c0_i32_0 : i32, i32, i32, i32
  }
  func.func @transform_1(%arg0: i32, %arg1: i32) -> (i32, i32, i32, i32) {
    %c0_i32 = arith.constant 0 : i32
    %c0_i32_0 = arith.constant 0 : i32
    %c0_i32_1 = arith.constant 0 : i32
    return %arg0, %arg1, %c0_i32, %c0_i32_0 : i32, i32, i32, i32
  }
  func.func @transform_2(%arg0: i32, %arg1: i32) -> (i32, i32) {
    %c0_i32 = arith.constant 0 : i32
    %c0_i32_0 = arith.constant 0 : i32
    %c0_i32_1 = arith.constant 0 : i32
    return %c0_i32, %c0_i32_0 : i32, i32
  }
  func.func @transform_3(%arg0: i32, %arg1: i32) -> (i32, i32, i32, i32) {
    %c0_i32 = arith.constant 0 : i32
    %c0_i32_0 = arith.constant 0 : i32
    %c0_i32_1 = arith.constant 0 : i32
    return %arg0, %arg1, %c0_i32, %c0_i32_0 : i32, i32, i32, i32
  }
  func.func @transform_4(%arg0: i32, %arg1: i32) -> (i32, i32, i32, i32) {
    %c0_i32 = arith.constant 0 : i32
    %c0_i32_0 = arith.constant 0 : i32
    %c0_i32_1 = arith.constant 0 : i32
    return %arg0, %arg1, %c0_i32, %c0_i32_0 : i32, i32, i32, i32
  }
}

module attributes {stable_mosaic.version = 11 : i64} {
  func.func @_norm_relu_kernel(%arg0: i32, %arg1: i32, %arg2: memref<1x8x8x8xf32, #tpu.memory_space<vmem>>, %arg3: memref<1x1x1x8xf32, #tpu.memory_space<vmem>>, %arg4: memref<1x1x1x8xf32, #tpu.memory_space<vmem>>, %arg5: memref<1x8x8x8xf32, #tpu.memory_space<vmem>>) attributes {dimension_semantics = [#tpu.dimension_semantics<parallel>, #tpu.dimension_semantics<parallel>], iteration_bounds = array<i64: 2, 1>, scalar_prefetch = 0 : i64, scratch_operands = 0 : i64, tpu.core_type = #tpu.core_type<tc>, window_params = [{transform_indices = @transform_0, window_bounds = array<i64: 1, 8, 8, 8>}, {transform_indices = @transform_1, window_bounds = array<i64: 1, 1, 1, 8>}, {transform_indices = @transform_2, window_bounds = array<i64: 1, 1, 1, 8>}, {transform_indices = @transform_3, window_bounds = array<i64: 1, 8, 8, 8>}]} {
    %c0 = arith.constant 0 : index
    %c0_0 = arith.constant 0 : index
    %c0_1 = arith.constant 0 : index
    %c0_2 = arith.constant 0 : index
    %0 = vector.load %arg2[%c0, %c0_0, %c0_1, %c0_2] : memref<1x8x8x8xf32, #tpu.memory_space<vmem>>, vector<1x8x8x8xf32>
    %c0_3 = arith.constant 0 : index
    %c0_4 = arith.constant 0 : index
    %c0_5 = arith.constant 0 : index
    %c0_6 = arith.constant 0 : index
    %1 = vector.load %arg3[%c0_3, %c0_4, %c0_5, %c0_6] : memref<1x1x1x8xf32, #tpu.memory_space<vmem>>, vector<1x1x1x8xf32>
    %2 = vector.broadcast %1 : vector<1x1x1x8xf32> to vector<1x8x8x8xf32>
    %3 = arith.subf %0, %2 : vector<1x8x8x8xf32>
    %c0_7 = arith.constant 0 : index
    %c0_8 = arith.constant 0 : index
    %c0_9 = arith.constant 0 : index
    %c0_10 = arith.constant 0 : index
    %4 = vector.load %arg4[%c0_7, %c0_8, %c0_9, %c0_10] : memref<1x1x1x8xf32, #tpu.memory_space<vmem>>, vector<1x1x1x8xf32>
    %5 = vector.broadcast %4 : vector<1x1x1x8xf32> to vector<1x8x8x8xf32>
    %6 = arith.mulf %3, %5 : vector<1x8x8x8xf32>
    %cst = arith.constant 0.000000e+00 : f32
    %7 = vector.broadcast %cst : f32 to vector<1x8x8x8xf32>
    %8 = arith.maximumf %6, %7 : vector<1x8x8x8xf32>
    %c0_11 = arith.constant 0 : index
    %c0_12 = arith.constant 0 : index
    %c0_13 = arith.constant 0 : index
    %c0_14 = arith.constant 0 : index
    %9 = vector.load %arg5[%c0_11, %c0_12, %c0_13, %c0_14] : memref<1x8x8x8xf32, #tpu.memory_space<vmem>>, vector<1x8x8x8xf32>
    tpu.vector_store %arg5[%c0_11, %c0_12, %c0_13, %c0_14], %8 {strides = array<i32>} : memref<1x8x8x8xf32, #tpu.memory_space<vmem>>, vector<1x8x8x8xf32>,
    return
  }
  func.func @transform_0(%arg0: i32, %arg1: i32) -> (i32, i32, i32, i32) {
    %c0_i32 = arith.constant 0 : i32
    %c0_i32_0 = arith.constant 0 : i32
    %c0_i32_1 = arith.constant 0 : i32
    return %arg0, %arg1, %c0_i32, %c0_i32_0 : i32, i32, i32, i32
  }
  func.func @transform_1(%arg0: i32, %arg1: i32) -> (i32, i32, i32, i32) {
    %c0_i32 = arith.constant 0 : i32
    %c0_i32_0 = arith.constant 0 : i32
    %c0_i32_1 = arith.constant 0 : i32
    %c0_i32_2 = arith.constant 0 : i32
    return %arg0, %c0_i32, %c0_i32_0, %c0_i32_1 : i32, i32, i32, i32
  }
  func.func @transform_2(%arg0: i32, %arg1: i32) -> (i32, i32, i32, i32) {
    %c0_i32 = arith.constant 0 : i32
    %c0_i32_0 = arith.constant 0 : i32
    %c0_i32_1 = arith.constant 0 : i32
    %c0_i32_2 = arith.constant 0 : i32
    return %arg0, %c0_i32, %c0_i32_0, %c0_i32_1 : i32, i32, i32, i32
  }
  func.func @transform_3(%arg0: i32, %arg1: i32) -> (i32, i32, i32, i32) {
    %c0_i32 = arith.constant 0 : i32
    %c0_i32_0 = arith.constant 0 : i32
    %c0_i32_1 = arith.constant 0 : i32
    return %arg0, %arg1, %c0_i32, %c0_i32_0 : i32, i32, i32, i32
  }
}

module attributes {stable_mosaic.version = 11 : i64} {
  func.func @_phase_conv_kernel(%arg0: i32, %arg1: i32, %arg2: memref<1x8x9x8xf32, #tpu.memory_space<vmem>>, %arg3: memref<1x8x9x8xf32, #tpu.memory_space<vmem>>, %arg4: memref<72x3xf32, #tpu.memory_space<vmem>>, %arg5: memref<1x16x16x3xf32, #tpu.memory_space<vmem>>, %arg6: memref<1x1x2x3xf32, #tpu.memory_space<vmem>>) attributes {dimension_semantics = [#tpu.dimension_semantics<parallel>, #tpu.dimension_semantics<parallel>], iteration_bounds = array<i64: 2, 1>, scalar_prefetch = 0 : i64, scratch_operands = 0 : i64, tpu.core_type = #tpu.core_type<tc>, window_params = [{transform_indices = @transform_0, window_bounds = array<i64: 1, 8, 9, 8>}, {transform_indices = @transform_1, window_bounds = array<i64: 1, 8, 9, 8>}, {pipeline_mode = #tpu.pipeline_mode<synchronous>, transform_indices = @transform_2, window_bounds = array<i64: 72, 3>}, {transform_indices = @transform_3, window_bounds = array<i64: 1, 16, 16, 3>}, {transform_indices = @transform_4, window_bounds = array<i64: 1, 1, 2, 3>}]} {
    %c0 = arith.constant 0 : index
    %c0_0 = arith.constant 0 : index
    %c0_1 = arith.constant 0 : index
    %c0_2 = arith.constant 0 : index
    %0 = vector.load %arg2[%c0, %c0_0, %c0_1, %c0_2] : memref<1x8x9x8xf32, #tpu.memory_space<vmem>>, vector<1x8x9x8xf32>
    %1 = vector.shape_cast %0 : vector<1x8x9x8xf32> to vector<8x9x8xf32>
    %c0_3 = arith.constant 0 : index
    %c0_4 = arith.constant 0 : index
    %c0_5 = arith.constant 0 : index
    %c0_6 = arith.constant 0 : index
    %2 = vector.load %arg3[%c0_3, %c0_4, %c0_5, %c0_6] : memref<1x8x9x8xf32, #tpu.memory_space<vmem>>, vector<1x8x9x8xf32>
    %3 = vector.shape_cast %2 : vector<1x8x9x8xf32> to vector<8x9x8xf32>
    %c0_7 = arith.constant 0 : index
    %c0_8 = arith.constant 0 : index
    %4 = vector.load %arg4[%c0_7, %c0_8] : memref<72x3xf32, #tpu.memory_space<vmem>>, vector<72x3xf32>
    %5 = vector.extract_strided_slice %1 {offsets = [0, 0, 0], sizes = [8, 8, 8], strides = [1, 1, 1]} : vector<8x9x8xf32> to vector<8x8x8xf32>
    %6 = vector.shape_cast %5 : vector<8x8x8xf32> to vector<64x8xf32>
    %7 = vector.extract_strided_slice %1 {offsets = [0, 1, 0], sizes = [8, 8, 8], strides = [1, 1, 1]} : vector<8x9x8xf32> to vector<8x8x8xf32>
    %8 = vector.shape_cast %7 : vector<8x8x8xf32> to vector<64x8xf32>
    %9 = vector.extract_strided_slice %3 {offsets = [0, 0, 0], sizes = [8, 8, 8], strides = [1, 1, 1]} : vector<8x9x8xf32> to vector<8x8x8xf32>
    %10 = vector.shape_cast %9 : vector<8x8x8xf32> to vector<64x8xf32>
    %11 = vector.extract_strided_slice %3 {offsets = [0, 1, 0], sizes = [8, 8, 8], strides = [1, 1, 1]} : vector<8x9x8xf32> to vector<8x8x8xf32>
    %12 = vector.shape_cast %11 : vector<8x8x8xf32> to vector<64x8xf32>
    %13 = tpu.concatenate %10, %6, %8, %12 in 1 : vector<64x8xf32>, vector<64x8xf32>, vector<64x8xf32>, vector<64x8xf32> -> vector<64x32xf32>
    %14 = vector.extract_strided_slice %4 {offsets = [0, 0], sizes = [8, 3], strides = [1, 1]} : vector<72x3xf32> to vector<8x3xf32>
    %cst = arith.constant dense<0.000000e+00> : vector<64x3xf32>
    %15 = tpu.matmul %6, %14, %cst {dimension_numbers = #tpu.dot_dimension_numbers<[1], [0], [0], [1], [0, 0, 1, 1], [], []>} : vector<64x8xf32>, vector<8x3xf32>, vector<64x3xf32> -> vector<64x3xf32>
    %16 = vector.extract_strided_slice %13 {offsets = [0, 0], sizes = [64, 16], strides = [1, 1]} : vector<64x32xf32> to vector<64x16xf32>
    %17 = vector.extract_strided_slice %4 {offsets = [8, 0], sizes = [16, 3], strides = [1, 1]} : vector<72x3xf32> to vector<16x3xf32>
    %cst_9 = arith.constant dense<0.000000e+00> : vector<64x3xf32>
    %18 = tpu.matmul %16, %17, %cst_9 {dimension_numbers = #tpu.dot_dimension_numbers<[1], [0], [0], [1], [0, 0, 1, 1], [], []>} : vector<64x16xf32>, vector<16x3xf32>, vector<64x3xf32> -> vector<64x3xf32>
    %19 = vector.extract_strided_slice %13 {offsets = [0, 8], sizes = [64, 16], strides = [1, 1]} : vector<64x32xf32> to vector<64x16xf32>
    %20 = vector.extract_strided_slice %4 {offsets = [24, 0], sizes = [16, 3], strides = [1, 1]} : vector<72x3xf32> to vector<16x3xf32>
    %cst_10 = arith.constant dense<0.000000e+00> : vector<64x3xf32>
    %21 = tpu.matmul %19, %20, %cst_10 {dimension_numbers = #tpu.dot_dimension_numbers<[1], [0], [0], [1], [0, 0, 1, 1], [], []>} : vector<64x16xf32>, vector<16x3xf32>, vector<64x3xf32> -> vector<64x3xf32>
    %22 = vector.extract_strided_slice %4 {offsets = [40, 0], sizes = [32, 3], strides = [1, 1]} : vector<72x3xf32> to vector<32x3xf32>
    %cst_11 = arith.constant dense<0.000000e+00> : vector<64x3xf32>
    %23 = tpu.matmul %13, %22, %cst_11 {dimension_numbers = #tpu.dot_dimension_numbers<[1], [0], [0], [1], [0, 0, 1, 1], [], []>} : vector<64x32xf32>, vector<32x3xf32>, vector<64x3xf32> -> vector<64x3xf32>
    %cst_12 = arith.constant dense<0.000000e+00> : vector<3xf32>
    %24 = vector.multi_reduction <add>, %15, %cst_12 [0] : vector<64x3xf32> to vector<3xf32>
    %25 = vector.shape_cast %24 : vector<3xf32> to vector<1x3xf32>
    %cst_13 = arith.constant dense<0.000000e+00> : vector<3xf32>
    %26 = vector.multi_reduction <add>, %21, %cst_13 [0] : vector<64x3xf32> to vector<3xf32>
    %27 = vector.shape_cast %26 : vector<3xf32> to vector<1x3xf32>
    %28 = arith.addf %25, %27 : vector<1x3xf32>
    %cst_14 = arith.constant dense<0.000000e+00> : vector<3xf32>
    %29 = vector.multi_reduction <add>, %18, %cst_14 [0] : vector<64x3xf32> to vector<3xf32>
    %30 = vector.shape_cast %29 : vector<3xf32> to vector<1x3xf32>
    %31 = arith.addf %28, %30 : vector<1x3xf32>
    %cst_15 = arith.constant dense<0.000000e+00> : vector<3xf32>
    %32 = vector.multi_reduction <add>, %23, %cst_15 [0] : vector<64x3xf32> to vector<3xf32>
    %33 = vector.shape_cast %32 : vector<3xf32> to vector<1x3xf32>
    %34 = arith.addf %31, %33 : vector<1x3xf32>
    %35 = arith.mulf %15, %15 : vector<64x3xf32>
    %cst_16 = arith.constant dense<0.000000e+00> : vector<3xf32>
    %36 = vector.multi_reduction <add>, %35, %cst_16 [0] : vector<64x3xf32> to vector<3xf32>
    %37 = vector.shape_cast %36 : vector<3xf32> to vector<1x3xf32>
    %38 = arith.mulf %21, %21 : vector<64x3xf32>
    %cst_17 = arith.constant dense<0.000000e+00> : vector<3xf32>
    %39 = vector.multi_reduction <add>, %38, %cst_17 [0] : vector<64x3xf32> to vector<3xf32>
    %40 = vector.shape_cast %39 : vector<3xf32> to vector<1x3xf32>
    %41 = arith.addf %37, %40 : vector<1x3xf32>
    %42 = arith.mulf %18, %18 : vector<64x3xf32>
    %cst_18 = arith.constant dense<0.000000e+00> : vector<3xf32>
    %43 = vector.multi_reduction <add>, %42, %cst_18 [0] : vector<64x3xf32> to vector<3xf32>
    %44 = vector.shape_cast %43 : vector<3xf32> to vector<1x3xf32>
    %45 = arith.addf %41, %44 : vector<1x3xf32>
    %46 = arith.mulf %23, %23 : vector<64x3xf32>
    %cst_19 = arith.constant dense<0.000000e+00> : vector<3xf32>
    %47 = vector.multi_reduction <add>, %46, %cst_19 [0] : vector<64x3xf32> to vector<3xf32>
    %48 = vector.shape_cast %47 : vector<3xf32> to vector<1x3xf32>
    %49 = arith.addf %45, %48 : vector<1x3xf32>
    %50 = tpu.concatenate %34, %49 in 0 : vector<1x3xf32>, vector<1x3xf32> -> vector<2x3xf32>
    %c0_20 = arith.constant 0 : index
    %c0_21 = arith.constant 0 : index
    %c0_22 = arith.constant 0 : index
    %c0_23 = arith.constant 0 : index
    %51 = vector.load %arg6[%c0_20, %c0_21, %c0_22, %c0_23] : memref<1x1x2x3xf32, #tpu.memory_space<vmem>>, vector<1x1x2x3xf32>
    %52 = vector.shape_cast %51 : vector<1x1x2x3xf32> to vector<2x3xf32>
    %53 = vector.shape_cast %50 : vector<2x3xf32> to vector<1x1x2x3xf32>
    tpu.vector_store %arg6[%c0_20, %c0_21, %c0_22, %c0_23], %53 {strides = array<i32>} : memref<1x1x2x3xf32, #tpu.memory_space<vmem>>, vector<1x1x2x3xf32>,
    %54 = vector.shape_cast %15 : vector<64x3xf32> to vector<8x8x3xf32>
    %55 = vector.shape_cast %21 : vector<64x3xf32> to vector<8x8x3xf32>
    %56 = vector.shape_cast %18 : vector<64x3xf32> to vector<8x8x3xf32>
    %57 = vector.shape_cast %23 : vector<64x3xf32> to vector<8x8x3xf32>
    %58 = vector.shape_cast %54 : vector<8x8x3xf32> to vector<8x8x1x3xf32>
    %59 = vector.shape_cast %55 : vector<8x8x3xf32> to vector<8x8x1x3xf32>
    %60 = tpu.concatenate %58, %59 in 2 : vector<8x8x1x3xf32>, vector<8x8x1x3xf32> -> vector<8x8x2x3xf32>
    %61 = vector.shape_cast %60 : vector<8x8x2x3xf32> to vector<8x16x3xf32>
    %62 = vector.shape_cast %56 : vector<8x8x3xf32> to vector<8x8x1x3xf32>
    %63 = vector.shape_cast %57 : vector<8x8x3xf32> to vector<8x8x1x3xf32>
    %64 = tpu.concatenate %62, %63 in 2 : vector<8x8x1x3xf32>, vector<8x8x1x3xf32> -> vector<8x8x2x3xf32>
    %65 = vector.shape_cast %64 : vector<8x8x2x3xf32> to vector<8x16x3xf32>
    %66 = vector.shape_cast %61 : vector<8x16x3xf32> to vector<8x1x16x3xf32>
    %67 = vector.shape_cast %65 : vector<8x16x3xf32> to vector<8x1x16x3xf32>
    %68 = tpu.concatenate %66, %67 in 1 : vector<8x1x16x3xf32>, vector<8x1x16x3xf32> -> vector<8x2x16x3xf32>
    %69 = vector.shape_cast %68 : vector<8x2x16x3xf32> to vector<16x16x3xf32>
    %c0_24 = arith.constant 0 : index
    %c0_25 = arith.constant 0 : index
    %c0_26 = arith.constant 0 : index
    %c0_27 = arith.constant 0 : index
    %70 = vector.load %arg5[%c0_24, %c0_25, %c0_26, %c0_27] : memref<1x16x16x3xf32, #tpu.memory_space<vmem>>, vector<1x16x16x3xf32>
    %71 = vector.shape_cast %70 : vector<1x16x16x3xf32> to vector<16x16x3xf32>
    %72 = vector.shape_cast %69 : vector<16x16x3xf32> to vector<1x16x16x3xf32>
    tpu.vector_store %arg5[%c0_24, %c0_25, %c0_26, %c0_27], %72 {strides = array<i32>} : memref<1x16x16x3xf32, #tpu.memory_space<vmem>>, vector<1x16x16x3xf32>,
    return
  }
  func.func @transform_0(%arg0: i32, %arg1: i32) -> (i32, i32, i32, i32) {
    %c0_i32 = arith.constant 0 : i32
    %c0_i32_0 = arith.constant 0 : i32
    %c0_i32_1 = arith.constant 0 : i32
    return %arg0, %arg1, %c0_i32, %c0_i32_0 : i32, i32, i32, i32
  }
  func.func @transform_1(%arg0: i32, %arg1: i32) -> (i32, i32, i32, i32) {
    %c0_i32 = arith.constant 0 : i32
    %c0_i32_0 = arith.constant 0 : i32
    %c0_i32_1 = arith.constant 0 : i32
    return %arg0, %arg1, %c0_i32, %c0_i32_0 : i32, i32, i32, i32
  }
  func.func @transform_2(%arg0: i32, %arg1: i32) -> (i32, i32) {
    %c0_i32 = arith.constant 0 : i32
    %c0_i32_0 = arith.constant 0 : i32
    %c0_i32_1 = arith.constant 0 : i32
    return %c0_i32, %c0_i32_0 : i32, i32
  }
  func.func @transform_3(%arg0: i32, %arg1: i32) -> (i32, i32, i32, i32) {
    %c0_i32 = arith.constant 0 : i32
    %c0_i32_0 = arith.constant 0 : i32
    %c0_i32_1 = arith.constant 0 : i32
    return %arg0, %arg1, %c0_i32, %c0_i32_0 : i32, i32, i32, i32
  }
  func.func @transform_4(%arg0: i32, %arg1: i32) -> (i32, i32, i32, i32) {
    %c0_i32 = arith.constant 0 : i32
    %c0_i32_0 = arith.constant 0 : i32
    %c0_i32_1 = arith.constant 0 : i32
    return %arg0, %arg1, %c0_i32, %c0_i32_0 : i32, i32, i32, i32
  }
}

module attributes {stable_mosaic.version = 11 : i64} {
  func.func @_norm_relu_kernel(%arg0: i32, %arg1: i32, %arg2: memref<1x16x16x3xf32, #tpu.memory_space<vmem>>, %arg3: memref<1x1x1x3xf32, #tpu.memory_space<vmem>>, %arg4: memref<1x1x1x3xf32, #tpu.memory_space<vmem>>, %arg5: memref<1x16x16x3xf32, #tpu.memory_space<vmem>>) attributes {dimension_semantics = [#tpu.dimension_semantics<parallel>, #tpu.dimension_semantics<parallel>], iteration_bounds = array<i64: 2, 1>, scalar_prefetch = 0 : i64, scratch_operands = 0 : i64, tpu.core_type = #tpu.core_type<tc>, window_params = [{transform_indices = @transform_0, window_bounds = array<i64: 1, 16, 16, 3>}, {transform_indices = @transform_1, window_bounds = array<i64: 1, 1, 1, 3>}, {transform_indices = @transform_2, window_bounds = array<i64: 1, 1, 1, 3>}, {transform_indices = @transform_3, window_bounds = array<i64: 1, 16, 16, 3>}]} {
    %c0 = arith.constant 0 : index
    %c0_0 = arith.constant 0 : index
    %c0_1 = arith.constant 0 : index
    %c0_2 = arith.constant 0 : index
    %0 = vector.load %arg2[%c0, %c0_0, %c0_1, %c0_2] : memref<1x16x16x3xf32, #tpu.memory_space<vmem>>, vector<1x16x16x3xf32>
    %c0_3 = arith.constant 0 : index
    %c0_4 = arith.constant 0 : index
    %c0_5 = arith.constant 0 : index
    %c0_6 = arith.constant 0 : index
    %1 = vector.load %arg3[%c0_3, %c0_4, %c0_5, %c0_6] : memref<1x1x1x3xf32, #tpu.memory_space<vmem>>, vector<1x1x1x3xf32>
    %2 = vector.broadcast %1 : vector<1x1x1x3xf32> to vector<1x16x16x3xf32>
    %3 = arith.subf %0, %2 : vector<1x16x16x3xf32>
    %c0_7 = arith.constant 0 : index
    %c0_8 = arith.constant 0 : index
    %c0_9 = arith.constant 0 : index
    %c0_10 = arith.constant 0 : index
    %4 = vector.load %arg4[%c0_7, %c0_8, %c0_9, %c0_10] : memref<1x1x1x3xf32, #tpu.memory_space<vmem>>, vector<1x1x1x3xf32>
    %5 = vector.broadcast %4 : vector<1x1x1x3xf32> to vector<1x16x16x3xf32>
    %6 = arith.mulf %3, %5 : vector<1x16x16x3xf32>
    %cst = arith.constant 0.000000e+00 : f32
    %7 = vector.broadcast %cst : f32 to vector<1x16x16x3xf32>
    %8 = arith.maximumf %6, %7 : vector<1x16x16x3xf32>
    %c0_11 = arith.constant 0 : index
    %c0_12 = arith.constant 0 : index
    %c0_13 = arith.constant 0 : index
    %c0_14 = arith.constant 0 : index
    %9 = vector.load %arg5[%c0_11, %c0_12, %c0_13, %c0_14] : memref<1x16x16x3xf32, #tpu.memory_space<vmem>>, vector<1x16x16x3xf32>
    tpu.vector_store %arg5[%c0_11, %c0_12, %c0_13, %c0_14], %8 {strides = array<i32>} : memref<1x16x16x3xf32, #tpu.memory_space<vmem>>, vector<1x16x16x3xf32>,
    return
  }
  func.func @transform_0(%arg0: i32, %arg1: i32) -> (i32, i32, i32, i32) {
    %c0_i32 = arith.constant 0 : i32
    %c0_i32_0 = arith.constant 0 : i32
    %c0_i32_1 = arith.constant 0 : i32
    return %arg0, %arg1, %c0_i32, %c0_i32_0 : i32, i32, i32, i32
  }
  func.func @transform_1(%arg0: i32, %arg1: i32) -> (i32, i32, i32, i32) {
    %c0_i32 = arith.constant 0 : i32
    %c0_i32_0 = arith.constant 0 : i32
    %c0_i32_1 = arith.constant 0 : i32
    %c0_i32_2 = arith.constant 0 : i32
    return %arg0, %c0_i32, %c0_i32_0, %c0_i32_1 : i32, i32, i32, i32
  }
  func.func @transform_2(%arg0: i32, %arg1: i32) -> (i32, i32, i32, i32) {
    %c0_i32 = arith.constant 0 : i32
    %c0_i32_0 = arith.constant 0 : i32
    %c0_i32_1 = arith.constant 0 : i32
    %c0_i32_2 = arith.constant 0 : i32
    return %arg0, %c0_i32, %c0_i32_0, %c0_i32_1 : i32, i32, i32, i32
  }
  func.func @transform_3(%arg0: i32, %arg1: i32) -> (i32, i32, i32, i32) {
    %c0_i32 = arith.constant 0 : i32
    %c0_i32_0 = arith.constant 0 : i32
    %c0_i32_1 = arith.constant 0 : i32
    return %arg0, %arg1, %c0_i32, %c0_i32_0 : i32, i32, i32, i32
  }
}

</mosaic_0001>

<llo_original>
// kernel: mul.28
$region0: #{mul.28}
  #allocation0 [shape = 's32[1]{0}', space=sflag, size = 0x4, scoped, tag = 'scoped memory for mul.28']
  %s0 = inlined_call_operand.vmem [shape: f32[2,1,1,16], index: 0, kind: input, shape index: {}, may-alias: {0,1}]
  %s1 = inlined_call_operand.vmem [shape: f32[2,1,1,16], index: 1, kind: input, shape index: {}, may-alias: {0,1}]
  %s2 = inlined_call_operand.vmem [shape: f32[2,1,1,16], index: 2, kind: output, shape index: {}]
  %v3 = vld [vmem:[%s0] sm:$0x3]
  %v4 = vld [vmem:[%s1] sm:$0x3]
  %5 = xla_tuple %v3, %v4
  %6 = xla_tuple %5
  %v7 = vmul.f32 %v3, %v4
  %8 = xla_tuple %v7
  %9 = vst [vmem:[%s2] sm:$0x3] %v7

// kernel: a_call__.9
$region0: #{a_call__.9}
  #allocation0 [shape = 'u32[]', space=smem, size = 0x4, offset = 0x4, fixed_abs, tag = 'smem constant byte address 0x4 - core index']
  #allocation1 [shape = 'u32[144,128]{1,0:T(1,128)}', space=vmem, size = 0x12000, scoped, tag = 'internal scratch']
  %s0 = inlined_call_operand.vmem [shape: f32[2,2,2,16], index: 0, kind: input, shape index: {}]
  %s1 = inlined_call_operand.vmem [shape: f32[2,1,1,16], index: 1, kind: input, shape index: {}]
  %s2 = inlined_call_operand.vmem [shape: f32[2,1,1,16], index: 2, kind: input, shape index: {}]
  %s3 = inlined_call_operand.vmem [shape: f32[2,2,2,16], index: 3, kind: output, shape index: {}]
  %s4 = sld [smem:[#allocation0]]
  $region45: #{a_call__.9} parent=0
    _
  %s6 = ssub.s32 1, %s4
  %s7 = scalar_select 0, %s6, %s4
  loop: start=0, step=1, limit=4
  $region2: #{a_call__.9} parent=0 // loop_pre_header
    _
  $region3: #{a_call__.9} parent=0 // loop_header
    %s9 = sphi 0, %s13
    %p10 = scmp.ge.s32.totalorder %s9, 4
    %s16 = sphi 0, %s28
    %s17 = sphi 0, %s24
    %s18 = sphi 0, %s16
    %s19 = sphi 0, %s17
    %s20 = sphi 0, %s18
    %s21 = sphi 0, %s19
    %s33 = sphi 0, %s35
    %s36 = sphi 0, %s33
    %s37 = sphi 0, %s36
    %s53 = sphi 0, %s37
    %s59 = sphi 0, %s61
    %s62 = sphi 0, %s59
    %s63 = sphi 0, %s62
    %s79 = sphi 0, %s63
    %s85 = sphi 0, %s87
    %s88 = sphi 0, %s85
    %s89 = sphi 0, %s88
    %s105 = sphi 0, %s89
    %s113 = sphi 0, %s115
    %s116 = sphi 0, %s113
    %s117 = sphi 0, %s116
    %s133 = sphi 0, %s117
  $region4: #{a_call__.9} parent=0 // loop_header_branch
    %12 = sbr.rel (%p10) target = $region8
  $region5: #{a_call__.9} parent=0 // loop_body
    %s14 = ssub.s32 %s9, 1
    %s15 = ssub.s32 %s9, 2
    %s22 = sadd.s32 1, %s17
    %p23 = scmp.ge.s32.totalorder %s22, 1
    %s24 = scalar_select %p23, 0, %s22
    %s25 = sadd.s32 1, %s16
    %s26 = scalar_select %p23, %s25, %s16
    %p27 = scmp.ge.s32.totalorder %s26, 2
    %s28 = scalar_select %p27, 0, %s26
    %s29 = ssub.s32 %s16, %s28
    %s30 = ssub.s32 %s17, %s24
    %s31 = sor.u32 %s29, %s30
    %p32 = scmp.eq.s32.totalorder %s31, 0
    %s34 = sadd.s32 %s33, 1
    %s35 = scalar_select %p32, %s33, %s34
    %p38 = pneg %p32
    %p39 = scmp.eq.s32.totalorder %s9, 1
    %p40 = por %p38, %p39
    %p41 = scmp.ne.s32.totalorder %s33, %s36
    %p42 = scmp.eq.s32.totalorder %s9, 0
    %p43 = por %p41, %p42
    %p44 = scmp.ne.s32.totalorder %s33, %s36
    %p45 = scmp.eq.s32.totalorder %s14, 1
    %p46 = por %p44, %p45
    %p47 = scmp.ne.s32.totalorder %s36, %s37
    %p48 = scmp.eq.s32.totalorder %s14, 0
    %p49 = por %p47, %p48
    %p50 = scmp.ne.s32.totalorder %s36, %s37
    %p51 = scmp.eq.s32.totalorder %s15, 1
    %p52 = por %p50, %p51
    %p54 = scmp.ne.s32.totalorder %s37, %s53
    %p55 = scmp.eq.s32.totalorder %s15, 0
    %p56 = por %p54, %p55
    %s57 = ssub.s32 %s16, %s28
    %p58 = scmp.eq.s32.totalorder %s57, 0
    %s60 = sadd.s32 %s59, 1
    %s61 = scalar_select %p58, %s59, %s60
    %p64 = pneg %p58
    %p65 = scmp.eq.s32.totalorder %s9, 1
    %p66 = por %p64, %p65
    %p67 = scmp.ne.s32.totalorder %s59, %s62
    %p68 = scmp.eq.s32.totalorder %s9, 0
    %p69 = por %p67, %p68
    %p70 = scmp.ne.s32.totalorder %s59, %s62
    %p71 = scmp.eq.s32.totalorder %s14, 1
    %p72 = por %p70, %p71
    %p73 = scmp.ne.s32.totalorder %s62, %s63
    %p74 = scmp.eq.s32.totalorder %s14, 0
    %p75 = por %p73, %p74
    %p76 = scmp.ne.s32.totalorder %s62, %s63
    %p77 = scmp.eq.s32.totalorder %s15, 1
    %p78 = por %p76, %p77
    %p80 = scmp.ne.s32.totalorder %s63, %s79
    %p81 = scmp.eq.s32.totalorder %s15, 0
    %p82 = por %p80, %p81
    %s83 = ssub.s32 %s16, %s28
    %p84 = scmp.eq.s32.totalorder %s83, 0
    %s86 = sadd.s32 %s85, 1
    %s87 = scalar_select %p84, %s85, %s86
    %p90 = pneg %p84
    %p91 = scmp.eq.s32.totalorder %s9, 1
    %p92 = por %p90, %p91
    %p93 = scmp.ne.s32.totalorder %s85, %s88
    %p94 = scmp.eq.s32.totalorder %s9, 0
    %p95 = por %p93, %p94
    %p96 = scmp.ne.s32.totalorder %s85, %s88
    %p97 = scmp.eq.s32.totalorder %s14, 1
    %p98 = por %p96, %p97
    %p99 = scmp.ne.s32.totalorder %s88, %s89
    %p100 = scmp.eq.s32.totalorder %s14, 0
    %p101 = por %p99, %p100
    %p102 = scmp.ne.s32.totalorder %s88, %s89
    %p103 = scmp.eq.s32.totalorder %s15, 1
    %p104 = por %p102, %p103
    %p106 = scmp.ne.s32.totalorder %s89, %s105
    %p107 = scmp.eq.s32.totalorder %s15, 0
    %p108 = por %p106, %p107
    %s109 = ssub.s32 %s16, %s28
    %s110 = ssub.s32 %s17, %s24
    %s111 = sor.u32 %s109, %s110
    %p112 = scmp.eq.s32.totalorder %s111, 0
    %s114 = sadd.s32 %s113, 1
    %s115 = scalar_select %p112, %s113, %s114
    %p118 = pneg %p112
    %p119 = scmp.eq.s32.totalorder %s9, 1
    %p120 = por %p118, %p119
    %p121 = scmp.ne.s32.totalorder %s113, %s116
    %p122 = scmp.eq.s32.totalorder %s9, 0
    %p123 = por %p121, %p122
    %p124 = scmp.ne.s32.totalorder %s113, %s116
    %p125 = scmp.eq.s32.totalorder %s14, 1
    %p126 = por %p124, %p125
    %p127 = scmp.ne.s32.totalorder %s116, %s117
    %p128 = scmp.eq.s32.totalorder %s14, 0
    %p129 = por %p127, %p128
    %p130 = scmp.ne.s32.totalorder %s116, %s117
    %p131 = scmp.eq.s32.totalorder %s15, 1
    %p132 = por %p130, %p131
    %p134 = scmp.ne.s32.totalorder %s117, %s133
    %p135 = scmp.eq.s32.totalorder %s15, 0
    %p136 = por %p134, %p135
    %p137 = scmp.le.s32.totalorder 1, %s9
    %p138 = scmp.lt.s32.totalorder %s9, 3
    %p139 = pnand %p137, %p138
    %p140 = pneg %p139
    // Predicated region
    $region9: #{a_call__.9} parent=5 // pred_check
      _
    $region10: #{a_call__.9} parent=5 // pred_check_branch
      %142 = sbr.rel (%p139) target = $region12
    $region11: #{a_call__.9} parent=5 // pred_region
      %s143 = ssub.s32 %s9, 1
    $region12: #{a_call__.9} parent=5 // pred_fallthru
      _
    %p144 = scmp.lt.s32.totalorder %s9, 2
    // Predicated region
    $region13: #{a_call__.9} parent=5 // pred_check
      %p145 = pneg %p144
    $region14: #{a_call__.9} parent=5 // pred_check_branch
      %147 = sbr.rel (%p145) target = $region16
    $region15: #{a_call__.9} parent=5 // pred_region
      // Predicated region
      $region17: #{a_call__.9} parent=15 // pred_check
        %p148 = pneg %p43
      $region18: #{a_call__.9} parent=15 // pred_check_branch
        %150 = sbr.rel (%p148) target = $region20
      $region19: #{a_call__.9} parent=15 // pred_region
        %s151 = smul.u32 2, %s17
        %p152 = scmp.lt.s32.totalorder %s16, 1
        %s153 = scalar_select %p152, %s16, 1
        %p154 = scmp.lt.s32.totalorder %s151, 1
        %s155 = scalar_select %p154, %s151, 1
        %s156 = smul.addr %s153, 2
        %s157 = sadd.s32 %s155, %s156
        %s158 = smul.addr %s157, 2
        %s159 = scalar_lea.vmem %s0, %s158
        %s160 = smul.u32 2, %s17
      $region20: #{a_call__.9} parent=15 // pred_fallthru
        _
      // Predicated region
      $region21: #{a_call__.9} parent=15 // pred_check
        %p161 = pneg %p69
      $region22: #{a_call__.9} parent=15 // pred_check_branch
        %163 = sbr.rel (%p161) target = $region24
      $region23: #{a_call__.9} parent=15 // pred_region
        %p164 = scmp.lt.s32.totalorder %s16, 1
        %s165 = scalar_select %p164, %s16, 1
        %s166 = scalar_lea.vmem %s1, %s165
      $region24: #{a_call__.9} parent=15 // pred_fallthru
        _
      // Predicated region
      $region25: #{a_call__.9} parent=15 // pred_check
        %p167 = pneg %p95
      $region26: #{a_call__.9} parent=15 // pred_check_branch
        %169 = sbr.rel (%p167) target = $region28
      $region27: #{a_call__.9} parent=15 // pred_region
        %p170 = scmp.lt.s32.totalorder %s16, 1
        %s171 = scalar_select %p170, %s16, 1
        %s172 = scalar_lea.vmem %s2, %s171
      $region28: #{a_call__.9} parent=15 // pred_fallthru
        _
    $region16: #{a_call__.9} parent=5 // pred_fallthru
      _
    %p173 = scmp.le.s32.totalorder 1, %s9
    %p174 = scmp.lt.s32.totalorder %s9, 3
    %p175 = pnand %p173, %p174
    %p176 = pneg %p175
    // Predicated region
    $region29: #{a_call__.9} parent=5 // pred_check
      _
    $region30: #{a_call__.9} parent=5 // pred_check_branch
      %178 = sbr.rel (%p175) target = $region32
    $region31: #{a_call__.9} parent=5 // pred_region
      %s179 = ssub.s32 %s9, 1
      %s180 = smul.u32 2, %s19
      %p181 = scmp.lt.s32.totalorder %s18, 1
      %s182 = scalar_select %p181, %s18, 1
      %p183 = scmp.lt.s32.totalorder %s180, 1
      %s184 = scalar_select %p183, %s180, 1
      %s185 = smul.addr %s182, 2
      %s186 = sadd.s32 %s184, %s185
      %s187 = smul.addr %s186, 2
      %s188 = scalar_lea.vmem %s0, %s187
      %p189 = pneg %p49
      %p190 = pneg %p46
      %p191 = scmp.lt.s32.totalorder %s18, 1
      %s192 = scalar_select %p191, %s18, 1
      %s193 = scalar_lea.vmem %s1, %s192
      %p194 = pneg %p75
      %p195 = pneg %p72
      %p196 = scmp.lt.s32.totalorder %s18, 1
      %s197 = scalar_select %p196, %s18, 1
      %s198 = scalar_lea.vmem %s2, %s197
      %p199 = pneg %p101
      %p200 = pneg %p98
      %p201 = pneg %p129
      %p202 = pneg %p126
      %s203 = smul.u32 2, %s19
      %p204 = scmp.lt.s32.totalorder %s18, 1
      %s205 = scalar_select %p204, %s18, 1
      %p206 = scmp.lt.s32.totalorder %s203, 1
      %s207 = scalar_select %p206, %s203, 1
      %s208 = smul.addr %s205, 2
      %s209 = sadd.s32 %s207, %s208
      %s210 = smul.addr %s209, 2
      %s211 = scalar_lea.vmem %s3, %s210
      %s212 = smul.u32 2, %s19
      %p213 = scmp.lt.s32.totalorder %s18, 1
      %s214 = scalar_select %p213, %s18, 1
      %p215 = scmp.lt.s32.totalorder %s212, 1
      %s216 = scalar_select %p215, %s212, 1
      %s217 = smul.addr %s214, 2
      %s218 = sadd.s32 %s216, %s217
      %s219 = smul.addr %s218, 2
      %s220 = scalar_lea.vmem %s0, %s219
      %s221 = smul.u32 2, %s19
      %p222 = scmp.lt.s32.totalorder %s18, 1
      %s223 = scalar_select %p222, %s18, 1
      %s224 = scalar_lea.vmem %s1, %s223
      %p225 = scmp.lt.s32.totalorder %s18, 1
      %s226 = scalar_select %p225, %s18, 1
      %s227 = scalar_lea.vmem %s2, %s226
      %s228 = smul.u32 2, %s19
      %p229 = scmp.lt.s32.totalorder %s18, 1
      %s230 = scalar_select %p229, %s18, 1
      %p231 = scmp.lt.s32.totalorder %s228, 1
      %s232 = scalar_select %p231, %s228, 1
      %s233 = smul.addr %s230, 2
      %s234 = sadd.s32 %s232, %s233
      %s235 = smul.addr %s234, 2
      %s236 = scalar_lea.vmem %s3, %s235
      %s237 = smul.u32 2, %s19
      %v238 = vld [vmem:[%s220] sm:$0x3]
      %v239 = vld [vmem:[%s220 + $0x2] sm:$0x3]
      %v240 = vld [vmem:[%s224] sm:$0x1]
      %v242 = vlaneseq
      %v243 = vshrl.u32 %v242, 7
      %v244 = vsub.s32 0, %v243
      %v245 = vrot.slane %v240, %v244
      %v247 = vsub.f32 %v238, %v245
      %v248 = vsub.f32 %v239, %v245
      %v249 = vld [vmem:[%s227] sm:$0x1]
      %v251 = vlaneseq
      %v252 = vshrl.u32 %v251, 7
      %v253 = vsub.s32 0, %v252
      %v254 = vrot.slane %v249, %v253
      %v256 = vmul.f32 %v247, %v254
      %v257 = vmul.f32 %v248, %v254
      %v258 = vmax.f32 %v256, 0.0
      %v259 = vmax.f32 %v257, 0.0
      %vm260 = vcmask 123904
      %261 = vst.msk [vmem:[%s236] sm:$0x3] %vm260, %v258
      %262 = vst.msk [vmem:[%s236 + $0x2] sm:$0x3] %vm260, %v259
      %s263 = smul.u32 2, %s19
      %p264 = scmp.lt.s32.totalorder %s18, 1
      %s265 = scalar_select %p264, %s18, 1
      %p266 = scmp.lt.s32.totalorder %s263, 1
      %s267 = scalar_select %p266, %s263, 1
      %s268 = smul.addr %s265, 2
      %s269 = sadd.s32 %s267, %s268
      %s270 = smul.addr %s269, 2
      %s271 = scalar_lea.vmem %s3, %s270
      // Predicated region
      $region33: #{a_call__.9} parent=31 // pred_check
        %p272 = pneg %p126
      $region34: #{a_call__.9} parent=31 // pred_check_branch
        %274 = sbr.rel (%p272) target = $region36
      $region35: #{a_call__.9} parent=31 // pred_region
        %s275 = smul.u32 2, %s19
      $region36: #{a_call__.9} parent=31 // pred_fallthru
        _
    $region32: #{a_call__.9} parent=5 // pred_fallthru
      _
    %p276 = scmp.le.s32.totalorder 2, %s9
    // Predicated region
    $region37: #{a_call__.9} parent=5 // pred_check
      %p277 = pneg %p276
    $region38: #{a_call__.9} parent=5 // pred_check_branch
      %279 = sbr.rel (%p277) target = $region40
    $region39: #{a_call__.9} parent=5 // pred_region
      %s280 = ssub.s32 %s9, 2
      // Predicated region
      $region41: #{a_call__.9} parent=39 // pred_check
        %p281 = pneg %p132
      $region42: #{a_call__.9} parent=39 // pred_check_branch
        %283 = sbr.rel (%p281) target = $region44
      $region43: #{a_call__.9} parent=39 // pred_region
        %s284 = smul.u32 2, %s21
        %p285 = scmp.lt.s32.totalorder %s20, 1
        %s286 = scalar_select %p285, %s20, 1
        %p287 = scmp.lt.s32.totalorder %s284, 1
        %s288 = scalar_select %p287, %s284, 1
        %s289 = smul.addr %s286, 2
        %s290 = sadd.s32 %s288, %s289
        %s291 = smul.addr %s290, 2
        %s292 = scalar_lea.vmem %s3, %s291
      $region44: #{a_call__.9} parent=39 // pred_fallthru
        _
    $region40: #{a_call__.9} parent=5 // pred_fallthru
      _
  $region6: #{a_call__.9} parent=0 // loop_footer
    %s13 = sadd.s32 1, %s9
  $region7: #{a_call__.9} parent=0 // loop_footer_branch
    %8 = sbr.rel target = $region3
  $region8: #{a_call__.9} parent=0 // loop_exit
    _

// kernel: a_call__.8
$region0: #{a_call__.8}
  #allocation0 [shape = 'u32[]', space=smem, size = 0x4, offset = 0x4, fixed_abs, tag = 'smem constant byte address 0x4 - core index']
  #allocation1 [shape = 'u32[144,128]{1,0:T(1,128)}', space=vmem, size = 0x12000, scoped, tag = 'internal scratch']
  %s0 = inlined_call_operand.vmem [shape: f32[2,1,2,8], index: 0, kind: input, shape index: {}]
  %s1 = inlined_call_operand.vmem [shape: f32[2,1,2,8], index: 1, kind: input, shape index: {}]
  %s2 = inlined_call_operand.hbm [shape: f32[72,16], index: 2, kind: input, shape index: {}]
  %s3 = inlined_call_operand.vmem [shape: f32[2,2,2,16], index: 3, kind: output, shape index: {0}]
  %s4 = inlined_call_operand.vmem [shape: f32[2,1,2,16], index: 4, kind: output, shape index: {1}]
  %5 = xla_tuple %s3, %s4
  %s6 = sld [smem:[#allocation0]]
  $region57: #{a_call__.8} parent=0
    _
  %s8 = ssub.s32 1, %s6
  %s9 = scalar_select 0, %s8, %s6
  $region1: #{a_call__.8} parent=0
    #allocation2 [shape = 'u8[36864]{0}', space=vmem, size = 0x9000, scoped, tag = 'input window, operand 2, single buffered']
    #allocation3 [shape = 's32[2]{0}', space=sflag, size = 0x8, scoped, tag = 'scoped memory for a_call__.8']
    %10 = vsyncpa [#allocation3], 0
    loop: start=0, step=1, limit=4
    $region2: #{a_call__.8} parent=1 // loop_pre_header
      _
    $region3: #{a_call__.8} parent=1 // loop_header
      %s12 = sphi 0, %s16
      %p13 = scmp.ge.s32.totalorder %s12, 4
      %s19 = sphi 0, %s31
      %s20 = sphi 0, %s27
      %s21 = sphi 0, %s19
      %s22 = sphi 0, %s20
      %s23 = sphi 0, %s21
      %s24 = sphi 0, %s22
      %s36 = sphi 0, %s38
      %s39 = sphi 0, %s36
      %s40 = sphi 0, %s39
      %s56 = sphi 0, %s40
      %s64 = sphi 0, %s66
      %s67 = sphi 0, %s64
      %s68 = sphi 0, %s67
      %s84 = sphi 0, %s68
      %s88 = sphi 0, %s88
      %s90 = sphi 0, %s88
      %s91 = sphi 0, %s90
      %s105 = sphi 0, %s91
      %s113 = sphi 0, %s115
      %s116 = sphi 0, %s113
      %s117 = sphi 0, %s116
      %s133 = sphi 0, %s117
      %s141 = sphi 0, %s143
      %s144 = sphi 0, %s141
      %s145 = sphi 0, %s144
      %s161 = sphi 0, %s145
    $region4: #{a_call__.8} parent=1 // loop_header_branch
      %15 = sbr.rel (%p13) target = $region8
    $region5: #{a_call__.8} parent=1 // loop_body
      %s17 = ssub.s32 %s12, 1
      %s18 = ssub.s32 %s12, 2
      %s25 = sadd.s32 1, %s20
      %p26 = scmp.ge.s32.totalorder %s25, 1
      %s27 = scalar_select %p26, 0, %s25
      %s28 = sadd.s32 1, %s19
      %s29 = scalar_select %p26, %s28, %s19
      %p30 = scmp.ge.s32.totalorder %s29, 2
      %s31 = scalar_select %p30, 0, %s29
      %s32 = ssub.s32 %s19, %s31
      %s33 = ssub.s32 %s20, %s27
      %s34 = sor.u32 %s32, %s33
      %p35 = scmp.eq.s32.totalorder %s34, 0
      %s37 = sadd.s32 %s36, 1
      %s38 = scalar_select %p35, %s36, %s37
      %p41 = pneg %p35
      %p42 = scmp.eq.s32.totalorder %s12, 1
      %p43 = por %p41, %p42
      %p44 = scmp.ne.s32.totalorder %s36, %s39
      %p45 = scmp.eq.s32.totalorder %s12, 0
      %p46 = por %p44, %p45
      %p47 = scmp.ne.s32.totalorder %s36, %s39
      %p48 = scmp.eq.s32.totalorder %s17, 1
      %p49 = por %p47, %p48
      %p50 = scmp.ne.s32.totalorder %s39, %s40
      %p51 = scmp.eq.s32.totalorder %s17, 0
      %p52 = por %p50, %p51
      %p53 = scmp.ne.s32.totalorder %s39, %s40
      %p54 = scmp.eq.s32.totalorder %s18, 1
      %p55 = por %p53, %p54
      %p57 = scmp.ne.s32.totalorder %s40, %s56
      %p58 = scmp.eq.s32.totalorder %s18, 0
      %p59 = por %p57, %p58
      %s60 = ssub.s32 %s19, %s31
      %s61 = ssub.s32 %s20, %s27
      %s62 = sor.u32 %s60, %s61
      %p63 = scmp.eq.s32.totalorder %s62, 0
      %s65 = sadd.s32 %s64, 1
      %s66 = scalar_select %p63, %s64, %s65
      %p69 = pneg %p63
      %p70 = scmp.eq.s32.totalorder %s12, 1
      %p71 = por %p69, %p70
      %p72 = scmp.ne.s32.totalorder %s64, %s67
      %p73 = scmp.eq.s32.totalorder %s12, 0
      %p74 = por %p72, %p73
      %p75 = scmp.ne.s32.totalorder %s64, %s67
      %p76 = scmp.eq.s32.totalorder %s17, 1
      %p77 = por %p75, %p76
      %p78 = scmp.ne.s32.totalorder %s67, %s68
      %p79 = scmp.eq.s32.totalorder %s17, 0
      %p80 = por %p78, %p79
      %p81 = scmp.ne.s32.totalorder %s67, %s68
      %p82 = scmp.eq.s32.totalorder %s18, 1
      %p83 = por %p81, %p82
      %p85 = scmp.ne.s32.totalorder %s68, %s84
      %p86 = scmp.eq.s32.totalorder %s18, 0
      %p87 = por %p85, %p86
      %s89 = sadd.s32 %s88, 1
      %p92 = scmp.eq.s32.totalorder %s12, 1
      %p93 = scmp.ne.s32.totalorder %s88, %s90
      %p94 = scmp.eq.s32.totalorder %s12, 0
      %p95 = por %p93, %p94
      %p96 = scmp.ne.s32.totalorder %s88, %s90
      %p97 = scmp.eq.s32.totalorder %s17, 1
      %p98 = por %p96, %p97
      %p99 = scmp.ne.s32.totalorder %s90, %s91
      %p100 = scmp.eq.s32.totalorder %s17, 0
      %p101 = por %p99, %p100
      %p102 = scmp.ne.s32.totalorder %s90, %s91
      %p103 = scmp.eq.s32.totalorder %s18, 1
      %p104 = por %p102, %p103
      %p106 = scmp.ne.s32.totalorder %s91, %s105
      %p107 = scmp.eq.s32.totalorder %s18, 0
      %p108 = por %p106, %p107
      %s109 = ssub.s32 %s19, %s31
      %s110 = ssub.s32 %s20, %s27
      %s111 = sor.u32 %s109, %s110
      %p112 = scmp.eq.s32.totalorder %s111, 0
      %s114 = sadd.s32 %s113, 1
      %s115 = scalar_select %p112, %s113, %s114
      %p118 = pneg %p112
      %p119 = scmp.eq.s32.totalorder %s12, 1
      %p120 = por %p118, %p119
      %p121 = scmp.ne.s32.totalorder %s113, %s116
      %p122 = scmp.eq.s32.totalorder %s12, 0
      %p123 = por %p121, %p122
      %p124 = scmp.ne.s32.totalorder %s113, %s116
      %p125 = scmp.eq.s32.totalorder %s17, 1
      %p126 = por %p124, %p125
      %p127 = scmp.ne.s32.totalorder %s116, %s117
      %p128 = scmp.eq.s32.totalorder %s17, 0
      %p129 = por %p127, %p128
      %p130 = scmp.ne.s32.totalorder %s116, %s117
      %p131 = scmp.eq.s32.totalorder %s18, 1
      %p132 = por %p130, %p131
      %p134 = scmp.ne.s32.totalorder %s117, %s133
      %p135 = scmp.eq.s32.totalorder %s18, 0
      %p136 = por %p134, %p135
      %s137 = ssub.s32 %s19, %s31
      %s138 = ssub.s32 %s20, %s27
      %s139 = sor.u32 %s137, %s138
      %p140 = scmp.eq.s32.totalorder %s139, 0
      %s142 = sadd.s32 %s141, 1
      %s143 = scalar_select %p140, %s141, %s142
      %p146 = pneg %p140
      %p147 = scmp.eq.s32.totalorder %s12, 1
      %p148 = por %p146, %p147
      %p149 = scmp.ne.s32.totalorder %s141, %s144
      %p150 = scmp.eq.s32.totalorder %s12, 0
      %p151 = por %p149, %p150
      %p152 = scmp.ne.s32.totalorder %s141, %s144
      %p153 = scmp.eq.s32.totalorder %s17, 1
      %p154 = por %p152, %p153
      %p155 = scmp.ne.s32.totalorder %s144, %s145
      %p156 = scmp.eq.s32.totalorder %s17, 0
      %p157 = por %p155, %p156
      %p158 = scmp.ne.s32.totalorder %s144, %s145
      %p159 = scmp.eq.s32.totalorder %s18, 1
      %p160 = por %p158, %p159
      %p162 = scmp.ne.s32.totalorder %s145, %s161
      %p163 = scmp.eq.s32.totalorder %s18, 0
      %p164 = por %p162, %p163
      %p165 = scmp.le.s32.totalorder 1, %s12
      %p166 = scmp.lt.s32.totalorder %s12, 3
      %p167 = pnand %p165, %p166
      %p168 = pneg %p167
      // Predicated region
      $region9: #{a_call__.8} parent=5 // pred_check
        _
      $region10: #{a_call__.8} parent=5 // pred_check_branch
        %170 = sbr.rel (%p167) target = $region12
      $region11: #{a_call__.8} parent=5 // pred_region
        %s171 = ssub.s32 %s12, 1
        // Predicated region
        $region13: #{a_call__.8} parent=11 // pred_check
          %p172 = pneg %p101
        $region14: #{a_call__.8} parent=11 // pred_check_branch
          %174 = sbr.rel (%p172) target = $region16
        $region15: #{a_call__.8} parent=11 // pred_region
          %s176 = ssub.s32 1152, 1152
          %177 = vsyncadd [#allocation3], %s176
          %s178 = sshll.u32 [#allocation2], 4
          %s179 = int_to_ptr.vmem [resolvable:$true] %s178
          %184 = dma.hbm_to_vmem [thread:$0]  %s2, 1152, %s179, [#allocation3], 128, 128, 8
        $region16: #{a_call__.8} parent=11 // pred_fallthru
          _
      $region12: #{a_call__.8} parent=5 // pred_fallthru
        _
      %p185 = scmp.lt.s32.totalorder %s12, 2
      // Predicated region
      $region17: #{a_call__.8} parent=5 // pred_check
        %p186 = pneg %p185
      $region18: #{a_call__.8} parent=5 // pred_check_branch
        %188 = sbr.rel (%p186) target = $region20
      $region19: #{a_call__.8} parent=5 // pred_region
        // Predicated region
        $region21: #{a_call__.8} parent=19 // pred_check
          %p189 = pneg %p46
        $region22: #{a_call__.8} parent=19 // pred_check_branch
          %191 = sbr.rel (%p189) target = $region24
        $region23: #{a_call__.8} parent=19 // pred_region
          %p192 = scmp.lt.s32.totalorder %s19, 1
          %s193 = scalar_select %p192, %s19, 1
          %p194 = scmp.lt.s32.totalorder %s20, 0
          %s195 = scalar_select %p194, %s20, 0
          %s196 = sadd.s32 %s195, %s193
          %s197 = smul.addr %s196, 2
          %s198 = scalar_lea.vmem %s0, %s197
        $region24: #{a_call__.8} parent=19 // pred_fallthru
          _
        // Predicated region
        $region25: #{a_call__.8} parent=19 // pred_check
          %p199 = pneg %p74
        $region26: #{a_call__.8} parent=19 // pred_check_branch
          %201 = sbr.rel (%p199) target = $region28
        $region27: #{a_call__.8} parent=19 // pred_region
          %p202 = scmp.lt.s32.totalorder %s19, 1
          %s203 = scalar_select %p202, %s19, 1
          %p204 = scmp.lt.s32.totalorder %s20, 0
          %s205 = scalar_select %p204, %s20, 0
          %s206 = sadd.s32 %s205, %s203
          %s207 = smul.addr %s206, 2
          %s208 = scalar_lea.vmem %s1, %s207
        $region28: #{a_call__.8} parent=19 // pred_fallthru
          _
      $region20: #{a_call__.8} parent=5 // pred_fallthru
        _
      %p209 = scmp.le.s32.totalorder 1, %s12
      %p210 = scmp.lt.s32.totalorder %s12, 3
      %p211 = pnand %p209, %p210
      %p212 = pneg %p211
      // Predicated region
      $region29: #{a_call__.8} parent=5 // pred_check
        _
      $region30: #{a_call__.8} parent=5 // pred_check_branch
        %214 = sbr.rel (%p211) target = $region32
      $region31: #{a_call__.8} parent=5 // pred_region
        %s215 = ssub.s32 %s12, 1
        // Predicated region
        $region33: #{a_call__.8} parent=31 // pred_check
          %p216 = pneg %p101
        $region34: #{a_call__.8} parent=31 // pred_check_branch
          %218 = sbr.rel (%p216) target = $region36
        $region35: #{a_call__.8} parent=31 // pred_region
          %219 = dma.done [#allocation3], 1152
        $region36: #{a_call__.8} parent=31 // pred_fallthru
          _
        %p220 = scmp.lt.s32.totalorder %s21, 1
        %s221 = scalar_select %p220, %s21, 1
        %p222 = scmp.lt.s32.totalorder %s22, 0
        %s223 = scalar_select %p222, %s22, 0
        %s224 = sadd.s32 %s223, %s221
        %s225 = smul.addr %s224, 2
        %s226 = scalar_lea.vmem %s0, %s225
        %p227 = pneg %p52
        %p228 = pneg %p49
        %p229 = scmp.lt.s32.totalorder %s21, 1
        %s230 = scalar_select %p229, %s21, 1
        %p231 = scmp.lt.s32.totalorder %s22, 0
        %s232 = scalar_select %p231, %s22, 0
        %s233 = sadd.s32 %s232, %s230
        %s234 = smul.addr %s233, 2
        %s235 = scalar_lea.vmem %s1, %s234
        %p236 = pneg %p80
        %p237 = pneg %p77
        %p238 = pneg %p101
        %p239 = pneg %p98
        %p240 = pneg %p129
        %p241 = pneg %p126
        %s242 = smul.u32 2, %s22
        %p243 = scmp.lt.s32.totalorder %s21, 1
        %s244 = scalar_select %p243, %s21, 1
        %p245 = scmp.lt.s32.totalorder %s242, 1
        %s246 = scalar_select %p245, %s242, 1
        %s247 = smul.addr %s244, 2
        %s248 = sadd.s32 %s246, %s247
        %s249 = smul.addr %s248, 2
        %s250 = scalar_lea.vmem %s3, %s249
        %p251 = pneg %p157
        %p252 = pneg %p154
        %p253 = scmp.lt.s32.totalorder %s21, 1
        %s254 = scalar_select %p253, %s21, 1
        %p255 = scmp.lt.s32.totalorder %s22, 0
        %s256 = scalar_select %p255, %s22, 0
        %s257 = sadd.s32 %s256, %s254
        %s258 = smul.addr %s257, 2
        %s259 = scalar_lea.vmem %s4, %s258
        %p260 = scmp.lt.s32.totalorder %s21, 1
        %s261 = scalar_select %p260, %s21, 1
        %p262 = scmp.lt.s32.totalorder %s22, 0
        %s263 = scalar_select %p262, %s22, 0
        %s264 = sadd.s32 %s263, %s261
        %s265 = smul.addr %s264, 2
        %s266 = scalar_lea.vmem %s0, %s265
        %p267 = scmp.lt.s32.totalorder %s21, 1
        %s268 = scalar_select %p267, %s21, 1
        %p269 = scmp.lt.s32.totalorder %s22, 0
        %s270 = scalar_select %p269, %s22, 0
        %s271 = sadd.s32 %s270, %s268
        %s272 = smul.addr %s271, 2
        %s273 = scalar_lea.vmem %s1, %s272
        %s274 = smul.u32 2, %s22
        %p275 = scmp.lt.s32.totalorder %s21, 1
        %s276 = scalar_select %p275, %s21, 1
        %p277 = scmp.lt.s32.totalorder %s274, 1
        %s278 = scalar_select %p277, %s274, 1
        %s279 = smul.addr %s276, 2
        %s280 = sadd.s32 %s278, %s279
        %s281 = smul.addr %s280, 2
        %s282 = scalar_lea.vmem %s3, %s281
        %s283 = smul.u32 2, %s22
        %p284 = scmp.lt.s32.totalorder %s21, 1
        %s285 = scalar_select %p284, %s21, 1
        %p286 = scmp.lt.s32.totalorder %s22, 0
        %s287 = scalar_select %p286, %s22, 0
        %s288 = sadd.s32 %s287, %s285
        %s289 = smul.addr %s288, 2
        %s290 = scalar_lea.vmem %s4, %s289
        %v291 = vld [vmem:[%s266] sm:$0x3]
        %v292 = vld [vmem:[%s273] sm:$0x3]
        %v293 = vld [vmem:[#allocation2] sm:$0xff]
        %v294 = vld [vmem:[#allocation2 + $0x8] sm:$0xff]
        %v295 = vld [vmem:[#allocation2 + $0x10] sm:$0xff]
        %v296 = vld [vmem:[#allocation2 + $0x18] sm:$0xff]
        %v297 = vld [vmem:[#allocation2 + $0x20] sm:$0xff]
        %v298 = vld [vmem:[#allocation2 + $0x28] sm:$0xff]
        %v299 = vld [vmem:[#allocation2 + $0x30] sm:$0xff]
        %v300 = vld [vmem:[#allocation2 + $0x38] sm:$0xff]
        %v301 = vld [vmem:[#allocation2 + $0x40] sm:$0xff]
        %303 = vrot.lane.b32.xlu0 %v291, 8
        %v304 = vpop.permute.xlu0 %303
        %v306 = vrot.slane %v291, 1
        %307 = vrot.lane.b32.xlu0 %v306, 16
        %v308 = vpop.permute.xlu0 %307
        %v311 = vrot.slane %v292, 1
        %312 = vrot.lane.b32.xlu0 %v311, 24
        %v313 = vpop.permute.xlu0 %312
        %vm315 = vcmask 64512
        %v316 = vsel %vm315, %v292, %v304
        %vm317 = vcmask 130048
        %v318 = vsel %vm317, %v316, %v308
        %vm319 = vcmask 195584
        %v320 = vsel %vm319, %v318, %v313
        %v321 = vsel %vm315, %v291, 0
        %323 = vmatprep.subr.mxu0 0.0
        %324 = vmatpush1.msra.mxu0 0.0
        %325 = vmatprep.subr.mxu0 0.0
        %326 = vmatpush1.msra.mxu0 0.0
        %327 = vmatprep.subr.mxu0 0.0
        %328 = vmatpush1.msra.mxu0 0.0
        %329 = vmatprep.subr.mxu0 0.0
        %330 = vmatpush1.msra.mxu0 0.0
        %331 = vmatprep.subr.mxu0 0.0
        %332 = vmatpush1.msra.mxu0 0.0
        %333 = vmatprep.subr.mxu0 0.0
        %334 = vmatpush1.msra.mxu0 0.0
        %335 = vmatprep.subr.mxu0 0.0
        %336 = vmatpush1.msra.mxu0 0.0
        %337 = vmatprep.subr.mxu0 0.0
        %338 = vmatpush1.msra.mxu0 0.0
        %339 = vmatprep.subr.mxu0 0.0
        %340 = vmatpush1.msra.mxu0 0.0
        %341 = vmatprep.subr.mxu0 0.0
        %342 = vmatpush1.msra.mxu0 0.0
        %343 = vmatprep.subr.mxu0 0.0
        %344 = vmatpush1.msra.mxu0 0.0
        %345 = vmatprep.subr.mxu0 0.0
        %346 = vmatpush1.msra.mxu0 0.0
        %347 = vmatprep.subr.mxu0 0.0
        %348 = vmatpush1.msra.mxu0 0.0
        %349 = vmatprep.subr.mxu0 0.0
        %350 = vmatpush1.msra.mxu0 0.0
        %351 = vmatprep.subr.mxu0 0.0
        %352 = vmatpush1.msra.mxu0 0.0
        %353 = vmatprep.subr.mxu0 0.0
        %354 = vmatpush1.msra.mxu0 %v293
        %355 = vmatprep.subr.mxu0 0.0
        %356 = vmatpush2.msra.mxu0 0.0
        %357 = vmatprep.subr.mxu0 0.0
        %358 = vmatpush2.msra.mxu0 0.0
        %359 = vmatprep.subr.mxu0 0.0
        %360 = vmatpush2.msra.mxu0 0.0
        %361 = vmatprep.subr.mxu0 0.0
        %362 = vmatpush2.msra.mxu0 0.0
        %363 = vmatprep.subr.mxu0 0.0
        %364 = vmatpush2.msra.mxu0 0.0
        %365 = vmatprep.subr.mxu0 0.0
        %366 = vmatpush2.msra.mxu0 0.0
        %367 = vmatprep.subr.mxu0 0.0
        %368 = vmatpush2.msra.mxu0 0.0
        %369 = vmatprep.subr.mxu0 0.0
        %370 = vmatpush2.msra.mxu0 0.0
        %371 = vmatprep.subr.mxu0 0.0
        %372 = vmatpush2.msra.mxu0 0.0
        %373 = vmatprep.subr.mxu0 0.0
        %374 = vmatpush2.msra.mxu0 0.0
        %375 = vmatprep.subr.mxu0 0.0
        %376 = vmatpush2.msra.mxu0 0.0
        %377 = vmatprep.subr.mxu0 0.0
        %378 = vmatpush2.msra.mxu0 0.0
        %379 = vmatprep.subr.mxu0 0.0
        %380 = vmatpush2.msra.mxu0 0.0
        %381 = vmatprep.subr.mxu0 0.0
        %382 = vmatpush2.msra.mxu0 0.0
        %383 = vmatprep.subr.mxu0 0.0
        %384 = vmatpush2.msra.mxu0 0.0
        %385 = vmatprep.subr.mxu0 0.0
        %386 = vmatpush2.msra.mxu0 0.0
        %387 = vmatprep.mubr.f32.mxu0 0.0
        %388 = vmatmul.mubr.f32.gmra.mxu0 %v321
        %v389 = vpop.f32.mrf.mxu0
        %v390 = vadd.f32 0.0, %v389
        %v391 = vpop.f32.mrf.mxu0
        %392 = vdwg.mxu0
        %v394 = vsel %vm317, %v320, 0
        %396 = vmatprep.subr.mxu0 0.0
        %397 = vmatpush1.msra.mxu0 0.0
        %398 = vmatprep.subr.mxu0 0.0
        %399 = vmatpush1.msra.mxu0 0.0
        %400 = vmatprep.subr.mxu0 0.0
        %401 = vmatpush1.msra.mxu0 0.0
        %402 = vmatprep.subr.mxu0 0.0
        %403 = vmatpush1.msra.mxu0 0.0
        %404 = vmatprep.subr.mxu0 0.0
        %405 = vmatpush1.msra.mxu0 0.0
        %406 = vmatprep.subr.mxu0 0.0
        %407 = vmatpush1.msra.mxu0 0.0
        %408 = vmatprep.subr.mxu0 0.0
        %409 = vmatpush1.msra.mxu0 0.0
        %410 = vmatprep.subr.mxu0 0.0
        %411 = vmatpush1.msra.mxu0 0.0
        %412 = vmatprep.subr.mxu0 0.0
        %413 = vmatpush1.msra.mxu0 0.0
        %414 = vmatprep.subr.mxu0 0.0
        %415 = vmatpush1.msra.mxu0 0.0
        %416 = vmatprep.subr.mxu0 0.0
        %417 = vmatpush1.msra.mxu0 0.0
        %418 = vmatprep.subr.mxu0 0.0
        %419 = vmatpush1.msra.mxu0 0.0
        %420 = vmatprep.subr.mxu0 0.0
        %421 = vmatpush1.msra.mxu0 0.0
        %422 = vmatprep.subr.mxu0 0.0
        %423 = vmatpush1.msra.mxu0 0.0
        %424 = vmatprep.subr.mxu0 0.0
        %425 = vmatpush1.msra.mxu0 %v295
        %426 = vmatprep.subr.mxu0 0.0
        %427 = vmatpush1.msra.mxu0 %v294
        %428 = vmatprep.subr.mxu0 0.0
        %429 = vmatpush2.msra.mxu0 0.0
        %430 = vmatprep.subr.mxu0 0.0
        %431 = vmatpush2.msra.mxu0 0.0
        %432 = vmatprep.subr.mxu0 0.0
        %433 = vmatpush2.msra.mxu0 0.0
        %434 = vmatprep.subr.mxu0 0.0
        %435 = vmatpush2.msra.mxu0 0.0
        %436 = vmatprep.subr.mxu0 0.0
        %437 = vmatpush2.msra.mxu0 0.0
        %438 = vmatprep.subr.mxu0 0.0
        %439 = vmatpush2.msra.mxu0 0.0
        %440 = vmatprep.subr.mxu0 0.0
        %441 = vmatpush2.msra.mxu0 0.0
        %442 = vmatprep.subr.mxu0 0.0
        %443 = vmatpush2.msra.mxu0 0.0
        %444 = vmatprep.subr.mxu0 0.0
        %445 = vmatpush2.msra.mxu0 0.0
        %446 = vmatprep.subr.mxu0 0.0
        %447 = vmatpush2.msra.mxu0 0.0
        %448 = vmatprep.subr.mxu0 0.0
        %449 = vmatpush2.msra.mxu0 0.0
        %450 = vmatprep.subr.mxu0 0.0
        %451 = vmatpush2.msra.mxu0 0.0
        %452 = vmatprep.subr.mxu0 0.0
        %453 = vmatpush2.msra.mxu0 0.0
        %454 = vmatprep.subr.mxu0 0.0
        %455 = vmatpush2.msra.mxu0 0.0
        %456 = vmatprep.subr.mxu0 0.0
        %457 = vmatpush2.msra.mxu0 0.0
        %458 = vmatprep.subr.mxu0 0.0
        %459 = vmatpush2.msra.mxu0 0.0
        %460 = vmatprep.mubr.f32.mxu0 0.0
        %461 = vmatmul.mubr.f32.gmra.mxu0 %v394
        %v462 = vpop.f32.mrf.mxu0
        %v463 = vadd.f32 0.0, %v462
        %v464 = vpop.f32.mrf.mxu0
        %465 = vdwg.mxu0
        %466 = vrot.lane.b32.xlu0 %v320, 120
        %v467 = vpop.permute.xlu0 %466
        %v468 = vsel %vm317, %v467, 0
        %470 = vmatprep.subr.mxu0 0.0
        %471 = vmatpush1.msra.mxu0 0.0
        %472 = vmatprep.subr.mxu0 0.0
        %473 = vmatpush1.msra.mxu0 0.0
        %474 = vmatprep.subr.mxu0 0.0
        %475 = vmatpush1.msra.mxu0 0.0
        %476 = vmatprep.subr.mxu0 0.0
        %477 = vmatpush1.msra.mxu0 0.0
        %478 = vmatprep.subr.mxu0 0.0
        %479 = vmatpush1.msra.mxu0 0.0
        %480 = vmatprep.subr.mxu0 0.0
        %481 = vmatpush1.msra.mxu0 0.0
        %482 = vmatprep.subr.mxu0 0.0
        %483 = vmatpush1.msra.mxu0 0.0
        %484 = vmatprep.subr.mxu0 0.0
        %485 = vmatpush1.msra.mxu0 0.0
        %486 = vmatprep.subr.mxu0 0.0
        %487 = vmatpush1.msra.mxu0 0.0
        %488 = vmatprep.subr.mxu0 0.0
        %489 = vmatpush1.msra.mxu0 0.0
        %490 = vmatprep.subr.mxu0 0.0
        %491 = vmatpush1.msra.mxu0 0.0
        %492 = vmatprep.subr.mxu0 0.0
        %493 = vmatpush1.msra.mxu0 0.0
        %494 = vmatprep.subr.mxu0 0.0
        %495 = vmatpush1.msra.mxu0 0.0
        %496 = vmatprep.subr.mxu0 0.0
        %497 = vmatpush1.msra.mxu0 0.0
        %498 = vmatprep.subr.mxu0 0.0
        %499 = vmatpush1.msra.mxu0 %v297
        %500 = vmatprep.subr.mxu0 0.0
        %501 = vmatpush1.msra.mxu0 %v296
        %502 = vmatprep.subr.mxu0 0.0
        %503 = vmatpush2.msra.mxu0 0.0
        %504 = vmatprep.subr.mxu0 0.0
        %505 = vmatpush2.msra.mxu0 0.0
        %506 = vmatprep.subr.mxu0 0.0
        %507 = vmatpush2.msra.mxu0 0.0
        %508 = vmatprep.subr.mxu0 0.0
        %509 = vmatpush2.msra.mxu0 0.0
        %510 = vmatprep.subr.mxu0 0.0
        %511 = vmatpush2.msra.mxu0 0.0
        %512 = vmatprep.subr.mxu0 0.0
        %513 = vmatpush2.msra.mxu0 0.0
        %514 = vmatprep.subr.mxu0 0.0
        %515 = vmatpush2.msra.mxu0 0.0
        %516 = vmatprep.subr.mxu0 0.0
        %517 = vmatpush2.msra.mxu0 0.0
        %518 = vmatprep.subr.mxu0 0.0
        %519 = vmatpush2.msra.mxu0 0.0
        %520 = vmatprep.subr.mxu0 0.0
        %521 = vmatpush2.msra.mxu0 0.0
        %522 = vmatprep.subr.mxu0 0.0
        %523 = vmatpush2.msra.mxu0 0.0
        %524 = vmatprep.subr.mxu0 0.0
        %525 = vmatpush2.msra.mxu0 0.0
        %526 = vmatprep.subr.mxu0 0.0
        %527 = vmatpush2.msra.mxu0 0.0
        %528 = vmatprep.subr.mxu0 0.0
        %529 = vmatpush2.msra.mxu0 0.0
        %530 = vmatprep.subr.mxu0 0.0
        %531 = vmatpush2.msra.mxu0 0.0
        %532 = vmatprep.subr.mxu0 0.0
        %533 = vmatpush2.msra.mxu0 0.0
        %534 = vmatprep.mubr.f32.mxu0 0.0
        %535 = vmatmul.mubr.f32.gmra.mxu0 %v468
        %v536 = vpop.f32.mrf.mxu0
        %v537 = vadd.f32 0.0, %v536
        %v538 = vpop.f32.mrf.mxu0
        %539 = vdwg.mxu0
        %vm540 = vcmask 261120
        %v541 = vsel %vm540, %v320, 0
        %543 = vmatprep.subr.mxu0 0.0
        %544 = vmatpush1.msra.mxu0 0.0
        %545 = vmatprep.subr.mxu0 0.0
        %546 = vmatpush1.msra.mxu0 0.0
        %547 = vmatprep.subr.mxu0 0.0
        %548 = vmatpush1.msra.mxu0 0.0
        %549 = vmatprep.subr.mxu0 0.0
        %550 = vmatpush1.msra.mxu0 0.0
        %551 = vmatprep.subr.mxu0 0.0
        %552 = vmatpush1.msra.mxu0 0.0
        %553 = vmatprep.subr.mxu0 0.0
        %554 = vmatpush1.msra.mxu0 0.0
        %555 = vmatprep.subr.mxu0 0.0
        %556 = vmatpush1.msra.mxu0 0.0
        %557 = vmatprep.subr.mxu0 0.0
        %558 = vmatpush1.msra.mxu0 0.0
        %559 = vmatprep.subr.mxu0 0.0
        %560 = vmatpush1.msra.mxu0 0.0
        %561 = vmatprep.subr.mxu0 0.0
        %562 = vmatpush1.msra.mxu0 0.0
        %563 = vmatprep.subr.mxu0 0.0
        %564 = vmatpush1.msra.mxu0 0.0
        %565 = vmatprep.subr.mxu0 0.0
        %566 = vmatpush1.msra.mxu0 0.0
        %567 = vmatprep.subr.mxu0 0.0
        %568 = vmatpush1.msra.mxu0 %v301
        %569 = vmatprep.subr.mxu0 0.0
        %570 = vmatpush1.msra.mxu0 %v300
        %571 = vmatprep.subr.mxu0 0.0
        %572 = vmatpush1.msra.mxu0 %v299
        %573 = vmatprep.subr.mxu0 0.0
        %574 = vmatpush1.msra.mxu0 %v298
        %575 = vmatprep.subr.mxu0 0.0
        %576 = vmatpush2.msra.mxu0 0.0
        %577 = vmatprep.subr.mxu0 0.0
        %578 = vmatpush2.msra.mxu0 0.0
        %579 = vmatprep.subr.mxu0 0.0
        %580 = vmatpush2.msra.mxu0 0.0
        %581 = vmatprep.subr.mxu0 0.0
        %582 = vmatpush2.msra.mxu0 0.0
        %583 = vmatprep.subr.mxu0 0.0
        %584 = vmatpush2.msra.mxu0 0.0
        %585 = vmatprep.subr.mxu0 0.0
        %586 = vmatpush2.msra.mxu0 0.0
        %587 = vmatprep.subr.mxu0 0.0
        %588 = vmatpush2.msra.mxu0 0.0
        %589 = vmatprep.subr.mxu0 0.0
        %590 = vmatpush2.msra.mxu0 0.0
        %591 = vmatprep.subr.mxu0 0.0
        %592 = vmatpush2.msra.mxu0 0.0
        %593 = vmatprep.subr.mxu0 0.0
        %594 = vmatpush2.msra.mxu0 0.0
        %595 = vmatprep.subr.mxu0 0.0
        %596 = vmatpush2.msra.mxu0 0.0
        %597 = vmatprep.subr.mxu0 0.0
        %598 = vmatpush2.msra.mxu0 0.0
        %599 = vmatprep.subr.mxu0 0.0
        %600 = vmatpush2.msra.mxu0 0.0
        %601 = vmatprep.subr.mxu0 0.0
        %602 = vmatpush2.msra.mxu0 0.0
        %603 = vmatprep.subr.mxu0 0.0
        %604 = vmatpush2.msra.mxu0 0.0
        %605 = vmatprep.subr.mxu0 0.0
        %606 = vmatpush2.msra.mxu0 0.0
        %607 = vmatprep.mubr.f32.mxu0 0.0
        %608 = vmatmul.mubr.f32.gmra.mxu0 %v541
        %v609 = vpop.f32.mrf.mxu0
        %v610 = vadd.f32 0.0, %v609
        %v611 = vpop.f32.mrf.mxu0
        %612 = vdwg.mxu0
        %v613 = vadd.f32 %v390, 0.0
        %v614 = vadd.f32 %v537, 0.0
        %v615 = vadd.f32 %v613, %v614
        %v616 = vadd.f32 %v463, 0.0
        %v617 = vadd.f32 %v615, %v616
        %v618 = vadd.f32 %v610, 0.0
        %v619 = vadd.f32 %v617, %v618
        %v620 = vmul.f32 %v390, %v390
        %v621 = vadd.f32 %v620, 0.0
        %v622 = vmul.f32 %v537, %v537
        %v623 = vadd.f32 %v622, 0.0
        %v624 = vadd.f32 %v621, %v623
        %v625 = vmul.f32 %v463, %v463
        %v626 = vadd.f32 %v625, 0.0
        %v627 = vadd.f32 %v624, %v626
        %v628 = vmul.f32 %v610, %v610
        %v629 = vadd.f32 %v628, 0.0
        %v630 = vadd.f32 %v627, %v629
        %v632 = vrot.slane %v630, 7
        %vm634 = vcmask 1040384
        %v635 = vsel %vm634, %v619, %v632
        %vm636 = vcmask 123904
        %637 = vst.msk [vmem:[%s290] sm:$0x3] %vm636, %v635
        %v639 = vrot.slane %v537, 7
        %v641 = vsel %vm634, %v390, %v639
        %v643 = vrot.slane %v610, 7
        %v645 = vsel %vm634, %v463, %v643
        %646 = vst.msk [vmem:[%s282] sm:$0x3] %vm636, %v641
        %647 = vst.msk [vmem:[%s282 + $0x2] sm:$0x3] %vm636, %v645
        %s648 = smul.u32 2, %s22
        %p649 = scmp.lt.s32.totalorder %s21, 1
        %s650 = scalar_select %p649, %s21, 1
        %p651 = scmp.lt.s32.totalorder %s648, 1
        %s652 = scalar_select %p651, %s648, 1
        %s653 = smul.addr %s650, 2
        %s654 = sadd.s32 %s652, %s653
        %s655 = smul.addr %s654, 2
        %s656 = scalar_lea.vmem %s3, %s655
        %p657 = scmp.lt.s32.totalorder %s21, 1
        %s658 = scalar_select %p657, %s21, 1
        %p659 = scmp.lt.s32.totalorder %s22, 0
        %s660 = scalar_select %p659, %s22, 0
        %s661 = sadd.s32 %s660, %s658
        %s662 = smul.addr %s661, 2
        %s663 = scalar_lea.vmem %s4, %s662
        // Predicated region
        $region37: #{a_call__.8} parent=31 // pred_check
          %p664 = pneg %p126
        $region38: #{a_call__.8} parent=31 // pred_check_branch
          %666 = sbr.rel (%p664) target = $region40
        $region39: #{a_call__.8} parent=31 // pred_region
          %s667 = smul.u32 2, %s22
        $region40: #{a_call__.8} parent=31 // pred_fallthru
          _
        // Predicated region
        $region41: #{a_call__.8} parent=31 // pred_check
          %p668 = pneg %p154
        $region42: #{a_call__.8} parent=31 // pred_check_branch
          %670 = sbr.rel (%p668) target = $region44
        $region43: #{a_call__.8} parent=31 // pred_region
          _
        $region44: #{a_call__.8} parent=31 // pred_fallthru
          _
      $region32: #{a_call__.8} parent=5 // pred_fallthru
        _
      %p671 = scmp.le.s32.totalorder 2, %s12
      // Predicated region
      $region45: #{a_call__.8} parent=5 // pred_check
        %p672 = pneg %p671
      $region46: #{a_call__.8} parent=5 // pred_check_branch
        %674 = sbr.rel (%p672) target = $region48
      $region47: #{a_call__.8} parent=5 // pred_region
        %s675 = ssub.s32 %s12, 2
        // Predicated region
        $region49: #{a_call__.8} parent=47 // pred_check
          %p676 = pneg %p132
        $region50: #{a_call__.8} parent=47 // pred_check_branch
          %678 = sbr.rel (%p676) target = $region52
        $region51: #{a_call__.8} parent=47 // pred_region
          %s679 = smul.u32 2, %s24
          %p680 = scmp.lt.s32.totalorder %s23, 1
          %s681 = scalar_select %p680, %s23, 1
          %p682 = scmp.lt.s32.totalorder %s679, 1
          %s683 = scalar_select %p682, %s679, 1
          %s684 = smul.addr %s681, 2
          %s685 = sadd.s32 %s683, %s684
          %s686 = smul.addr %s685, 2
          %s687 = scalar_lea.vmem %s3, %s686
        $region52: #{a_call__.8} parent=47 // pred_fallthru
          _
        // Predicated region
        $region53: #{a_call__.8} parent=47 // pred_check
          %p688 = pneg %p160
        $region54: #{a_call__.8} parent=47 // pred_check_branch
          %690 = sbr.rel (%p688) target = $region56
        $region55: #{a_call__.8} parent=47 // pred_region
          %p691 = scmp.lt.s32.totalorder %s23, 1
          %s692 = scalar_select %p691, %s23, 1
          %p693 = scmp.lt.s32.totalorder %s24, 0
          %s694 = scalar_select %p693, %s24, 0
          %s695 = sadd.s32 %s694, %s692
          %s696 = smul.addr %s695, 2
          %s697 = scalar_lea.vmem %s4, %s696
        $region56: #{a_call__.8} parent=47 // pred_fallthru
          _
      $region48: #{a_call__.8} parent=5 // pred_fallthru
        _
    $region6: #{a_call__.8} parent=1 // loop_footer
      %s16 = sadd.s32 1, %s12
    $region7: #{a_call__.8} parent=1 // loop_footer_branch
      %11 = sbr.rel target = $region3
    $region8: #{a_call__.8} parent=1 // loop_exit
      _
    %698 = vsyncpa [#allocation3], 1
    %s699 = scalar_lea.sflag [#allocation3], 1
    %700 = vsyncpa %s699, 1

// kernel: a_call__.11
$region0: #{a_call__.11}
  #allocation0 [shape = 'u32[]', space=smem, size = 0x4, offset = 0x4, fixed_abs, tag = 'smem constant byte address 0x4 - core index']
  #allocation1 [shape = 'u32[144,128]{1,0:T(1,128)}', space=vmem, size = 0x12000, scoped, tag = 'internal scratch']
  %s0 = inlined_call_operand.vmem [shape: f32[2,4,4,16], index: 0, kind: input, shape index: {}]
  %s1 = inlined_call_operand.vmem [shape: f32[2,1,1,16], index: 1, kind: input, shape index: {}]
  %s2 = inlined_call_operand.vmem [shape: f32[2,1,1,16], index: 2, kind: input, shape index: {}]
  %s3 = inlined_call_operand.vmem [shape: f32[2,4,4,16], index: 3, kind: output, shape index: {}]
  %s4 = sld [smem:[#allocation0]]
  $region45: #{a_call__.11} parent=0
    _
  %s6 = ssub.s32 1, %s4
  %s7 = scalar_select 0, %s6, %s4
  loop: start=0, step=1, limit=4
  $region2: #{a_call__.11} parent=0 // loop_pre_header
    _
  $region3: #{a_call__.11} parent=0 // loop_header
    %s9 = sphi 0, %s13
    %p10 = scmp.ge.s32.totalorder %s9, 4
    %s16 = sphi 0, %s28
    %s17 = sphi 0, %s24
    %s18 = sphi 0, %s16
    %s19 = sphi 0, %s17
    %s20 = sphi 0, %s18
    %s21 = sphi 0, %s19
    %s33 = sphi 0, %s35
    %s36 = sphi 0, %s33
    %s37 = sphi 0, %s36
    %s53 = sphi 0, %s37
    %s59 = sphi 0, %s61
    %s62 = sphi 0, %s59
    %s63 = sphi 0, %s62
    %s79 = sphi 0, %s63
    %s85 = sphi 0, %s87
    %s88 = sphi 0, %s85
    %s89 = sphi 0, %s88
    %s105 = sphi 0, %s89
    %s113 = sphi 0, %s115
    %s116 = sphi 0, %s113
    %s117 = sphi 0, %s116
    %s133 = sphi 0, %s117
  $region4: #{a_call__.11} parent=0 // loop_header_branch
    %12 = sbr.rel (%p10) target = $region8
  $region5: #{a_call__.11} parent=0 // loop_body
    %s14 = ssub.s32 %s9, 1
    %s15 = ssub.s32 %s9, 2
    %s22 = sadd.s32 1, %s17
    %p23 = scmp.ge.s32.totalorder %s22, 1
    %s24 = scalar_select %p23, 0, %s22
    %s25 = sadd.s32 1, %s16
    %s26 = scalar_select %p23, %s25, %s16
    %p27 = scmp.ge.s32.totalorder %s26, 2
    %s28 = scalar_select %p27, 0, %s26
    %s29 = ssub.s32 %s16, %s28
    %s30 = ssub.s32 %s17, %s24
    %s31 = sor.u32 %s29, %s30
    %p32 = scmp.eq.s32.totalorder %s31, 0
    %s34 = sadd.s32 %s33, 1
    %s35 = scalar_select %p32, %s33, %s34
    %p38 = pneg %p32
    %p39 = scmp.eq.s32.totalorder %s9, 1
    %p40 = por %p38, %p39
    %p41 = scmp.ne.s32.totalorder %s33, %s36
    %p42 = scmp.eq.s32.totalorder %s9, 0
    %p43 = por %p41, %p42
    %p44 = scmp.ne.s32.totalorder %s33, %s36
    %p45 = scmp.eq.s32.totalorder %s14, 1
    %p46 = por %p44, %p45
    %p47 = scmp.ne.s32.totalorder %s36, %s37
    %p48 = scmp.eq.s32.totalorder %s14, 0
    %p49 = por %p47, %p48
    %p50 = scmp.ne.s32.totalorder %s36, %s37
    %p51 = scmp.eq.s32.totalorder %s15, 1
    %p52 = por %p50, %p51
    %p54 = scmp.ne.s32.totalorder %s37, %s53
    %p55 = scmp.eq.s32.totalorder %s15, 0
    %p56 = por %p54, %p55
    %s57 = ssub.s32 %s16, %s28
    %p58 = scmp.eq.s32.totalorder %s57, 0
    %s60 = sadd.s32 %s59, 1
    %s61 = scalar_select %p58, %s59, %s60
    %p64 = pneg %p58
    %p65 = scmp.eq.s32.totalorder %s9, 1
    %p66 = por %p64, %p65
    %p67 = scmp.ne.s32.totalorder %s59, %s62
    %p68 = scmp.eq.s32.totalorder %s9, 0
    %p69 = por %p67, %p68
    %p70 = scmp.ne.s32.totalorder %s59, %s62
    %p71 = scmp.eq.s32.totalorder %s14, 1
    %p72 = por %p70, %p71
    %p73 = scmp.ne.s32.totalorder %s62, %s63
    %p74 = scmp.eq.s32.totalorder %s14, 0
    %p75 = por %p73, %p74
    %p76 = scmp.ne.s32.totalorder %s62, %s63
    %p77 = scmp.eq.s32.totalorder %s15, 1
    %p78 = por %p76, %p77
    %p80 = scmp.ne.s32.totalorder %s63, %s79
    %p81 = scmp.eq.s32.totalorder %s15, 0
    %p82 = por %p80, %p81
    %s83 = ssub.s32 %s16, %s28
    %p84 = scmp.eq.s32.totalorder %s83, 0
    %s86 = sadd.s32 %s85, 1
    %s87 = scalar_select %p84, %s85, %s86
    %p90 = pneg %p84
    %p91 = scmp.eq.s32.totalorder %s9, 1
    %p92 = por %p90, %p91
    %p93 = scmp.ne.s32.totalorder %s85, %s88
    %p94 = scmp.eq.s32.totalorder %s9, 0
    %p95 = por %p93, %p94
    %p96 = scmp.ne.s32.totalorder %s85, %s88
    %p97 = scmp.eq.s32.totalorder %s14, 1
    %p98 = por %p96, %p97
    %p99 = scmp.ne.s32.totalorder %s88, %s89
    %p100 = scmp.eq.s32.totalorder %s14, 0
    %p101 = por %p99, %p100
    %p102 = scmp.ne.s32.totalorder %s88, %s89
    %p103 = scmp.eq.s32.totalorder %s15, 1
    %p104 = por %p102, %p103
    %p106 = scmp.ne.s32.totalorder %s89, %s105
    %p107 = scmp.eq.s32.totalorder %s15, 0
    %p108 = por %p106, %p107
    %s109 = ssub.s32 %s16, %s28
    %s110 = ssub.s32 %s17, %s24
    %s111 = sor.u32 %s109, %s110
    %p112 = scmp.eq.s32.totalorder %s111, 0
    %s114 = sadd.s32 %s113, 1
    %s115 = scalar_select %p112, %s113, %s114
    %p118 = pneg %p112
    %p119 = scmp.eq.s32.totalorder %s9, 1
    %p120 = por %p118, %p119
    %p121 = scmp.ne.s32.totalorder %s113, %s116
    %p122 = scmp.eq.s32.totalorder %s9, 0
    %p123 = por %p121, %p122
    %p124 = scmp.ne.s32.totalorder %s113, %s116
    %p125 = scmp.eq.s32.totalorder %s14, 1
    %p126 = por %p124, %p125
    %p127 = scmp.ne.s32.totalorder %s116, %s117
    %p128 = scmp.eq.s32.totalorder %s14, 0
    %p129 = por %p127, %p128
    %p130 = scmp.ne.s32.totalorder %s116, %s117
    %p131 = scmp.eq.s32.totalorder %s15, 1
    %p132 = por %p130, %p131
    %p134 = scmp.ne.s32.totalorder %s117, %s133
    %p135 = scmp.eq.s32.totalorder %s15, 0
    %p136 = por %p134, %p135
    %p137 = scmp.le.s32.totalorder 1, %s9
    %p138 = scmp.lt.s32.totalorder %s9, 3
    %p139 = pnand %p137, %p138
    %p140 = pneg %p139
    // Predicated region
    $region9: #{a_call__.11} parent=5 // pred_check
      _
    $region10: #{a_call__.11} parent=5 // pred_check_branch
      %142 = sbr.rel (%p139) target = $region12
    $region11: #{a_call__.11} parent=5 // pred_region
      %s143 = ssub.s32 %s9, 1
    $region12: #{a_call__.11} parent=5 // pred_fallthru
      _
    %p144 = scmp.lt.s32.totalorder %s9, 2
    // Predicated region
    $region13: #{a_call__.11} parent=5 // pred_check
      %p145 = pneg %p144
    $region14: #{a_call__.11} parent=5 // pred_check_branch
      %147 = sbr.rel (%p145) target = $region16
    $region15: #{a_call__.11} parent=5 // pred_region
      // Predicated region
      $region17: #{a_call__.11} parent=15 // pred_check
        %p148 = pneg %p43
      $region18: #{a_call__.11} parent=15 // pred_check_branch
        %150 = sbr.rel (%p148) target = $region20
      $region19: #{a_call__.11} parent=15 // pred_region
        %s151 = smul.u32 4, %s17
        %p152 = scmp.lt.s32.totalorder %s16, 1
        %s153 = scalar_select %p152, %s16, 1
        %p154 = scmp.lt.s32.totalorder %s151, 3
        %s155 = scalar_select %p154, %s151, 3
        %s156 = smul.addr %s153, 4
        %s157 = sadd.s32 %s155, %s156
        %s158 = smul.addr %s157, 4
        %s159 = scalar_lea.vmem %s0, %s158
        %s160 = smul.u32 4, %s17
      $region20: #{a_call__.11} parent=15 // pred_fallthru
        _
      // Predicated region
      $region21: #{a_call__.11} parent=15 // pred_check
        %p161 = pneg %p69
      $region22: #{a_call__.11} parent=15 // pred_check_branch
        %163 = sbr.rel (%p161) target = $region24
      $region23: #{a_call__.11} parent=15 // pred_region
        %p164 = scmp.lt.s32.totalorder %s16, 1
        %s165 = scalar_select %p164, %s16, 1
        %s166 = scalar_lea.vmem %s1, %s165
      $region24: #{a_call__.11} parent=15 // pred_fallthru
        _
      // Predicated region
      $region25: #{a_call__.11} parent=15 // pred_check
        %p167 = pneg %p95
      $region26: #{a_call__.11} parent=15 // pred_check_branch
        %169 = sbr.rel (%p167) target = $region28
      $region27: #{a_call__.11} parent=15 // pred_region
        %p170 = scmp.lt.s32.totalorder %s16, 1
        %s171 = scalar_select %p170, %s16, 1
        %s172 = scalar_lea.vmem %s2, %s171
      $region28: #{a_call__.11} parent=15 // pred_fallthru
        _
    $region16: #{a_call__.11} parent=5 // pred_fallthru
      _
    %p173 = scmp.le.s32.totalorder 1, %s9
    %p174 = scmp.lt.s32.totalorder %s9, 3
    %p175 = pnand %p173, %p174
    %p176 = pneg %p175
    // Predicated region
    $region29: #{a_call__.11} parent=5 // pred_check
      _
    $region30: #{a_call__.11} parent=5 // pred_check_branch
      %178 = sbr.rel (%p175) target = $region32
    $region31: #{a_call__.11} parent=5 // pred_region
      %s179 = ssub.s32 %s9, 1
      %s180 = smul.u32 4, %s19
      %p181 = scmp.lt.s32.totalorder %s18, 1
      %s182 = scalar_select %p181, %s18, 1
      %p183 = scmp.lt.s32.totalorder %s180, 3
      %s184 = scalar_select %p183, %s180, 3
      %s185 = smul.addr %s182, 4
      %s186 = sadd.s32 %s184, %s185
      %s187 = smul.addr %s186, 4
      %s188 = scalar_lea.vmem %s0, %s187
      %p189 = pneg %p49
      %p190 = pneg %p46
      %p191 = scmp.lt.s32.totalorder %s18, 1
      %s192 = scalar_select %p191, %s18, 1
      %s193 = scalar_lea.vmem %s1, %s192
      %p194 = pneg %p75
      %p195 = pneg %p72
      %p196 = scmp.lt.s32.totalorder %s18, 1
      %s197 = scalar_select %p196, %s18, 1
      %s198 = scalar_lea.vmem %s2, %s197
      %p199 = pneg %p101
      %p200 = pneg %p98
      %p201 = pneg %p129
      %p202 = pneg %p126
      %s203 = smul.u32 4, %s19
      %p204 = scmp.lt.s32.totalorder %s18, 1
      %s205 = scalar_select %p204, %s18, 1
      %p206 = scmp.lt.s32.totalorder %s203, 3
      %s207 = scalar_select %p206, %s203, 3
      %s208 = smul.addr %s205, 4
      %s209 = sadd.s32 %s207, %s208
      %s210 = smul.addr %s209, 4
      %s211 = scalar_lea.vmem %s3, %s210
      %s212 = smul.u32 4, %s19
      %p213 = scmp.lt.s32.totalorder %s18, 1
      %s214 = scalar_select %p213, %s18, 1
      %p215 = scmp.lt.s32.totalorder %s212, 3
      %s216 = scalar_select %p215, %s212, 3
      %s217 = smul.addr %s214, 4
      %s218 = sadd.s32 %s216, %s217
      %s219 = smul.addr %s218, 4
      %s220 = scalar_lea.vmem %s0, %s219
      %s221 = smul.u32 4, %s19
      %p222 = scmp.lt.s32.totalorder %s18, 1
      %s223 = scalar_select %p222, %s18, 1
      %s224 = scalar_lea.vmem %s1, %s223
      %p225 = scmp.lt.s32.totalorder %s18, 1
      %s226 = scalar_select %p225, %s18, 1
      %s227 = scalar_lea.vmem %s2, %s226
      %s228 = smul.u32 4, %s19
      %p229 = scmp.lt.s32.totalorder %s18, 1
      %s230 = scalar_select %p229, %s18, 1
      %p231 = scmp.lt.s32.totalorder %s228, 3
      %s232 = scalar_select %p231, %s228, 3
      %s233 = smul.addr %s230, 4
      %s234 = sadd.s32 %s232, %s233
      %s235 = smul.addr %s234, 4
      %s236 = scalar_lea.vmem %s3, %s235
      %s237 = smul.u32 4, %s19
      %v238 = vld [vmem:[%s220] sm:$0xf]
      %v239 = vld [vmem:[%s220 + $0x4] sm:$0xf]
      %v240 = vld [vmem:[%s220 + $0x8] sm:$0xf]
      %v241 = vld [vmem:[%s220 + $0xc] sm:$0xf]
      %v242 = vld [vmem:[%s224] sm:$0x1]
      %v244 = vlaneseq
      %v245 = vshrl.u32 %v244, 7
      %v246 = vsub.s32 0, %v245
      %v247 = vrot.slane %v242, %v246
      %v249 = vsub.f32 %v238, %v247
      %v250 = vsub.f32 %v239, %v247
      %v251 = vsub.f32 %v240, %v247
      %v252 = vsub.f32 %v241, %v247
      %v253 = vld [vmem:[%s227] sm:$0x1]
      %v255 = vlaneseq
      %v256 = vshrl.u32 %v255, 7
      %v257 = vsub.s32 0, %v256
      %v258 = vrot.slane %v253, %v257
      %v260 = vmul.f32 %v249, %v258
      %v261 = vmul.f32 %v250, %v258
      %v262 = vmul.f32 %v251, %v258
      %v263 = vmul.f32 %v252, %v258
      %v264 = vmax.f32 %v260, 0.0
      %v265 = vmax.f32 %v261, 0.0
      %v266 = vmax.f32 %v262, 0.0
      %v267 = vmax.f32 %v263, 0.0
      %vm268 = vcmask 125952
      %269 = vst.msk [vmem:[%s236] sm:$0xf] %vm268, %v264
      %270 = vst.msk [vmem:[%s236 + $0x4] sm:$0xf] %vm268, %v265
      %271 = vst.msk [vmem:[%s236 + $0x8] sm:$0xf] %vm268, %v266
      %272 = vst.msk [vmem:[%s236 + $0xc] sm:$0xf] %vm268, %v267
      %s273 = smul.u32 4, %s19
      %p274 = scmp.lt.s32.totalorder %s18, 1
      %s275 = scalar_select %p274, %s18, 1
      %p276 = scmp.lt.s32.totalorder %s273, 3
      %s277 = scalar_select %p276, %s273, 3
      %s278 = smul.addr %s275, 4
      %s279 = sadd.s32 %s277, %s278
      %s280 = smul.addr %s279, 4
      %s281 = scalar_lea.vmem %s3, %s280
      // Predicated region
      $region33: #{a_call__.11} parent=31 // pred_check
        %p282 = pneg %p126
      $region34: #{a_call__.11} parent=31 // pred_check_branch
        %284 = sbr.rel (%p282) target = $region36
      $region35: #{a_call__.11} parent=31 // pred_region
        %s285 = smul.u32 4, %s19
      $region36: #{a_call__.11} parent=31 // pred_fallthru
        _
    $region32: #{a_call__.11} parent=5 // pred_fallthru
      _
    %p286 = scmp.le.s32.totalorder 2, %s9
    // Predicated region
    $region37: #{a_call__.11} parent=5 // pred_check
      %p287 = pneg %p286
    $region38: #{a_call__.11} parent=5 // pred_check_branch
      %289 = sbr.rel (%p287) target = $region40
    $region39: #{a_call__.11} parent=5 // pred_region
      %s290 = ssub.s32 %s9, 2
      // Predicated region
      $region41: #{a_call__.11} parent=39 // pred_check
        %p291 = pneg %p132
      $region42: #{a_call__.11} parent=39 // pred_check_branch
        %293 = sbr.rel (%p291) target = $region44
      $region43: #{a_call__.11} parent=39 // pred_region
        %s294 = smul.u32 4, %s21
        %p295 = scmp.lt.s32.totalorder %s20, 1
        %s296 = scalar_select %p295, %s20, 1
        %p297 = scmp.lt.s32.totalorder %s294, 3
        %s298 = scalar_select %p297, %s294, 3
        %s299 = smul.addr %s296, 4
        %s300 = sadd.s32 %s298, %s299
        %s301 = smul.addr %s300, 4
        %s302 = scalar_lea.vmem %s3, %s301
      $region44: #{a_call__.11} parent=39 // pred_fallthru
        _
    $region40: #{a_call__.11} parent=5 // pred_fallthru
      _
  $region6: #{a_call__.11} parent=0 // loop_footer
    %s13 = sadd.s32 1, %s9
  $region7: #{a_call__.11} parent=0 // loop_footer_branch
    %8 = sbr.rel target = $region3
  $region8: #{a_call__.11} parent=0 // loop_exit
    _

// kernel: mul.30
$region0: #{mul.30}
  #allocation0 [shape = 's32[1]{0}', space=sflag, size = 0x4, scoped, tag = 'scoped memory for mul.30']
  %s0 = inlined_call_operand.vmem [shape: f32[2,1,1,8], index: 0, kind: input, shape index: {}, may-alias: {0,1}]
  %s1 = inlined_call_operand.vmem [shape: f32[2,1,1,8], index: 1, kind: input, shape index: {}, may-alias: {0,1}]
  %s2 = inlined_call_operand.vmem [shape: f32[2,1,1,8], index: 2, kind: output, shape index: {}]
  %v3 = vld [vmem:[%s0] sm:$0x3]
  %v4 = vld [vmem:[%s1] sm:$0x3]
  %5 = xla_tuple %v3, %v4
  %6 = xla_tuple %5
  %v7 = vmul.f32 %v3, %v4
  %8 = xla_tuple %v7
  %9 = vst [vmem:[%s2] sm:$0x3] %v7

// kernel: a_call__.10
$region0: #{a_call__.10}
  #allocation0 [shape = 'u32[]', space=smem, size = 0x4, offset = 0x4, fixed_abs, tag = 'smem constant byte address 0x4 - core index']
  #allocation1 [shape = 'u32[144,128]{1,0:T(1,128)}', space=vmem, size = 0x12000, scoped, tag = 'internal scratch']
  %s0 = inlined_call_operand.vmem [shape: f32[2,2,3,16], index: 0, kind: input, shape index: {}]
  %s1 = inlined_call_operand.vmem [shape: f32[2,2,3,16], index: 1, kind: input, shape index: {}]
  %s2 = inlined_call_operand.vmem [shape: f32[144,16], index: 2, kind: input, shape index: {}]
  %s3 = inlined_call_operand.vmem [shape: f32[2,4,4,16], index: 3, kind: output, shape index: {0}]
  %s4 = inlined_call_operand.vmem [shape: f32[2,1,2,16], index: 4, kind: output, shape index: {1}]
  %5 = xla_tuple %s3, %s4
  %s6 = sld [smem:[#allocation0]]
  $region53: #{a_call__.10} parent=0
    _
  %s8 = ssub.s32 1, %s6
  %s9 = scalar_select 0, %s8, %s6
  loop: start=0, step=1, limit=4
  $region2: #{a_call__.10} parent=0 // loop_pre_header
    _
  $region3: #{a_call__.10} parent=0 // loop_header
    %s11 = sphi 0, %s15
    %p12 = scmp.ge.s32.totalorder %s11, 4
    %s18 = sphi 0, %s30
    %s19 = sphi 0, %s26
    %s20 = sphi 0, %s18
    %s21 = sphi 0, %s19
    %s22 = sphi 0, %s20
    %s23 = sphi 0, %s21
    %s35 = sphi 0, %s37
    %s38 = sphi 0, %s35
    %s39 = sphi 0, %s38
    %s55 = sphi 0, %s39
    %s63 = sphi 0, %s65
    %s66 = sphi 0, %s63
    %s67 = sphi 0, %s66
    %s83 = sphi 0, %s67
    %s87 = sphi 0, %s87
    %s89 = sphi 0, %s87
    %s90 = sphi 0, %s89
    %s104 = sphi 0, %s90
    %s112 = sphi 0, %s114
    %s115 = sphi 0, %s112
    %s116 = sphi 0, %s115
    %s132 = sphi 0, %s116
    %s140 = sphi 0, %s142
    %s143 = sphi 0, %s140
    %s144 = sphi 0, %s143
    %s160 = sphi 0, %s144
  $region4: #{a_call__.10} parent=0 // loop_header_branch
    %14 = sbr.rel (%p12) target = $region8
  $region5: #{a_call__.10} parent=0 // loop_body
    %s16 = ssub.s32 %s11, 1
    %s17 = ssub.s32 %s11, 2
    %s24 = sadd.s32 1, %s19
    %p25 = scmp.ge.s32.totalorder %s24, 1
    %s26 = scalar_select %p25, 0, %s24
    %s27 = sadd.s32 1, %s18
    %s28 = scalar_select %p25, %s27, %s18
    %p29 = scmp.ge.s32.totalorder %s28, 2
    %s30 = scalar_select %p29, 0, %s28
    %s31 = ssub.s32 %s18, %s30
    %s32 = ssub.s32 %s19, %s26
    %s33 = sor.u32 %s31, %s32
    %p34 = scmp.eq.s32.totalorder %s33, 0
    %s36 = sadd.s32 %s35, 1
    %s37 = scalar_select %p34, %s35, %s36
    %p40 = pneg %p34
    %p41 = scmp.eq.s32.totalorder %s11, 1
    %p42 = por %p40, %p41
    %p43 = scmp.ne.s32.totalorder %s35, %s38
    %p44 = scmp.eq.s32.totalorder %s11, 0
    %p45 = por %p43, %p44
    %p46 = scmp.ne.s32.totalorder %s35, %s38
    %p47 = scmp.eq.s32.totalorder %s16, 1
    %p48 = por %p46, %p47
    %p49 = scmp.ne.s32.totalorder %s38, %s39
    %p50 = scmp.eq.s32.totalorder %s16, 0
    %p51 = por %p49, %p50
    %p52 = scmp.ne.s32.totalorder %s38, %s39
    %p53 = scmp.eq.s32.totalorder %s17, 1
    %p54 = por %p52, %p53
    %p56 = scmp.ne.s32.totalorder %s39, %s55
    %p57 = scmp.eq.s32.totalorder %s17, 0
    %p58 = por %p56, %p57
    %s59 = ssub.s32 %s18, %s30
    %s60 = ssub.s32 %s19, %s26
    %s61 = sor.u32 %s59, %s60
    %p62 = scmp.eq.s32.totalorder %s61, 0
    %s64 = sadd.s32 %s63, 1
    %s65 = scalar_select %p62, %s63, %s64
    %p68 = pneg %p62
    %p69 = scmp.eq.s32.totalorder %s11, 1
    %p70 = por %p68, %p69
    %p71 = scmp.ne.s32.totalorder %s63, %s66
    %p72 = scmp.eq.s32.totalorder %s11, 0
    %p73 = por %p71, %p72
    %p74 = scmp.ne.s32.totalorder %s63, %s66
    %p75 = scmp.eq.s32.totalorder %s16, 1
    %p76 = por %p74, %p75
    %p77 = scmp.ne.s32.totalorder %s66, %s67
    %p78 = scmp.eq.s32.totalorder %s16, 0
    %p79 = por %p77, %p78
    %p80 = scmp.ne.s32.totalorder %s66, %s67
    %p81 = scmp.eq.s32.totalorder %s17, 1
    %p82 = por %p80, %p81
    %p84 = scmp.ne.s32.totalorder %s67, %s83
    %p85 = scmp.eq.s32.totalorder %s17, 0
    %p86 = por %p84, %p85
    %s88 = sadd.s32 %s87, 1
    %p91 = scmp.eq.s32.totalorder %s11, 1
    %p92 = scmp.ne.s32.totalorder %s87, %s89
    %p93 = scmp.eq.s32.totalorder %s11, 0
    %p94 = por %p92, %p93
    %p95 = scmp.ne.s32.totalorder %s87, %s89
    %p96 = scmp.eq.s32.totalorder %s16, 1
    %p97 = por %p95, %p96
    %p98 = scmp.ne.s32.totalorder %s89, %s90
    %p99 = scmp.eq.s32.totalorder %s16, 0
    %p100 = por %p98, %p99
    %p101 = scmp.ne.s32.totalorder %s89, %s90
    %p102 = scmp.eq.s32.totalorder %s17, 1
    %p103 = por %p101, %p102
    %p105 = scmp.ne.s32.totalorder %s90, %s104
    %p106 = scmp.eq.s32.totalorder %s17, 0
    %p107 = por %p105, %p106
    %s108 = ssub.s32 %s18, %s30
    %s109 = ssub.s32 %s19, %s26
    %s110 = sor.u32 %s108, %s109
    %p111 = scmp.eq.s32.totalorder %s110, 0
    %s113 = sadd.s32 %s112, 1
    %s114 = scalar_select %p111, %s112, %s113
    %p117 = pneg %p111
    %p118 = scmp.eq.s32.totalorder %s11, 1
    %p119 = por %p117, %p118
    %p120 = scmp.ne.s32.totalorder %s112, %s115
    %p121 = scmp.eq.s32.totalorder %s11, 0
    %p122 = por %p120, %p121
    %p123 = scmp.ne.s32.totalorder %s112, %s115
    %p124 = scmp.eq.s32.totalorder %s16, 1
    %p125 = por %p123, %p124
    %p126 = scmp.ne.s32.totalorder %s115, %s116
    %p127 = scmp.eq.s32.totalorder %s16, 0
    %p128 = por %p126, %p127
    %p129 = scmp.ne.s32.totalorder %s115, %s116
    %p130 = scmp.eq.s32.totalorder %s17, 1
    %p131 = por %p129, %p130
    %p133 = scmp.ne.s32.totalorder %s116, %s132
    %p134 = scmp.eq.s32.totalorder %s17, 0
    %p135 = por %p133, %p134
    %s136 = ssub.s32 %s18, %s30
    %s137 = ssub.s32 %s19, %s26
    %s138 = sor.u32 %s136, %s137
    %p139 = scmp.eq.s32.totalorder %s138, 0
    %s141 = sadd.s32 %s140, 1
    %s142 = scalar_select %p139, %s140, %s141
    %p145 = pneg %p139
    %p146 = scmp.eq.s32.totalorder %s11, 1
    %p147 = por %p145, %p146
    %p148 = scmp.ne.s32.totalorder %s140, %s143
    %p149 = scmp.eq.s32.totalorder %s11, 0
    %p150 = por %p148, %p149
    %p151 = scmp.ne.s32.totalorder %s140, %s143
    %p152 = scmp.eq.s32.totalorder %s16, 1
    %p153 = por %p151, %p152
    %p154 = scmp.ne.s32.totalorder %s143, %s144
    %p155 = scmp.eq.s32.totalorder %s16, 0
    %p156 = por %p154, %p155
    %p157 = scmp.ne.s32.totalorder %s143, %s144
    %p158 = scmp.eq.s32.totalorder %s17, 1
    %p159 = por %p157, %p158
    %p161 = scmp.ne.s32.totalorder %s144, %s160
    %p162 = scmp.eq.s32.totalorder %s17, 0
    %p163 = por %p161, %p162
    %p164 = scmp.le.s32.totalorder 1, %s11
    %p165 = scmp.lt.s32.totalorder %s11, 3
    %p166 = pnand %p164, %p165
    %p167 = pneg %p166
    // Predicated region
    $region9: #{a_call__.10} parent=5 // pred_check
      _
    $region10: #{a_call__.10} parent=5 // pred_check_branch
      %169 = sbr.rel (%p166) target = $region12
    $region11: #{a_call__.10} parent=5 // pred_region
      %s170 = ssub.s32 %s11, 1
      // Predicated region
      $region13: #{a_call__.10} parent=11 // pred_check
        %p171 = pneg %p100
      $region14: #{a_call__.10} parent=11 // pred_check_branch
        %173 = sbr.rel (%p171) target = $region16
      $region15: #{a_call__.10} parent=11 // pred_region
        _
      $region16: #{a_call__.10} parent=11 // pred_fallthru
        _
    $region12: #{a_call__.10} parent=5 // pred_fallthru
      _
    %p174 = scmp.lt.s32.totalorder %s11, 2
    // Predicated region
    $region17: #{a_call__.10} parent=5 // pred_check
      %p175 = pneg %p174
    $region18: #{a_call__.10} parent=5 // pred_check_branch
      %177 = sbr.rel (%p175) target = $region20
    $region19: #{a_call__.10} parent=5 // pred_region
      // Predicated region
      $region21: #{a_call__.10} parent=19 // pred_check
        %p178 = pneg %p45
      $region22: #{a_call__.10} parent=19 // pred_check_branch
        %180 = sbr.rel (%p178) target = $region24
      $region23: #{a_call__.10} parent=19 // pred_region
        %s181 = smul.u32 2, %s19
        %p182 = scmp.lt.s32.totalorder %s18, 1
        %s183 = scalar_select %p182, %s18, 1
        %p184 = scmp.lt.s32.totalorder %s181, 1
        %s185 = scalar_select %p184, %s181, 1
        %s186 = smul.addr %s183, 2
        %s187 = sadd.s32 %s185, %s186
        %s188 = smul.addr %s187, 4
        %s189 = scalar_lea.vmem %s0, %s188
        %s190 = smul.u32 2, %s19
      $region24: #{a_call__.10} parent=19 // pred_fallthru
        _
      // Predicated region
      $region25: #{a_call__.10} parent=19 // pred_check
        %p191 = pneg %p73
      $region26: #{a_call__.10} parent=19 // pred_check_branch
        %193 = sbr.rel (%p191) target = $region28
      $region27: #{a_call__.10} parent=19 // pred_region
        %s194 = smul.u32 2, %s19
        %p195 = scmp.lt.s32.totalorder %s18, 1
        %s196 = scalar_select %p195, %s18, 1
        %p197 = scmp.lt.s32.totalorder %s194, 1
        %s198 = scalar_select %p197, %s194, 1
        %s199 = smul.addr %s196, 2
        %s200 = sadd.s32 %s198, %s199
        %s201 = smul.addr %s200, 4
        %s202 = scalar_lea.vmem %s1, %s201
        %s203 = smul.u32 2, %s19
      $region28: #{a_call__.10} parent=19 // pred_fallthru
        _
    $region20: #{a_call__.10} parent=5 // pred_fallthru
      _
    %p204 = scmp.le.s32.totalorder 1, %s11
    %p205 = scmp.lt.s32.totalorder %s11, 3
    %p206 = pnand %p204, %p205
    %p207 = pneg %p206
    // Predicated region
    $region29: #{a_call__.10} parent=5 // pred_check
      _
    $region30: #{a_call__.10} parent=5 // pred_check_branch
      %209 = sbr.rel (%p206) target = $region32
    $region31: #{a_call__.10} parent=5 // pred_region
      %s210 = ssub.s32 %s11, 1
      %s211 = smul.u32 2, %s21
      %p212 = scmp.lt.s32.totalorder %s20, 1
      %s213 = scalar_select %p212, %s20, 1
      %p214 = scmp.lt.s32.totalorder %s211, 1
      %s215 = scalar_select %p214, %s211, 1
      %s216 = smul.addr %s213, 2
      %s217 = sadd.s32 %s215, %s216
      %s218 = smul.addr %s217, 4
      %s219 = scalar_lea.vmem %s0, %s218
      %p220 = pneg %p51
      %p221 = pneg %p48
      %s222 = smul.u32 2, %s21
      %p223 = scmp.lt.s32.totalorder %s20, 1
      %s224 = scalar_select %p223, %s20, 1
      %p225 = scmp.lt.s32.totalorder %s222, 1
      %s226 = scalar_select %p225, %s222, 1
      %s227 = smul.addr %s224, 2
      %s228 = sadd.s32 %s226, %s227
      %s229 = smul.addr %s228, 4
      %s230 = scalar_lea.vmem %s1, %s229
      %p231 = pneg %p79
      %p232 = pneg %p76
      %p233 = pneg %p100
      %p234 = pneg %p97
      %p235 = pneg %p128
      %p236 = pneg %p125
      %s237 = smul.u32 4, %s21
      %p238 = scmp.lt.s32.totalorder %s20, 1
      %s239 = scalar_select %p238, %s20, 1
      %p240 = scmp.lt.s32.totalorder %s237, 3
      %s241 = scalar_select %p240, %s237, 3
      %s242 = smul.addr %s239, 4
      %s243 = sadd.s32 %s241, %s242
      %s244 = smul.addr %s243, 4
      %s245 = scalar_lea.vmem %s3, %s244
      %p246 = pneg %p156
      %p247 = pneg %p153
      %p248 = scmp.lt.s32.totalorder %s20, 1
      %s249 = scalar_select %p248, %s20, 1
      %p250 = scmp.lt.s32.totalorder %s21, 0
      %s251 = scalar_select %p250, %s21, 0
      %s252 = sadd.s32 %s251, %s249
      %s253 = smul.addr %s252, 2
      %s254 = scalar_lea.vmem %s4, %s253
      %s255 = smul.u32 2, %s21
      %p256 = scmp.lt.s32.totalorder %s20, 1
      %s257 = scalar_select %p256, %s20, 1
      %p258 = scmp.lt.s32.totalorder %s255, 1
      %s259 = scalar_select %p258, %s255, 1
      %s260 = smul.addr %s257, 2
      %s261 = sadd.s32 %s259, %s260
      %s262 = smul.addr %s261, 4
      %s263 = scalar_lea.vmem %s0, %s262
      %s264 = smul.u32 2, %s21
      %s265 = smul.u32 2, %s21
      %p266 = scmp.lt.s32.totalorder %s20, 1
      %s267 = scalar_select %p266, %s20, 1
      %p268 = scmp.lt.s32.totalorder %s265, 1
      %s269 = scalar_select %p268, %s265, 1
      %s270 = smul.addr %s267, 2
      %s271 = sadd.s32 %s269, %s270
      %s272 = smul.addr %s271, 4
      %s273 = scalar_lea.vmem %s1, %s272
      %s274 = smul.u32 2, %s21
      %s275 = smul.u32 4, %s21
      %p276 = scmp.lt.s32.totalorder %s20, 1
      %s277 = scalar_select %p276, %s20, 1
      %p278 = scmp.lt.s32.totalorder %s275, 3
      %s279 = scalar_select %p278, %s275, 3
      %s280 = smul.addr %s277, 4
      %s281 = sadd.s32 %s279, %s280
      %s282 = smul.addr %s281, 4
      %s283 = scalar_lea.vmem %s3, %s282
      %s284 = smul.u32 4, %s21
      %p285 = scmp.lt.s32.totalorder %s20, 1
      %s286 = scalar_select %p285, %s20, 1
      %p287 = scmp.lt.s32.totalorder %s21, 0
      %s288 = scalar_select %p287, %s21, 0
      %s289 = sadd.s32 %s288, %s286
      %s290 = smul.addr %s289, 2
      %s291 = scalar_lea.vmem %s4, %s290
      %v292 = vld [vmem:[%s263] sm:$0x7]
      %v293 = vld [vmem:[%s263 + $0x4] sm:$0x7]
      %v294 = vld [vmem:[%s273] sm:$0x7]
      %v295 = vld [vmem:[%s273 + $0x4] sm:$0x7]
      %v296 = vld [vmem:[%s2] sm:$0xff]
      %v297 = vld [vmem:[%s2 + $0x8] sm:$0xff]
      %v298 = vld [vmem:[%s2 + $0x10] sm:$0xff]
      %v299 = vld [vmem:[%s2 + $0x18] sm:$0xff]
      %v300 = vld [vmem:[%s2 + $0x20] sm:$0xff]
      %v301 = vld [vmem:[%s2 + $0x28] sm:$0xff]
      %v302 = vld [vmem:[%s2 + $0x30] sm:$0xff]
      %v303 = vld [vmem:[%s2 + $0x38] sm:$0xff]
      %v304 = vld [vmem:[%s2 + $0x40] sm:$0xff]
      %v305 = vld [vmem:[%s2 + $0x48] sm:$0xff]
      %v306 = vld [vmem:[%s2 + $0x50] sm:$0xff]
      %v307 = vld [vmem:[%s2 + $0x58] sm:$0xff]
      %v308 = vld [vmem:[%s2 + $0x60] sm:$0xff]
      %v309 = vld [vmem:[%s2 + $0x68] sm:$0xff]
      %v310 = vld [vmem:[%s2 + $0x70] sm:$0xff]
      %v311 = vld [vmem:[%s2 + $0x78] sm:$0xff]
      %v312 = vld [vmem:[%s2 + $0x80] sm:$0xff]
      %v313 = vld [vmem:[%s2 + $0x88] sm:$0xff]
      %v317 = vunpack.c.l.s4 1983009808
      %v318 = vunpack.c.0.s8 %v317
      %v319 = vlaneseq
      %v320 = vshrl.u32 %v319, 7
      %v321 = vsub.s32 %v318, %v320
      %v322 = vrot.slane %v292, %v321
      %v323 = vcombine.high %v322, %v322
      %v325 = vunpack.c.l.s4 1983009808
      %v326 = vunpack.c.0.s8 %v325
      %v327 = vlaneseq
      %v328 = vshrl.u32 %v327, 7
      %v329 = vsub.s32 %v326, %v328
      %v330 = vrot.slane %v293, %v329
      %v331 = vcombine.high %v330, %v330
      %vm332 = vcmask 1040384
      %vm333 = vcmask 1042434
      %vm334 = vmor %vm332, %vm333
      %vm335 = vcmask 1044484
      %vm336 = vmor %vm334, %vm335
      %vm337 = vcmask 1046534
      %vm338 = vmor %vm336, %vm337
      %v339 = vrot.slane %v322, 7
      %v340 = vrot.slane %v339, 2
      %v341 = vrot.slane %v323, 7
      %v342 = vsel %vm338, %v340, %v341
      %v343 = vrot.slane %v330, 7
      %v344 = vrot.slane %v343, 2
      %v345 = vrot.slane %v331, 7
      %v346 = vsel %vm338, %v344, %v345
      %v350 = vunpack.c.l.s4 1983009808
      %v351 = vunpack.c.0.s8 %v350
      %v352 = vlaneseq
      %v353 = vshrl.u32 %v352, 7
      %v354 = vsub.s32 %v351, %v353
      %v355 = vrot.slane %v294, %v354
      %v356 = vcombine.high %v355, %v355
      %v358 = vunpack.c.l.s4 1983009808
      %v359 = vunpack.c.0.s8 %v358
      %v360 = vlaneseq
      %v361 = vshrl.u32 %v360, 7
      %v362 = vsub.s32 %v359, %v361
      %v363 = vrot.slane %v295, %v362
      %v364 = vcombine.high %v363, %v363
      %v365 = vrot.slane %v355, 7
      %v366 = vrot.slane %v365, 2
      %v367 = vrot.slane %v356, 7
      %v368 = vsel %vm338, %v366, %v367
      %v369 = vrot.slane %v363, 7
      %v370 = vrot.slane %v369, 2
      %v371 = vrot.slane %v364, 7
      %v372 = vsel %vm338, %v370, %v371
      %v373 = vcombine.low %v294, %v295
      %v375 = vunpack.c.l.s4 1983009808
      %v376 = vunpack.c.0.s8 %v375
      %v377 = vlaneseq
      %v378 = vshrl.u32 %v377, 7
      %v379 = vsub.s32 %v376, %v378
      %v380 = vrot.slane %v373, %v379
      %v382 = vcombine.low %v292, %v293
      %v384 = vunpack.c.l.s4 1983009808
      %v385 = vunpack.c.0.s8 %v384
      %v386 = vlaneseq
      %v387 = vshrl.u32 %v386, 7
      %v388 = vsub.s32 %v385, %v387
      %v389 = vrot.slane %v382, %v388
      %390 = vrot.lane.b32.xlu0 %v389, 16
      %v391 = vpop.permute.xlu0 %390
      %v393 = vcombine.low %v342, %v346
      %v395 = vunpack.c.l.s4 1983009808
      %v396 = vunpack.c.0.s8 %v395
      %v397 = vlaneseq
      %v398 = vshrl.u32 %v397, 7
      %v399 = vsub.s32 %v396, %v398
      %v400 = vrot.slane %v393, %v399
      %401 = vrot.lane.b32.xlu0 %v400, 32
      %v402 = vpop.permute.xlu0 %401
      %v404 = vcombine.low %v368, %v372
      %v406 = vunpack.c.l.s4 1983009808
      %v407 = vunpack.c.0.s8 %v406
      %v408 = vlaneseq
      %v409 = vshrl.u32 %v408, 7
      %v410 = vsub.s32 %v407, %v409
      %v411 = vrot.slane %v404, %v410
      %412 = vrot.lane.b32.xlu0 %v411, 48
      %v413 = vpop.permute.xlu0 %412
      %vm415 = vcmask 130048
      %v416 = vsel %vm415, %v380, %v391
      %vm417 = vcmask 261120
      %v418 = vsel %vm417, %v416, %v402
      %vm419 = vcmask 392192
      %v420 = vsel %vm419, %v418, %v413
      %v421 = vsel %vm415, %v389, 0
      %423 = vmatprep.subr.mxu0 0.0
      %424 = vmatpush1.msra.mxu0 0.0
      %425 = vmatprep.subr.mxu0 0.0
      %426 = vmatpush1.msra.mxu0 0.0
      %427 = vmatprep.subr.mxu0 0.0
      %428 = vmatpush1.msra.mxu0 0.0
      %429 = vmatprep.subr.mxu0 0.0
      %430 = vmatpush1.msra.mxu0 0.0
      %431 = vmatprep.subr.mxu0 0.0
      %432 = vmatpush1.msra.mxu0 0.0
      %433 = vmatprep.subr.mxu0 0.0
      %434 = vmatpush1.msra.mxu0 0.0
      %435 = vmatprep.subr.mxu0 0.0
      %436 = vmatpush1.msra.mxu0 0.0
      %437 = vmatprep.subr.mxu0 0.0
      %438 = vmatpush1.msra.mxu0 0.0
      %439 = vmatprep.subr.mxu0 0.0
      %440 = vmatpush1.msra.mxu0 0.0
      %441 = vmatprep.subr.mxu0 0.0
      %442 = vmatpush1.msra.mxu0 0.0
      %443 = vmatprep.subr.mxu0 0.0
      %444 = vmatpush1.msra.mxu0 0.0
      %445 = vmatprep.subr.mxu0 0.0
      %446 = vmatpush1.msra.mxu0 0.0
      %447 = vmatprep.subr.mxu0 0.0
      %448 = vmatpush1.msra.mxu0 0.0
      %449 = vmatprep.subr.mxu0 0.0
      %450 = vmatpush1.msra.mxu0 0.0
      %451 = vmatprep.subr.mxu0 0.0
      %452 = vmatpush1.msra.mxu0 %v297
      %453 = vmatprep.subr.mxu0 0.0
      %454 = vmatpush1.msra.mxu0 %v296
      %455 = vmatprep.subr.mxu0 0.0
      %456 = vmatpush2.msra.mxu0 0.0
      %457 = vmatprep.subr.mxu0 0.0
      %458 = vmatpush2.msra.mxu0 0.0
      %459 = vmatprep.subr.mxu0 0.0
      %460 = vmatpush2.msra.mxu0 0.0
      %461 = vmatprep.subr.mxu0 0.0
      %462 = vmatpush2.msra.mxu0 0.0
      %463 = vmatprep.subr.mxu0 0.0
      %464 = vmatpush2.msra.mxu0 0.0
      %465 = vmatprep.subr.mxu0 0.0
      %466 = vmatpush2.msra.mxu0 0.0
      %467 = vmatprep.subr.mxu0 0.0
      %468 = vmatpush2.msra.mxu0 0.0
      %469 = vmatprep.subr.mxu0 0.0
      %470 = vmatpush2.msra.mxu0 0.0
      %471 = vmatprep.subr.mxu0 0.0
      %472 = vmatpush2.msra.mxu0 0.0
      %473 = vmatprep.subr.mxu0 0.0
      %474 = vmatpush2.msra.mxu0 0.0
      %475 = vmatprep.subr.mxu0 0.0
      %476 = vmatpush2.msra.mxu0 0.0
      %477 = vmatprep.subr.mxu0 0.0
      %478 = vmatpush2.msra.mxu0 0.0
      %479 = vmatprep.subr.mxu0 0.0
      %480 = vmatpush2.msra.mxu0 0.0
      %481 = vmatprep.subr.mxu0 0.0
      %482 = vmatpush2.msra.mxu0 0.0
      %483 = vmatprep.subr.mxu0 0.0
      %484 = vmatpush2.msra.mxu0 0.0
      %485 = vmatprep.subr.mxu0 0.0
      %486 = vmatpush2.msra.mxu0 0.0
      %487 = vmatprep.mubr.f32.mxu0 0.0
      %488 = vmatmul.mubr.f32.gmra.mxu0 %v421
      %v489 = vpop.f32.mrf.mxu0
      %v490 = vadd.f32 0.0, %v489
      %v491 = vpop.f32.mrf.mxu0
      %492 = vdwg.mxu0
      %v494 = vsel %vm417, %v420, 0
      %496 = vmatprep.subr.mxu0 0.0
      %497 = vmatpush1.msra.mxu0 0.0
      %498 = vmatprep.subr.mxu0 0.0
      %499 = vmatpush1.msra.mxu0 0.0
      %500 = vmatprep.subr.mxu0 0.0
      %501 = vmatpush1.msra.mxu0 0.0
      %502 = vmatprep.subr.mxu0 0.0
      %503 = vmatpush1.msra.mxu0 0.0
      %504 = vmatprep.subr.mxu0 0.0
      %505 = vmatpush1.msra.mxu0 0.0
      %506 = vmatprep.subr.mxu0 0.0
      %507 = vmatpush1.msra.mxu0 0.0
      %508 = vmatprep.subr.mxu0 0.0
      %509 = vmatpush1.msra.mxu0 0.0
      %510 = vmatprep.subr.mxu0 0.0
      %511 = vmatpush1.msra.mxu0 0.0
      %512 = vmatprep.subr.mxu0 0.0
      %513 = vmatpush1.msra.mxu0 0.0
      %514 = vmatprep.subr.mxu0 0.0
      %515 = vmatpush1.msra.mxu0 0.0
      %516 = vmatprep.subr.mxu0 0.0
      %517 = vmatpush1.msra.mxu0 0.0
      %518 = vmatprep.subr.mxu0 0.0
      %519 = vmatpush1.msra.mxu0 0.0
      %520 = vmatprep.subr.mxu0 0.0
      %521 = vmatpush1.msra.mxu0 %v301
      %522 = vmatprep.subr.mxu0 0.0
      %523 = vmatpush1.msra.mxu0 %v300
      %524 = vmatprep.subr.mxu0 0.0
      %525 = vmatpush1.msra.mxu0 %v299
      %526 = vmatprep.subr.mxu0 0.0
      %527 = vmatpush1.msra.mxu0 %v298
      %528 = vmatprep.subr.mxu0 0.0
      %529 = vmatpush2.msra.mxu0 0.0
      %530 = vmatprep.subr.mxu0 0.0
      %531 = vmatpush2.msra.mxu0 0.0
      %532 = vmatprep.subr.mxu0 0.0
      %533 = vmatpush2.msra.mxu0 0.0
      %534 = vmatprep.subr.mxu0 0.0
      %535 = vmatpush2.msra.mxu0 0.0
      %536 = vmatprep.subr.mxu0 0.0
      %537 = vmatpush2.msra.mxu0 0.0
      %538 = vmatprep.subr.mxu0 0.0
      %539 = vmatpush2.msra.mxu0 0.0
      %540 = vmatprep.subr.mxu0 0.0
      %541 = vmatpush2.msra.mxu0 0.0
      %542 = vmatprep.subr.mxu0 0.0
      %543 = vmatpush2.msra.mxu0 0.0
      %544 = vmatprep.subr.mxu0 0.0
      %545 = vmatpush2.msra.mxu0 0.0
      %546 = vmatprep.subr.mxu0 0.0
      %547 = vmatpush2.msra.mxu0 0.0
      %548 = vmatprep.subr.mxu0 0.0
      %549 = vmatpush2.msra.mxu0 0.0
      %550 = vmatprep.subr.mxu0 0.0
      %551 = vmatpush2.msra.mxu0 0.0
      %552 = vmatprep.subr.mxu0 0.0
      %553 = vmatpush2.msra.mxu0 0.0
      %554 = vmatprep.subr.mxu0 0.0
      %555 = vmatpush2.msra.mxu0 0.0
      %556 = vmatprep.subr.mxu0 0.0
      %557 = vmatpush2.msra.mxu0 0.0
      %558 = vmatprep.subr.mxu0 0.0
      %559 = vmatpush2.msra.mxu0 0.0
      %560 = vmatprep.mubr.f32.mxu0 0.0
      %561 = vmatmul.mubr.f32.gmra.mxu0 %v494
      %v562 = vpop.f32.mrf.mxu0
      %v563 = vadd.f32 0.0, %v562
      %v564 = vpop.f32.mrf.mxu0
      %565 = vdwg.mxu0
      %566 = vrot.lane.b32.xlu0 %v420, 112
      %v567 = vpop.permute.xlu0 %566
      %v568 = vsel %vm417, %v567, 0
      %570 = vmatprep.subr.mxu0 0.0
      %571 = vmatpush1.msra.mxu0 0.0
      %572 = vmatprep.subr.mxu0 0.0
      %573 = vmatpush1.msra.mxu0 0.0
      %574 = vmatprep.subr.mxu0 0.0
      %575 = vmatpush1.msra.mxu0 0.0
      %576 = vmatprep.subr.mxu0 0.0
      %577 = vmatpush1.msra.mxu0 0.0
      %578 = vmatprep.subr.mxu0 0.0
      %579 = vmatpush1.msra.mxu0 0.0
      %580 = vmatprep.subr.mxu0 0.0
      %581 = vmatpush1.msra.mxu0 0.0
      %582 = vmatprep.subr.mxu0 0.0
      %583 = vmatpush1.msra.mxu0 0.0
      %584 = vmatprep.subr.mxu0 0.0
      %585 = vmatpush1.msra.mxu0 0.0
      %586 = vmatprep.subr.mxu0 0.0
      %587 = vmatpush1.msra.mxu0 0.0
      %588 = vmatprep.subr.mxu0 0.0
      %589 = vmatpush1.msra.mxu0 0.0
      %590 = vmatprep.subr.mxu0 0.0
      %591 = vmatpush1.msra.mxu0 0.0
      %592 = vmatprep.subr.mxu0 0.0
      %593 = vmatpush1.msra.mxu0 0.0
      %594 = vmatprep.subr.mxu0 0.0
      %595 = vmatpush1.msra.mxu0 %v305
      %596 = vmatprep.subr.mxu0 0.0
      %597 = vmatpush1.msra.mxu0 %v304
      %598 = vmatprep.subr.mxu0 0.0
      %599 = vmatpush1.msra.mxu0 %v303
      %600 = vmatprep.subr.mxu0 0.0
      %601 = vmatpush1.msra.mxu0 %v302
      %602 = vmatprep.subr.mxu0 0.0
      %603 = vmatpush2.msra.mxu0 0.0
      %604 = vmatprep.subr.mxu0 0.0
      %605 = vmatpush2.msra.mxu0 0.0
      %606 = vmatprep.subr.mxu0 0.0
      %607 = vmatpush2.msra.mxu0 0.0
      %608 = vmatprep.subr.mxu0 0.0
      %609 = vmatpush2.msra.mxu0 0.0
      %610 = vmatprep.subr.mxu0 0.0
      %611 = vmatpush2.msra.mxu0 0.0
      %612 = vmatprep.subr.mxu0 0.0
      %613 = vmatpush2.msra.mxu0 0.0
      %614 = vmatprep.subr.mxu0 0.0
      %615 = vmatpush2.msra.mxu0 0.0
      %616 = vmatprep.subr.mxu0 0.0
      %617 = vmatpush2.msra.mxu0 0.0
      %618 = vmatprep.subr.mxu0 0.0
      %619 = vmatpush2.msra.mxu0 0.0
      %620 = vmatprep.subr.mxu0 0.0
      %621 = vmatpush2.msra.mxu0 0.0
      %622 = vmatprep.subr.mxu0 0.0
      %623 = vmatpush2.msra.mxu0 0.0
      %624 = vmatprep.subr.mxu0 0.0
      %625 = vmatpush2.msra.mxu0 0.0
      %626 = vmatprep.subr.mxu0 0.0
      %627 = vmatpush2.msra.mxu0 0.0
      %628 = vmatprep.subr.mxu0 0.0
      %629 = vmatpush2.msra.mxu0 0.0
      %630 = vmatprep.subr.mxu0 0.0
      %631 = vmatpush2.msra.mxu0 0.0
      %632 = vmatprep.subr.mxu0 0.0
      %633 = vmatpush2.msra.mxu0 0.0
      %634 = vmatprep.mubr.f32.mxu0 0.0
      %635 = vmatmul.mubr.f32.gmra.mxu0 %v568
      %v636 = vpop.f32.mrf.mxu0
      %v637 = vadd.f32 0.0, %v636
      %v638 = vpop.f32.mrf.mxu0
      %639 = vdwg.mxu0
      %vm640 = vcmask 523264
      %v641 = vsel %vm640, %v420, 0
      %643 = vmatprep.subr.mxu0 0.0
      %644 = vmatpush1.msra.mxu0 0.0
      %645 = vmatprep.subr.mxu0 0.0
      %646 = vmatpush1.msra.mxu0 0.0
      %647 = vmatprep.subr.mxu0 0.0
      %648 = vmatpush1.msra.mxu0 0.0
      %649 = vmatprep.subr.mxu0 0.0
      %650 = vmatpush1.msra.mxu0 0.0
      %651 = vmatprep.subr.mxu0 0.0
      %652 = vmatpush1.msra.mxu0 0.0
      %653 = vmatprep.subr.mxu0 0.0
      %654 = vmatpush1.msra.mxu0 0.0
      %655 = vmatprep.subr.mxu0 0.0
      %656 = vmatpush1.msra.mxu0 0.0
      %657 = vmatprep.subr.mxu0 0.0
      %658 = vmatpush1.msra.mxu0 0.0
      %659 = vmatprep.subr.mxu0 0.0
      %660 = vmatpush1.msra.mxu0 %v313
      %661 = vmatprep.subr.mxu0 0.0
      %662 = vmatpush1.msra.mxu0 %v312
      %663 = vmatprep.subr.mxu0 0.0
      %664 = vmatpush1.msra.mxu0 %v311
      %665 = vmatprep.subr.mxu0 0.0
      %666 = vmatpush1.msra.mxu0 %v310
      %667 = vmatprep.subr.mxu0 0.0
      %668 = vmatpush1.msra.mxu0 %v309
      %669 = vmatprep.subr.mxu0 0.0
      %670 = vmatpush1.msra.mxu0 %v308
      %671 = vmatprep.subr.mxu0 0.0
      %672 = vmatpush1.msra.mxu0 %v307
      %673 = vmatprep.subr.mxu0 0.0
      %674 = vmatpush1.msra.mxu0 %v306
      %675 = vmatprep.subr.mxu0 0.0
      %676 = vmatpush2.msra.mxu0 0.0
      %677 = vmatprep.subr.mxu0 0.0
      %678 = vmatpush2.msra.mxu0 0.0
      %679 = vmatprep.subr.mxu0 0.0
      %680 = vmatpush2.msra.mxu0 0.0
      %681 = vmatprep.subr.mxu0 0.0
      %682 = vmatpush2.msra.mxu0 0.0
      %683 = vmatprep.subr.mxu0 0.0
      %684 = vmatpush2.msra.mxu0 0.0
      %685 = vmatprep.subr.mxu0 0.0
      %686 = vmatpush2.msra.mxu0 0.0
      %687 = vmatprep.subr.mxu0 0.0
      %688 = vmatpush2.msra.mxu0 0.0
      %689 = vmatprep.subr.mxu0 0.0
      %690 = vmatpush2.msra.mxu0 0.0
      %691 = vmatprep.subr.mxu0 0.0
      %692 = vmatpush2.msra.mxu0 0.0
      %693 = vmatprep.subr.mxu0 0.0
      %694 = vmatpush2.msra.mxu0 0.0
      %695 = vmatprep.subr.mxu0 0.0
      %696 = vmatpush2.msra.mxu0 0.0
      %697 = vmatprep.subr.mxu0 0.0
      %698 = vmatpush2.msra.mxu0 0.0
      %699 = vmatprep.subr.mxu0 0.0
      %700 = vmatpush2.msra.mxu0 0.0
      %701 = vmatprep.subr.mxu0 0.0
      %702 = vmatpush2.msra.mxu0 0.0
      %703 = vmatprep.subr.mxu0 0.0
      %704 = vmatpush2.msra.mxu0 0.0
      %705 = vmatprep.subr.mxu0 0.0
      %706 = vmatpush2.msra.mxu0 0.0
      %707 = vmatprep.mubr.f32.mxu0 0.0
      %708 = vmatmul.mubr.f32.gmra.mxu0 %v641
      %v709 = vpop.f32.mrf.mxu0
      %v710 = vadd.f32 0.0, %v709
      %v711 = vpop.f32.mrf.mxu0
      %712 = vdwg.mxu0
      %vm713 = vcmask 125952
      %v714 = vsel %vm713, %v490, 0.0
      %v715 = vrot.slane %v714, 4
      %v716 = vadd.f32 %v714, %v715
      %v717 = vrot.slane %v716, 2
      %v718 = vadd.f32 %v716, %v717
      %v719 = vrot.slane %v718, 1
      %v720 = vadd.f32 %v718, %v719
      %v721 = vsel %vm713, %v637, 0.0
      %v722 = vrot.slane %v721, 4
      %v723 = vadd.f32 %v721, %v722
      %v724 = vrot.slane %v723, 2
      %v725 = vadd.f32 %v723, %v724
      %v726 = vrot.slane %v725, 1
      %v727 = vadd.f32 %v725, %v726
      %v728 = vadd.f32 %v720, %v727
      %v729 = vsel %vm713, %v563, 0.0
      %v730 = vrot.slane %v729, 4
      %v731 = vadd.f32 %v729, %v730
      %v732 = vrot.slane %v731, 2
      %v733 = vadd.f32 %v731, %v732
      %v734 = vrot.slane %v733, 1
      %v735 = vadd.f32 %v733, %v734
      %v736 = vadd.f32 %v728, %v735
      %v737 = vsel %vm713, %v710, 0.0
      %v738 = vrot.slane %v737, 4
      %v739 = vadd.f32 %v737, %v738
      %v740 = vrot.slane %v739, 2
      %v741 = vadd.f32 %v739, %v740
      %v742 = vrot.slane %v741, 1
      %v743 = vadd.f32 %v741, %v742
      %v744 = vadd.f32 %v736, %v743
      %v745 = vmul.f32 %v490, %v490
      %v746 = vsel %vm713, %v745, 0.0
      %v747 = vrot.slane %v746, 4
      %v748 = vadd.f32 %v746, %v747
      %v749 = vrot.slane %v748, 2
      %v750 = vadd.f32 %v748, %v749
      %v751 = vrot.slane %v750, 1
      %v752 = vadd.f32 %v750, %v751
      %v753 = vmul.f32 %v637, %v637
      %v754 = vsel %vm713, %v753, 0.0
      %v755 = vrot.slane %v754, 4
      %v756 = vadd.f32 %v754, %v755
      %v757 = vrot.slane %v756, 2
      %v758 = vadd.f32 %v756, %v757
      %v759 = vrot.slane %v758, 1
      %v760 = vadd.f32 %v758, %v759
      %v761 = vadd.f32 %v752, %v760
      %v762 = vmul.f32 %v563, %v563
      %v763 = vsel %vm713, %v762, 0.0
      %v764 = vrot.slane %v763, 4
      %v765 = vadd.f32 %v763, %v764
      %v766 = vrot.slane %v765, 2
      %v767 = vadd.f32 %v765, %v766
      %v768 = vrot.slane %v767, 1
      %v769 = vadd.f32 %v767, %v768
      %v770 = vadd.f32 %v761, %v769
      %v771 = vmul.f32 %v710, %v710
      %v772 = vsel %vm713, %v771, 0.0
      %v773 = vrot.slane %v772, 4
      %v774 = vadd.f32 %v772, %v773
      %v775 = vrot.slane %v774, 2
      %v776 = vadd.f32 %v774, %v775
      %v777 = vrot.slane %v776, 1
      %v778 = vadd.f32 %v776, %v777
      %v779 = vadd.f32 %v770, %v778
      %v780 = vsel %vm332, %v744, %v779
      %vm781 = vcmask 123904
      %782 = vst.msk [vmem:[%s291] sm:$0x3] %vm781, %v780
      %v785 = vunpack.c.l.s4 1966171168
      %v786 = vunpack.c.0.s8 %v785
      %v787 = vlaneseq
      %v788 = vshrl.u32 %v787, 7
      %v789 = vsub.s32 %v786, %v788
      %v790 = vrot.slane %v490, %v789
      %v791 = vcombine.high %v790, %v790
      %v793 = vunpack.c.l.s4 1966171168
      %v794 = vunpack.c.0.s8 %v793
      %v795 = vlaneseq
      %v796 = vshrl.u32 %v795, 7
      %v797 = vsub.s32 %v794, %v796
      %v798 = vrot.slane %v790, %v797
      %v800 = vunpack.c.l.s4 1966171168
      %v801 = vunpack.c.0.s8 %v800
      %v802 = vlaneseq
      %v803 = vshrl.u32 %v802, 7
      %v804 = vsub.s32 %v801, %v803
      %v805 = vrot.slane %v791, %v804
      %v806 = vcombine.high %v798, %v798
      %v807 = vcombine.high %v805, %v805
      %v814 = vunpack.c.l.s4 1966171168
      %v815 = vunpack.c.0.s8 %v814
      %v816 = vlaneseq
      %v817 = vshrl.u32 %v816, 7
      %v818 = vsub.s32 %v815, %v817
      %v819 = vrot.slane %v637, %v818
      %v820 = vcombine.high %v819, %v819
      %v822 = vunpack.c.l.s4 1966171168
      %v823 = vunpack.c.0.s8 %v822
      %v824 = vlaneseq
      %v825 = vshrl.u32 %v824, 7
      %v826 = vsub.s32 %v823, %v825
      %v827 = vrot.slane %v819, %v826
      %v829 = vunpack.c.l.s4 1966171168
      %v830 = vunpack.c.0.s8 %v829
      %v831 = vlaneseq
      %v832 = vshrl.u32 %v831, 7
      %v833 = vsub.s32 %v830, %v832
      %v834 = vrot.slane %v820, %v833
      %v835 = vcombine.high %v827, %v827
      %v836 = vcombine.high %v834, %v834
      %v837 = vlaneseq
      %v838 = vshrl.u32 %v837, 7
      %v839 = vsub.s32 0, %v838
      %v840 = vrot.slane %v827, %v839
      %v841 = vlaneseq
      %v842 = vshrl.u32 %v841, 7
      %v843 = vsub.s32 0, %v842
      %v844 = vrot.slane %v834, %v843
      %v845 = vlaneseq
      %v846 = vshrl.u32 %v845, 7
      %v847 = vsub.s32 0, %v846
      %v848 = vrot.slane %v835, %v847
      %v849 = vlaneseq
      %v850 = vshrl.u32 %v849, 7
      %v851 = vsub.s32 0, %v850
      %v852 = vrot.slane %v836, %v851
      %v857 = vsel %vm332, %v798, %v840
      %v858 = vsel %vm332, %v805, %v844
      %v859 = vsel %vm332, %v806, %v848
      %v860 = vsel %vm332, %v807, %v852
      %v863 = vunpack.c.l.s4 1966171168
      %v864 = vunpack.c.0.s8 %v863
      %v865 = vlaneseq
      %v866 = vshrl.u32 %v865, 7
      %v867 = vsub.s32 %v864, %v866
      %v868 = vrot.slane %v563, %v867
      %v869 = vcombine.high %v868, %v868
      %v871 = vunpack.c.l.s4 1966171168
      %v872 = vunpack.c.0.s8 %v871
      %v873 = vlaneseq
      %v874 = vshrl.u32 %v873, 7
      %v875 = vsub.s32 %v872, %v874
      %v876 = vrot.slane %v868, %v875
      %v878 = vunpack.c.l.s4 1966171168
      %v879 = vunpack.c.0.s8 %v878
      %v880 = vlaneseq
      %v881 = vshrl.u32 %v880, 7
      %v882 = vsub.s32 %v879, %v881
      %v883 = vrot.slane %v869, %v882
      %v884 = vcombine.high %v876, %v876
      %v885 = vcombine.high %v883, %v883
      %v892 = vunpack.c.l.s4 1966171168
      %v893 = vunpack.c.0.s8 %v892
      %v894 = vlaneseq
      %v895 = vshrl.u32 %v894, 7
      %v896 = vsub.s32 %v893, %v895
      %v897 = vrot.slane %v710, %v896
      %v898 = vcombine.high %v897, %v897
      %v900 = vunpack.c.l.s4 1966171168
      %v901 = vunpack.c.0.s8 %v900
      %v902 = vlaneseq
      %v903 = vshrl.u32 %v902, 7
      %v904 = vsub.s32 %v901, %v903
      %v905 = vrot.slane %v897, %v904
      %v907 = vunpack.c.l.s4 1966171168
      %v908 = vunpack.c.0.s8 %v907
      %v909 = vlaneseq
      %v910 = vshrl.u32 %v909, 7
      %v911 = vsub.s32 %v908, %v910
      %v912 = vrot.slane %v898, %v911
      %v913 = vcombine.high %v905, %v905
      %v914 = vcombine.high %v912, %v912
      %v915 = vlaneseq
      %v916 = vshrl.u32 %v915, 7
      %v917 = vsub.s32 0, %v916
      %v918 = vrot.slane %v905, %v917
      %v919 = vlaneseq
      %v920 = vshrl.u32 %v919, 7
      %v921 = vsub.s32 0, %v920
      %v922 = vrot.slane %v912, %v921
      %v923 = vlaneseq
      %v924 = vshrl.u32 %v923, 7
      %v925 = vsub.s32 0, %v924
      %v926 = vrot.slane %v913, %v925
      %v927 = vlaneseq
      %v928 = vshrl.u32 %v927, 7
      %v929 = vsub.s32 0, %v928
      %v930 = vrot.slane %v914, %v929
      %v935 = vsel %vm332, %v876, %v918
      %v936 = vsel %vm332, %v883, %v922
      %v937 = vsel %vm332, %v884, %v926
      %v938 = vsel %vm332, %v885, %v930
      %v947 = vcombine.low %v857, %v858
      %v949 = vunpack.c.l.s4 1983009808
      %v950 = vunpack.c.0.s8 %v949
      %v951 = vlaneseq
      %v952 = vshrl.u32 %v951, 7
      %v953 = vsub.s32 %v950, %v952
      %v954 = vrot.slane %v947, %v953
      %v955 = vcombine.low %v935, %v936
      %v957 = vunpack.c.l.s4 1983009808
      %v958 = vunpack.c.0.s8 %v957
      %v959 = vlaneseq
      %v960 = vshrl.u32 %v959, 7
      %v961 = vsub.s32 %v958, %v960
      %v962 = vrot.slane %v955, %v961
      %v963 = vcombine.low %v859, %v860
      %v965 = vunpack.c.l.s4 1983009808
      %v966 = vunpack.c.0.s8 %v965
      %v967 = vlaneseq
      %v968 = vshrl.u32 %v967, 7
      %v969 = vsub.s32 %v966, %v968
      %v970 = vrot.slane %v963, %v969
      %v971 = vcombine.low %v937, %v938
      %v973 = vunpack.c.l.s4 1983009808
      %v974 = vunpack.c.0.s8 %v973
      %v975 = vlaneseq
      %v976 = vshrl.u32 %v975, 7
      %v977 = vsub.s32 %v974, %v976
      %v978 = vrot.slane %v971, %v977
      %983 = vst.msk [vmem:[%s283] sm:$0xf] %vm713, %v954
      %984 = vst.msk [vmem:[%s283 + $0x4] sm:$0xf] %vm713, %v962
      %985 = vst.msk [vmem:[%s283 + $0x8] sm:$0xf] %vm713, %v970
      %986 = vst.msk [vmem:[%s283 + $0xc] sm:$0xf] %vm713, %v978
      %s987 = smul.u32 4, %s21
      %p988 = scmp.lt.s32.totalorder %s20, 1
      %s989 = scalar_select %p988, %s20, 1
      %p990 = scmp.lt.s32.totalorder %s987, 3
      %s991 = scalar_select %p990, %s987, 3
      %s992 = smul.addr %s989, 4
      %s993 = sadd.s32 %s991, %s992
      %s994 = smul.addr %s993, 4
      %s995 = scalar_lea.vmem %s3, %s994
      %p996 = scmp.lt.s32.totalorder %s20, 1
      %s997 = scalar_select %p996, %s20, 1
      %p998 = scmp.lt.s32.totalorder %s21, 0
      %s999 = scalar_select %p998, %s21, 0
      %s1000 = sadd.s32 %s999, %s997
      %s1001 = smul.addr %s1000, 2
      %s1002 = scalar_lea.vmem %s4, %s1001
      // Predicated region
      $region33: #{a_call__.10} parent=31 // pred_check
        %p1003 = pneg %p125
      $region34: #{a_call__.10} parent=31 // pred_check_branch
        %1005 = sbr.rel (%p1003) target = $region36
      $region35: #{a_call__.10} parent=31 // pred_region
        %s1006 = smul.u32 4, %s21
      $region36: #{a_call__.10} parent=31 // pred_fallthru
        _
      // Predicated region
      $region37: #{a_call__.10} parent=31 // pred_check
        %p1007 = pneg %p153
      $region38: #{a_call__.10} parent=31 // pred_check_branch
        %1009 = sbr.rel (%p1007) target = $region40
      $region39: #{a_call__.10} parent=31 // pred_region
        _
      $region40: #{a_call__.10} parent=31 // pred_fallthru
        _
    $region32: #{a_call__.10} parent=5 // pred_fallthru
      _
    %p1010 = scmp.le.s32.totalorder 2, %s11
    // Predicated region
    $region41: #{a_call__.10} parent=5 // pred_check
      %p1011 = pneg %p1010
    $region42: #{a_call__.10} parent=5 // pred_check_branch
      %1013 = sbr.rel (%p1011) target = $region44
    $region43: #{a_call__.10} parent=5 // pred_region
      %s1014 = ssub.s32 %s11, 2
      // Predicated region
      $region45: #{a_call__.10} parent=43 // pred_check
        %p1015 = pneg %p131
      $region46: #{a_call__.10} parent=43 // pred_check_branch
        %1017 = sbr.rel (%p1015) target = $region48
      $region47: #{a_call__.10} parent=43 // pred_region
        %s1018 = smul.u32 4, %s23
        %p1019 = scmp.lt.s32.totalorder %s22, 1
        %s1020 = scalar_select %p1019, %s22, 1
        %p1021 = scmp.lt.s32.totalorder %s1018, 3
        %s1022 = scalar_select %p1021, %s1018, 3
        %s1023 = smul.addr %s1020, 4
        %s1024 = sadd.s32 %s1022, %s1023
        %s1025 = smul.addr %s1024, 4
        %s1026 = scalar_lea.vmem %s3, %s1025
      $region48: #{a_call__.10} parent=43 // pred_fallthru
        _
      // Predicated region
      $region49: #{a_call__.10} parent=43 // pred_check
        %p1027 = pneg %p159
      $region50: #{a_call__.10} parent=43 // pred_check_branch
        %1029 = sbr.rel (%p1027) target = $region52
      $region51: #{a_call__.10} parent=43 // pred_region
        %p1030 = scmp.lt.s32.totalorder %s22, 1
        %s1031 = scalar_select %p1030, %s22, 1
        %p1032 = scmp.lt.s32.totalorder %s23, 0
        %s1033 = scalar_select %p1032, %s23, 0
        %s1034 = sadd.s32 %s1033, %s1031
        %s1035 = smul.addr %s1034, 2
        %s1036 = scalar_lea.vmem %s4, %s1035
      $region52: #{a_call__.10} parent=43 // pred_fallthru
        _
    $region44: #{a_call__.10} parent=5 // pred_fallthru
      _
  $region6: #{a_call__.10} parent=0 // loop_footer
    %s15 = sadd.s32 1, %s11
  $region7: #{a_call__.10} parent=0 // loop_footer_branch
    %10 = sbr.rel target = $region3
  $region8: #{a_call__.10} parent=0 // loop_exit
    _

// kernel: a_call__.13
$region0: #{a_call__.13}
  #allocation0 [shape = 'u32[]', space=smem, size = 0x4, offset = 0x4, fixed_abs, tag = 'smem constant byte address 0x4 - core index']
  #allocation1 [shape = 'u32[144,128]{1,0:T(1,128)}', space=vmem, size = 0x12000, scoped, tag = 'internal scratch']
  %s0 = inlined_call_operand.vmem [shape: f32[2,8,8,8], index: 0, kind: input, shape index: {}]
  %s1 = inlined_call_operand.vmem [shape: f32[2,1,1,8], index: 1, kind: input, shape index: {}]
  %s2 = inlined_call_operand.vmem [shape: f32[2,1,1,8], index: 2, kind: input, shape index: {}]
  %s3 = inlined_call_operand.vmem [shape: f32[2,8,8,8], index: 3, kind: output, shape index: {}]
  %s4 = sld [smem:[#allocation0]]
  $region45: #{a_call__.13} parent=0
    _
  %s6 = ssub.s32 1, %s4
  %s7 = scalar_select 0, %s6, %s4
  loop: start=0, step=1, limit=4
  $region2: #{a_call__.13} parent=0 // loop_pre_header
    _
  $region3: #{a_call__.13} parent=0 // loop_header
    %s9 = sphi 0, %s13
    %p10 = scmp.ge.s32.totalorder %s9, 4
    %s16 = sphi 0, %s28
    %s17 = sphi 0, %s24
    %s18 = sphi 0, %s16
    %s19 = sphi 0, %s17
    %s20 = sphi 0, %s18
    %s21 = sphi 0, %s19
    %s33 = sphi 0, %s35
    %s36 = sphi 0, %s33
    %s37 = sphi 0, %s36
    %s53 = sphi 0, %s37
    %s59 = sphi 0, %s61
    %s62 = sphi 0, %s59
    %s63 = sphi 0, %s62
    %s79 = sphi 0, %s63
    %s85 = sphi 0, %s87
    %s88 = sphi 0, %s85
    %s89 = sphi 0, %s88
    %s105 = sphi 0, %s89
    %s113 = sphi 0, %s115
    %s116 = sphi 0, %s113
    %s117 = sphi 0, %s116
    %s133 = sphi 0, %s117
  $region4: #{a_call__.13} parent=0 // loop_header_branch
    %12 = sbr.rel (%p10) target = $region8
  $region5: #{a_call__.13} parent=0 // loop_body
    %s14 = ssub.s32 %s9, 1
    %s15 = ssub.s32 %s9, 2
    %s22 = sadd.s32 1, %s17
    %p23 = scmp.ge.s32.totalorder %s22, 1
    %s24 = scalar_select %p23, 0, %s22
    %s25 = sadd.s32 1, %s16
    %s26 = scalar_select %p23, %s25, %s16
    %p27 = scmp.ge.s32.totalorder %s26, 2
    %s28 = scalar_select %p27, 0, %s26
    %s29 = ssub.s32 %s16, %s28
    %s30 = ssub.s32 %s17, %s24
    %s31 = sor.u32 %s29, %s30
    %p32 = scmp.eq.s32.totalorder %s31, 0
    %s34 = sadd.s32 %s33, 1
    %s35 = scalar_select %p32, %s33, %s34
    %p38 = pneg %p32
    %p39 = scmp.eq.s32.totalorder %s9, 1
    %p40 = por %p38, %p39
    %p41 = scmp.ne.s32.totalorder %s33, %s36
    %p42 = scmp.eq.s32.totalorder %s9, 0
    %p43 = por %p41, %p42
    %p44 = scmp.ne.s32.totalorder %s33, %s36
    %p45 = scmp.eq.s32.totalorder %s14, 1
    %p46 = por %p44, %p45
    %p47 = scmp.ne.s32.totalorder %s36, %s37
    %p48 = scmp.eq.s32.totalorder %s14, 0
    %p49 = por %p47, %p48
    %p50 = scmp.ne.s32.totalorder %s36, %s37
    %p51 = scmp.eq.s32.totalorder %s15, 1
    %p52 = por %p50, %p51
    %p54 = scmp.ne.s32.totalorder %s37, %s53
    %p55 = scmp.eq.s32.totalorder %s15, 0
    %p56 = por %p54, %p55
    %s57 = ssub.s32 %s16, %s28
    %p58 = scmp.eq.s32.totalorder %s57, 0
    %s60 = sadd.s32 %s59, 1
    %s61 = scalar_select %p58, %s59, %s60
    %p64 = pneg %p58
    %p65 = scmp.eq.s32.totalorder %s9, 1
    %p66 = por %p64, %p65
    %p67 = scmp.ne.s32.totalorder %s59, %s62
    %p68 = scmp.eq.s32.totalorder %s9, 0
    %p69 = por %p67, %p68
    %p70 = scmp.ne.s32.totalorder %s59, %s62
    %p71 = scmp.eq.s32.totalorder %s14, 1
    %p72 = por %p70, %p71
    %p73 = scmp.ne.s32.totalorder %s62, %s63
    %p74 = scmp.eq.s32.totalorder %s14, 0
    %p75 = por %p73, %p74
    %p76 = scmp.ne.s32.totalorder %s62, %s63
    %p77 = scmp.eq.s32.totalorder %s15, 1
    %p78 = por %p76, %p77
    %p80 = scmp.ne.s32.totalorder %s63, %s79
    %p81 = scmp.eq.s32.totalorder %s15, 0
    %p82 = por %p80, %p81
    %s83 = ssub.s32 %s16, %s28
    %p84 = scmp.eq.s32.totalorder %s83, 0
    %s86 = sadd.s32 %s85, 1
    %s87 = scalar_select %p84, %s85, %s86
    %p90 = pneg %p84
    %p91 = scmp.eq.s32.totalorder %s9, 1
    %p92 = por %p90, %p91
    %p93 = scmp.ne.s32.totalorder %s85, %s88
    %p94 = scmp.eq.s32.totalorder %s9, 0
    %p95 = por %p93, %p94
    %p96 = scmp.ne.s32.totalorder %s85, %s88
    %p97 = scmp.eq.s32.totalorder %s14, 1
    %p98 = por %p96, %p97
    %p99 = scmp.ne.s32.totalorder %s88, %s89
    %p100 = scmp.eq.s32.totalorder %s14, 0
    %p101 = por %p99, %p100
    %p102 = scmp.ne.s32.totalorder %s88, %s89
    %p103 = scmp.eq.s32.totalorder %s15, 1
    %p104 = por %p102, %p103
    %p106 = scmp.ne.s32.totalorder %s89, %s105
    %p107 = scmp.eq.s32.totalorder %s15, 0
    %p108 = por %p106, %p107
    %s109 = ssub.s32 %s16, %s28
    %s110 = ssub.s32 %s17, %s24
    %s111 = sor.u32 %s109, %s110
    %p112 = scmp.eq.s32.totalorder %s111, 0
    %s114 = sadd.s32 %s113, 1
    %s115 = scalar_select %p112, %s113, %s114
    %p118 = pneg %p112
    %p119 = scmp.eq.s32.totalorder %s9, 1
    %p120 = por %p118, %p119
    %p121 = scmp.ne.s32.totalorder %s113, %s116
    %p122 = scmp.eq.s32.totalorder %s9, 0
    %p123 = por %p121, %p122
    %p124 = scmp.ne.s32.totalorder %s113, %s116
    %p125 = scmp.eq.s32.totalorder %s14, 1
    %p126 = por %p124, %p125
    %p127 = scmp.ne.s32.totalorder %s116, %s117
    %p128 = scmp.eq.s32.totalorder %s14, 0
    %p129 = por %p127, %p128
    %p130 = scmp.ne.s32.totalorder %s116, %s117
    %p131 = scmp.eq.s32.totalorder %s15, 1
    %p132 = por %p130, %p131
    %p134 = scmp.ne.s32.totalorder %s117, %s133
    %p135 = scmp.eq.s32.totalorder %s15, 0
    %p136 = por %p134, %p135
    %p137 = scmp.le.s32.totalorder 1, %s9
    %p138 = scmp.lt.s32.totalorder %s9, 3
    %p139 = pnand %p137, %p138
    %p140 = pneg %p139
    // Predicated region
    $region9: #{a_call__.13} parent=5 // pred_check
      _
    $region10: #{a_call__.13} parent=5 // pred_check_branch
      %142 = sbr.rel (%p139) target = $region12
    $region11: #{a_call__.13} parent=5 // pred_region
      %s143 = ssub.s32 %s9, 1
    $region12: #{a_call__.13} parent=5 // pred_fallthru
      _
    %p144 = scmp.lt.s32.totalorder %s9, 2
    // Predicated region
    $region13: #{a_call__.13} parent=5 // pred_check
      %p145 = pneg %p144
    $region14: #{a_call__.13} parent=5 // pred_check_branch
      %147 = sbr.rel (%p145) target = $region16
    $region15: #{a_call__.13} parent=5 // pred_region
      // Predicated region
      $region17: #{a_call__.13} parent=15 // pred_check
        %p148 = pneg %p43
      $region18: #{a_call__.13} parent=15 // pred_check_branch
        %150 = sbr.rel (%p148) target = $region20
      $region19: #{a_call__.13} parent=15 // pred_region
        %s151 = smul.u32 8, %s17
        %p152 = scmp.lt.s32.totalorder %s16, 1
        %s153 = scalar_select %p152, %s16, 1
        %p154 = scmp.lt.s32.totalorder %s151, 7
        %s155 = scalar_select %p154, %s151, 7
        %s156 = smul.addr %s153, 8
        %s157 = sadd.s32 %s155, %s156
        %s158 = smul.addr %s157, 8
        %s159 = scalar_lea.vmem %s0, %s158
        %s160 = smul.u32 8, %s17
      $region20: #{a_call__.13} parent=15 // pred_fallthru
        _
      // Predicated region
      $region21: #{a_call__.13} parent=15 // pred_check
        %p161 = pneg %p69
      $region22: #{a_call__.13} parent=15 // pred_check_branch
        %163 = sbr.rel (%p161) target = $region24
      $region23: #{a_call__.13} parent=15 // pred_region
        %p164 = scmp.lt.s32.totalorder %s16, 1
        %s165 = scalar_select %p164, %s16, 1
        %s166 = scalar_lea.vmem %s1, %s165
      $region24: #{a_call__.13} parent=15 // pred_fallthru
        _
      // Predicated region
      $region25: #{a_call__.13} parent=15 // pred_check
        %p167 = pneg %p95
      $region26: #{a_call__.13} parent=15 // pred_check_branch
        %169 = sbr.rel (%p167) target = $region28
      $region27: #{a_call__.13} parent=15 // pred_region
        %p170 = scmp.lt.s32.totalorder %s16, 1
        %s171 = scalar_select %p170, %s16, 1
        %s172 = scalar_lea.vmem %s2, %s171
      $region28: #{a_call__.13} parent=15 // pred_fallthru
        _
    $region16: #{a_call__.13} parent=5 // pred_fallthru
      _
    %p173 = scmp.le.s32.totalorder 1, %s9
    %p174 = scmp.lt.s32.totalorder %s9, 3
    %p175 = pnand %p173, %p174
    %p176 = pneg %p175
    // Predicated region
    $region29: #{a_call__.13} parent=5 // pred_check
      _
    $region30: #{a_call__.13} parent=5 // pred_check_branch
      %178 = sbr.rel (%p175) target = $region32
    $region31: #{a_call__.13} parent=5 // pred_region
      %s179 = ssub.s32 %s9, 1
      %s180 = smul.u32 8, %s19
      %p181 = scmp.lt.s32.totalorder %s18, 1
      %s182 = scalar_select %p181, %s18, 1
      %p183 = scmp.lt.s32.totalorder %s180, 7
      %s184 = scalar_select %p183, %s180, 7
      %s185 = smul.addr %s182, 8
      %s186 = sadd.s32 %s184, %s185
      %s187 = smul.addr %s186, 8
      %s188 = scalar_lea.vmem %s0, %s187
      %p189 = pneg %p49
      %p190 = pneg %p46
      %p191 = scmp.lt.s32.totalorder %s18, 1
      %s192 = scalar_select %p191, %s18, 1
      %s193 = scalar_lea.vmem %s1, %s192
      %p194 = pneg %p75
      %p195 = pneg %p72
      %p196 = scmp.lt.s32.totalorder %s18, 1
      %s197 = scalar_select %p196, %s18, 1
      %s198 = scalar_lea.vmem %s2, %s197
      %p199 = pneg %p101
      %p200 = pneg %p98
      %p201 = pneg %p129
      %p202 = pneg %p126
      %s203 = smul.u32 8, %s19
      %p204 = scmp.lt.s32.totalorder %s18, 1
      %s205 = scalar_select %p204, %s18, 1
      %p206 = scmp.lt.s32.totalorder %s203, 7
      %s207 = scalar_select %p206, %s203, 7
      %s208 = smul.addr %s205, 8
      %s209 = sadd.s32 %s207, %s208
      %s210 = smul.addr %s209, 8
      %s211 = scalar_lea.vmem %s3, %s210
      %s212 = smul.u32 8, %s19
      %p213 = scmp.lt.s32.totalorder %s18, 1
      %s214 = scalar_select %p213, %s18, 1
      %p215 = scmp.lt.s32.totalorder %s212, 7
      %s216 = scalar_select %p215, %s212, 7
      %s217 = smul.addr %s214, 8
      %s218 = sadd.s32 %s216, %s217
      %s219 = smul.addr %s218, 8
      %s220 = scalar_lea.vmem %s0, %s219
      %s221 = smul.u32 8, %s19
      %p222 = scmp.lt.s32.totalorder %s18, 1
      %s223 = scalar_select %p222, %s18, 1
      %s224 = scalar_lea.vmem %s1, %s223
      %p225 = scmp.lt.s32.totalorder %s18, 1
      %s226 = scalar_select %p225, %s18, 1
      %s227 = scalar_lea.vmem %s2, %s226
      %s228 = smul.u32 8, %s19
      %p229 = scmp.lt.s32.totalorder %s18, 1
      %s230 = scalar_select %p229, %s18, 1
      %p231 = scmp.lt.s32.totalorder %s228, 7
      %s232 = scalar_select %p231, %s228, 7
      %s233 = smul.addr %s230, 8
      %s234 = sadd.s32 %s232, %s233
      %s235 = smul.addr %s234, 8
      %s236 = scalar_lea.vmem %s3, %s235
      %s237 = smul.u32 8, %s19
      %v238 = vld [vmem:[%s220] sm:$0xff]
      %v239 = vld [vmem:[%s220 + $0x8] sm:$0xff]
      %v240 = vld [vmem:[%s220 + $0x10] sm:$0xff]
      %v241 = vld [vmem:[%s220 + $0x18] sm:$0xff]
      %v242 = vld [vmem:[%s220 + $0x20] sm:$0xff]
      %v243 = vld [vmem:[%s220 + $0x28] sm:$0xff]
      %v244 = vld [vmem:[%s220 + $0x30] sm:$0xff]
      %v245 = vld [vmem:[%s220 + $0x38] sm:$0xff]
      %v246 = vld [vmem:[%s224] sm:$0x1]
      %v248 = vlaneseq
      %v249 = vshrl.u32 %v248, 7
      %v250 = vsub.s32 0, %v249
      %v251 = vrot.slane %v246, %v250
      %v253 = vsub.f32 %v238, %v251
      %v254 = vsub.f32 %v239, %v251
      %v255 = vsub.f32 %v240, %v251
      %v256 = vsub.f32 %v241, %v251
      %v257 = vsub.f32 %v242, %v251
      %v258 = vsub.f32 %v243, %v251
      %v259 = vsub.f32 %v244, %v251
      %v260 = vsub.f32 %v245, %v251
      %v261 = vld [vmem:[%s227] sm:$0x1]
      %v263 = vlaneseq
      %v264 = vshrl.u32 %v263, 7
      %v265 = vsub.s32 0, %v264
      %v266 = vrot.slane %v261, %v265
      %v268 = vmul.f32 %v253, %v266
      %v269 = vmul.f32 %v254, %v266
      %v270 = vmul.f32 %v255, %v266
      %v271 = vmul.f32 %v256, %v266
      %v272 = vmul.f32 %v257, %v266
      %v273 = vmul.f32 %v258, %v266
      %v274 = vmul.f32 %v259, %v266
      %v275 = vmul.f32 %v260, %v266
      %v276 = vmax.f32 %v268, 0.0
      %v277 = vmax.f32 %v269, 0.0
      %v278 = vmax.f32 %v270, 0.0
      %v279 = vmax.f32 %v271, 0.0
      %v280 = vmax.f32 %v272, 0.0
      %v281 = vmax.f32 %v273, 0.0
      %v282 = vmax.f32 %v274, 0.0
      %v283 = vmax.f32 %v275, 0.0
      %vm284 = vcmask 64512
      %285 = vst.msk [vmem:[%s236] sm:$0xff] %vm284, %v276
      %286 = vst.msk [vmem:[%s236 + $0x8] sm:$0xff] %vm284, %v277
      %287 = vst.msk [vmem:[%s236 + $0x10] sm:$0xff] %vm284, %v278
      %288 = vst.msk [vmem:[%s236 + $0x18] sm:$0xff] %vm284, %v279
      %289 = vst.msk [vmem:[%s236 + $0x20] sm:$0xff] %vm284, %v280
      %290 = vst.msk [vmem:[%s236 + $0x28] sm:$0xff] %vm284, %v281
      %291 = vst.msk [vmem:[%s236 + $0x30] sm:$0xff] %vm284, %v282
      %292 = vst.msk [vmem:[%s236 + $0x38] sm:$0xff] %vm284, %v283
      %s293 = smul.u32 8, %s19
      %p294 = scmp.lt.s32.totalorder %s18, 1
      %s295 = scalar_select %p294, %s18, 1
      %p296 = scmp.lt.s32.totalorder %s293, 7
      %s297 = scalar_select %p296, %s293, 7
      %s298 = smul.addr %s295, 8
      %s299 = sadd.s32 %s297, %s298
      %s300 = smul.addr %s299, 8
      %s301 = scalar_lea.vmem %s3, %s300
      // Predicated region
      $region33: #{a_call__.13} parent=31 // pred_check
        %p302 = pneg %p126
      $region34: #{a_call__.13} parent=31 // pred_check_branch
        %304 = sbr.rel (%p302) target = $region36
      $region35: #{a_call__.13} parent=31 // pred_region
        %s305 = smul.u32 8, %s19
      $region36: #{a_call__.13} parent=31 // pred_fallthru
        _
    $region32: #{a_call__.13} parent=5 // pred_fallthru
      _
    %p306 = scmp.le.s32.totalorder 2, %s9
    // Predicated region
    $region37: #{a_call__.13} parent=5 // pred_check
      %p307 = pneg %p306
    $region38: #{a_call__.13} parent=5 // pred_check_branch
      %309 = sbr.rel (%p307) target = $region40
    $region39: #{a_call__.13} parent=5 // pred_region
      %s310 = ssub.s32 %s9, 2
      // Predicated region
      $region41: #{a_call__.13} parent=39 // pred_check
        %p311 = pneg %p132
      $region42: #{a_call__.13} parent=39 // pred_check_branch
        %313 = sbr.rel (%p311) target = $region44
      $region43: #{a_call__.13} parent=39 // pred_region
        %s314 = smul.u32 8, %s21
        %p315 = scmp.lt.s32.totalorder %s20, 1
        %s316 = scalar_select %p315, %s20, 1
        %p317 = scmp.lt.s32.totalorder %s314, 7
        %s318 = scalar_select %p317, %s314, 7
        %s319 = smul.addr %s316, 8
        %s320 = sadd.s32 %s318, %s319
        %s321 = smul.addr %s320, 8
        %s322 = scalar_lea.vmem %s3, %s321
      $region44: #{a_call__.13} parent=39 // pred_fallthru
        _
    $region40: #{a_call__.13} parent=5 // pred_fallthru
      _
  $region6: #{a_call__.13} parent=0 // loop_footer
    %s13 = sadd.s32 1, %s9
  $region7: #{a_call__.13} parent=0 // loop_footer_branch
    %8 = sbr.rel target = $region3
  $region8: #{a_call__.13} parent=0 // loop_exit
    _

// kernel: mul.31
$region0: #{mul.31}
  #allocation0 [shape = 's32[1]{0}', space=sflag, size = 0x4, scoped, tag = 'scoped memory for mul.31']
  %s0 = inlined_call_operand.vmem [shape: f32[2,1,1,3], index: 0, kind: input, shape index: {}, may-alias: {0,1}]
  %s1 = inlined_call_operand.vmem [shape: f32[2,1,1,3], index: 1, kind: input, shape index: {}, may-alias: {0,1}]
  %s2 = inlined_call_operand.vmem [shape: f32[2,1,1,3], index: 2, kind: output, shape index: {}]
  %v3 = vld [vmem:[%s0] sm:$0x3]
  %v4 = vld [vmem:[%s1] sm:$0x3]
  %5 = xla_tuple %v3, %v4
  %6 = xla_tuple %5
  %v7 = vmul.f32 %v3, %v4
  %8 = xla_tuple %v7
  %9 = vst [vmem:[%s2] sm:$0x3] %v7

// kernel: a_call__.12
$region0: #{a_call__.12}
  #allocation0 [shape = 'u32[]', space=smem, size = 0x4, offset = 0x4, fixed_abs, tag = 'smem constant byte address 0x4 - core index']
  #allocation1 [shape = 'u32[144,128]{1,0:T(1,128)}', space=vmem, size = 0x12000, scoped, tag = 'internal scratch']
  %s0 = inlined_call_operand.vmem [shape: f32[2,4,5,16], index: 0, kind: input, shape index: {}]
  %s1 = inlined_call_operand.vmem [shape: f32[2,4,5,16], index: 1, kind: input, shape index: {}]
  %s2 = inlined_call_operand.vmem [shape: f32[144,8], index: 2, kind: input, shape index: {}]
  %s3 = inlined_call_operand.vmem [shape: f32[2,8,8,8], index: 3, kind: output, shape index: {0}]
  %s4 = inlined_call_operand.vmem [shape: f32[2,1,2,8], index: 4, kind: output, shape index: {1}]
  %5 = xla_tuple %s3, %s4
  %s6 = sld [smem:[#allocation0]]
  $region53: #{a_call__.12} parent=0
    _
  %s8 = ssub.s32 1, %s6
  %s9 = scalar_select 0, %s8, %s6
  loop: start=0, step=1, limit=4
  $region2: #{a_call__.12} parent=0 // loop_pre_header
    _
  $region3: #{a_call__.12} parent=0 // loop_header
    %s11 = sphi 0, %s15
    %p12 = scmp.ge.s32.totalorder %s11, 4
    %s18 = sphi 0, %s30
    %s19 = sphi 0, %s26
    %s20 = sphi 0, %s18
    %s21 = sphi 0, %s19
    %s22 = sphi 0, %s20
    %s23 = sphi 0, %s21
    %s35 = sphi 0, %s37
    %s38 = sphi 0, %s35
    %s39 = sphi 0, %s38
    %s55 = sphi 0, %s39
    %s63 = sphi 0, %s65
    %s66 = sphi 0, %s63
    %s67 = sphi 0, %s66
    %s83 = sphi 0, %s67
    %s87 = sphi 0, %s87
    %s89 = sphi 0, %s87
    %s90 = sphi 0, %s89
    %s104 = sphi 0, %s90
    %s112 = sphi 0, %s114
    %s115 = sphi 0, %s112
    %s116 = sphi 0, %s115
    %s132 = sphi 0, %s116
    %s140 = sphi 0, %s142
    %s143 = sphi 0, %s140
    %s144 = sphi 0, %s143
    %s160 = sphi 0, %s144
  $region4: #{a_call__.12} parent=0 // loop_header_branch
    %14 = sbr.rel (%p12) target = $region8
  $region5: #{a_call__.12} parent=0 // loop_body
    %s16 = ssub.s32 %s11, 1
    %s17 = ssub.s32 %s11, 2
    %s24 = sadd.s32 1, %s19
    %p25 = scmp.ge.s32.totalorder %s24, 1
    %s26 = scalar_select %p25, 0, %s24
    %s27 = sadd.s32 1, %s18
    %s28 = scalar_select %p25, %s27, %s18
    %p29 = scmp.ge.s32.totalorder %s28, 2
    %s30 = scalar_select %p29, 0, %s28
    %s31 = ssub.s32 %s18, %s30
    %s32 = ssub.s32 %s19, %s26
    %s33 = sor.u32 %s31, %s32
    %p34 = scmp.eq.s32.totalorder %s33, 0
    %s36 = sadd.s32 %s35, 1
    %s37 = scalar_select %p34, %s35, %s36
    %p40 = pneg %p34
    %p41 = scmp.eq.s32.totalorder %s11, 1
    %p42 = por %p40, %p41
    %p43 = scmp.ne.s32.totalorder %s35, %s38
    %p44 = scmp.eq.s32.totalorder %s11, 0
    %p45 = por %p43, %p44
    %p46 = scmp.ne.s32.totalorder %s35, %s38
    %p47 = scmp.eq.s32.totalorder %s16, 1
    %p48 = por %p46, %p47
    %p49 = scmp.ne.s32.totalorder %s38, %s39
    %p50 = scmp.eq.s32.totalorder %s16, 0
    %p51 = por %p49, %p50
    %p52 = scmp.ne.s32.totalorder %s38, %s39
    %p53 = scmp.eq.s32.totalorder %s17, 1
    %p54 = por %p52, %p53
    %p56 = scmp.ne.s32.totalorder %s39, %s55
    %p57 = scmp.eq.s32.totalorder %s17, 0
    %p58 = por %p56, %p57
    %s59 = ssub.s32 %s18, %s30
    %s60 = ssub.s32 %s19, %s26
    %s61 = sor.u32 %s59, %s60
    %p62 = scmp.eq.s32.totalorder %s61, 0
    %s64 = sadd.s32 %s63, 1
    %s65 = scalar_select %p62, %s63, %s64
    %p68 = pneg %p62
    %p69 = scmp.eq.s32.totalorder %s11, 1
    %p70 = por %p68, %p69
    %p71 = scmp.ne.s32.totalorder %s63, %s66
    %p72 = scmp.eq.s32.totalorder %s11, 0
    %p73 = por %p71, %p72
    %p74 = scmp.ne.s32.totalorder %s63, %s66
    %p75 = scmp.eq.s32.totalorder %s16, 1
    %p76 = por %p74, %p75
    %p77 = scmp.ne.s32.totalorder %s66, %s67
    %p78 = scmp.eq.s32.totalorder %s16, 0
    %p79 = por %p77, %p78
    %p80 = scmp.ne.s32.totalorder %s66, %s67
    %p81 = scmp.eq.s32.totalorder %s17, 1
    %p82 = por %p80, %p81
    %p84 = scmp.ne.s32.totalorder %s67, %s83
    %p85 = scmp.eq.s32.totalorder %s17, 0
    %p86 = por %p84, %p85
    %s88 = sadd.s32 %s87, 1
    %p91 = scmp.eq.s32.totalorder %s11, 1
    %p92 = scmp.ne.s32.totalorder %s87, %s89
    %p93 = scmp.eq.s32.totalorder %s11, 0
    %p94 = por %p92, %p93
    %p95 = scmp.ne.s32.totalorder %s87, %s89
    %p96 = scmp.eq.s32.totalorder %s16, 1
    %p97 = por %p95, %p96
    %p98 = scmp.ne.s32.totalorder %s89, %s90
    %p99 = scmp.eq.s32.totalorder %s16, 0
    %p100 = por %p98, %p99
    %p101 = scmp.ne.s32.totalorder %s89, %s90
    %p102 = scmp.eq.s32.totalorder %s17, 1
    %p103 = por %p101, %p102
    %p105 = scmp.ne.s32.totalorder %s90, %s104
    %p106 = scmp.eq.s32.totalorder %s17, 0
    %p107 = por %p105, %p106
    %s108 = ssub.s32 %s18, %s30
    %s109 = ssub.s32 %s19, %s26
    %s110 = sor.u32 %s108, %s109
    %p111 = scmp.eq.s32.totalorder %s110, 0
    %s113 = sadd.s32 %s112, 1
    %s114 = scalar_select %p111, %s112, %s113
    %p117 = pneg %p111
    %p118 = scmp.eq.s32.totalorder %s11, 1
    %p119 = por %p117, %p118
    %p120 = scmp.ne.s32.totalorder %s112, %s115
    %p121 = scmp.eq.s32.totalorder %s11, 0
    %p122 = por %p120, %p121
    %p123 = scmp.ne.s32.totalorder %s112, %s115
    %p124 = scmp.eq.s32.totalorder %s16, 1
    %p125 = por %p123, %p124
    %p126 = scmp.ne.s32.totalorder %s115, %s116
    %p127 = scmp.eq.s32.totalorder %s16, 0
    %p128 = por %p126, %p127
    %p129 = scmp.ne.s32.totalorder %s115, %s116
    %p130 = scmp.eq.s32.totalorder %s17, 1
    %p131 = por %p129, %p130
    %p133 = scmp.ne.s32.totalorder %s116, %s132
    %p134 = scmp.eq.s32.totalorder %s17, 0
    %p135 = por %p133, %p134
    %s136 = ssub.s32 %s18, %s30
    %s137 = ssub.s32 %s19, %s26
    %s138 = sor.u32 %s136, %s137
    %p139 = scmp.eq.s32.totalorder %s138, 0
    %s141 = sadd.s32 %s140, 1
    %s142 = scalar_select %p139, %s140, %s141
    %p145 = pneg %p139
    %p146 = scmp.eq.s32.totalorder %s11, 1
    %p147 = por %p145, %p146
    %p148 = scmp.ne.s32.totalorder %s140, %s143
    %p149 = scmp.eq.s32.totalorder %s11, 0
    %p150 = por %p148, %p149
    %p151 = scmp.ne.s32.totalorder %s140, %s143
    %p152 = scmp.eq.s32.totalorder %s16, 1
    %p153 = por %p151, %p152
    %p154 = scmp.ne.s32.totalorder %s143, %s144
    %p155 = scmp.eq.s32.totalorder %s16, 0
    %p156 = por %p154, %p155
    %p157 = scmp.ne.s32.totalorder %s143, %s144
    %p158 = scmp.eq.s32.totalorder %s17, 1
    %p159 = por %p157, %p158
    %p161 = scmp.ne.s32.totalorder %s144, %s160
    %p162 = scmp.eq.s32.totalorder %s17, 0
    %p163 = por %p161, %p162
    %p164 = scmp.le.s32.totalorder 1, %s11
    %p165 = scmp.lt.s32.totalorder %s11, 3
    %p166 = pnand %p164, %p165
    %p167 = pneg %p166
    // Predicated region
    $region9: #{a_call__.12} parent=5 // pred_check
      _
    $region10: #{a_call__.12} parent=5 // pred_check_branch
      %169 = sbr.rel (%p166) target = $region12
    $region11: #{a_call__.12} parent=5 // pred_region
      %s170 = ssub.s32 %s11, 1
      // Predicated region
      $region13: #{a_call__.12} parent=11 // pred_check
        %p171 = pneg %p100
      $region14: #{a_call__.12} parent=11 // pred_check_branch
        %173 = sbr.rel (%p171) target = $region16
      $region15: #{a_call__.12} parent=11 // pred_region
        _
      $region16: #{a_call__.12} parent=11 // pred_fallthru
        _
    $region12: #{a_call__.12} parent=5 // pred_fallthru
      _
    %p174 = scmp.lt.s32.totalorder %s11, 2
    // Predicated region
    $region17: #{a_call__.12} parent=5 // pred_check
      %p175 = pneg %p174
    $region18: #{a_call__.12} parent=5 // pred_check_branch
      %177 = sbr.rel (%p175) target = $region20
    $region19: #{a_call__.12} parent=5 // pred_region
      // Predicated region
      $region21: #{a_call__.12} parent=19 // pred_check
        %p178 = pneg %p45
      $region22: #{a_call__.12} parent=19 // pred_check_branch
        %180 = sbr.rel (%p178) target = $region24
      $region23: #{a_call__.12} parent=19 // pred_region
        %s181 = smul.u32 4, %s19
        %p182 = scmp.lt.s32.totalorder %s18, 1
        %s183 = scalar_select %p182, %s18, 1
        %p184 = scmp.lt.s32.totalorder %s181, 3
        %s185 = scalar_select %p184, %s181, 3
        %s186 = smul.addr %s183, 4
        %s187 = sadd.s32 %s185, %s186
        %s188 = smul.addr %s187, 8
        %s189 = scalar_lea.vmem %s0, %s188
        %s190 = smul.u32 4, %s19
      $region24: #{a_call__.12} parent=19 // pred_fallthru
        _
      // Predicated region
      $region25: #{a_call__.12} parent=19 // pred_check
        %p191 = pneg %p73
      $region26: #{a_call__.12} parent=19 // pred_check_branch
        %193 = sbr.rel (%p191) target = $region28
      $region27: #{a_call__.12} parent=19 // pred_region
        %s194 = smul.u32 4, %s19
        %p195 = scmp.lt.s32.totalorder %s18, 1
        %s196 = scalar_select %p195, %s18, 1
        %p197 = scmp.lt.s32.totalorder %s194, 3
        %s198 = scalar_select %p197, %s194, 3
        %s199 = smul.addr %s196, 4
        %s200 = sadd.s32 %s198, %s199
        %s201 = smul.addr %s200, 8
        %s202 = scalar_lea.vmem %s1, %s201
        %s203 = smul.u32 4, %s19
      $region28: #{a_call__.12} parent=19 // pred_fallthru
        _
    $region20: #{a_call__.12} parent=5 // pred_fallthru
      _
    %p204 = scmp.le.s32.totalorder 1, %s11
    %p205 = scmp.lt.s32.totalorder %s11, 3
    %p206 = pnand %p204, %p205
    %p207 = pneg %p206
    // Predicated region
    $region29: #{a_call__.12} parent=5 // pred_check
      _
    $region30: #{a_call__.12} parent=5 // pred_check_branch
      %209 = sbr.rel (%p206) target = $region32
    $region31: #{a_call__.12} parent=5 // pred_region
      %s210 = ssub.s32 %s11, 1
      %s211 = smul.u32 4, %s21
      %p212 = scmp.lt.s32.totalorder %s20, 1
      %s213 = scalar_select %p212, %s20, 1
      %p214 = scmp.lt.s32.totalorder %s211, 3
      %s215 = scalar_select %p214, %s211, 3
      %s216 = smul.addr %s213, 4
      %s217 = sadd.s32 %s215, %s216
      %s218 = smul.addr %s217, 8
      %s219 = scalar_lea.vmem %s0, %s218
      %p220 = pneg %p51
      %p221 = pneg %p48
      %s222 = smul.u32 4, %s21
      %p223 = scmp.lt.s32.totalorder %s20, 1
      %s224 = scalar_select %p223, %s20, 1
      %p225 = scmp.lt.s32.totalorder %s222, 3
      %s226 = scalar_select %p225, %s222, 3
      %s227 = smul.addr %s224, 4
      %s228 = sadd.s32 %s226, %s227
      %s229 = smul.addr %s228, 8
      %s230 = scalar_lea.vmem %s1, %s229
      %p231 = pneg %p79
      %p232 = pneg %p76
      %p233 = pneg %p100
      %p234 = pneg %p97
      %p235 = pneg %p128
      %p236 = pneg %p125
      %s237 = smul.u32 8, %s21
      %p238 = scmp.lt.s32.totalorder %s20, 1
      %s239 = scalar_select %p238, %s20, 1
      %p240 = scmp.lt.s32.totalorder %s237, 7
      %s241 = scalar_select %p240, %s237, 7
      %s242 = smul.addr %s239, 8
      %s243 = sadd.s32 %s241, %s242
      %s244 = smul.addr %s243, 8
      %s245 = scalar_lea.vmem %s3, %s244
      %p246 = pneg %p156
      %p247 = pneg %p153
      %p248 = scmp.lt.s32.totalorder %s20, 1
      %s249 = scalar_select %p248, %s20, 1
      %p250 = scmp.lt.s32.totalorder %s21, 0
      %s251 = scalar_select %p250, %s21, 0
      %s252 = sadd.s32 %s251, %s249
      %s253 = smul.addr %s252, 2
      %s254 = scalar_lea.vmem %s4, %s253
      %s255 = smul.u32 4, %s21
      %p256 = scmp.lt.s32.totalorder %s20, 1
      %s257 = scalar_select %p256, %s20, 1
      %p258 = scmp.lt.s32.totalorder %s255, 3
      %s259 = scalar_select %p258, %s255, 3
      %s260 = smul.addr %s257, 4
      %s261 = sadd.s32 %s259, %s260
      %s262 = smul.addr %s261, 8
      %s263 = scalar_lea.vmem %s0, %s262
      %s264 = smul.u32 4, %s21
      %s265 = smul.u32 4, %s21
      %p266 = scmp.lt.s32.totalorder %s20, 1
      %s267 = scalar_select %p266, %s20, 1
      %p268 = scmp.lt.s32.totalorder %s265, 3
      %s269 = scalar_select %p268, %s265, 3
      %s270 = smul.addr %s267, 4
      %s271 = sadd.s32 %s269, %s270
      %s272 = smul.addr %s271, 8
      %s273 = scalar_lea.vmem %s1, %s272
      %s274 = smul.u32 4, %s21
      %s275 = smul.u32 8, %s21
      %p276 = scmp.lt.s32.totalorder %s20, 1
      %s277 = scalar_select %p276, %s20, 1
      %p278 = scmp.lt.s32.totalorder %s275, 7
      %s279 = scalar_select %p278, %s275, 7
      %s280 = smul.addr %s277, 8
      %s281 = sadd.s32 %s279, %s280
      %s282 = smul.addr %s281, 8
      %s283 = scalar_lea.vmem %s3, %s282
      %s284 = smul.u32 8, %s21
      %p285 = scmp.lt.s32.totalorder %s20, 1
      %s286 = scalar_select %p285, %s20, 1
      %p287 = scmp.lt.s32.totalorder %s21, 0
      %s288 = scalar_select %p287, %s21, 0
      %s289 = sadd.s32 %s288, %s286
      %s290 = smul.addr %s289, 2
      %s291 = scalar_lea.vmem %s4, %s290
      %v292 = vld [vmem:[%s263] sm:$0x1f]
      %v293 = vld [vmem:[%s263 + $0x8] sm:$0x1f]
      %v294 = vld [vmem:[%s263 + $0x10] sm:$0x1f]
      %v295 = vld [vmem:[%s263 + $0x18] sm:$0x1f]
      %v296 = vld [vmem:[%s273] sm:$0x1f]
      %v297 = vld [vmem:[%s273 + $0x8] sm:$0x1f]
      %v298 = vld [vmem:[%s273 + $0x10] sm:$0x1f]
      %v299 = vld [vmem:[%s273 + $0x18] sm:$0x1f]
      %v300 = vld [vmem:[%s2] sm:$0xff]
      %v301 = vld [vmem:[%s2 + $0x8] sm:$0xff]
      %v302 = vld [vmem:[%s2 + $0x10] sm:$0xff]
      %v303 = vld [vmem:[%s2 + $0x18] sm:$0xff]
      %v304 = vld [vmem:[%s2 + $0x20] sm:$0xff]
      %v305 = vld [vmem:[%s2 + $0x28] sm:$0xff]
      %v306 = vld [vmem:[%s2 + $0x30] sm:$0xff]
      %v307 = vld [vmem:[%s2 + $0x38] sm:$0xff]
      %v308 = vld [vmem:[%s2 + $0x40] sm:$0xff]
      %v309 = vld [vmem:[%s2 + $0x48] sm:$0xff]
      %v310 = vld [vmem:[%s2 + $0x50] sm:$0xff]
      %v311 = vld [vmem:[%s2 + $0x58] sm:$0xff]
      %v312 = vld [vmem:[%s2 + $0x60] sm:$0xff]
      %v313 = vld [vmem:[%s2 + $0x68] sm:$0xff]
      %v314 = vld [vmem:[%s2 + $0x70] sm:$0xff]
      %v315 = vld [vmem:[%s2 + $0x78] sm:$0xff]
      %v316 = vld [vmem:[%s2 + $0x80] sm:$0xff]
      %v317 = vld [vmem:[%s2 + $0x88] sm:$0xff]
      %v322 = vcombine.high %v292, %v292
      %v323 = vcombine.high %v293, %v293
      %v324 = vcombine.high %v294, %v294
      %v325 = vcombine.high %v295, %v295
      %vm326 = vcmask 1042432
      %vm327 = vcmask 1046532
      %vm328 = vmor %vm326, %vm327
      %v329 = vrot.slane %v292, 5
      %v330 = vrot.slane %v329, 4
      %v331 = vrot.slane %v322, 5
      %v332 = vsel %vm328, %v330, %v331
      %v333 = vrot.slane %v293, 5
      %v334 = vrot.slane %v333, 4
      %v335 = vrot.slane %v323, 5
      %v336 = vsel %vm328, %v334, %v335
      %v337 = vrot.slane %v294, 5
      %v338 = vrot.slane %v337, 4
      %v339 = vrot.slane %v324, 5
      %v340 = vsel %vm328, %v338, %v339
      %v341 = vrot.slane %v295, 5
      %v342 = vrot.slane %v341, 4
      %v343 = vrot.slane %v325, 5
      %v344 = vsel %vm328, %v342, %v343
      %v349 = vcombine.high %v296, %v296
      %v350 = vcombine.high %v297, %v297
      %v351 = vcombine.high %v298, %v298
      %v352 = vcombine.high %v299, %v299
      %v353 = vrot.slane %v296, 5
      %v354 = vrot.slane %v353, 4
      %v355 = vrot.slane %v349, 5
      %v356 = vsel %vm328, %v354, %v355
      %v357 = vrot.slane %v297, 5
      %v358 = vrot.slane %v357, 4
      %v359 = vrot.slane %v350, 5
      %v360 = vsel %vm328, %v358, %v359
      %v361 = vrot.slane %v298, 5
      %v362 = vrot.slane %v361, 4
      %v363 = vrot.slane %v351, 5
      %v364 = vsel %vm328, %v362, %v363
      %v365 = vrot.slane %v299, 5
      %v366 = vrot.slane %v365, 4
      %v367 = vrot.slane %v352, 5
      %v368 = vsel %vm328, %v366, %v367
      %v369 = vcombine.low %v296, %v297
      %v370 = vcombine.low %v298, %v299
      %v373 = vcombine.low %v292, %v293
      %v374 = vcombine.low %v294, %v295
      %375 = vrot.lane.b32.xlu0 %v373, 16
      %v376 = vpop.permute.xlu0 %375
      %377 = vrot.lane.b32.xlu0 %v374, 16
      %v378 = vpop.permute.xlu0 %377
      %v381 = vcombine.low %v332, %v336
      %v382 = vcombine.low %v340, %v344
      %383 = vrot.lane.b32.xlu0 %v381, 32
      %v384 = vpop.permute.xlu0 %383
      %385 = vrot.lane.b32.xlu0 %v382, 32
      %v386 = vpop.permute.xlu0 %385
      %v389 = vcombine.low %v356, %v360
      %v390 = vcombine.low %v364, %v368
      %391 = vrot.lane.b32.xlu0 %v389, 48
      %v392 = vpop.permute.xlu0 %391
      %393 = vrot.lane.b32.xlu0 %v390, 48
      %v394 = vpop.permute.xlu0 %393
      %vm397 = vcmask 130048
      %v398 = vsel %vm397, %v369, %v376
      %v399 = vsel %vm397, %v370, %v378
      %vm400 = vcmask 261120
      %v401 = vsel %vm400, %v398, %v384
      %v402 = vsel %vm400, %v399, %v386
      %vm403 = vcmask 392192
      %v404 = vsel %vm403, %v401, %v392
      %v405 = vsel %vm403, %v402, %v394
      %v406 = vsel %vm397, %v373, 0
      %v408 = vsel %vm397, %v374, 0
      %410 = vmatprep.subr.mxu0 0.0
      %411 = vmatpush1.msra.mxu0 0.0
      %412 = vmatprep.subr.mxu0 0.0
      %413 = vmatpush1.msra.mxu0 0.0
      %414 = vmatprep.subr.mxu0 0.0
      %415 = vmatpush1.msra.mxu0 0.0
      %416 = vmatprep.subr.mxu0 0.0
      %417 = vmatpush1.msra.mxu0 0.0
      %418 = vmatprep.subr.mxu0 0.0
      %419 = vmatpush1.msra.mxu0 0.0
      %420 = vmatprep.subr.mxu0 0.0
      %421 = vmatpush1.msra.mxu0 0.0
      %422 = vmatprep.subr.mxu0 0.0
      %423 = vmatpush1.msra.mxu0 0.0
      %424 = vmatprep.subr.mxu0 0.0
      %425 = vmatpush1.msra.mxu0 0.0
      %426 = vmatprep.subr.mxu0 0.0
      %427 = vmatpush1.msra.mxu0 0.0
      %428 = vmatprep.subr.mxu0 0.0
      %429 = vmatpush1.msra.mxu0 0.0
      %430 = vmatprep.subr.mxu0 0.0
      %431 = vmatpush1.msra.mxu0 0.0
      %432 = vmatprep.subr.mxu0 0.0
      %433 = vmatpush1.msra.mxu0 0.0
      %434 = vmatprep.subr.mxu0 0.0
      %435 = vmatpush1.msra.mxu0 0.0
      %436 = vmatprep.subr.mxu0 0.0
      %437 = vmatpush1.msra.mxu0 0.0
      %438 = vmatprep.subr.mxu0 0.0
      %439 = vmatpush1.msra.mxu0 %v301
      %440 = vmatprep.subr.mxu0 0.0
      %441 = vmatpush1.msra.mxu0 %v300
      %442 = vmatprep.subr.mxu0 0.0
      %443 = vmatpush2.msra.mxu0 0.0
      %444 = vmatprep.subr.mxu0 0.0
      %445 = vmatpush2.msra.mxu0 0.0
      %446 = vmatprep.subr.mxu0 0.0
      %447 = vmatpush2.msra.mxu0 0.0
      %448 = vmatprep.subr.mxu0 0.0
      %449 = vmatpush2.msra.mxu0 0.0
      %450 = vmatprep.subr.mxu0 0.0
      %451 = vmatpush2.msra.mxu0 0.0
      %452 = vmatprep.subr.mxu0 0.0
      %453 = vmatpush2.msra.mxu0 0.0
      %454 = vmatprep.subr.mxu0 0.0
      %455 = vmatpush2.msra.mxu0 0.0
      %456 = vmatprep.subr.mxu0 0.0
      %457 = vmatpush2.msra.mxu0 0.0
      %458 = vmatprep.subr.mxu0 0.0
      %459 = vmatpush2.msra.mxu0 0.0
      %460 = vmatprep.subr.mxu0 0.0
      %461 = vmatpush2.msra.mxu0 0.0
      %462 = vmatprep.subr.mxu0 0.0
      %463 = vmatpush2.msra.mxu0 0.0
      %464 = vmatprep.subr.mxu0 0.0
      %465 = vmatpush2.msra.mxu0 0.0
      %466 = vmatprep.subr.mxu0 0.0
      %467 = vmatpush2.msra.mxu0 0.0
      %468 = vmatprep.subr.mxu0 0.0
      %469 = vmatpush2.msra.mxu0 0.0
      %470 = vmatprep.subr.mxu0 0.0
      %471 = vmatpush2.msra.mxu0 0.0
      %472 = vmatprep.subr.mxu0 0.0
      %473 = vmatpush2.msra.mxu0 0.0
      %474 = vmatprep.mubr.f32.mxu0 0.0
      %475 = vmatmul.mubr.f32.gmra.mxu0 %v406
      %v476 = vpop.f32.mrf.mxu0
      %v477 = vadd.f32 0.0, %v476
      %v478 = vpop.f32.mrf.mxu0
      %479 = vmatprep.mubr.f32.mxu0 0.0
      %480 = vmatmul.mubr.f32.gmra.mxu0 %v408
      %v481 = vpop.f32.mrf.mxu0
      %v482 = vadd.f32 0.0, %v481
      %v483 = vpop.f32.mrf.mxu0
      %484 = vdwg.mxu0
      %v486 = vsel %vm400, %v404, 0
      %v489 = vsel %vm400, %v405, 0
      %491 = vmatprep.subr.mxu0 0.0
      %492 = vmatpush1.msra.mxu0 0.0
      %493 = vmatprep.subr.mxu0 0.0
      %494 = vmatpush1.msra.mxu0 0.0
      %495 = vmatprep.subr.mxu0 0.0
      %496 = vmatpush1.msra.mxu0 0.0
      %497 = vmatprep.subr.mxu0 0.0
      %498 = vmatpush1.msra.mxu0 0.0
      %499 = vmatprep.subr.mxu0 0.0
      %500 = vmatpush1.msra.mxu0 0.0
      %501 = vmatprep.subr.mxu0 0.0
      %502 = vmatpush1.msra.mxu0 0.0
      %503 = vmatprep.subr.mxu0 0.0
      %504 = vmatpush1.msra.mxu0 0.0
      %505 = vmatprep.subr.mxu0 0.0
      %506 = vmatpush1.msra.mxu0 0.0
      %507 = vmatprep.subr.mxu0 0.0
      %508 = vmatpush1.msra.mxu0 0.0
      %509 = vmatprep.subr.mxu0 0.0
      %510 = vmatpush1.msra.mxu0 0.0
      %511 = vmatprep.subr.mxu0 0.0
      %512 = vmatpush1.msra.mxu0 0.0
      %513 = vmatprep.subr.mxu0 0.0
      %514 = vmatpush1.msra.mxu0 0.0
      %515 = vmatprep.subr.mxu0 0.0
      %516 = vmatpush1.msra.mxu0 %v305
      %517 = vmatprep.subr.mxu0 0.0
      %518 = vmatpush1.msra.mxu0 %v304
      %519 = vmatprep.subr.mxu0 0.0
      %520 = vmatpush1.msra.mxu0 %v303
      %521 = vmatprep.subr.mxu0 0.0
      %522 = vmatpush1.msra.mxu0 %v302
      %523 = vmatprep.subr.mxu0 0.0
      %524 = vmatpush2.msra.mxu0 0.0
      %525 = vmatprep.subr.mxu0 0.0
      %526 = vmatpush2.msra.mxu0 0.0
      %527 = vmatprep.subr.mxu0 0.0
      %528 = vmatpush2.msra.mxu0 0.0
      %529 = vmatprep.subr.mxu0 0.0
      %530 = vmatpush2.msra.mxu0 0.0
      %531 = vmatprep.subr.mxu0 0.0
      %532 = vmatpush2.msra.mxu0 0.0
      %533 = vmatprep.subr.mxu0 0.0
      %534 = vmatpush2.msra.mxu0 0.0
      %535 = vmatprep.subr.mxu0 0.0
      %536 = vmatpush2.msra.mxu0 0.0
      %537 = vmatprep.subr.mxu0 0.0
      %538 = vmatpush2.msra.mxu0 0.0
      %539 = vmatprep.subr.mxu0 0.0
      %540 = vmatpush2.msra.mxu0 0.0
      %541 = vmatprep.subr.mxu0 0.0
      %542 = vmatpush2.msra.mxu0 0.0
      %543 = vmatprep.subr.mxu0 0.0
      %544 = vmatpush2.msra.mxu0 0.0
      %545 = vmatprep.subr.mxu0 0.0
      %546 = vmatpush2.msra.mxu0 0.0
      %547 = vmatprep.subr.mxu0 0.0
      %548 = vmatpush2.msra.mxu0 0.0
      %549 = vmatprep.subr.mxu0 0.0
      %550 = vmatpush2.msra.mxu0 0.0
      %551 = vmatprep.subr.mxu0 0.0
      %552 = vmatpush2.msra.mxu0 0.0
      %553 = vmatprep.subr.mxu0 0.0
      %554 = vmatpush2.msra.mxu0 0.0
      %555 = vmatprep.mubr.f32.mxu0 0.0
      %556 = vmatmul.mubr.f32.gmra.mxu0 %v486
      %v557 = vpop.f32.mrf.mxu0
      %v558 = vadd.f32 0.0, %v557
      %v559 = vpop.f32.mrf.mxu0
      %560 = vmatprep.mubr.f32.mxu0 0.0
      %561 = vmatmul.mubr.f32.gmra.mxu0 %v489
      %v562 = vpop.f32.mrf.mxu0
      %v563 = vadd.f32 0.0, %v562
      %v564 = vpop.f32.mrf.mxu0
      %565 = vdwg.mxu0
      %566 = vrot.lane.b32.xlu0 %v404, 112
      %v567 = vpop.permute.xlu0 %566
      %568 = vrot.lane.b32.xlu0 %v405, 112
      %v569 = vpop.permute.xlu0 %568
      %v570 = vsel %vm400, %v567, 0
      %v572 = vsel %vm400, %v569, 0
      %574 = vmatprep.subr.mxu0 0.0
      %575 = vmatpush1.msra.mxu0 0.0
      %576 = vmatprep.subr.mxu0 0.0
      %577 = vmatpush1.msra.mxu0 0.0
      %578 = vmatprep.subr.mxu0 0.0
      %579 = vmatpush1.msra.mxu0 0.0
      %580 = vmatprep.subr.mxu0 0.0
      %581 = vmatpush1.msra.mxu0 0.0
      %582 = vmatprep.subr.mxu0 0.0
      %583 = vmatpush1.msra.mxu0 0.0
      %584 = vmatprep.subr.mxu0 0.0
      %585 = vmatpush1.msra.mxu0 0.0
      %586 = vmatprep.subr.mxu0 0.0
      %587 = vmatpush1.msra.mxu0 0.0
      %588 = vmatprep.subr.mxu0 0.0
      %589 = vmatpush1.msra.mxu0 0.0
      %590 = vmatprep.subr.mxu0 0.0
      %591 = vmatpush1.msra.mxu0 0.0
      %592 = vmatprep.subr.mxu0 0.0
      %593 = vmatpush1.msra.mxu0 0.0
      %594 = vmatprep.subr.mxu0 0.0
      %595 = vmatpush1.msra.mxu0 0.0
      %596 = vmatprep.subr.mxu0 0.0
      %597 = vmatpush1.msra.mxu0 0.0
      %598 = vmatprep.subr.mxu0 0.0
      %599 = vmatpush1.msra.mxu0 %v309
      %600 = vmatprep.subr.mxu0 0.0
      %601 = vmatpush1.msra.mxu0 %v308
      %602 = vmatprep.subr.mxu0 0.0
      %603 = vmatpush1.msra.mxu0 %v307
      %604 = vmatprep.subr.mxu0 0.0
      %605 = vmatpush1.msra.mxu0 %v306
      %606 = vmatprep.subr.mxu0 0.0
      %607 = vmatpush2.msra.mxu0 0.0
      %608 = vmatprep.subr.mxu0 0.0
      %609 = vmatpush2.msra.mxu0 0.0
      %610 = vmatprep.subr.mxu0 0.0
      %611 = vmatpush2.msra.mxu0 0.0
      %612 = vmatprep.subr.mxu0 0.0
      %613 = vmatpush2.msra.mxu0 0.0
      %614 = vmatprep.subr.mxu0 0.0
      %615 = vmatpush2.msra.mxu0 0.0
      %616 = vmatprep.subr.mxu0 0.0
      %617 = vmatpush2.msra.mxu0 0.0
      %618 = vmatprep.subr.mxu0 0.0
      %619 = vmatpush2.msra.mxu0 0.0
      %620 = vmatprep.subr.mxu0 0.0
      %621 = vmatpush2.msra.mxu0 0.0
      %622 = vmatprep.subr.mxu0 0.0
      %623 = vmatpush2.msra.mxu0 0.0
      %624 = vmatprep.subr.mxu0 0.0
      %625 = vmatpush2.msra.mxu0 0.0
      %626 = vmatprep.subr.mxu0 0.0
      %627 = vmatpush2.msra.mxu0 0.0
      %628 = vmatprep.subr.mxu0 0.0
      %629 = vmatpush2.msra.mxu0 0.0
      %630 = vmatprep.subr.mxu0 0.0
      %631 = vmatpush2.msra.mxu0 0.0
      %632 = vmatprep.subr.mxu0 0.0
      %633 = vmatpush2.msra.mxu0 0.0
      %634 = vmatprep.subr.mxu0 0.0
      %635 = vmatpush2.msra.mxu0 0.0
      %636 = vmatprep.subr.mxu0 0.0
      %637 = vmatpush2.msra.mxu0 0.0
      %638 = vmatprep.mubr.f32.mxu0 0.0
      %639 = vmatmul.mubr.f32.gmra.mxu0 %v570
      %v640 = vpop.f32.mrf.mxu0
      %v641 = vadd.f32 0.0, %v640
      %v642 = vpop.f32.mrf.mxu0
      %643 = vmatprep.mubr.f32.mxu0 0.0
      %644 = vmatmul.mubr.f32.gmra.mxu0 %v572
      %v645 = vpop.f32.mrf.mxu0
      %v646 = vadd.f32 0.0, %v645
      %v647 = vpop.f32.mrf.mxu0
      %648 = vdwg.mxu0
      %vm649 = vcmask 523264
      %v650 = vsel %vm649, %v404, 0
      %v652 = vsel %vm649, %v405, 0
      %654 = vmatprep.subr.mxu0 0.0
      %655 = vmatpush1.msra.mxu0 0.0
      %656 = vmatprep.subr.mxu0 0.0
      %657 = vmatpush1.msra.mxu0 0.0
      %658 = vmatprep.subr.mxu0 0.0
      %659 = vmatpush1.msra.mxu0 0.0
      %660 = vmatprep.subr.mxu0 0.0
      %661 = vmatpush1.msra.mxu0 0.0
      %662 = vmatprep.subr.mxu0 0.0
      %663 = vmatpush1.msra.mxu0 0.0
      %664 = vmatprep.subr.mxu0 0.0
      %665 = vmatpush1.msra.mxu0 0.0
      %666 = vmatprep.subr.mxu0 0.0
      %667 = vmatpush1.msra.mxu0 0.0
      %668 = vmatprep.subr.mxu0 0.0
      %669 = vmatpush1.msra.mxu0 0.0
      %670 = vmatprep.subr.mxu0 0.0
      %671 = vmatpush1.msra.mxu0 %v317
      %672 = vmatprep.subr.mxu0 0.0
      %673 = vmatpush1.msra.mxu0 %v316
      %674 = vmatprep.subr.mxu0 0.0
      %675 = vmatpush1.msra.mxu0 %v315
      %676 = vmatprep.subr.mxu0 0.0
      %677 = vmatpush1.msra.mxu0 %v314
      %678 = vmatprep.subr.mxu0 0.0
      %679 = vmatpush1.msra.mxu0 %v313
      %680 = vmatprep.subr.mxu0 0.0
      %681 = vmatpush1.msra.mxu0 %v312
      %682 = vmatprep.subr.mxu0 0.0
      %683 = vmatpush1.msra.mxu0 %v311
      %684 = vmatprep.subr.mxu0 0.0
      %685 = vmatpush1.msra.mxu0 %v310
      %686 = vmatprep.subr.mxu0 0.0
      %687 = vmatpush2.msra.mxu0 0.0
      %688 = vmatprep.subr.mxu0 0.0
      %689 = vmatpush2.msra.mxu0 0.0
      %690 = vmatprep.subr.mxu0 0.0
      %691 = vmatpush2.msra.mxu0 0.0
      %692 = vmatprep.subr.mxu0 0.0
      %693 = vmatpush2.msra.mxu0 0.0
      %694 = vmatprep.subr.mxu0 0.0
      %695 = vmatpush2.msra.mxu0 0.0
      %696 = vmatprep.subr.mxu0 0.0
      %697 = vmatpush2.msra.mxu0 0.0
      %698 = vmatprep.subr.mxu0 0.0
      %699 = vmatpush2.msra.mxu0 0.0
      %700 = vmatprep.subr.mxu0 0.0
      %701 = vmatpush2.msra.mxu0 0.0
      %702 = vmatprep.subr.mxu0 0.0
      %703 = vmatpush2.msra.mxu0 0.0
      %704 = vmatprep.subr.mxu0 0.0
      %705 = vmatpush2.msra.mxu0 0.0
      %706 = vmatprep.subr.mxu0 0.0
      %707 = vmatpush2.msra.mxu0 0.0
      %708 = vmatprep.subr.mxu0 0.0
      %709 = vmatpush2.msra.mxu0 0.0
      %710 = vmatprep.subr.mxu0 0.0
      %711 = vmatpush2.msra.mxu0 0.0
      %712 = vmatprep.subr.mxu0 0.0
      %713 = vmatpush2.msra.mxu0 0.0
      %714 = vmatprep.subr.mxu0 0.0
      %715 = vmatpush2.msra.mxu0 0.0
      %716 = vmatprep.subr.mxu0 0.0
      %717 = vmatpush2.msra.mxu0 0.0
      %718 = vmatprep.mubr.f32.mxu0 0.0
      %719 = vmatmul.mubr.f32.gmra.mxu0 %v650
      %v720 = vpop.f32.mrf.mxu0
      %v721 = vadd.f32 0.0, %v720
      %v722 = vpop.f32.mrf.mxu0
      %723 = vmatprep.mubr.f32.mxu0 0.0
      %724 = vmatmul.mubr.f32.gmra.mxu0 %v652
      %v725 = vpop.f32.mrf.mxu0
      %v726 = vadd.f32 0.0, %v725
      %v727 = vpop.f32.mrf.mxu0
      %728 = vdwg.mxu0
      %vm729 = vcmask 64512
      %v730 = vsel %vm729, %v477, 0.0
      %v731 = vsel %vm729, %v482, 0.0
      %v732 = vadd.f32 %v730, %v731
      %v733 = vrot.slane %v732, 4
      %v734 = vadd.f32 %v732, %v733
      %v735 = vrot.slane %v734, 2
      %v736 = vadd.f32 %v734, %v735
      %v737 = vrot.slane %v736, 1
      %v738 = vadd.f32 %v736, %v737
      %v739 = vsel %vm729, %v641, 0.0
      %v740 = vsel %vm729, %v646, 0.0
      %v741 = vadd.f32 %v739, %v740
      %v742 = vrot.slane %v741, 4
      %v743 = vadd.f32 %v741, %v742
      %v744 = vrot.slane %v743, 2
      %v745 = vadd.f32 %v743, %v744
      %v746 = vrot.slane %v745, 1
      %v747 = vadd.f32 %v745, %v746
      %v748 = vadd.f32 %v738, %v747
      %v749 = vsel %vm729, %v558, 0.0
      %v750 = vsel %vm729, %v563, 0.0
      %v751 = vadd.f32 %v749, %v750
      %v752 = vrot.slane %v751, 4
      %v753 = vadd.f32 %v751, %v752
      %v754 = vrot.slane %v753, 2
      %v755 = vadd.f32 %v753, %v754
      %v756 = vrot.slane %v755, 1
      %v757 = vadd.f32 %v755, %v756
      %v758 = vadd.f32 %v748, %v757
      %v759 = vsel %vm729, %v721, 0.0
      %v760 = vsel %vm729, %v726, 0.0
      %v761 = vadd.f32 %v759, %v760
      %v762 = vrot.slane %v761, 4
      %v763 = vadd.f32 %v761, %v762
      %v764 = vrot.slane %v763, 2
      %v765 = vadd.f32 %v763, %v764
      %v766 = vrot.slane %v765, 1
      %v767 = vadd.f32 %v765, %v766
      %v768 = vadd.f32 %v758, %v767
      %v769 = vmul.f32 %v477, %v477
      %v770 = vmul.f32 %v482, %v482
      %v771 = vsel %vm729, %v769, 0.0
      %v772 = vsel %vm729, %v770, 0.0
      %v773 = vadd.f32 %v771, %v772
      %v774 = vrot.slane %v773, 4
      %v775 = vadd.f32 %v773, %v774
      %v776 = vrot.slane %v775, 2
      %v777 = vadd.f32 %v775, %v776
      %v778 = vrot.slane %v777, 1
      %v779 = vadd.f32 %v777, %v778
      %v780 = vmul.f32 %v641, %v641
      %v781 = vmul.f32 %v646, %v646
      %v782 = vsel %vm729, %v780, 0.0
      %v783 = vsel %vm729, %v781, 0.0
      %v784 = vadd.f32 %v782, %v783
      %v785 = vrot.slane %v784, 4
      %v786 = vadd.f32 %v784, %v785
      %v787 = vrot.slane %v786, 2
      %v788 = vadd.f32 %v786, %v787
      %v789 = vrot.slane %v788, 1
      %v790 = vadd.f32 %v788, %v789
      %v791 = vadd.f32 %v779, %v790
      %v792 = vmul.f32 %v558, %v558
      %v793 = vmul.f32 %v563, %v563
      %v794 = vsel %vm729, %v792, 0.0
      %v795 = vsel %vm729, %v793, 0.0
      %v796 = vadd.f32 %v794, %v795
      %v797 = vrot.slane %v796, 4
      %v798 = vadd.f32 %v796, %v797
      %v799 = vrot.slane %v798, 2
      %v800 = vadd.f32 %v798, %v799
      %v801 = vrot.slane %v800, 1
      %v802 = vadd.f32 %v800, %v801
      %v803 = vadd.f32 %v791, %v802
      %v804 = vmul.f32 %v721, %v721
      %v805 = vmul.f32 %v726, %v726
      %v806 = vsel %vm729, %v804, 0.0
      %v807 = vsel %vm729, %v805, 0.0
      %v808 = vadd.f32 %v806, %v807
      %v809 = vrot.slane %v808, 4
      %v810 = vadd.f32 %v808, %v809
      %v811 = vrot.slane %v810, 2
      %v812 = vadd.f32 %v810, %v811
      %v813 = vrot.slane %v812, 1
      %v814 = vadd.f32 %v812, %v813
      %v815 = vadd.f32 %v803, %v814
      %vm816 = vcmask 1040384
      %v817 = vsel %vm816, %v768, %v815
      %vm818 = vcmask 58368
      %819 = vst.msk [vmem:[%s291] sm:$0x3] %vm818, %v817
      %v822 = vcombine.high %v477, %v477
      %v824 = vunpack.c.l.s4 1966171168
      %v825 = vunpack.c.0.s8 %v824
      %v826 = vlaneseq
      %v827 = vshrl.u32 %v826, 7
      %v828 = vsub.s32 %v825, %v827
      %v829 = vrot.slane %v477, %v828
      %v831 = vunpack.c.l.s4 1966171168
      %v832 = vunpack.c.0.s8 %v831
      %v833 = vlaneseq
      %v834 = vshrl.u32 %v833, 7
      %v835 = vsub.s32 %v832, %v834
      %v836 = vrot.slane %v822, %v835
      %v837 = vcombine.high %v829, %v829
      %v838 = vcombine.high %v836, %v836
      %v840 = vunpack.c.l.s4 1966171168
      %v841 = vunpack.c.0.s8 %v840
      %v842 = vlaneseq
      %v843 = vshrl.u32 %v842, 7
      %v844 = vsub.s32 %v841, %v843
      %v845 = vrot.slane %v829, %v844
      %v847 = vunpack.c.l.s4 1966171168
      %v848 = vunpack.c.0.s8 %v847
      %v849 = vlaneseq
      %v850 = vshrl.u32 %v849, 7
      %v851 = vsub.s32 %v848, %v850
      %v852 = vrot.slane %v836, %v851
      %v854 = vunpack.c.l.s4 1966171168
      %v855 = vunpack.c.0.s8 %v854
      %v856 = vlaneseq
      %v857 = vshrl.u32 %v856, 7
      %v858 = vsub.s32 %v855, %v857
      %v859 = vrot.slane %v837, %v858
      %v861 = vunpack.c.l.s4 1966171168
      %v862 = vunpack.c.0.s8 %v861
      %v863 = vlaneseq
      %v864 = vshrl.u32 %v863, 7
      %v865 = vsub.s32 %v862, %v864
      %v866 = vrot.slane %v838, %v865
      %v867 = vcombine.high %v845, %v845
      %v868 = vcombine.high %v852, %v852
      %v869 = vcombine.high %v859, %v859
      %v870 = vcombine.high %v866, %v866
      %v871 = vcombine.high %v482, %v482
      %v873 = vunpack.c.l.s4 1966171168
      %v874 = vunpack.c.0.s8 %v873
      %v875 = vlaneseq
      %v876 = vshrl.u32 %v875, 7
      %v877 = vsub.s32 %v874, %v876
      %v878 = vrot.slane %v482, %v877
      %v880 = vunpack.c.l.s4 1966171168
      %v881 = vunpack.c.0.s8 %v880
      %v882 = vlaneseq
      %v883 = vshrl.u32 %v882, 7
      %v884 = vsub.s32 %v881, %v883
      %v885 = vrot.slane %v871, %v884
      %v886 = vcombine.high %v878, %v878
      %v887 = vcombine.high %v885, %v885
      %v889 = vunpack.c.l.s4 1966171168
      %v890 = vunpack.c.0.s8 %v889
      %v891 = vlaneseq
      %v892 = vshrl.u32 %v891, 7
      %v893 = vsub.s32 %v890, %v892
      %v894 = vrot.slane %v878, %v893
      %v896 = vunpack.c.l.s4 1966171168
      %v897 = vunpack.c.0.s8 %v896
      %v898 = vlaneseq
      %v899 = vshrl.u32 %v898, 7
      %v900 = vsub.s32 %v897, %v899
      %v901 = vrot.slane %v885, %v900
      %v903 = vunpack.c.l.s4 1966171168
      %v904 = vunpack.c.0.s8 %v903
      %v905 = vlaneseq
      %v906 = vshrl.u32 %v905, 7
      %v907 = vsub.s32 %v904, %v906
      %v908 = vrot.slane %v886, %v907
      %v910 = vunpack.c.l.s4 1966171168
      %v911 = vunpack.c.0.s8 %v910
      %v912 = vlaneseq
      %v913 = vshrl.u32 %v912, 7
      %v914 = vsub.s32 %v911, %v913
      %v915 = vrot.slane %v887, %v914
      %v916 = vcombine.high %v894, %v894
      %v917 = vcombine.high %v901, %v901
      %v918 = vcombine.high %v908, %v908
      %v919 = vcombine.high %v915, %v915
      %v938 = vcombine.high %v641, %v641
      %v940 = vunpack.c.l.s4 1966171168
      %v941 = vunpack.c.0.s8 %v940
      %v942 = vlaneseq
      %v943 = vshrl.u32 %v942, 7
      %v944 = vsub.s32 %v941, %v943
      %v945 = vrot.slane %v641, %v944
      %v947 = vunpack.c.l.s4 1966171168
      %v948 = vunpack.c.0.s8 %v947
      %v949 = vlaneseq
      %v950 = vshrl.u32 %v949, 7
      %v951 = vsub.s32 %v948, %v950
      %v952 = vrot.slane %v938, %v951
      %v953 = vcombine.high %v945, %v945
      %v954 = vcombine.high %v952, %v952
      %v956 = vunpack.c.l.s4 1966171168
      %v957 = vunpack.c.0.s8 %v956
      %v958 = vlaneseq
      %v959 = vshrl.u32 %v958, 7
      %v960 = vsub.s32 %v957, %v959
      %v961 = vrot.slane %v945, %v960
      %v963 = vunpack.c.l.s4 1966171168
      %v964 = vunpack.c.0.s8 %v963
      %v965 = vlaneseq
      %v966 = vshrl.u32 %v965, 7
      %v967 = vsub.s32 %v964, %v966
      %v968 = vrot.slane %v952, %v967
      %v970 = vunpack.c.l.s4 1966171168
      %v971 = vunpack.c.0.s8 %v970
      %v972 = vlaneseq
      %v973 = vshrl.u32 %v972, 7
      %v974 = vsub.s32 %v971, %v973
      %v975 = vrot.slane %v953, %v974
      %v977 = vunpack.c.l.s4 1966171168
      %v978 = vunpack.c.0.s8 %v977
      %v979 = vlaneseq
      %v980 = vshrl.u32 %v979, 7
      %v981 = vsub.s32 %v978, %v980
      %v982 = vrot.slane %v954, %v981
      %v983 = vcombine.high %v961, %v961
      %v984 = vcombine.high %v968, %v968
      %v985 = vcombine.high %v975, %v975
      %v986 = vcombine.high %v982, %v982
      %v987 = vcombine.high %v646, %v646
      %v989 = vunpack.c.l.s4 1966171168
      %v990 = vunpack.c.0.s8 %v989
      %v991 = vlaneseq
      %v992 = vshrl.u32 %v991, 7
      %v993 = vsub.s32 %v990, %v992
      %v994 = vrot.slane %v646, %v993
      %v996 = vunpack.c.l.s4 1966171168
      %v997 = vunpack.c.0.s8 %v996
      %v998 = vlaneseq
      %v999 = vshrl.u32 %v998, 7
      %v1000 = vsub.s32 %v997, %v999
      %v1001 = vrot.slane %v987, %v1000
      %v1002 = vcombine.high %v994, %v994
      %v1003 = vcombine.high %v1001, %v1001
      %v1005 = vunpack.c.l.s4 1966171168
      %v1006 = vunpack.c.0.s8 %v1005
      %v1007 = vlaneseq
      %v1008 = vshrl.u32 %v1007, 7
      %v1009 = vsub.s32 %v1006, %v1008
      %v1010 = vrot.slane %v994, %v1009
      %v1012 = vunpack.c.l.s4 1966171168
      %v1013 = vunpack.c.0.s8 %v1012
      %v1014 = vlaneseq
      %v1015 = vshrl.u32 %v1014, 7
      %v1016 = vsub.s32 %v1013, %v1015
      %v1017 = vrot.slane %v1001, %v1016
      %v1019 = vunpack.c.l.s4 1966171168
      %v1020 = vunpack.c.0.s8 %v1019
      %v1021 = vlaneseq
      %v1022 = vshrl.u32 %v1021, 7
      %v1023 = vsub.s32 %v1020, %v1022
      %v1024 = vrot.slane %v1002, %v1023
      %v1026 = vunpack.c.l.s4 1966171168
      %v1027 = vunpack.c.0.s8 %v1026
      %v1028 = vlaneseq
      %v1029 = vshrl.u32 %v1028, 7
      %v1030 = vsub.s32 %v1027, %v1029
      %v1031 = vrot.slane %v1003, %v1030
      %v1032 = vcombine.high %v1010, %v1010
      %v1033 = vcombine.high %v1017, %v1017
      %v1034 = vcombine.high %v1024, %v1024
      %v1035 = vcombine.high %v1031, %v1031
      %v1036 = vlaneseq
      %v1037 = vshrl.u32 %v1036, 7
      %v1038 = vsub.s32 0, %v1037
      %v1039 = vrot.slane %v961, %v1038
      %v1040 = vlaneseq
      %v1041 = vshrl.u32 %v1040, 7
      %v1042 = vsub.s32 0, %v1041
      %v1043 = vrot.slane %v975, %v1042
      %v1044 = vlaneseq
      %v1045 = vshrl.u32 %v1044, 7
      %v1046 = vsub.s32 0, %v1045
      %v1047 = vrot.slane %v983, %v1046
      %v1048 = vlaneseq
      %v1049 = vshrl.u32 %v1048, 7
      %v1050 = vsub.s32 0, %v1049
      %v1051 = vrot.slane %v985, %v1050
      %v1052 = vlaneseq
      %v1053 = vshrl.u32 %v1052, 7
      %v1054 = vsub.s32 0, %v1053
      %v1055 = vrot.slane %v968, %v1054
      %v1056 = vlaneseq
      %v1057 = vshrl.u32 %v1056, 7
      %v1058 = vsub.s32 0, %v1057
      %v1059 = vrot.slane %v982, %v1058
      %v1060 = vlaneseq
      %v1061 = vshrl.u32 %v1060, 7
      %v1062 = vsub.s32 0, %v1061
      %v1063 = vrot.slane %v984, %v1062
      %v1064 = vlaneseq
      %v1065 = vshrl.u32 %v1064, 7
      %v1066 = vsub.s32 0, %v1065
      %v1067 = vrot.slane %v986, %v1066
      %v1068 = vlaneseq
      %v1069 = vshrl.u32 %v1068, 7
      %v1070 = vsub.s32 0, %v1069
      %v1071 = vrot.slane %v1010, %v1070
      %v1072 = vlaneseq
      %v1073 = vshrl.u32 %v1072, 7
      %v1074 = vsub.s32 0, %v1073
      %v1075 = vrot.slane %v1024, %v1074
      %v1076 = vlaneseq
      %v1077 = vshrl.u32 %v1076, 7
      %v1078 = vsub.s32 0, %v1077
      %v1079 = vrot.slane %v1032, %v1078
      %v1080 = vlaneseq
      %v1081 = vshrl.u32 %v1080, 7
      %v1082 = vsub.s32 0, %v1081
      %v1083 = vrot.slane %v1034, %v1082
      %v1084 = vlaneseq
      %v1085 = vshrl.u32 %v1084, 7
      %v1086 = vsub.s32 0, %v1085
      %v1087 = vrot.slane %v1017, %v1086
      %v1088 = vlaneseq
      %v1089 = vshrl.u32 %v1088, 7
      %v1090 = vsub.s32 0, %v1089
      %v1091 = vrot.slane %v1031, %v1090
      %v1092 = vlaneseq
      %v1093 = vshrl.u32 %v1092, 7
      %v1094 = vsub.s32 0, %v1093
      %v1095 = vrot.slane %v1033, %v1094
      %v1096 = vlaneseq
      %v1097 = vshrl.u32 %v1096, 7
      %v1098 = vsub.s32 0, %v1097
      %v1099 = vrot.slane %v1035, %v1098
      %v1116 = vsel %vm816, %v845, %v1039
      %v1117 = vsel %vm816, %v859, %v1043
      %v1118 = vsel %vm816, %v867, %v1047
      %v1119 = vsel %vm816, %v869, %v1051
      %v1120 = vsel %vm816, %v852, %v1055
      %v1121 = vsel %vm816, %v866, %v1059
      %v1122 = vsel %vm816, %v868, %v1063
      %v1123 = vsel %vm816, %v870, %v1067
      %v1124 = vsel %vm816, %v894, %v1071
      %v1125 = vsel %vm816, %v908, %v1075
      %v1126 = vsel %vm816, %v916, %v1079
      %v1127 = vsel %vm816, %v918, %v1083
      %v1128 = vsel %vm816, %v901, %v1087
      %v1129 = vsel %vm816, %v915, %v1091
      %v1130 = vsel %vm816, %v917, %v1095
      %v1131 = vsel %vm816, %v919, %v1099
      %v1134 = vcombine.high %v558, %v558
      %v1136 = vunpack.c.l.s4 1966171168
      %v1137 = vunpack.c.0.s8 %v1136
      %v1138 = vlaneseq
      %v1139 = vshrl.u32 %v1138, 7
      %v1140 = vsub.s32 %v1137, %v1139
      %v1141 = vrot.slane %v558, %v1140
      %v1143 = vunpack.c.l.s4 1966171168
      %v1144 = vunpack.c.0.s8 %v1143
      %v1145 = vlaneseq
      %v1146 = vshrl.u32 %v1145, 7
      %v1147 = vsub.s32 %v1144, %v1146
      %v1148 = vrot.slane %v1134, %v1147
      %v1149 = vcombine.high %v1141, %v1141
      %v1150 = vcombine.high %v1148, %v1148
      %v1152 = vunpack.c.l.s4 1966171168
      %v1153 = vunpack.c.0.s8 %v1152
      %v1154 = vlaneseq
      %v1155 = vshrl.u32 %v1154, 7
      %v1156 = vsub.s32 %v1153, %v1155
      %v1157 = vrot.slane %v1141, %v1156
      %v1159 = vunpack.c.l.s4 1966171168
      %v1160 = vunpack.c.0.s8 %v1159
      %v1161 = vlaneseq
      %v1162 = vshrl.u32 %v1161, 7
      %v1163 = vsub.s32 %v1160, %v1162
      %v1164 = vrot.slane %v1148, %v1163
      %v1166 = vunpack.c.l.s4 1966171168
      %v1167 = vunpack.c.0.s8 %v1166
      %v1168 = vlaneseq
      %v1169 = vshrl.u32 %v1168, 7
      %v1170 = vsub.s32 %v1167, %v1169
      %v1171 = vrot.slane %v1149, %v1170
      %v1173 = vunpack.c.l.s4 1966171168
      %v1174 = vunpack.c.0.s8 %v1173
      %v1175 = vlaneseq
      %v1176 = vshrl.u32 %v1175, 7
      %v1177 = vsub.s32 %v1174, %v1176
      %v1178 = vrot.slane %v1150, %v1177
      %v1179 = vcombine.high %v1157, %v1157
      %v1180 = vcombine.high %v1164, %v1164
      %v1181 = vcombine.high %v1171, %v1171
      %v1182 = vcombine.high %v1178, %v1178
      %v1183 = vcombine.high %v563, %v563
      %v1185 = vunpack.c.l.s4 1966171168
      %v1186 = vunpack.c.0.s8 %v1185
      %v1187 = vlaneseq
      %v1188 = vshrl.u32 %v1187, 7
      %v1189 = vsub.s32 %v1186, %v1188
      %v1190 = vrot.slane %v563, %v1189
      %v1192 = vunpack.c.l.s4 1966171168
      %v1193 = vunpack.c.0.s8 %v1192
      %v1194 = vlaneseq
      %v1195 = vshrl.u32 %v1194, 7
      %v1196 = vsub.s32 %v1193, %v1195
      %v1197 = vrot.slane %v1183, %v1196
      %v1198 = vcombine.high %v1190, %v1190
      %v1199 = vcombine.high %v1197, %v1197
      %v1201 = vunpack.c.l.s4 1966171168
      %v1202 = vunpack.c.0.s8 %v1201
      %v1203 = vlaneseq
      %v1204 = vshrl.u32 %v1203, 7
      %v1205 = vsub.s32 %v1202, %v1204
      %v1206 = vrot.slane %v1190, %v1205
      %v1208 = vunpack.c.l.s4 1966171168
      %v1209 = vunpack.c.0.s8 %v1208
      %v1210 = vlaneseq
      %v1211 = vshrl.u32 %v1210, 7
      %v1212 = vsub.s32 %v1209, %v1211
      %v1213 = vrot.slane %v1197, %v1212
      %v1215 = vunpack.c.l.s4 1966171168
      %v1216 = vunpack.c.0.s8 %v1215
      %v1217 = vlaneseq
      %v1218 = vshrl.u32 %v1217, 7
      %v1219 = vsub.s32 %v1216, %v1218
      %v1220 = vrot.slane %v1198, %v1219
      %v1222 = vunpack.c.l.s4 1966171168
      %v1223 = vunpack.c.0.s8 %v1222
      %v1224 = vlaneseq
      %v1225 = vshrl.u32 %v1224, 7
      %v1226 = vsub.s32 %v1223, %v1225
      %v1227 = vrot.slane %v1199, %v1226
      %v1228 = vcombine.high %v1206, %v1206
      %v1229 = vcombine.high %v1213, %v1213
      %v1230 = vcombine.high %v1220, %v1220
      %v1231 = vcombine.high %v1227, %v1227
      %v1250 = vcombine.high %v721, %v721
      %v1252 = vunpack.c.l.s4 1966171168
      %v1253 = vunpack.c.0.s8 %v1252
      %v1254 = vlaneseq
      %v1255 = vshrl.u32 %v1254, 7
      %v1256 = vsub.s32 %v1253, %v1255
      %v1257 = vrot.slane %v721, %v1256
      %v1259 = vunpack.c.l.s4 1966171168
      %v1260 = vunpack.c.0.s8 %v1259
      %v1261 = vlaneseq
      %v1262 = vshrl.u32 %v1261, 7
      %v1263 = vsub.s32 %v1260, %v1262
      %v1264 = vrot.slane %v1250, %v1263
      %v1265 = vcombine.high %v1257, %v1257
      %v1266 = vcombine.high %v1264, %v1264
      %v1268 = vunpack.c.l.s4 1966171168
      %v1269 = vunpack.c.0.s8 %v1268
      %v1270 = vlaneseq
      %v1271 = vshrl.u32 %v1270, 7
      %v1272 = vsub.s32 %v1269, %v1271
      %v1273 = vrot.slane %v1257, %v1272
      %v1275 = vunpack.c.l.s4 1966171168
      %v1276 = vunpack.c.0.s8 %v1275
      %v1277 = vlaneseq
      %v1278 = vshrl.u32 %v1277, 7
      %v1279 = vsub.s32 %v1276, %v1278
      %v1280 = vrot.slane %v1264, %v1279
      %v1282 = vunpack.c.l.s4 1966171168
      %v1283 = vunpack.c.0.s8 %v1282
      %v1284 = vlaneseq
      %v1285 = vshrl.u32 %v1284, 7
      %v1286 = vsub.s32 %v1283, %v1285
      %v1287 = vrot.slane %v1265, %v1286
      %v1289 = vunpack.c.l.s4 1966171168
      %v1290 = vunpack.c.0.s8 %v1289
      %v1291 = vlaneseq
      %v1292 = vshrl.u32 %v1291, 7
      %v1293 = vsub.s32 %v1290, %v1292
      %v1294 = vrot.slane %v1266, %v1293
      %v1295 = vcombine.high %v1273, %v1273
      %v1296 = vcombine.high %v1280, %v1280
      %v1297 = vcombine.high %v1287, %v1287
      %v1298 = vcombine.high %v1294, %v1294
      %v1299 = vcombine.high %v726, %v726
      %v1301 = vunpack.c.l.s4 1966171168
      %v1302 = vunpack.c.0.s8 %v1301
      %v1303 = vlaneseq
      %v1304 = vshrl.u32 %v1303, 7
      %v1305 = vsub.s32 %v1302, %v1304
      %v1306 = vrot.slane %v726, %v1305
      %v1308 = vunpack.c.l.s4 1966171168
      %v1309 = vunpack.c.0.s8 %v1308
      %v1310 = vlaneseq
      %v1311 = vshrl.u32 %v1310, 7
      %v1312 = vsub.s32 %v1309, %v1311
      %v1313 = vrot.slane %v1299, %v1312
      %v1314 = vcombine.high %v1306, %v1306
      %v1315 = vcombine.high %v1313, %v1313
      %v1317 = vunpack.c.l.s4 1966171168
      %v1318 = vunpack.c.0.s8 %v1317
      %v1319 = vlaneseq
      %v1320 = vshrl.u32 %v1319, 7
      %v1321 = vsub.s32 %v1318, %v1320
      %v1322 = vrot.slane %v1306, %v1321
      %v1324 = vunpack.c.l.s4 1966171168
      %v1325 = vunpack.c.0.s8 %v1324
      %v1326 = vlaneseq
      %v1327 = vshrl.u32 %v1326, 7
      %v1328 = vsub.s32 %v1325, %v1327
      %v1329 = vrot.slane %v1313, %v1328
      %v1331 = vunpack.c.l.s4 1966171168
      %v1332 = vunpack.c.0.s8 %v1331
      %v1333 = vlaneseq
      %v1334 = vshrl.u32 %v1333, 7
      %v1335 = vsub.s32 %v1332, %v1334
      %v1336 = vrot.slane %v1314, %v1335
      %v1338 = vunpack.c.l.s4 1966171168
      %v1339 = vunpack.c.0.s8 %v1338
      %v1340 = vlaneseq
      %v1341 = vshrl.u32 %v1340, 7
      %v1342 = vsub.s32 %v1339, %v1341
      %v1343 = vrot.slane %v1315, %v1342
      %v1344 = vcombine.high %v1322, %v1322
      %v1345 = vcombine.high %v1329, %v1329
      %v1346 = vcombine.high %v1336, %v1336
      %v1347 = vcombine.high %v1343, %v1343
      %v1348 = vlaneseq
      %v1349 = vshrl.u32 %v1348, 7
      %v1350 = vsub.s32 0, %v1349
      %v1351 = vrot.slane %v1273, %v1350
      %v1352 = vlaneseq
      %v1353 = vshrl.u32 %v1352, 7
      %v1354 = vsub.s32 0, %v1353
      %v1355 = vrot.slane %v1287, %v1354
      %v1356 = vlaneseq
      %v1357 = vshrl.u32 %v1356, 7
      %v1358 = vsub.s32 0, %v1357
      %v1359 = vrot.slane %v1295, %v1358
      %v1360 = vlaneseq
      %v1361 = vshrl.u32 %v1360, 7
      %v1362 = vsub.s32 0, %v1361
      %v1363 = vrot.slane %v1297, %v1362
      %v1364 = vlaneseq
      %v1365 = vshrl.u32 %v1364, 7
      %v1366 = vsub.s32 0, %v1365
      %v1367 = vrot.slane %v1280, %v1366
      %v1368 = vlaneseq
      %v1369 = vshrl.u32 %v1368, 7
      %v1370 = vsub.s32 0, %v1369
      %v1371 = vrot.slane %v1294, %v1370
      %v1372 = vlaneseq
      %v1373 = vshrl.u32 %v1372, 7
      %v1374 = vsub.s32 0, %v1373
      %v1375 = vrot.slane %v1296, %v1374
      %v1376 = vlaneseq
      %v1377 = vshrl.u32 %v1376, 7
      %v1378 = vsub.s32 0, %v1377
      %v1379 = vrot.slane %v1298, %v1378
      %v1380 = vlaneseq
      %v1381 = vshrl.u32 %v1380, 7
      %v1382 = vsub.s32 0, %v1381
      %v1383 = vrot.slane %v1322, %v1382
      %v1384 = vlaneseq
      %v1385 = vshrl.u32 %v1384, 7
      %v1386 = vsub.s32 0, %v1385
      %v1387 = vrot.slane %v1336, %v1386
      %v1388 = vlaneseq
      %v1389 = vshrl.u32 %v1388, 7
      %v1390 = vsub.s32 0, %v1389
      %v1391 = vrot.slane %v1344, %v1390
      %v1392 = vlaneseq
      %v1393 = vshrl.u32 %v1392, 7
      %v1394 = vsub.s32 0, %v1393
      %v1395 = vrot.slane %v1346, %v1394
      %v1396 = vlaneseq
      %v1397 = vshrl.u32 %v1396, 7
      %v1398 = vsub.s32 0, %v1397
      %v1399 = vrot.slane %v1329, %v1398
      %v1400 = vlaneseq
      %v1401 = vshrl.u32 %v1400, 7
      %v1402 = vsub.s32 0, %v1401
      %v1403 = vrot.slane %v1343, %v1402
      %v1404 = vlaneseq
      %v1405 = vshrl.u32 %v1404, 7
      %v1406 = vsub.s32 0, %v1405
      %v1407 = vrot.slane %v1345, %v1406
      %v1408 = vlaneseq
      %v1409 = vshrl.u32 %v1408, 7
      %v1410 = vsub.s32 0, %v1409
      %v1411 = vrot.slane %v1347, %v1410
      %v1428 = vsel %vm816, %v1157, %v1351
      %v1429 = vsel %vm816, %v1171, %v1355
      %v1430 = vsel %vm816, %v1179, %v1359
      %v1431 = vsel %vm816, %v1181, %v1363
      %v1432 = vsel %vm816, %v1164, %v1367
      %v1433 = vsel %vm816, %v1178, %v1371
      %v1434 = vsel %vm816, %v1180, %v1375
      %v1435 = vsel %vm816, %v1182, %v1379
      %v1436 = vsel %vm816, %v1206, %v1383
      %v1437 = vsel %vm816, %v1220, %v1387
      %v1438 = vsel %vm816, %v1228, %v1391
      %v1439 = vsel %vm816, %v1230, %v1395
      %v1440 = vsel %vm816, %v1213, %v1399
      %v1441 = vsel %vm816, %v1227, %v1403
      %v1442 = vsel %vm816, %v1229, %v1407
      %v1443 = vsel %vm816, %v1231, %v1411
      %v1476 = vcombine.low %v1116, %v1117
      %v1477 = vcombine.low %v1118, %v1119
      %v1479 = vunpack.c.l.s4 1983009808
      %v1480 = vunpack.c.0.s8 %v1479
      %v1481 = vlaneseq
      %v1482 = vshrl.u32 %v1481, 7
      %v1483 = vsub.s32 %v1480, %v1482
      %v1484 = vrot.slane %v1476, %v1483
      %v1486 = vunpack.c.l.s4 1983009808
      %v1487 = vunpack.c.0.s8 %v1486
      %v1488 = vlaneseq
      %v1489 = vshrl.u32 %v1488, 7
      %v1490 = vsub.s32 %v1487, %v1489
      %v1491 = vrot.slane %v1477, %v1490
      %v1492 = vcombine.low %v1484, %v1491
      %v1493 = vcombine.low %v1428, %v1429
      %v1494 = vcombine.low %v1430, %v1431
      %v1496 = vunpack.c.l.s4 1983009808
      %v1497 = vunpack.c.0.s8 %v1496
      %v1498 = vlaneseq
      %v1499 = vshrl.u32 %v1498, 7
      %v1500 = vsub.s32 %v1497, %v1499
      %v1501 = vrot.slane %v1493, %v1500
      %v1503 = vunpack.c.l.s4 1983009808
      %v1504 = vunpack.c.0.s8 %v1503
      %v1505 = vlaneseq
      %v1506 = vshrl.u32 %v1505, 7
      %v1507 = vsub.s32 %v1504, %v1506
      %v1508 = vrot.slane %v1494, %v1507
      %v1509 = vcombine.low %v1501, %v1508
      %v1510 = vcombine.low %v1120, %v1121
      %v1511 = vcombine.low %v1122, %v1123
      %v1513 = vunpack.c.l.s4 1983009808
      %v1514 = vunpack.c.0.s8 %v1513
      %v1515 = vlaneseq
      %v1516 = vshrl.u32 %v1515, 7
      %v1517 = vsub.s32 %v1514, %v1516
      %v1518 = vrot.slane %v1510, %v1517
      %v1520 = vunpack.c.l.s4 1983009808
      %v1521 = vunpack.c.0.s8 %v1520
      %v1522 = vlaneseq
      %v1523 = vshrl.u32 %v1522, 7
      %v1524 = vsub.s32 %v1521, %v1523
      %v1525 = vrot.slane %v1511, %v1524
      %v1526 = vcombine.low %v1518, %v1525
      %v1527 = vcombine.low %v1432, %v1433
      %v1528 = vcombine.low %v1434, %v1435
      %v1530 = vunpack.c.l.s4 1983009808
      %v1531 = vunpack.c.0.s8 %v1530
      %v1532 = vlaneseq
      %v1533 = vshrl.u32 %v1532, 7
      %v1534 = vsub.s32 %v1531, %v1533
      %v1535 = vrot.slane %v1527, %v1534
      %v1537 = vunpack.c.l.s4 1983009808
      %v1538 = vunpack.c.0.s8 %v1537
      %v1539 = vlaneseq
      %v1540 = vshrl.u32 %v1539, 7
      %v1541 = vsub.s32 %v1538, %v1540
      %v1542 = vrot.slane %v1528, %v1541
      %v1543 = vcombine.low %v1535, %v1542
      %v1544 = vcombine.low %v1124, %v1125
      %v1545 = vcombine.low %v1126, %v1127
      %v1547 = vunpack.c.l.s4 1983009808
      %v1548 = vunpack.c.0.s8 %v1547
      %v1549 = vlaneseq
      %v1550 = vshrl.u32 %v1549, 7
      %v1551 = vsub.s32 %v1548, %v1550
      %v1552 = vrot.slane %v1544, %v1551
      %v1554 = vunpack.c.l.s4 1983009808
      %v1555 = vunpack.c.0.s8 %v1554
      %v1556 = vlaneseq
      %v1557 = vshrl.u32 %v1556, 7
      %v1558 = vsub.s32 %v1555, %v1557
      %v1559 = vrot.slane %v1545, %v1558
      %v1560 = vcombine.low %v1552, %v1559
      %v1561 = vcombine.low %v1436, %v1437
      %v1562 = vcombine.low %v1438, %v1439
      %v1564 = vunpack.c.l.s4 1983009808
      %v1565 = vunpack.c.0.s8 %v1564
      %v1566 = vlaneseq
      %v1567 = vshrl.u32 %v1566, 7
      %v1568 = vsub.s32 %v1565, %v1567
      %v1569 = vrot.slane %v1561, %v1568
      %v1571 = vunpack.c.l.s4 1983009808
      %v1572 = vunpack.c.0.s8 %v1571
      %v1573 = vlaneseq
      %v1574 = vshrl.u32 %v1573, 7
      %v1575 = vsub.s32 %v1572, %v1574
      %v1576 = vrot.slane %v1562, %v1575
      %v1577 = vcombine.low %v1569, %v1576
      %v1578 = vcombine.low %v1128, %v1129
      %v1579 = vcombine.low %v1130, %v1131
      %v1581 = vunpack.c.l.s4 1983009808
      %v1582 = vunpack.c.0.s8 %v1581
      %v1583 = vlaneseq
      %v1584 = vshrl.u32 %v1583, 7
      %v1585 = vsub.s32 %v1582, %v1584
      %v1586 = vrot.slane %v1578, %v1585
      %v1588 = vunpack.c.l.s4 1983009808
      %v1589 = vunpack.c.0.s8 %v1588
      %v1590 = vlaneseq
      %v1591 = vshrl.u32 %v1590, 7
      %v1592 = vsub.s32 %v1589, %v1591
      %v1593 = vrot.slane %v1579, %v1592
      %v1594 = vcombine.low %v1586, %v1593
      %v1595 = vcombine.low %v1440, %v1441
      %v1596 = vcombine.low %v1442, %v1443
      %v1598 = vunpack.c.l.s4 1983009808
      %v1599 = vunpack.c.0.s8 %v1598
      %v1600 = vlaneseq
      %v1601 = vshrl.u32 %v1600, 7
      %v1602 = vsub.s32 %v1599, %v1601
      %v1603 = vrot.slane %v1595, %v1602
      %v1605 = vunpack.c.l.s4 1983009808
      %v1606 = vunpack.c.0.s8 %v1605
      %v1607 = vlaneseq
      %v1608 = vshrl.u32 %v1607, 7
      %v1609 = vsub.s32 %v1606, %v1608
      %v1610 = vrot.slane %v1596, %v1609
      %v1611 = vcombine.low %v1603, %v1610
      %1620 = vst.msk [vmem:[%s283] sm:$0xff] %vm729, %v1492
      %1621 = vst.msk [vmem:[%s283 + $0x8] sm:$0xff] %vm729, %v1509
      %1622 = vst.msk [vmem:[%s283 + $0x10] sm:$0xff] %vm729, %v1526
      %1623 = vst.msk [vmem:[%s283 + $0x18] sm:$0xff] %vm729, %v1543
      %1624 = vst.msk [vmem:[%s283 + $0x20] sm:$0xff] %vm729, %v1560
      %1625 = vst.msk [vmem:[%s283 + $0x28] sm:$0xff] %vm729, %v1577
      %1626 = vst.msk [vmem:[%s283 + $0x30] sm:$0xff] %vm729, %v1594
      %1627 = vst.msk [vmem:[%s283 + $0x38] sm:$0xff] %vm729, %v1611
      %s1628 = smul.u32 8, %s21
      %p1629 = scmp.lt.s32.totalorder %s20, 1
      %s1630 = scalar_select %p1629, %s20, 1
      %p1631 = scmp.lt.s32.totalorder %s1628, 7
      %s1632 = scalar_select %p1631, %s1628, 7
      %s1633 = smul.addr %s1630, 8
      %s1634 = sadd.s32 %s1632, %s1633
      %s1635 = smul.addr %s1634, 8
      %s1636 = scalar_lea.vmem %s3, %s1635
      %p1637 = scmp.lt.s32.totalorder %s20, 1
      %s1638 = scalar_select %p1637, %s20, 1
      %p1639 = scmp.lt.s32.totalorder %s21, 0
      %s1640 = scalar_select %p1639, %s21, 0
      %s1641 = sadd.s32 %s1640, %s1638
      %s1642 = smul.addr %s1641, 2
      %s1643 = scalar_lea.vmem %s4, %s1642
      // Predicated region
      $region33: #{a_call__.12} parent=31 // pred_check
        %p1644 = pneg %p125
      $region34: #{a_call__.12} parent=31 // pred_check_branch
        %1646 = sbr.rel (%p1644) target = $region36
      $region35: #{a_call__.12} parent=31 // pred_region
        %s1647 = smul.u32 8, %s21
      $region36: #{a_call__.12} parent=31 // pred_fallthru
        _
      // Predicated region
      $region37: #{a_call__.12} parent=31 // pred_check
        %p1648 = pneg %p153
      $region38: #{a_call__.12} parent=31 // pred_check_branch
        %1650 = sbr.rel (%p1648) target = $region40
      $region39: #{a_call__.12} parent=31 // pred_region
        _
      $region40: #{a_call__.12} parent=31 // pred_fallthru
        _
    $region32: #{a_call__.12} parent=5 // pred_fallthru
      _
    %p1651 = scmp.le.s32.totalorder 2, %s11
    // Predicated region
    $region41: #{a_call__.12} parent=5 // pred_check
      %p1652 = pneg %p1651
    $region42: #{a_call__.12} parent=5 // pred_check_branch
      %1654 = sbr.rel (%p1652) target = $region44
    $region43: #{a_call__.12} parent=5 // pred_region
      %s1655 = ssub.s32 %s11, 2
      // Predicated region
      $region45: #{a_call__.12} parent=43 // pred_check
        %p1656 = pneg %p131
      $region46: #{a_call__.12} parent=43 // pred_check_branch
        %1658 = sbr.rel (%p1656) target = $region48
      $region47: #{a_call__.12} parent=43 // pred_region
        %s1659 = smul.u32 8, %s23
        %p1660 = scmp.lt.s32.totalorder %s22, 1
        %s1661 = scalar_select %p1660, %s22, 1
        %p1662 = scmp.lt.s32.totalorder %s1659, 7
        %s1663 = scalar_select %p1662, %s1659, 7
        %s1664 = smul.addr %s1661, 8
        %s1665 = sadd.s32 %s1663, %s1664
        %s1666 = smul.addr %s1665, 8
        %s1667 = scalar_lea.vmem %s3, %s1666
      $region48: #{a_call__.12} parent=43 // pred_fallthru
        _
      // Predicated region
      $region49: #{a_call__.12} parent=43 // pred_check
        %p1668 = pneg %p159
      $region50: #{a_call__.12} parent=43 // pred_check_branch
        %1670 = sbr.rel (%p1668) target = $region52
      $region51: #{a_call__.12} parent=43 // pred_region
        %p1671 = scmp.lt.s32.totalorder %s22, 1
        %s1672 = scalar_select %p1671, %s22, 1
        %p1673 = scmp.lt.s32.totalorder %s23, 0
        %s1674 = scalar_select %p1673, %s23, 0
        %s1675 = sadd.s32 %s1674, %s1672
        %s1676 = smul.addr %s1675, 2
        %s1677 = scalar_lea.vmem %s4, %s1676
      $region52: #{a_call__.12} parent=43 // pred_fallthru
        _
    $region44: #{a_call__.12} parent=5 // pred_fallthru
      _
  $region6: #{a_call__.12} parent=0 // loop_footer
    %s15 = sadd.s32 1, %s11
  $region7: #{a_call__.12} parent=0 // loop_footer_branch
    %10 = sbr.rel target = $region3
  $region8: #{a_call__.12} parent=0 // loop_exit
    _

// kernel: a_call__.15
$region0: #{a_call__.15}
  #allocation0 [shape = 'u32[]', space=smem, size = 0x4, offset = 0x4, fixed_abs, tag = 'smem constant byte address 0x4 - core index']
  #allocation1 [shape = 'u32[144,128]{1,0:T(1,128)}', space=vmem, size = 0x12000, scoped, tag = 'internal scratch']
  %s0 = inlined_call_operand.vmem [shape: f32[2,16,16,3], index: 0, kind: input, shape index: {}]
  %s1 = inlined_call_operand.vmem [shape: f32[2,1,1,3], index: 1, kind: input, shape index: {}]
  %s2 = inlined_call_operand.vmem [shape: f32[2,1,1,3], index: 2, kind: input, shape index: {}]
  %s3 = inlined_call_operand.vmem [shape: f32[2,16,16,3], index: 3, kind: output, shape index: {}]
  %s4 = sld [smem:[#allocation0]]
  $region45: #{a_call__.15} parent=0
    _
  %s6 = ssub.s32 1, %s4
  %s7 = scalar_select 0, %s6, %s4
  loop: start=0, step=1, limit=4
  $region2: #{a_call__.15} parent=0 // loop_pre_header
    _
  $region3: #{a_call__.15} parent=0 // loop_header
    %s9 = sphi 0, %s13
    %p10 = scmp.ge.s32.totalorder %s9, 4
    %s16 = sphi 0, %s28
    %s17 = sphi 0, %s24
    %s18 = sphi 0, %s16
    %s19 = sphi 0, %s17
    %s20 = sphi 0, %s18
    %s21 = sphi 0, %s19
    %s33 = sphi 0, %s35
    %s36 = sphi 0, %s33
    %s37 = sphi 0, %s36
    %s53 = sphi 0, %s37
    %s59 = sphi 0, %s61
    %s62 = sphi 0, %s59
    %s63 = sphi 0, %s62
    %s79 = sphi 0, %s63
    %s85 = sphi 0, %s87
    %s88 = sphi 0, %s85
    %s89 = sphi 0, %s88
    %s105 = sphi 0, %s89
    %s113 = sphi 0, %s115
    %s116 = sphi 0, %s113
    %s117 = sphi 0, %s116
    %s133 = sphi 0, %s117
  $region4: #{a_call__.15} parent=0 // loop_header_branch
    %12 = sbr.rel (%p10) target = $region8
  $region5: #{a_call__.15} parent=0 // loop_body
    %s14 = ssub.s32 %s9, 1
    %s15 = ssub.s32 %s9, 2
    %s22 = sadd.s32 1, %s17
    %p23 = scmp.ge.s32.totalorder %s22, 1
    %s24 = scalar_select %p23, 0, %s22
    %s25 = sadd.s32 1, %s16
    %s26 = scalar_select %p23, %s25, %s16
    %p27 = scmp.ge.s32.totalorder %s26, 2
    %s28 = scalar_select %p27, 0, %s26
    %s29 = ssub.s32 %s16, %s28
    %s30 = ssub.s32 %s17, %s24
    %s31 = sor.u32 %s29, %s30
    %p32 = scmp.eq.s32.totalorder %s31, 0
    %s34 = sadd.s32 %s33, 1
    %s35 = scalar_select %p32, %s33, %s34
    %p38 = pneg %p32
    %p39 = scmp.eq.s32.totalorder %s9, 1
    %p40 = por %p38, %p39
    %p41 = scmp.ne.s32.totalorder %s33, %s36
    %p42 = scmp.eq.s32.totalorder %s9, 0
    %p43 = por %p41, %p42
    %p44 = scmp.ne.s32.totalorder %s33, %s36
    %p45 = scmp.eq.s32.totalorder %s14, 1
    %p46 = por %p44, %p45
    %p47 = scmp.ne.s32.totalorder %s36, %s37
    %p48 = scmp.eq.s32.totalorder %s14, 0
    %p49 = por %p47, %p48
    %p50 = scmp.ne.s32.totalorder %s36, %s37
    %p51 = scmp.eq.s32.totalorder %s15, 1
    %p52 = por %p50, %p51
    %p54 = scmp.ne.s32.totalorder %s37, %s53
    %p55 = scmp.eq.s32.totalorder %s15, 0
    %p56 = por %p54, %p55
    %s57 = ssub.s32 %s16, %s28
    %p58 = scmp.eq.s32.totalorder %s57, 0
    %s60 = sadd.s32 %s59, 1
    %s61 = scalar_select %p58, %s59, %s60
    %p64 = pneg %p58
    %p65 = scmp.eq.s32.totalorder %s9, 1
    %p66 = por %p64, %p65
    %p67 = scmp.ne.s32.totalorder %s59, %s62
    %p68 = scmp.eq.s32.totalorder %s9, 0
    %p69 = por %p67, %p68
    %p70 = scmp.ne.s32.totalorder %s59, %s62
    %p71 = scmp.eq.s32.totalorder %s14, 1
    %p72 = por %p70, %p71
    %p73 = scmp.ne.s32.totalorder %s62, %s63
    %p74 = scmp.eq.s32.totalorder %s14, 0
    %p75 = por %p73, %p74
    %p76 = scmp.ne.s32.totalorder %s62, %s63
    %p77 = scmp.eq.s32.totalorder %s15, 1
    %p78 = por %p76, %p77
    %p80 = scmp.ne.s32.totalorder %s63, %s79
    %p81 = scmp.eq.s32.totalorder %s15, 0
    %p82 = por %p80, %p81
    %s83 = ssub.s32 %s16, %s28
    %p84 = scmp.eq.s32.totalorder %s83, 0
    %s86 = sadd.s32 %s85, 1
    %s87 = scalar_select %p84, %s85, %s86
    %p90 = pneg %p84
    %p91 = scmp.eq.s32.totalorder %s9, 1
    %p92 = por %p90, %p91
    %p93 = scmp.ne.s32.totalorder %s85, %s88
    %p94 = scmp.eq.s32.totalorder %s9, 0
    %p95 = por %p93, %p94
    %p96 = scmp.ne.s32.totalorder %s85, %s88
    %p97 = scmp.eq.s32.totalorder %s14, 1
    %p98 = por %p96, %p97
    %p99 = scmp.ne.s32.totalorder %s88, %s89
    %p100 = scmp.eq.s32.totalorder %s14, 0
    %p101 = por %p99, %p100
    %p102 = scmp.ne.s32.totalorder %s88, %s89
    %p103 = scmp.eq.s32.totalorder %s15, 1
    %p104 = por %p102, %p103
    %p106 = scmp.ne.s32.totalorder %s89, %s105
    %p107 = scmp.eq.s32.totalorder %s15, 0
    %p108 = por %p106, %p107
    %s109 = ssub.s32 %s16, %s28
    %s110 = ssub.s32 %s17, %s24
    %s111 = sor.u32 %s109, %s110
    %p112 = scmp.eq.s32.totalorder %s111, 0
    %s114 = sadd.s32 %s113, 1
    %s115 = scalar_select %p112, %s113, %s114
    %p118 = pneg %p112
    %p119 = scmp.eq.s32.totalorder %s9, 1
    %p120 = por %p118, %p119
    %p121 = scmp.ne.s32.totalorder %s113, %s116
    %p122 = scmp.eq.s32.totalorder %s9, 0
    %p123 = por %p121, %p122
    %p124 = scmp.ne.s32.totalorder %s113, %s116
    %p125 = scmp.eq.s32.totalorder %s14, 1
    %p126 = por %p124, %p125
    %p127 = scmp.ne.s32.totalorder %s116, %s117
    %p128 = scmp.eq.s32.totalorder %s14, 0
    %p129 = por %p127, %p128
    %p130 = scmp.ne.s32.totalorder %s116, %s117
    %p131 = scmp.eq.s32.totalorder %s15, 1
    %p132 = por %p130, %p131
    %p134 = scmp.ne.s32.totalorder %s117, %s133
    %p135 = scmp.eq.s32.totalorder %s15, 0
    %p136 = por %p134, %p135
    %p137 = scmp.le.s32.totalorder 1, %s9
    %p138 = scmp.lt.s32.totalorder %s9, 3
    %p139 = pnand %p137, %p138
    %p140 = pneg %p139
    // Predicated region
    $region9: #{a_call__.15} parent=5 // pred_check
      _
    $region10: #{a_call__.15} parent=5 // pred_check_branch
      %142 = sbr.rel (%p139) target = $region12
    $region11: #{a_call__.15} parent=5 // pred_region
      %s143 = ssub.s32 %s9, 1
    $region12: #{a_call__.15} parent=5 // pred_fallthru
      _
    %p144 = scmp.lt.s32.totalorder %s9, 2
    // Predicated region
    $region13: #{a_call__.15} parent=5 // pred_check
      %p145 = pneg %p144
    $region14: #{a_call__.15} parent=5 // pred_check_branch
      %147 = sbr.rel (%p145) target = $region16
    $region15: #{a_call__.15} parent=5 // pred_region
      // Predicated region
      $region17: #{a_call__.15} parent=15 // pred_check
        %p148 = pneg %p43
      $region18: #{a_call__.15} parent=15 // pred_check_branch
        %150 = sbr.rel (%p148) target = $region20
      $region19: #{a_call__.15} parent=15 // pred_region
        %s151 = smul.u32 16, %s17
        %p152 = scmp.lt.s32.totalorder %s16, 1
        %s153 = scalar_select %p152, %s16, 1
        %p154 = scmp.lt.s32.totalorder %s151, 15
        %s155 = scalar_select %p154, %s151, 15
        %s156 = smul.addr %s155, 2
        %s157 = smul.addr %s153, 32
        %s158 = sadd.s32 %s156, %s157
        %s159 = smul.addr %s158, 8
        %s160 = scalar_lea.vmem %s0, %s159
        %s161 = smul.u32 16, %s17
      $region20: #{a_call__.15} parent=15 // pred_fallthru
        _
      // Predicated region
      $region21: #{a_call__.15} parent=15 // pred_check
        %p162 = pneg %p69
      $region22: #{a_call__.15} parent=15 // pred_check_branch
        %164 = sbr.rel (%p162) target = $region24
      $region23: #{a_call__.15} parent=15 // pred_region
        %p165 = scmp.lt.s32.totalorder %s16, 1
        %s166 = scalar_select %p165, %s16, 1
        %s167 = scalar_lea.vmem %s1, %s166
      $region24: #{a_call__.15} parent=15 // pred_fallthru
        _
      // Predicated region
      $region25: #{a_call__.15} parent=15 // pred_check
        %p168 = pneg %p95
      $region26: #{a_call__.15} parent=15 // pred_check_branch
        %170 = sbr.rel (%p168) target = $region28
      $region27: #{a_call__.15} parent=15 // pred_region
        %p171 = scmp.lt.s32.totalorder %s16, 1
        %s172 = scalar_select %p171, %s16, 1
        %s173 = scalar_lea.vmem %s2, %s172
      $region28: #{a_call__.15} parent=15 // pred_fallthru
        _
    $region16: #{a_call__.15} parent=5 // pred_fallthru
      _
    %p174 = scmp.le.s32.totalorder 1, %s9
    %p175 = scmp.lt.s32.totalorder %s9, 3
    %p176 = pnand %p174, %p175
    %p177 = pneg %p176
    // Predicated region
    $region29: #{a_call__.15} parent=5 // pred_check
      _
    $region30: #{a_call__.15} parent=5 // pred_check_branch
      %179 = sbr.rel (%p176) target = $region32
    $region31: #{a_call__.15} parent=5 // pred_region
      %s180 = ssub.s32 %s9, 1
      %s181 = smul.u32 16, %s19
      %p182 = scmp.lt.s32.totalorder %s18, 1
      %s183 = scalar_select %p182, %s18, 1
      %p184 = scmp.lt.s32.totalorder %s181, 15
      %s185 = scalar_select %p184, %s181, 15
      %s186 = smul.addr %s185, 2
      %s187 = smul.addr %s183, 32
      %s188 = sadd.s32 %s186, %s187
      %s189 = smul.addr %s188, 8
      %s190 = scalar_lea.vmem %s0, %s189
      %p191 = pneg %p49
      %p192 = pneg %p46
      %p193 = scmp.lt.s32.totalorder %s18, 1
      %s194 = scalar_select %p193, %s18, 1
      %s195 = scalar_lea.vmem %s1, %s194
      %p196 = pneg %p75
      %p197 = pneg %p72
      %p198 = scmp.lt.s32.totalorder %s18, 1
      %s199 = scalar_select %p198, %s18, 1
      %s200 = scalar_lea.vmem %s2, %s199
      %p201 = pneg %p101
      %p202 = pneg %p98
      %p203 = pneg %p129
      %p204 = pneg %p126
      %s205 = smul.u32 16, %s19
      %p206 = scmp.lt.s32.totalorder %s18, 1
      %s207 = scalar_select %p206, %s18, 1
      %p208 = scmp.lt.s32.totalorder %s205, 15
      %s209 = scalar_select %p208, %s205, 15
      %s210 = smul.addr %s209, 2
      %s211 = smul.addr %s207, 32
      %s212 = sadd.s32 %s210, %s211
      %s213 = smul.addr %s212, 8
      %s214 = scalar_lea.vmem %s3, %s213
      %s215 = smul.u32 16, %s19
      %p216 = scmp.lt.s32.totalorder %s18, 1
      %s217 = scalar_select %p216, %s18, 1
      %p218 = scmp.lt.s32.totalorder %s215, 15
      %s219 = scalar_select %p218, %s215, 15
      %s220 = smul.addr %s219, 2
      %s221 = smul.addr %s217, 32
      %s222 = sadd.s32 %s220, %s221
      %s223 = smul.addr %s222, 8
      %s224 = scalar_lea.vmem %s0, %s223
      %s225 = smul.u32 16, %s19
      %p226 = scmp.lt.s32.totalorder %s18, 1
      %s227 = scalar_select %p226, %s18, 1
      %s228 = scalar_lea.vmem %s1, %s227
      %p229 = scmp.lt.s32.totalorder %s18, 1
      %s230 = scalar_select %p229, %s18, 1
      %s231 = scalar_lea.vmem %s2, %s230
      %s232 = smul.u32 16, %s19
      %p233 = scmp.lt.s32.totalorder %s18, 1
      %s234 = scalar_select %p233, %s18, 1
      %p235 = scmp.lt.s32.totalorder %s232, 15
      %s236 = scalar_select %p235, %s232, 15
      %s237 = smul.addr %s236, 2
      %s238 = smul.addr %s234, 32
      %s239 = sadd.s32 %s237, %s238
      %s240 = smul.addr %s239, 8
      %s241 = scalar_lea.vmem %s3, %s240
      %s242 = smul.u32 16, %s19
      %v243 = vld [vmem:[%s224] sm:$0xff]
      %v244 = vld [vmem:[%s224 + $0x8] sm:$0xff]
      %v245 = vld [vmem:[%s224 + $0x10] sm:$0xff]
      %v246 = vld [vmem:[%s224 + $0x18] sm:$0xff]
      %v247 = vld [vmem:[%s224 + $0x20] sm:$0xff]
      %v248 = vld [vmem:[%s224 + $0x28] sm:$0xff]
      %v249 = vld [vmem:[%s224 + $0x30] sm:$0xff]
      %v250 = vld [vmem:[%s224 + $0x38] sm:$0xff]
      %v251 = vld [vmem:[%s224 + $0x40] sm:$0xff]
      %v252 = vld [vmem:[%s224 + $0x48] sm:$0xff]
      %v253 = vld [vmem:[%s224 + $0x50] sm:$0xff]
      %v254 = vld [vmem:[%s224 + $0x58] sm:$0xff]
      %v255 = vld [vmem:[%s224 + $0x60] sm:$0xff]
      %v256 = vld [vmem:[%s224 + $0x68] sm:$0xff]
      %v257 = vld [vmem:[%s224 + $0x70] sm:$0xff]
      %v258 = vld [vmem:[%s224 + $0x78] sm:$0xff]
      %v259 = vld [vmem:[%s224 + $0x80] sm:$0xff]
      %v260 = vld [vmem:[%s224 + $0x88] sm:$0xff]
      %v261 = vld [vmem:[%s224 + $0x90] sm:$0xff]
      %v262 = vld [vmem:[%s224 + $0x98] sm:$0xff]
      %v263 = vld [vmem:[%s224 + $0xa0] sm:$0xff]
      %v264 = vld [vmem:[%s224 + $0xa8] sm:$0xff]
      %v265 = vld [vmem:[%s224 + $0xb0] sm:$0xff]
      %v266 = vld [vmem:[%s224 + $0xb8] sm:$0xff]
      %v267 = vld [vmem:[%s224 + $0xc0] sm:$0xff]
      %v268 = vld [vmem:[%s224 + $0xc8] sm:$0xff]
      %v269 = vld [vmem:[%s224 + $0xd0] sm:$0xff]
      %v270 = vld [vmem:[%s224 + $0xd8] sm:$0xff]
      %v271 = vld [vmem:[%s224 + $0xe0] sm:$0xff]
      %v272 = vld [vmem:[%s224 + $0xe8] sm:$0xff]
      %v273 = vld [vmem:[%s224 + $0xf0] sm:$0xff]
      %v274 = vld [vmem:[%s224 + $0xf8] sm:$0xff]
      %v275 = vld [vmem:[%s228] sm:$0x1]
      %v277 = vlaneseq
      %v278 = vshrl.u32 %v277, 7
      %v279 = vsub.s32 0, %v278
      %v280 = vrot.slane %v275, %v279
      %v282 = vsub.f32 %v243, %v280
      %v283 = vsub.f32 %v244, %v280
      %v284 = vsub.f32 %v245, %v280
      %v285 = vsub.f32 %v246, %v280
      %v286 = vsub.f32 %v247, %v280
      %v287 = vsub.f32 %v248, %v280
      %v288 = vsub.f32 %v249, %v280
      %v289 = vsub.f32 %v250, %v280
      %v290 = vsub.f32 %v251, %v280
      %v291 = vsub.f32 %v252, %v280
      %v292 = vsub.f32 %v253, %v280
      %v293 = vsub.f32 %v254, %v280
      %v294 = vsub.f32 %v255, %v280
      %v295 = vsub.f32 %v256, %v280
      %v296 = vsub.f32 %v257, %v280
      %v297 = vsub.f32 %v258, %v280
      %v298 = vsub.f32 %v259, %v280
      %v299 = vsub.f32 %v260, %v280
      %v300 = vsub.f32 %v261, %v280
      %v301 = vsub.f32 %v262, %v280
      %v302 = vsub.f32 %v263, %v280
      %v303 = vsub.f32 %v264, %v280
      %v304 = vsub.f32 %v265, %v280
      %v305 = vsub.f32 %v266, %v280
      %v306 = vsub.f32 %v267, %v280
      %v307 = vsub.f32 %v268, %v280
      %v308 = vsub.f32 %v269, %v280
      %v309 = vsub.f32 %v270, %v280
      %v310 = vsub.f32 %v271, %v280
      %v311 = vsub.f32 %v272, %v280
      %v312 = vsub.f32 %v273, %v280
      %v313 = vsub.f32 %v274, %v280
      %v314 = vld [vmem:[%s231] sm:$0x1]
      %v316 = vlaneseq
      %v317 = vshrl.u32 %v316, 7
      %v318 = vsub.s32 0, %v317
      %v319 = vrot.slane %v314, %v318
      %v321 = vmul.f32 %v282, %v319
      %v322 = vmul.f32 %v283, %v319
      %v323 = vmul.f32 %v284, %v319
      %v324 = vmul.f32 %v285, %v319
      %v325 = vmul.f32 %v286, %v319
      %v326 = vmul.f32 %v287, %v319
      %v327 = vmul.f32 %v288, %v319
      %v328 = vmul.f32 %v289, %v319
      %v329 = vmul.f32 %v290, %v319
      %v330 = vmul.f32 %v291, %v319
      %v331 = vmul.f32 %v292, %v319
      %v332 = vmul.f32 %v293, %v319
      %v333 = vmul.f32 %v294, %v319
      %v334 = vmul.f32 %v295, %v319
      %v335 = vmul.f32 %v296, %v319
      %v336 = vmul.f32 %v297, %v319
      %v337 = vmul.f32 %v298, %v319
      %v338 = vmul.f32 %v299, %v319
      %v339 = vmul.f32 %v300, %v319
      %v340 = vmul.f32 %v301, %v319
      %v341 = vmul.f32 %v302, %v319
      %v342 = vmul.f32 %v303, %v319
      %v343 = vmul.f32 %v304, %v319
      %v344 = vmul.f32 %v305, %v319
      %v345 = vmul.f32 %v306, %v319
      %v346 = vmul.f32 %v307, %v319
      %v347 = vmul.f32 %v308, %v319
      %v348 = vmul.f32 %v309, %v319
      %v349 = vmul.f32 %v310, %v319
      %v350 = vmul.f32 %v311, %v319
      %v351 = vmul.f32 %v312, %v319
      %v352 = vmul.f32 %v313, %v319
      %v353 = vmax.f32 %v321, 0.0
      %v354 = vmax.f32 %v322, 0.0
      %v355 = vmax.f32 %v323, 0.0
      %v356 = vmax.f32 %v324, 0.0
      %v357 = vmax.f32 %v325, 0.0
      %v358 = vmax.f32 %v326, 0.0
      %v359 = vmax.f32 %v327, 0.0
      %v360 = vmax.f32 %v328, 0.0
      %v361 = vmax.f32 %v329, 0.0
      %v362 = vmax.f32 %v330, 0.0
      %v363 = vmax.f32 %v331, 0.0
      %v364 = vmax.f32 %v332, 0.0
      %v365 = vmax.f32 %v333, 0.0
      %v366 = vmax.f32 %v334, 0.0
      %v367 = vmax.f32 %v335, 0.0
      %v368 = vmax.f32 %v336, 0.0
      %v369 = vmax.f32 %v337, 0.0
      %v370 = vmax.f32 %v338, 0.0
      %v371 = vmax.f32 %v339, 0.0
      %v372 = vmax.f32 %v340, 0.0
      %v373 = vmax.f32 %v341, 0.0
      %v374 = vmax.f32 %v342, 0.0
      %v375 = vmax.f32 %v343, 0.0
      %v376 = vmax.f32 %v344, 0.0
      %v377 = vmax.f32 %v345, 0.0
      %v378 = vmax.f32 %v346, 0.0
      %v379 = vmax.f32 %v347, 0.0
      %v380 = vmax.f32 %v348, 0.0
      %v381 = vmax.f32 %v349, 0.0
      %v382 = vmax.f32 %v350, 0.0
      %v383 = vmax.f32 %v351, 0.0
      %v384 = vmax.f32 %v352, 0.0
      %vm385 = vcmask 23552
      %386 = vst.msk [vmem:[%s241] sm:$0xff] %vm385, %v353
      %387 = vst.msk [vmem:[%s241 + $0x8] sm:$0xff] %vm385, %v354
      %388 = vst.msk [vmem:[%s241 + $0x10] sm:$0xff] %vm385, %v355
      %389 = vst.msk [vmem:[%s241 + $0x18] sm:$0xff] %vm385, %v356
      %390 = vst.msk [vmem:[%s241 + $0x20] sm:$0xff] %vm385, %v357
      %391 = vst.msk [vmem:[%s241 + $0x28] sm:$0xff] %vm385, %v358
      %392 = vst.msk [vmem:[%s241 + $0x30] sm:$0xff] %vm385, %v359
      %393 = vst.msk [vmem:[%s241 + $0x38] sm:$0xff] %vm385, %v360
      %394 = vst.msk [vmem:[%s241 + $0x40] sm:$0xff] %vm385, %v361
      %395 = vst.msk [vmem:[%s241 + $0x48] sm:$0xff] %vm385, %v362
      %396 = vst.msk [vmem:[%s241 + $0x50] sm:$0xff] %vm385, %v363
      %397 = vst.msk [vmem:[%s241 + $0x58] sm:$0xff] %vm385, %v364
      %398 = vst.msk [vmem:[%s241 + $0x60] sm:$0xff] %vm385, %v365
      %399 = vst.msk [vmem:[%s241 + $0x68] sm:$0xff] %vm385, %v366
      %400 = vst.msk [vmem:[%s241 + $0x70] sm:$0xff] %vm385, %v367
      %401 = vst.msk [vmem:[%s241 + $0x78] sm:$0xff] %vm385, %v368
      %402 = vst.msk [vmem:[%s241 + $0x80] sm:$0xff] %vm385, %v369
      %403 = vst.msk [vmem:[%s241 + $0x88] sm:$0xff] %vm385, %v370
      %404 = vst.msk [vmem:[%s241 + $0x90] sm:$0xff] %vm385, %v371
      %405 = vst.msk [vmem:[%s241 + $0x98] sm:$0xff] %vm385, %v372
      %406 = vst.msk [vmem:[%s241 + $0xa0] sm:$0xff] %vm385, %v373
      %407 = vst.msk [vmem:[%s241 + $0xa8] sm:$0xff] %vm385, %v374
      %408 = vst.msk [vmem:[%s241 + $0xb0] sm:$0xff] %vm385, %v375
      %409 = vst.msk [vmem:[%s241 + $0xb8] sm:$0xff] %vm385, %v376
      %410 = vst.msk [vmem:[%s241 + $0xc0] sm:$0xff] %vm385, %v377
      %411 = vst.msk [vmem:[%s241 + $0xc8] sm:$0xff] %vm385, %v378
      %412 = vst.msk [vmem:[%s241 + $0xd0] sm:$0xff] %vm385, %v379
      %413 = vst.msk [vmem:[%s241 + $0xd8] sm:$0xff] %vm385, %v380
      %414 = vst.msk [vmem:[%s241 + $0xe0] sm:$0xff] %vm385, %v381
      %415 = vst.msk [vmem:[%s241 + $0xe8] sm:$0xff] %vm385, %v382
      %416 = vst.msk [vmem:[%s241 + $0xf0] sm:$0xff] %vm385, %v383
      %417 = vst.msk [vmem:[%s241 + $0xf8] sm:$0xff] %vm385, %v384
      %s418 = smul.u32 16, %s19
      %p419 = scmp.lt.s32.totalorder %s18, 1
      %s420 = scalar_select %p419, %s18, 1
      %p421 = scmp.lt.s32.totalorder %s418, 15
      %s422 = scalar_select %p421, %s418, 15
      %s423 = smul.addr %s422, 2
      %s424 = smul.addr %s420, 32
      %s425 = sadd.s32 %s423, %s424
      %s426 = smul.addr %s425, 8
      %s427 = scalar_lea.vmem %s3, %s426
      // Predicated region
      $region33: #{a_call__.15} parent=31 // pred_check
        %p428 = pneg %p126
      $region34: #{a_call__.15} parent=31 // pred_check_branch
        %430 = sbr.rel (%p428) target = $region36
      $region35: #{a_call__.15} parent=31 // pred_region
        %s431 = smul.u32 16, %s19
      $region36: #{a_call__.15} parent=31 // pred_fallthru
        _
    $region32: #{a_call__.15} parent=5 // pred_fallthru
      _
    %p432 = scmp.le.s32.totalorder 2, %s9
    // Predicated region
    $region37: #{a_call__.15} parent=5 // pred_check
      %p433 = pneg %p432
    $region38: #{a_call__.15} parent=5 // pred_check_branch
      %435 = sbr.rel (%p433) target = $region40
    $region39: #{a_call__.15} parent=5 // pred_region
      %s436 = ssub.s32 %s9, 2
      // Predicated region
      $region41: #{a_call__.15} parent=39 // pred_check
        %p437 = pneg %p132
      $region42: #{a_call__.15} parent=39 // pred_check_branch
        %439 = sbr.rel (%p437) target = $region44
      $region43: #{a_call__.15} parent=39 // pred_region
        %s440 = smul.u32 16, %s21
        %p441 = scmp.lt.s32.totalorder %s20, 1
        %s442 = scalar_select %p441, %s20, 1
        %p443 = scmp.lt.s32.totalorder %s440, 15
        %s444 = scalar_select %p443, %s440, 15
        %s445 = smul.addr %s444, 2
        %s446 = smul.addr %s442, 32
        %s447 = sadd.s32 %s445, %s446
        %s448 = smul.addr %s447, 8
        %s449 = scalar_lea.vmem %s3, %s448
      $region44: #{a_call__.15} parent=39 // pred_fallthru
        _
    $region40: #{a_call__.15} parent=5 // pred_fallthru
      _
  $region6: #{a_call__.15} parent=0 // loop_footer
    %s13 = sadd.s32 1, %s9
  $region7: #{a_call__.15} parent=0 // loop_footer_branch
    %8 = sbr.rel target = $region3
  $region8: #{a_call__.15} parent=0 // loop_exit
    _

// kernel: a_call__.14
$region0: #{a_call__.14}
  #allocation0 [shape = 'u32[]', space=smem, size = 0x4, offset = 0x4, fixed_abs, tag = 'smem constant byte address 0x4 - core index']
  #allocation1 [shape = 'u32[144,128]{1,0:T(1,128)}', space=vmem, size = 0x12000, scoped, tag = 'internal scratch']
  %s0 = inlined_call_operand.vmem [shape: f32[2,8,9,8], index: 0, kind: input, shape index: {}]
  %s1 = inlined_call_operand.vmem [shape: f32[2,8,9,8], index: 1, kind: input, shape index: {}]
  %s2 = inlined_call_operand.vmem [shape: f32[72,3], index: 2, kind: input, shape index: {}]
  %s3 = inlined_call_operand.vmem [shape: f32[2,16,16,3], index: 3, kind: output, shape index: {0}]
  %s4 = inlined_call_operand.vmem [shape: f32[2,1,2,3], index: 4, kind: output, shape index: {1}]
  %5 = xla_tuple %s3, %s4
  %s6 = sld [smem:[#allocation0]]
  $region53: #{a_call__.14} parent=0
    _
  %s8 = ssub.s32 1, %s6
  %s9 = scalar_select 0, %s8, %s6
  loop: start=0, step=1, limit=4
  $region2: #{a_call__.14} parent=0 // loop_pre_header
    _
  $region3: #{a_call__.14} parent=0 // loop_header
    %s11 = sphi 0, %s15
    %p12 = scmp.ge.s32.totalorder %s11, 4
    %s18 = sphi 0, %s30
    %s19 = sphi 0, %s26
    %s20 = sphi 0, %s18
    %s21 = sphi 0, %s19
    %s22 = sphi 0, %s20
    %s23 = sphi 0, %s21
    %s35 = sphi 0, %s37
    %s38 = sphi 0, %s35
    %s39 = sphi 0, %s38
    %s55 = sphi 0, %s39
    %s63 = sphi 0, %s65
    %s66 = sphi 0, %s63
    %s67 = sphi 0, %s66
    %s83 = sphi 0, %s67
    %s87 = sphi 0, %s87
    %s89 = sphi 0, %s87
    %s90 = sphi 0, %s89
    %s104 = sphi 0, %s90
    %s112 = sphi 0, %s114
    %s115 = sphi 0, %s112
    %s116 = sphi 0, %s115
    %s132 = sphi 0, %s116
    %s140 = sphi 0, %s142
    %s143 = sphi 0, %s140
    %s144 = sphi 0, %s143
    %s160 = sphi 0, %s144
  $region4: #{a_call__.14} parent=0 // loop_header_branch
    %14 = sbr.rel (%p12) target = $region8
  $region5: #{a_call__.14} parent=0 // loop_body
    %s16 = ssub.s32 %s11, 1
    %s17 = ssub.s32 %s11, 2
    %s24 = sadd.s32 1, %s19
    %p25 = scmp.ge.s32.totalorder %s24, 1
    %s26 = scalar_select %p25, 0, %s24
    %s27 = sadd.s32 1, %s18
    %s28 = scalar_select %p25, %s27, %s18
    %p29 = scmp.ge.s32.totalorder %s28, 2
    %s30 = scalar_select %p29, 0, %s28
    %s31 = ssub.s32 %s18, %s30
    %s32 = ssub.s32 %s19, %s26
    %s33 = sor.u32 %s31, %s32
    %p34 = scmp.eq.s32.totalorder %s33, 0
    %s36 = sadd.s32 %s35, 1
    %s37 = scalar_select %p34, %s35, %s36
    %p40 = pneg %p34
    %p41 = scmp.eq.s32.totalorder %s11, 1
    %p42 = por %p40, %p41
    %p43 = scmp.ne.s32.totalorder %s35, %s38
    %p44 = scmp.eq.s32.totalorder %s11, 0
    %p45 = por %p43, %p44
    %p46 = scmp.ne.s32.totalorder %s35, %s38
    %p47 = scmp.eq.s32.totalorder %s16, 1
    %p48 = por %p46, %p47
    %p49 = scmp.ne.s32.totalorder %s38, %s39
    %p50 = scmp.eq.s32.totalorder %s16, 0
    %p51 = por %p49, %p50
    %p52 = scmp.ne.s32.totalorder %s38, %s39
    %p53 = scmp.eq.s32.totalorder %s17, 1
    %p54 = por %p52, %p53
    %p56 = scmp.ne.s32.totalorder %s39, %s55
    %p57 = scmp.eq.s32.totalorder %s17, 0
    %p58 = por %p56, %p57
    %s59 = ssub.s32 %s18, %s30
    %s60 = ssub.s32 %s19, %s26
    %s61 = sor.u32 %s59, %s60
    %p62 = scmp.eq.s32.totalorder %s61, 0
    %s64 = sadd.s32 %s63, 1
    %s65 = scalar_select %p62, %s63, %s64
    %p68 = pneg %p62
    %p69 = scmp.eq.s32.totalorder %s11, 1
    %p70 = por %p68, %p69
    %p71 = scmp.ne.s32.totalorder %s63, %s66
    %p72 = scmp.eq.s32.totalorder %s11, 0
    %p73 = por %p71, %p72
    %p74 = scmp.ne.s32.totalorder %s63, %s66
    %p75 = scmp.eq.s32.totalorder %s16, 1
    %p76 = por %p74, %p75
    %p77 = scmp.ne.s32.totalorder %s66, %s67
    %p78 = scmp.eq.s32.totalorder %s16, 0
    %p79 = por %p77, %p78
    %p80 = scmp.ne.s32.totalorder %s66, %s67
    %p81 = scmp.eq.s32.totalorder %s17, 1
    %p82 = por %p80, %p81
    %p84 = scmp.ne.s32.totalorder %s67, %s83
    %p85 = scmp.eq.s32.totalorder %s17, 0
    %p86 = por %p84, %p85
    %s88 = sadd.s32 %s87, 1
    %p91 = scmp.eq.s32.totalorder %s11, 1
    %p92 = scmp.ne.s32.totalorder %s87, %s89
    %p93 = scmp.eq.s32.totalorder %s11, 0
    %p94 = por %p92, %p93
    %p95 = scmp.ne.s32.totalorder %s87, %s89
    %p96 = scmp.eq.s32.totalorder %s16, 1
    %p97 = por %p95, %p96
    %p98 = scmp.ne.s32.totalorder %s89, %s90
    %p99 = scmp.eq.s32.totalorder %s16, 0
    %p100 = por %p98, %p99
    %p101 = scmp.ne.s32.totalorder %s89, %s90
    %p102 = scmp.eq.s32.totalorder %s17, 1
    %p103 = por %p101, %p102
    %p105 = scmp.ne.s32.totalorder %s90, %s104
    %p106 = scmp.eq.s32.totalorder %s17, 0
    %p107 = por %p105, %p106
    %s108 = ssub.s32 %s18, %s30
    %s109 = ssub.s32 %s19, %s26
    %s110 = sor.u32 %s108, %s109
    %p111 = scmp.eq.s32.totalorder %s110, 0
    %s113 = sadd.s32 %s112, 1
    %s114 = scalar_select %p111, %s112, %s113
    %p117 = pneg %p111
    %p118 = scmp.eq.s32.totalorder %s11, 1
    %p119 = por %p117, %p118
    %p120 = scmp.ne.s32.totalorder %s112, %s115
    %p121 = scmp.eq.s32.totalorder %s11, 0
    %p122 = por %p120, %p121
    %p123 = scmp.ne.s32.totalorder %s112, %s115
    %p124 = scmp.eq.s32.totalorder %s16, 1
    %p125 = por %p123, %p124
    %p126 = scmp.ne.s32.totalorder %s115, %s116
    %p127 = scmp.eq.s32.totalorder %s16, 0
    %p128 = por %p126, %p127
    %p129 = scmp.ne.s32.totalorder %s115, %s116
    %p130 = scmp.eq.s32.totalorder %s17, 1
    %p131 = por %p129, %p130
    %p133 = scmp.ne.s32.totalorder %s116, %s132
    %p134 = scmp.eq.s32.totalorder %s17, 0
    %p135 = por %p133, %p134
    %s136 = ssub.s32 %s18, %s30
    %s137 = ssub.s32 %s19, %s26
    %s138 = sor.u32 %s136, %s137
    %p139 = scmp.eq.s32.totalorder %s138, 0
    %s141 = sadd.s32 %s140, 1
    %s142 = scalar_select %p139, %s140, %s141
    %p145 = pneg %p139
    %p146 = scmp.eq.s32.totalorder %s11, 1
    %p147 = por %p145, %p146
    %p148 = scmp.ne.s32.totalorder %s140, %s143
    %p149 = scmp.eq.s32.totalorder %s11, 0
    %p150 = por %p148, %p149
    %p151 = scmp.ne.s32.totalorder %s140, %s143
    %p152 = scmp.eq.s32.totalorder %s16, 1
    %p153 = por %p151, %p152
    %p154 = scmp.ne.s32.totalorder %s143, %s144
    %p155 = scmp.eq.s32.totalorder %s16, 0
    %p156 = por %p154, %p155
    %p157 = scmp.ne.s32.totalorder %s143, %s144
    %p158 = scmp.eq.s32.totalorder %s17, 1
    %p159 = por %p157, %p158
    %p161 = scmp.ne.s32.totalorder %s144, %s160
    %p162 = scmp.eq.s32.totalorder %s17, 0
    %p163 = por %p161, %p162
    %p164 = scmp.le.s32.totalorder 1, %s11
    %p165 = scmp.lt.s32.totalorder %s11, 3
    %p166 = pnand %p164, %p165
    %p167 = pneg %p166
    // Predicated region
    $region9: #{a_call__.14} parent=5 // pred_check
      _
    $region10: #{a_call__.14} parent=5 // pred_check_branch
      %169 = sbr.rel (%p166) target = $region12
    $region11: #{a_call__.14} parent=5 // pred_region
      %s170 = ssub.s32 %s11, 1
      // Predicated region
      $region13: #{a_call__.14} parent=11 // pred_check
        %p171 = pneg %p100
      $region14: #{a_call__.14} parent=11 // pred_check_branch
        %173 = sbr.rel (%p171) target = $region16
      $region15: #{a_call__.14} parent=11 // pred_region
        _
      $region16: #{a_call__.14} parent=11 // pred_fallthru
        _
    $region12: #{a_call__.14} parent=5 // pred_fallthru
      _
    %p174 = scmp.lt.s32.totalorder %s11, 2
    // Predicated region
    $region17: #{a_call__.14} parent=5 // pred_check
      %p175 = pneg %p174
    $region18: #{a_call__.14} parent=5 // pred_check_branch
      %177 = sbr.rel (%p175) target = $region20
    $region19: #{a_call__.14} parent=5 // pred_region
      // Predicated region
      $region21: #{a_call__.14} parent=19 // pred_check
        %p178 = pneg %p45
      $region22: #{a_call__.14} parent=19 // pred_check_branch
        %180 = sbr.rel (%p178) target = $region24
      $region23: #{a_call__.14} parent=19 // pred_region
        %s181 = smul.u32 8, %s19
        %p182 = scmp.lt.s32.totalorder %s18, 1
        %s183 = scalar_select %p182, %s18, 1
        %p184 = scmp.lt.s32.totalorder %s181, 7
        %s185 = scalar_select %p184, %s181, 7
        %s186 = smul.addr %s185, 2
        %s187 = smul.addr %s183, 16
        %s188 = sadd.s32 %s186, %s187
        %s189 = smul.addr %s188, 8
        %s190 = scalar_lea.vmem %s0, %s189
        %s191 = smul.u32 8, %s19
      $region24: #{a_call__.14} parent=19 // pred_fallthru
        _
      // Predicated region
      $region25: #{a_call__.14} parent=19 // pred_check
        %p192 = pneg %p73
      $region26: #{a_call__.14} parent=19 // pred_check_branch
        %194 = sbr.rel (%p192) target = $region28
      $region27: #{a_call__.14} parent=19 // pred_region
        %s195 = smul.u32 8, %s19
        %p196 = scmp.lt.s32.totalorder %s18, 1
        %s197 = scalar_select %p196, %s18, 1
        %p198 = scmp.lt.s32.totalorder %s195, 7
        %s199 = scalar_select %p198, %s195, 7
        %s200 = smul.addr %s199, 2
        %s201 = smul.addr %s197, 16
        %s202 = sadd.s32 %s200, %s201
        %s203 = smul.addr %s202, 8
        %s204 = scalar_lea.vmem %s1, %s203
        %s205 = smul.u32 8, %s19
      $region28: #{a_call__.14} parent=19 // pred_fallthru
        _
    $region20: #{a_call__.14} parent=5 // pred_fallthru
      _
    %p206 = scmp.le.s32.totalorder 1, %s11
    %p207 = scmp.lt.s32.totalorder %s11, 3
    %p208 = pnand %p206, %p207
    %p209 = pneg %p208
    // Predicated region
    $region29: #{a_call__.14} parent=5 // pred_check
      _
    $region30: #{a_call__.14} parent=5 // pred_check_branch
      %211 = sbr.rel (%p208) target = $region32
    $region31: #{a_call__.14} parent=5 // pred_region
      %s212 = ssub.s32 %s11, 1
      %s213 = smul.u32 8, %s21
      %p214 = scmp.lt.s32.totalorder %s20, 1
      %s215 = scalar_select %p214, %s20, 1
      %p216 = scmp.lt.s32.totalorder %s213, 7
      %s217 = scalar_select %p216, %s213, 7
      %s218 = smul.addr %s217, 2
      %s219 = smul.addr %s215, 16
      %s220 = sadd.s32 %s218, %s219
      %s221 = smul.addr %s220, 8
      %s222 = scalar_lea.vmem %s0, %s221
      %p223 = pneg %p51
      %p224 = pneg %p48
      %s225 = smul.u32 8, %s21
      %p226 = scmp.lt.s32.totalorder %s20, 1
      %s227 = scalar_select %p226, %s20, 1
      %p228 = scmp.lt.s32.totalorder %s225, 7
      %s229 = scalar_select %p228, %s225, 7
      %s230 = smul.addr %s229, 2
      %s231 = smul.addr %s227, 16
      %s232 = sadd.s32 %s230, %s231
      %s233 = smul.addr %s232, 8
      %s234 = scalar_lea.vmem %s1, %s233
      %p235 = pneg %p79
      %p236 = pneg %p76
      %p237 = pneg %p100
      %p238 = pneg %p97
      %p239 = pneg %p128
      %p240 = pneg %p125
      %s241 = smul.u32 16, %s21
      %p242 = scmp.lt.s32.totalorder %s20, 1
      %s243 = scalar_select %p242, %s20, 1
      %p244 = scmp.lt.s32.totalorder %s241, 15
      %s245 = scalar_select %p244, %s241, 15
      %s246 = smul.addr %s245, 2
      %s247 = smul.addr %s243, 32
      %s248 = sadd.s32 %s246, %s247
      %s249 = smul.addr %s248, 8
      %s250 = scalar_lea.vmem %s3, %s249
      %p251 = pneg %p156
      %p252 = pneg %p153
      %p253 = scmp.lt.s32.totalorder %s20, 1
      %s254 = scalar_select %p253, %s20, 1
      %p255 = scmp.lt.s32.totalorder %s21, 0
      %s256 = scalar_select %p255, %s21, 0
      %s257 = sadd.s32 %s256, %s254
      %s258 = smul.addr %s257, 2
      %s259 = scalar_lea.vmem %s4, %s258
      %s260 = smul.u32 8, %s21
      %p261 = scmp.lt.s32.totalorder %s20, 1
      %s262 = scalar_select %p261, %s20, 1
      %p263 = scmp.lt.s32.totalorder %s260, 7
      %s264 = scalar_select %p263, %s260, 7
      %s265 = smul.addr %s264, 2
      %s266 = smul.addr %s262, 16
      %s267 = sadd.s32 %s265, %s266
      %s268 = smul.addr %s267, 8
      %s269 = scalar_lea.vmem %s0, %s268
      %s270 = smul.u32 8, %s21
      %s271 = smul.u32 8, %s21
      %p272 = scmp.lt.s32.totalorder %s20, 1
      %s273 = scalar_select %p272, %s20, 1
      %p274 = scmp.lt.s32.totalorder %s271, 7
      %s275 = scalar_select %p274, %s271, 7
      %s276 = smul.addr %s275, 2
      %s277 = smul.addr %s273, 16
      %s278 = sadd.s32 %s276, %s277
      %s279 = smul.addr %s278, 8
      %s280 = scalar_lea.vmem %s1, %s279
      %s281 = smul.u32 8, %s21
      %s282 = smul.u32 16, %s21
      %p283 = scmp.lt.s32.totalorder %s20, 1
      %s284 = scalar_select %p283, %s20, 1
      %p285 = scmp.lt.s32.totalorder %s282, 15
      %s286 = scalar_select %p285, %s282, 15
      %s287 = smul.addr %s286, 2
      %s288 = smul.addr %s284, 32
      %s289 = sadd.s32 %s287, %s288
      %s290 = smul.addr %s289, 8
      %s291 = scalar_lea.vmem %s3, %s290
      %s292 = smul.u32 16, %s21
      %p293 = scmp.lt.s32.totalorder %s20, 1
      %s294 = scalar_select %p293, %s20, 1
      %p295 = scmp.lt.s32.totalorder %s21, 0
      %s296 = scalar_select %p295, %s21, 0
      %s297 = sadd.s32 %s296, %s294
      %s298 = smul.addr %s297, 2
      %s299 = scalar_lea.vmem %s4, %s298
      %v300 = vld [vmem:[%s269] sm:$0xff]
      %v301 = vld [vmem:[%s269 + $0x8] sm:$0x1]
      %v302 = vld [vmem:[%s269 + $0x10] sm:$0xff]
      %v303 = vld [vmem:[%s269 + $0x18] sm:$0x1]
      %v304 = vld [vmem:[%s269 + $0x20] sm:$0xff]
      %v305 = vld [vmem:[%s269 + $0x28] sm:$0x1]
      %v306 = vld [vmem:[%s269 + $0x30] sm:$0xff]
      %v307 = vld [vmem:[%s269 + $0x38] sm:$0x1]
      %v308 = vld [vmem:[%s269 + $0x40] sm:$0xff]
      %v309 = vld [vmem:[%s269 + $0x48] sm:$0x1]
      %v310 = vld [vmem:[%s269 + $0x50] sm:$0xff]
      %v311 = vld [vmem:[%s269 + $0x58] sm:$0x1]
      %v312 = vld [vmem:[%s269 + $0x60] sm:$0xff]
      %v313 = vld [vmem:[%s269 + $0x68] sm:$0x1]
      %v314 = vld [vmem:[%s269 + $0x70] sm:$0xff]
      %v315 = vld [vmem:[%s269 + $0x78] sm:$0x1]
      %v316 = vld [vmem:[%s280] sm:$0xff]
      %v317 = vld [vmem:[%s280 + $0x8] sm:$0x1]
      %v318 = vld [vmem:[%s280 + $0x10] sm:$0xff]
      %v319 = vld [vmem:[%s280 + $0x18] sm:$0x1]
      %v320 = vld [vmem:[%s280 + $0x20] sm:$0xff]
      %v321 = vld [vmem:[%s280 + $0x28] sm:$0x1]
      %v322 = vld [vmem:[%s280 + $0x30] sm:$0xff]
      %v323 = vld [vmem:[%s280 + $0x38] sm:$0x1]
      %v324 = vld [vmem:[%s280 + $0x40] sm:$0xff]
      %v325 = vld [vmem:[%s280 + $0x48] sm:$0x1]
      %v326 = vld [vmem:[%s280 + $0x50] sm:$0xff]
      %v327 = vld [vmem:[%s280 + $0x58] sm:$0x1]
      %v328 = vld [vmem:[%s280 + $0x60] sm:$0xff]
      %v329 = vld [vmem:[%s280 + $0x68] sm:$0x1]
      %v330 = vld [vmem:[%s280 + $0x70] sm:$0xff]
      %v331 = vld [vmem:[%s280 + $0x78] sm:$0x1]
      %v332 = vld [vmem:[%s2] sm:$0xff]
      %v333 = vld [vmem:[%s2 + $0x8] sm:$0xff]
      %v334 = vld [vmem:[%s2 + $0x10] sm:$0xff]
      %v335 = vld [vmem:[%s2 + $0x18] sm:$0xff]
      %v336 = vld [vmem:[%s2 + $0x20] sm:$0xff]
      %v337 = vld [vmem:[%s2 + $0x28] sm:$0xff]
      %v338 = vld [vmem:[%s2 + $0x30] sm:$0xff]
      %v339 = vld [vmem:[%s2 + $0x38] sm:$0xff]
      %v340 = vld [vmem:[%s2 + $0x40] sm:$0xff]
      %vm357 = vcmask 1046528
      %v358 = vrot.slane %v300, 1
      %v359 = vrot.slane %v301, 1
      %v360 = vsel %vm357, %v358, %v359
      %v361 = vrot.slane %v302, 1
      %v362 = vrot.slane %v303, 1
      %v363 = vsel %vm357, %v361, %v362
      %v364 = vrot.slane %v304, 1
      %v365 = vrot.slane %v305, 1
      %v366 = vsel %vm357, %v364, %v365
      %v367 = vrot.slane %v306, 1
      %v368 = vrot.slane %v307, 1
      %v369 = vsel %vm357, %v367, %v368
      %v370 = vrot.slane %v308, 1
      %v371 = vrot.slane %v309, 1
      %v372 = vsel %vm357, %v370, %v371
      %v373 = vrot.slane %v310, 1
      %v374 = vrot.slane %v311, 1
      %v375 = vsel %vm357, %v373, %v374
      %v376 = vrot.slane %v312, 1
      %v377 = vrot.slane %v313, 1
      %v378 = vsel %vm357, %v376, %v377
      %v379 = vrot.slane %v314, 1
      %v380 = vrot.slane %v315, 1
      %v381 = vsel %vm357, %v379, %v380
      %v398 = vrot.slane %v316, 1
      %v399 = vrot.slane %v317, 1
      %v400 = vsel %vm357, %v398, %v399
      %v401 = vrot.slane %v318, 1
      %v402 = vrot.slane %v319, 1
      %v403 = vsel %vm357, %v401, %v402
      %v404 = vrot.slane %v320, 1
      %v405 = vrot.slane %v321, 1
      %v406 = vsel %vm357, %v404, %v405
      %v407 = vrot.slane %v322, 1
      %v408 = vrot.slane %v323, 1
      %v409 = vsel %vm357, %v407, %v408
      %v410 = vrot.slane %v324, 1
      %v411 = vrot.slane %v325, 1
      %v412 = vsel %vm357, %v410, %v411
      %v413 = vrot.slane %v326, 1
      %v414 = vrot.slane %v327, 1
      %v415 = vsel %vm357, %v413, %v414
      %v416 = vrot.slane %v328, 1
      %v417 = vrot.slane %v329, 1
      %v418 = vsel %vm357, %v416, %v417
      %v419 = vrot.slane %v330, 1
      %v420 = vrot.slane %v331, 1
      %v421 = vsel %vm357, %v419, %v420
      %422 = vrot.lane.b32.xlu0 %v300, 8
      %v423 = vpop.permute.xlu0 %422
      %424 = vrot.lane.b32.xlu0 %v302, 8
      %v425 = vpop.permute.xlu0 %424
      %426 = vrot.lane.b32.xlu0 %v304, 8
      %v427 = vpop.permute.xlu0 %426
      %428 = vrot.lane.b32.xlu0 %v306, 8
      %v429 = vpop.permute.xlu0 %428
      %430 = vrot.lane.b32.xlu0 %v308, 8
      %v431 = vpop.permute.xlu0 %430
      %432 = vrot.lane.b32.xlu0 %v310, 8
      %v433 = vpop.permute.xlu0 %432
      %434 = vrot.lane.b32.xlu0 %v312, 8
      %v435 = vpop.permute.xlu0 %434
      %436 = vrot.lane.b32.xlu0 %v314, 8
      %v437 = vpop.permute.xlu0 %436
      %446 = vrot.lane.b32.xlu0 %v360, 16
      %v447 = vpop.permute.xlu0 %446
      %448 = vrot.lane.b32.xlu0 %v363, 16
      %v449 = vpop.permute.xlu0 %448
      %450 = vrot.lane.b32.xlu0 %v366, 16
      %v451 = vpop.permute.xlu0 %450
      %452 = vrot.lane.b32.xlu0 %v369, 16
      %v453 = vpop.permute.xlu0 %452
      %454 = vrot.lane.b32.xlu0 %v372, 16
      %v455 = vpop.permute.xlu0 %454
      %456 = vrot.lane.b32.xlu0 %v375, 16
      %v457 = vpop.permute.xlu0 %456
      %458 = vrot.lane.b32.xlu0 %v378, 16
      %v459 = vpop.permute.xlu0 %458
      %460 = vrot.lane.b32.xlu0 %v381, 16
      %v461 = vpop.permute.xlu0 %460
      %470 = vrot.lane.b32.xlu0 %v400, 24
      %v471 = vpop.permute.xlu0 %470
      %472 = vrot.lane.b32.xlu0 %v403, 24
      %v473 = vpop.permute.xlu0 %472
      %474 = vrot.lane.b32.xlu0 %v406, 24
      %v475 = vpop.permute.xlu0 %474
      %476 = vrot.lane.b32.xlu0 %v409, 24
      %v477 = vpop.permute.xlu0 %476
      %478 = vrot.lane.b32.xlu0 %v412, 24
      %v479 = vpop.permute.xlu0 %478
      %480 = vrot.lane.b32.xlu0 %v415, 24
      %v481 = vpop.permute.xlu0 %480
      %482 = vrot.lane.b32.xlu0 %v418, 24
      %v483 = vpop.permute.xlu0 %482
      %484 = vrot.lane.b32.xlu0 %v421, 24
      %v485 = vpop.permute.xlu0 %484
      %vm494 = vcmask 64512
      %v495 = vsel %vm494, %v316, %v423
      %v496 = vsel %vm494, %v318, %v425
      %v497 = vsel %vm494, %v320, %v427
      %v498 = vsel %vm494, %v322, %v429
      %v499 = vsel %vm494, %v324, %v431
      %v500 = vsel %vm494, %v326, %v433
      %v501 = vsel %vm494, %v328, %v435
      %v502 = vsel %vm494, %v330, %v437
      %vm503 = vcmask 130048
      %v504 = vsel %vm503, %v495, %v447
      %v505 = vsel %vm503, %v496, %v449
      %v506 = vsel %vm503, %v497, %v451
      %v507 = vsel %vm503, %v498, %v453
      %v508 = vsel %vm503, %v499, %v455
      %v509 = vsel %vm503, %v500, %v457
      %v510 = vsel %vm503, %v501, %v459
      %v511 = vsel %vm503, %v502, %v461
      %vm512 = vcmask 195584
      %v513 = vsel %vm512, %v504, %v471
      %v514 = vsel %vm512, %v505, %v473
      %v515 = vsel %vm512, %v506, %v475
      %v516 = vsel %vm512, %v507, %v477
      %v517 = vsel %vm512, %v508, %v479
      %v518 = vsel %vm512, %v509, %v481
      %v519 = vsel %vm512, %v510, %v483
      %v520 = vsel %vm512, %v511, %v485
      %v521 = vsel %vm494, %v300, 0
      %v523 = vsel %vm494, %v302, 0
      %v525 = vsel %vm494, %v304, 0
      %v527 = vsel %vm494, %v306, 0
      %v529 = vsel %vm494, %v308, 0
      %v531 = vsel %vm494, %v310, 0
      %v533 = vsel %vm494, %v312, 0
      %v535 = vsel %vm494, %v314, 0
      %537 = vmatprep.subr.mxu0 0.0
      %538 = vmatpush1.msra.mxu0 0.0
      %539 = vmatprep.subr.mxu0 0.0
      %540 = vmatpush1.msra.mxu0 0.0
      %541 = vmatprep.subr.mxu0 0.0
      %542 = vmatpush1.msra.mxu0 0.0
      %543 = vmatprep.subr.mxu0 0.0
      %544 = vmatpush1.msra.mxu0 0.0
      %545 = vmatprep.subr.mxu0 0.0
      %546 = vmatpush1.msra.mxu0 0.0
      %547 = vmatprep.subr.mxu0 0.0
      %548 = vmatpush1.msra.mxu0 0.0
      %549 = vmatprep.subr.mxu0 0.0
      %550 = vmatpush1.msra.mxu0 0.0
      %551 = vmatprep.subr.mxu0 0.0
      %552 = vmatpush1.msra.mxu0 0.0
      %553 = vmatprep.subr.mxu0 0.0
      %554 = vmatpush1.msra.mxu0 0.0
      %555 = vmatprep.subr.mxu0 0.0
      %556 = vmatpush1.msra.mxu0 0.0
      %557 = vmatprep.subr.mxu0 0.0
      %558 = vmatpush1.msra.mxu0 0.0
      %559 = vmatprep.subr.mxu0 0.0
      %560 = vmatpush1.msra.mxu0 0.0
      %561 = vmatprep.subr.mxu0 0.0
      %562 = vmatpush1.msra.mxu0 0.0
      %563 = vmatprep.subr.mxu0 0.0
      %564 = vmatpush1.msra.mxu0 0.0
      %565 = vmatprep.subr.mxu0 0.0
      %566 = vmatpush1.msra.mxu0 0.0
      %567 = vmatprep.subr.mxu0 0.0
      %568 = vmatpush1.msra.mxu0 %v332
      %569 = vmatprep.subr.mxu0 0.0
      %570 = vmatpush2.msra.mxu0 0.0
      %571 = vmatprep.subr.mxu0 0.0
      %572 = vmatpush2.msra.mxu0 0.0
      %573 = vmatprep.subr.mxu0 0.0
      %574 = vmatpush2.msra.mxu0 0.0
      %575 = vmatprep.subr.mxu0 0.0
      %576 = vmatpush2.msra.mxu0 0.0
      %577 = vmatprep.subr.mxu0 0.0
      %578 = vmatpush2.msra.mxu0 0.0
      %579 = vmatprep.subr.mxu0 0.0
      %580 = vmatpush2.msra.mxu0 0.0
      %581 = vmatprep.subr.mxu0 0.0
      %582 = vmatpush2.msra.mxu0 0.0
      %583 = vmatprep.subr.mxu0 0.0
      %584 = vmatpush2.msra.mxu0 0.0
      %585 = vmatprep.subr.mxu0 0.0
      %586 = vmatpush2.msra.mxu0 0.0
      %587 = vmatprep.subr.mxu0 0.0
      %588 = vmatpush2.msra.mxu0 0.0
      %589 = vmatprep.subr.mxu0 0.0
      %590 = vmatpush2.msra.mxu0 0.0
      %591 = vmatprep.subr.mxu0 0.0
      %592 = vmatpush2.msra.mxu0 0.0
      %593 = vmatprep.subr.mxu0 0.0
      %594 = vmatpush2.msra.mxu0 0.0
      %595 = vmatprep.subr.mxu0 0.0
      %596 = vmatpush2.msra.mxu0 0.0
      %597 = vmatprep.subr.mxu0 0.0
      %598 = vmatpush2.msra.mxu0 0.0
      %599 = vmatprep.subr.mxu0 0.0
      %600 = vmatpush2.msra.mxu0 0.0
      %601 = vmatprep.mubr.f32.mxu0 0.0
      %602 = vmatmul.mubr.f32.gmra.mxu0 %v521
      %v603 = vpop.f32.mrf.mxu0
      %v604 = vadd.f32 0.0, %v603
      %v605 = vpop.f32.mrf.mxu0
      %606 = vmatprep.mubr.f32.mxu0 0.0
      %607 = vmatmul.mubr.f32.gmra.mxu0 %v523
      %v608 = vpop.f32.mrf.mxu0
      %v609 = vadd.f32 0.0, %v608
      %v610 = vpop.f32.mrf.mxu0
      %611 = vmatprep.mubr.f32.mxu0 0.0
      %612 = vmatmul.mubr.f32.gmra.mxu0 %v525
      %v613 = vpop.f32.mrf.mxu0
      %v614 = vadd.f32 0.0, %v613
      %v615 = vpop.f32.mrf.mxu0
      %616 = vmatprep.mubr.f32.mxu0 0.0
      %617 = vmatmul.mubr.f32.gmra.mxu0 %v527
      %v618 = vpop.f32.mrf.mxu0
      %v619 = vadd.f32 0.0, %v618
      %v620 = vpop.f32.mrf.mxu0
      %621 = vmatprep.mubr.f32.mxu0 0.0
      %622 = vmatmul.mubr.f32.gmra.mxu0 %v529
      %v623 = vpop.f32.mrf.mxu0
      %v624 = vadd.f32 0.0, %v623
      %v625 = vpop.f32.mrf.mxu0
      %626 = vmatprep.mubr.f32.mxu0 0.0
      %627 = vmatmul.mubr.f32.gmra.mxu0 %v531
      %v628 = vpop.f32.mrf.mxu0
      %v629 = vadd.f32 0.0, %v628
      %v630 = vpop.f32.mrf.mxu0
      %631 = vmatprep.mubr.f32.mxu0 0.0
      %632 = vmatmul.mubr.f32.gmra.mxu0 %v533
      %v633 = vpop.f32.mrf.mxu0
      %v634 = vadd.f32 0.0, %v633
      %v635 = vpop.f32.mrf.mxu0
      %636 = vmatprep.mubr.f32.mxu0 0.0
      %637 = vmatmul.mubr.f32.gmra.mxu0 %v535
      %v638 = vpop.f32.mrf.mxu0
      %v639 = vadd.f32 0.0, %v638
      %v640 = vpop.f32.mrf.mxu0
      %641 = vdwg.mxu0
      %v643 = vsel %vm503, %v513, 0
      %v646 = vsel %vm503, %v514, 0
      %v649 = vsel %vm503, %v515, 0
      %v652 = vsel %vm503, %v516, 0
      %v655 = vsel %vm503, %v517, 0
      %v658 = vsel %vm503, %v518, 0
      %v661 = vsel %vm503, %v519, 0
      %v664 = vsel %vm503, %v520, 0
      %666 = vmatprep.subr.mxu0 0.0
      %667 = vmatpush1.msra.mxu0 0.0
      %668 = vmatprep.subr.mxu0 0.0
      %669 = vmatpush1.msra.mxu0 0.0
      %670 = vmatprep.subr.mxu0 0.0
      %671 = vmatpush1.msra.mxu0 0.0
      %672 = vmatprep.subr.mxu0 0.0
      %673 = vmatpush1.msra.mxu0 0.0
      %674 = vmatprep.subr.mxu0 0.0
      %675 = vmatpush1.msra.mxu0 0.0
      %676 = vmatprep.subr.mxu0 0.0
      %677 = vmatpush1.msra.mxu0 0.0
      %678 = vmatprep.subr.mxu0 0.0
      %679 = vmatpush1.msra.mxu0 0.0
      %680 = vmatprep.subr.mxu0 0.0
      %681 = vmatpush1.msra.mxu0 0.0
      %682 = vmatprep.subr.mxu0 0.0
      %683 = vmatpush1.msra.mxu0 0.0
      %684 = vmatprep.subr.mxu0 0.0
      %685 = vmatpush1.msra.mxu0 0.0
      %686 = vmatprep.subr.mxu0 0.0
      %687 = vmatpush1.msra.mxu0 0.0
      %688 = vmatprep.subr.mxu0 0.0
      %689 = vmatpush1.msra.mxu0 0.0
      %690 = vmatprep.subr.mxu0 0.0
      %691 = vmatpush1.msra.mxu0 0.0
      %692 = vmatprep.subr.mxu0 0.0
      %693 = vmatpush1.msra.mxu0 0.0
      %694 = vmatprep.subr.mxu0 0.0
      %695 = vmatpush1.msra.mxu0 %v334
      %696 = vmatprep.subr.mxu0 0.0
      %697 = vmatpush1.msra.mxu0 %v333
      %698 = vmatprep.subr.mxu0 0.0
      %699 = vmatpush2.msra.mxu0 0.0
      %700 = vmatprep.subr.mxu0 0.0
      %701 = vmatpush2.msra.mxu0 0.0
      %702 = vmatprep.subr.mxu0 0.0
      %703 = vmatpush2.msra.mxu0 0.0
      %704 = vmatprep.subr.mxu0 0.0
      %705 = vmatpush2.msra.mxu0 0.0
      %706 = vmatprep.subr.mxu0 0.0
      %707 = vmatpush2.msra.mxu0 0.0
      %708 = vmatprep.subr.mxu0 0.0
      %709 = vmatpush2.msra.mxu0 0.0
      %710 = vmatprep.subr.mxu0 0.0
      %711 = vmatpush2.msra.mxu0 0.0
      %712 = vmatprep.subr.mxu0 0.0
      %713 = vmatpush2.msra.mxu0 0.0
      %714 = vmatprep.subr.mxu0 0.0
      %715 = vmatpush2.msra.mxu0 0.0
      %716 = vmatprep.subr.mxu0 0.0
      %717 = vmatpush2.msra.mxu0 0.0
      %718 = vmatprep.subr.mxu0 0.0
      %719 = vmatpush2.msra.mxu0 0.0
      %720 = vmatprep.subr.mxu0 0.0
      %721 = vmatpush2.msra.mxu0 0.0
      %722 = vmatprep.subr.mxu0 0.0
      %723 = vmatpush2.msra.mxu0 0.0
      %724 = vmatprep.subr.mxu0 0.0
      %725 = vmatpush2.msra.mxu0 0.0
      %726 = vmatprep.subr.mxu0 0.0
      %727 = vmatpush2.msra.mxu0 0.0
      %728 = vmatprep.subr.mxu0 0.0
      %729 = vmatpush2.msra.mxu0 0.0
      %730 = vmatprep.mubr.f32.mxu0 0.0
      %731 = vmatmul.mubr.f32.gmra.mxu0 %v643
      %v732 = vpop.f32.mrf.mxu0
      %v733 = vadd.f32 0.0, %v732
      %v734 = vpop.f32.mrf.mxu0
      %735 = vmatprep.mubr.f32.mxu0 0.0
      %736 = vmatmul.mubr.f32.gmra.mxu0 %v646
      %v737 = vpop.f32.mrf.mxu0
      %v738 = vadd.f32 0.0, %v737
      %v739 = vpop.f32.mrf.mxu0
      %740 = vmatprep.mubr.f32.mxu0 0.0
      %741 = vmatmul.mubr.f32.gmra.mxu0 %v649
      %v742 = vpop.f32.mrf.mxu0
      %v743 = vadd.f32 0.0, %v742
      %v744 = vpop.f32.mrf.mxu0
      %745 = vmatprep.mubr.f32.mxu0 0.0
      %746 = vmatmul.mubr.f32.gmra.mxu0 %v652
      %v747 = vpop.f32.mrf.mxu0
      %v748 = vadd.f32 0.0, %v747
      %v749 = vpop.f32.mrf.mxu0
      %750 = vmatprep.mubr.f32.mxu0 0.0
      %751 = vmatmul.mubr.f32.gmra.mxu0 %v655
      %v752 = vpop.f32.mrf.mxu0
      %v753 = vadd.f32 0.0, %v752
      %v754 = vpop.f32.mrf.mxu0
      %755 = vmatprep.mubr.f32.mxu0 0.0
      %756 = vmatmul.mubr.f32.gmra.mxu0 %v658
      %v757 = vpop.f32.mrf.mxu0
      %v758 = vadd.f32 0.0, %v757
      %v759 = vpop.f32.mrf.mxu0
      %760 = vmatprep.mubr.f32.mxu0 0.0
      %761 = vmatmul.mubr.f32.gmra.mxu0 %v661
      %v762 = vpop.f32.mrf.mxu0
      %v763 = vadd.f32 0.0, %v762
      %v764 = vpop.f32.mrf.mxu0
      %765 = vmatprep.mubr.f32.mxu0 0.0
      %766 = vmatmul.mubr.f32.gmra.mxu0 %v664
      %v767 = vpop.f32.mrf.mxu0
      %v768 = vadd.f32 0.0, %v767
      %v769 = vpop.f32.mrf.mxu0
      %770 = vdwg.mxu0
      %771 = vrot.lane.b32.xlu0 %v513, 120
      %v772 = vpop.permute.xlu0 %771
      %773 = vrot.lane.b32.xlu0 %v514, 120
      %v774 = vpop.permute.xlu0 %773
      %775 = vrot.lane.b32.xlu0 %v515, 120
      %v776 = vpop.permute.xlu0 %775
      %777 = vrot.lane.b32.xlu0 %v516, 120
      %v778 = vpop.permute.xlu0 %777
      %779 = vrot.lane.b32.xlu0 %v517, 120
      %v780 = vpop.permute.xlu0 %779
      %781 = vrot.lane.b32.xlu0 %v518, 120
      %v782 = vpop.permute.xlu0 %781
      %783 = vrot.lane.b32.xlu0 %v519, 120
      %v784 = vpop.permute.xlu0 %783
      %785 = vrot.lane.b32.xlu0 %v520, 120
      %v786 = vpop.permute.xlu0 %785
      %v787 = vsel %vm503, %v772, 0
      %v789 = vsel %vm503, %v774, 0
      %v791 = vsel %vm503, %v776, 0
      %v793 = vsel %vm503, %v778, 0
      %v795 = vsel %vm503, %v780, 0
      %v797 = vsel %vm503, %v782, 0
      %v799 = vsel %vm503, %v784, 0
      %v801 = vsel %vm503, %v786, 0
      %803 = vmatprep.subr.mxu0 0.0
      %804 = vmatpush1.msra.mxu0 0.0
      %805 = vmatprep.subr.mxu0 0.0
      %806 = vmatpush1.msra.mxu0 0.0
      %807 = vmatprep.subr.mxu0 0.0
      %808 = vmatpush1.msra.mxu0 0.0
      %809 = vmatprep.subr.mxu0 0.0
      %810 = vmatpush1.msra.mxu0 0.0
      %811 = vmatprep.subr.mxu0 0.0
      %812 = vmatpush1.msra.mxu0 0.0
      %813 = vmatprep.subr.mxu0 0.0
      %814 = vmatpush1.msra.mxu0 0.0
      %815 = vmatprep.subr.mxu0 0.0
      %816 = vmatpush1.msra.mxu0 0.0
      %817 = vmatprep.subr.mxu0 0.0
      %818 = vmatpush1.msra.mxu0 0.0
      %819 = vmatprep.subr.mxu0 0.0
      %820 = vmatpush1.msra.mxu0 0.0
      %821 = vmatprep.subr.mxu0 0.0
      %822 = vmatpush1.msra.mxu0 0.0
      %823 = vmatprep.subr.mxu0 0.0
      %824 = vmatpush1.msra.mxu0 0.0
      %825 = vmatprep.subr.mxu0 0.0
      %826 = vmatpush1.msra.mxu0 0.0
      %827 = vmatprep.subr.mxu0 0.0
      %828 = vmatpush1.msra.mxu0 0.0
      %829 = vmatprep.subr.mxu0 0.0
      %830 = vmatpush1.msra.mxu0 0.0
      %831 = vmatprep.subr.mxu0 0.0
      %832 = vmatpush1.msra.mxu0 %v336
      %833 = vmatprep.subr.mxu0 0.0
      %834 = vmatpush1.msra.mxu0 %v335
      %835 = vmatprep.subr.mxu0 0.0
      %836 = vmatpush2.msra.mxu0 0.0
      %837 = vmatprep.subr.mxu0 0.0
      %838 = vmatpush2.msra.mxu0 0.0
      %839 = vmatprep.subr.mxu0 0.0
      %840 = vmatpush2.msra.mxu0 0.0
      %841 = vmatprep.subr.mxu0 0.0
      %842 = vmatpush2.msra.mxu0 0.0
      %843 = vmatprep.subr.mxu0 0.0
      %844 = vmatpush2.msra.mxu0 0.0
      %845 = vmatprep.subr.mxu0 0.0
      %846 = vmatpush2.msra.mxu0 0.0
      %847 = vmatprep.subr.mxu0 0.0
      %848 = vmatpush2.msra.mxu0 0.0
      %849 = vmatprep.subr.mxu0 0.0
      %850 = vmatpush2.msra.mxu0 0.0
      %851 = vmatprep.subr.mxu0 0.0
      %852 = vmatpush2.msra.mxu0 0.0
      %853 = vmatprep.subr.mxu0 0.0
      %854 = vmatpush2.msra.mxu0 0.0
      %855 = vmatprep.subr.mxu0 0.0
      %856 = vmatpush2.msra.mxu0 0.0
      %857 = vmatprep.subr.mxu0 0.0
      %858 = vmatpush2.msra.mxu0 0.0
      %859 = vmatprep.subr.mxu0 0.0
      %860 = vmatpush2.msra.mxu0 0.0
      %861 = vmatprep.subr.mxu0 0.0
      %862 = vmatpush2.msra.mxu0 0.0
      %863 = vmatprep.subr.mxu0 0.0
      %864 = vmatpush2.msra.mxu0 0.0
      %865 = vmatprep.subr.mxu0 0.0
      %866 = vmatpush2.msra.mxu0 0.0
      %867 = vmatprep.mubr.f32.mxu0 0.0
      %868 = vmatmul.mubr.f32.gmra.mxu0 %v787
      %v869 = vpop.f32.mrf.mxu0
      %v870 = vadd.f32 0.0, %v869
      %v871 = vpop.f32.mrf.mxu0
      %872 = vmatprep.mubr.f32.mxu0 0.0
      %873 = vmatmul.mubr.f32.gmra.mxu0 %v789
      %v874 = vpop.f32.mrf.mxu0
      %v875 = vadd.f32 0.0, %v874
      %v876 = vpop.f32.mrf.mxu0
      %877 = vmatprep.mubr.f32.mxu0 0.0
      %878 = vmatmul.mubr.f32.gmra.mxu0 %v791
      %v879 = vpop.f32.mrf.mxu0
      %v880 = vadd.f32 0.0, %v879
      %v881 = vpop.f32.mrf.mxu0
      %882 = vmatprep.mubr.f32.mxu0 0.0
      %883 = vmatmul.mubr.f32.gmra.mxu0 %v793
      %v884 = vpop.f32.mrf.mxu0
      %v885 = vadd.f32 0.0, %v884
      %v886 = vpop.f32.mrf.mxu0
      %887 = vmatprep.mubr.f32.mxu0 0.0
      %888 = vmatmul.mubr.f32.gmra.mxu0 %v795
      %v889 = vpop.f32.mrf.mxu0
      %v890 = vadd.f32 0.0, %v889
      %v891 = vpop.f32.mrf.mxu0
      %892 = vmatprep.mubr.f32.mxu0 0.0
      %893 = vmatmul.mubr.f32.gmra.mxu0 %v797
      %v894 = vpop.f32.mrf.mxu0
      %v895 = vadd.f32 0.0, %v894
      %v896 = vpop.f32.mrf.mxu0
      %897 = vmatprep.mubr.f32.mxu0 0.0
      %898 = vmatmul.mubr.f32.gmra.mxu0 %v799
      %v899 = vpop.f32.mrf.mxu0
      %v900 = vadd.f32 0.0, %v899
      %v901 = vpop.f32.mrf.mxu0
      %902 = vmatprep.mubr.f32.mxu0 0.0
      %903 = vmatmul.mubr.f32.gmra.mxu0 %v801
      %v904 = vpop.f32.mrf.mxu0
      %v905 = vadd.f32 0.0, %v904
      %v906 = vpop.f32.mrf.mxu0
      %907 = vdwg.mxu0
      %vm908 = vcmask 261120
      %v909 = vsel %vm908, %v513, 0
      %v911 = vsel %vm908, %v514, 0
      %v913 = vsel %vm908, %v515, 0
      %v915 = vsel %vm908, %v516, 0
      %v917 = vsel %vm908, %v517, 0
      %v919 = vsel %vm908, %v518, 0
      %v921 = vsel %vm908, %v519, 0
      %v923 = vsel %vm908, %v520, 0
      %925 = vmatprep.subr.mxu0 0.0
      %926 = vmatpush1.msra.mxu0 0.0
      %927 = vmatprep.subr.mxu0 0.0
      %928 = vmatpush1.msra.mxu0 0.0
      %929 = vmatprep.subr.mxu0 0.0
      %930 = vmatpush1.msra.mxu0 0.0
      %931 = vmatprep.subr.mxu0 0.0
      %932 = vmatpush1.msra.mxu0 0.0
      %933 = vmatprep.subr.mxu0 0.0
      %934 = vmatpush1.msra.mxu0 0.0
      %935 = vmatprep.subr.mxu0 0.0
      %936 = vmatpush1.msra.mxu0 0.0
      %937 = vmatprep.subr.mxu0 0.0
      %938 = vmatpush1.msra.mxu0 0.0
      %939 = vmatprep.subr.mxu0 0.0
      %940 = vmatpush1.msra.mxu0 0.0
      %941 = vmatprep.subr.mxu0 0.0
      %942 = vmatpush1.msra.mxu0 0.0
      %943 = vmatprep.subr.mxu0 0.0
      %944 = vmatpush1.msra.mxu0 0.0
      %945 = vmatprep.subr.mxu0 0.0
      %946 = vmatpush1.msra.mxu0 0.0
      %947 = vmatprep.subr.mxu0 0.0
      %948 = vmatpush1.msra.mxu0 0.0
      %949 = vmatprep.subr.mxu0 0.0
      %950 = vmatpush1.msra.mxu0 %v340
      %951 = vmatprep.subr.mxu0 0.0
      %952 = vmatpush1.msra.mxu0 %v339
      %953 = vmatprep.subr.mxu0 0.0
      %954 = vmatpush1.msra.mxu0 %v338
      %955 = vmatprep.subr.mxu0 0.0
      %956 = vmatpush1.msra.mxu0 %v337
      %957 = vmatprep.subr.mxu0 0.0
      %958 = vmatpush2.msra.mxu0 0.0
      %959 = vmatprep.subr.mxu0 0.0
      %960 = vmatpush2.msra.mxu0 0.0
      %961 = vmatprep.subr.mxu0 0.0
      %962 = vmatpush2.msra.mxu0 0.0
      %963 = vmatprep.subr.mxu0 0.0
      %964 = vmatpush2.msra.mxu0 0.0
      %965 = vmatprep.subr.mxu0 0.0
      %966 = vmatpush2.msra.mxu0 0.0
      %967 = vmatprep.subr.mxu0 0.0
      %968 = vmatpush2.msra.mxu0 0.0
      %969 = vmatprep.subr.mxu0 0.0
      %970 = vmatpush2.msra.mxu0 0.0
      %971 = vmatprep.subr.mxu0 0.0
      %972 = vmatpush2.msra.mxu0 0.0
      %973 = vmatprep.subr.mxu0 0.0
      %974 = vmatpush2.msra.mxu0 0.0
      %975 = vmatprep.subr.mxu0 0.0
      %976 = vmatpush2.msra.mxu0 0.0
      %977 = vmatprep.subr.mxu0 0.0
      %978 = vmatpush2.msra.mxu0 0.0
      %979 = vmatprep.subr.mxu0 0.0
      %980 = vmatpush2.msra.mxu0 0.0
      %981 = vmatprep.subr.mxu0 0.0
      %982 = vmatpush2.msra.mxu0 0.0
      %983 = vmatprep.subr.mxu0 0.0
      %984 = vmatpush2.msra.mxu0 0.0
      %985 = vmatprep.subr.mxu0 0.0
      %986 = vmatpush2.msra.mxu0 0.0
      %987 = vmatprep.subr.mxu0 0.0
      %988 = vmatpush2.msra.mxu0 0.0
      %989 = vmatprep.mubr.f32.mxu0 0.0
      %990 = vmatmul.mubr.f32.gmra.mxu0 %v909
      %v991 = vpop.f32.mrf.mxu0
      %v992 = vadd.f32 0.0, %v991
      %v993 = vpop.f32.mrf.mxu0
      %994 = vmatprep.mubr.f32.mxu0 0.0
      %995 = vmatmul.mubr.f32.gmra.mxu0 %v911
      %v996 = vpop.f32.mrf.mxu0
      %v997 = vadd.f32 0.0, %v996
      %v998 = vpop.f32.mrf.mxu0
      %999 = vmatprep.mubr.f32.mxu0 0.0
      %1000 = vmatmul.mubr.f32.gmra.mxu0 %v913
      %v1001 = vpop.f32.mrf.mxu0
      %v1002 = vadd.f32 0.0, %v1001
      %v1003 = vpop.f32.mrf.mxu0
      %1004 = vmatprep.mubr.f32.mxu0 0.0
      %1005 = vmatmul.mubr.f32.gmra.mxu0 %v915
      %v1006 = vpop.f32.mrf.mxu0
      %v1007 = vadd.f32 0.0, %v1006
      %v1008 = vpop.f32.mrf.mxu0
      %1009 = vmatprep.mubr.f32.mxu0 0.0
      %1010 = vmatmul.mubr.f32.gmra.mxu0 %v917
      %v1011 = vpop.f32.mrf.mxu0
      %v1012 = vadd.f32 0.0, %v1011
      %v1013 = vpop.f32.mrf.mxu0
      %1014 = vmatprep.mubr.f32.mxu0 0.0
      %1015 = vmatmul.mubr.f32.gmra.mxu0 %v919
      %v1016 = vpop.f32.mrf.mxu0
      %v1017 = vadd.f32 0.0, %v1016
      %v1018 = vpop.f32.mrf.mxu0
      %1019 = vmatprep.mubr.f32.mxu0 0.0
      %1020 = vmatmul.mubr.f32.gmra.mxu0 %v921
      %v1021 = vpop.f32.mrf.mxu0
      %v1022 = vadd.f32 0.0, %v1021
      %v1023 = vpop.f32.mrf.mxu0
      %1024 = vmatprep.mubr.f32.mxu0 0.0
      %1025 = vmatmul.mubr.f32.gmra.mxu0 %v923
      %v1026 = vpop.f32.mrf.mxu0
      %v1027 = vadd.f32 0.0, %v1026
      %v1028 = vpop.f32.mrf.mxu0
      %1029 = vdwg.mxu0
      %vm1030 = vcmask 23552
      %v1031 = vsel %vm1030, %v604, 0.0
      %v1032 = vsel %vm1030, %v609, 0.0
      %v1033 = vadd.f32 %v1031, %v1032
      %v1034 = vsel %vm1030, %v614, 0.0
      %v1035 = vadd.f32 %v1033, %v1034
      %v1036 = vsel %vm1030, %v619, 0.0
      %v1037 = vadd.f32 %v1035, %v1036
      %v1038 = vsel %vm1030, %v624, 0.0
      %v1039 = vadd.f32 %v1037, %v1038
      %v1040 = vsel %vm1030, %v629, 0.0
      %v1041 = vadd.f32 %v1039, %v1040
      %v1042 = vsel %vm1030, %v634, 0.0
      %v1043 = vadd.f32 %v1041, %v1042
      %v1044 = vsel %vm1030, %v639, 0.0
      %v1045 = vadd.f32 %v1043, %v1044
      %v1046 = vrot.slane %v1045, 4
      %v1047 = vadd.f32 %v1045, %v1046
      %v1048 = vrot.slane %v1047, 2
      %v1049 = vadd.f32 %v1047, %v1048
      %v1050 = vrot.slane %v1049, 1
      %v1051 = vadd.f32 %v1049, %v1050
      %v1052 = vsel %vm1030, %v870, 0.0
      %v1053 = vsel %vm1030, %v875, 0.0
      %v1054 = vadd.f32 %v1052, %v1053
      %v1055 = vsel %vm1030, %v880, 0.0
      %v1056 = vadd.f32 %v1054, %v1055
      %v1057 = vsel %vm1030, %v885, 0.0
      %v1058 = vadd.f32 %v1056, %v1057
      %v1059 = vsel %vm1030, %v890, 0.0
      %v1060 = vadd.f32 %v1058, %v1059
      %v1061 = vsel %vm1030, %v895, 0.0
      %v1062 = vadd.f32 %v1060, %v1061
      %v1063 = vsel %vm1030, %v900, 0.0
      %v1064 = vadd.f32 %v1062, %v1063
      %v1065 = vsel %vm1030, %v905, 0.0
      %v1066 = vadd.f32 %v1064, %v1065
      %v1067 = vrot.slane %v1066, 4
      %v1068 = vadd.f32 %v1066, %v1067
      %v1069 = vrot.slane %v1068, 2
      %v1070 = vadd.f32 %v1068, %v1069
      %v1071 = vrot.slane %v1070, 1
      %v1072 = vadd.f32 %v1070, %v1071
      %v1073 = vadd.f32 %v1051, %v1072
      %v1074 = vsel %vm1030, %v733, 0.0
      %v1075 = vsel %vm1030, %v738, 0.0
      %v1076 = vadd.f32 %v1074, %v1075
      %v1077 = vsel %vm1030, %v743, 0.0
      %v1078 = vadd.f32 %v1076, %v1077
      %v1079 = vsel %vm1030, %v748, 0.0
      %v1080 = vadd.f32 %v1078, %v1079
      %v1081 = vsel %vm1030, %v753, 0.0
      %v1082 = vadd.f32 %v1080, %v1081
      %v1083 = vsel %vm1030, %v758, 0.0
      %v1084 = vadd.f32 %v1082, %v1083
      %v1085 = vsel %vm1030, %v763, 0.0
      %v1086 = vadd.f32 %v1084, %v1085
      %v1087 = vsel %vm1030, %v768, 0.0
      %v1088 = vadd.f32 %v1086, %v1087
      %v1089 = vrot.slane %v1088, 4
      %v1090 = vadd.f32 %v1088, %v1089
      %v1091 = vrot.slane %v1090, 2
      %v1092 = vadd.f32 %v1090, %v1091
      %v1093 = vrot.slane %v1092, 1
      %v1094 = vadd.f32 %v1092, %v1093
      %v1095 = vadd.f32 %v1073, %v1094
      %v1096 = vsel %vm1030, %v992, 0.0
      %v1097 = vsel %vm1030, %v997, 0.0
      %v1098 = vadd.f32 %v1096, %v1097
      %v1099 = vsel %vm1030, %v1002, 0.0
      %v1100 = vadd.f32 %v1098, %v1099
      %v1101 = vsel %vm1030, %v1007, 0.0
      %v1102 = vadd.f32 %v1100, %v1101
      %v1103 = vsel %vm1030, %v1012, 0.0
      %v1104 = vadd.f32 %v1102, %v1103
      %v1105 = vsel %vm1030, %v1017, 0.0
      %v1106 = vadd.f32 %v1104, %v1105
      %v1107 = vsel %vm1030, %v1022, 0.0
      %v1108 = vadd.f32 %v1106, %v1107
      %v1109 = vsel %vm1030, %v1027, 0.0
      %v1110 = vadd.f32 %v1108, %v1109
      %v1111 = vrot.slane %v1110, 4
      %v1112 = vadd.f32 %v1110, %v1111
      %v1113 = vrot.slane %v1112, 2
      %v1114 = vadd.f32 %v1112, %v1113
      %v1115 = vrot.slane %v1114, 1
      %v1116 = vadd.f32 %v1114, %v1115
      %v1117 = vadd.f32 %v1095, %v1116
      %v1118 = vmul.f32 %v604, %v604
      %v1119 = vmul.f32 %v609, %v609
      %v1120 = vmul.f32 %v614, %v614
      %v1121 = vmul.f32 %v619, %v619
      %v1122 = vmul.f32 %v624, %v624
      %v1123 = vmul.f32 %v629, %v629
      %v1124 = vmul.f32 %v634, %v634
      %v1125 = vmul.f32 %v639, %v639
      %v1126 = vsel %vm1030, %v1118, 0.0
      %v1127 = vsel %vm1030, %v1119, 0.0
      %v1128 = vadd.f32 %v1126, %v1127
      %v1129 = vsel %vm1030, %v1120, 0.0
      %v1130 = vadd.f32 %v1128, %v1129
      %v1131 = vsel %vm1030, %v1121, 0.0
      %v1132 = vadd.f32 %v1130, %v1131
      %v1133 = vsel %vm1030, %v1122, 0.0
      %v1134 = vadd.f32 %v1132, %v1133
      %v1135 = vsel %vm1030, %v1123, 0.0
      %v1136 = vadd.f32 %v1134, %v1135
      %v1137 = vsel %vm1030, %v1124, 0.0
      %v1138 = vadd.f32 %v1136, %v1137
      %v1139 = vsel %vm1030, %v1125, 0.0
      %v1140 = vadd.f32 %v1138, %v1139
      %v1141 = vrot.slane %v1140, 4
      %v1142 = vadd.f32 %v1140, %v1141
      %v1143 = vrot.slane %v1142, 2
      %v1144 = vadd.f32 %v1142, %v1143
      %v1145 = vrot.slane %v1144, 1
      %v1146 = vadd.f32 %v1144, %v1145
      %v1147 = vmul.f32 %v870, %v870
      %v1148 = vmul.f32 %v875, %v875
      %v1149 = vmul.f32 %v880, %v880
      %v1150 = vmul.f32 %v885, %v885
      %v1151 = vmul.f32 %v890, %v890
      %v1152 = vmul.f32 %v895, %v895
      %v1153 = vmul.f32 %v900, %v900
      %v1154 = vmul.f32 %v905, %v905
      %v1155 = vsel %vm1030, %v1147, 0.0
      %v1156 = vsel %vm1030, %v1148, 0.0
      %v1157 = vadd.f32 %v1155, %v1156
      %v1158 = vsel %vm1030, %v1149, 0.0
      %v1159 = vadd.f32 %v1157, %v1158
      %v1160 = vsel %vm1030, %v1150, 0.0
      %v1161 = vadd.f32 %v1159, %v1160
      %v1162 = vsel %vm1030, %v1151, 0.0
      %v1163 = vadd.f32 %v1161, %v1162
      %v1164 = vsel %vm1030, %v1152, 0.0
      %v1165 = vadd.f32 %v1163, %v1164
      %v1166 = vsel %vm1030, %v1153, 0.0
      %v1167 = vadd.f32 %v1165, %v1166
      %v1168 = vsel %vm1030, %v1154, 0.0
      %v1169 = vadd.f32 %v1167, %v1168
      %v1170 = vrot.slane %v1169, 4
      %v1171 = vadd.f32 %v1169, %v1170
      %v1172 = vrot.slane %v1171, 2
      %v1173 = vadd.f32 %v1171, %v1172
      %v1174 = vrot.slane %v1173, 1
      %v1175 = vadd.f32 %v1173, %v1174
      %v1176 = vadd.f32 %v1146, %v1175
      %v1177 = vmul.f32 %v733, %v733
      %v1178 = vmul.f32 %v738, %v738
      %v1179 = vmul.f32 %v743, %v743
      %v1180 = vmul.f32 %v748, %v748
      %v1181 = vmul.f32 %v753, %v753
      %v1182 = vmul.f32 %v758, %v758
      %v1183 = vmul.f32 %v763, %v763
      %v1184 = vmul.f32 %v768, %v768
      %v1185 = vsel %vm1030, %v1177, 0.0
      %v1186 = vsel %vm1030, %v1178, 0.0
      %v1187 = vadd.f32 %v1185, %v1186
      %v1188 = vsel %vm1030, %v1179, 0.0
      %v1189 = vadd.f32 %v1187, %v1188
      %v1190 = vsel %vm1030, %v1180, 0.0
      %v1191 = vadd.f32 %v1189, %v1190
      %v1192 = vsel %vm1030, %v1181, 0.0
      %v1193 = vadd.f32 %v1191, %v1192
      %v1194 = vsel %vm1030, %v1182, 0.0
      %v1195 = vadd.f32 %v1193, %v1194
      %v1196 = vsel %vm1030, %v1183, 0.0
      %v1197 = vadd.f32 %v1195, %v1196
      %v1198 = vsel %vm1030, %v1184, 0.0
      %v1199 = vadd.f32 %v1197, %v1198
      %v1200 = vrot.slane %v1199, 4
      %v1201 = vadd.f32 %v1199, %v1200
      %v1202 = vrot.slane %v1201, 2
      %v1203 = vadd.f32 %v1201, %v1202
      %v1204 = vrot.slane %v1203, 1
      %v1205 = vadd.f32 %v1203, %v1204
      %v1206 = vadd.f32 %v1176, %v1205
      %v1207 = vmul.f32 %v992, %v992
      %v1208 = vmul.f32 %v997, %v997
      %v1209 = vmul.f32 %v1002, %v1002
      %v1210 = vmul.f32 %v1007, %v1007
      %v1211 = vmul.f32 %v1012, %v1012
      %v1212 = vmul.f32 %v1017, %v1017
      %v1213 = vmul.f32 %v1022, %v1022
      %v1214 = vmul.f32 %v1027, %v1027
      %v1215 = vsel %vm1030, %v1207, 0.0
      %v1216 = vsel %vm1030, %v1208, 0.0
      %v1217 = vadd.f32 %v1215, %v1216
      %v1218 = vsel %vm1030, %v1209, 0.0
      %v1219 = vadd.f32 %v1217, %v1218
      %v1220 = vsel %vm1030, %v1210, 0.0
      %v1221 = vadd.f32 %v1219, %v1220
      %v1222 = vsel %vm1030, %v1211, 0.0
      %v1223 = vadd.f32 %v1221, %v1222
      %v1224 = vsel %vm1030, %v1212, 0.0
      %v1225 = vadd.f32 %v1223, %v1224
      %v1226 = vsel %vm1030, %v1213, 0.0
      %v1227 = vadd.f32 %v1225, %v1226
      %v1228 = vsel %vm1030, %v1214, 0.0
      %v1229 = vadd.f32 %v1227, %v1228
      %v1230 = vrot.slane %v1229, 4
      %v1231 = vadd.f32 %v1229, %v1230
      %v1232 = vrot.slane %v1231, 2
      %v1233 = vadd.f32 %v1231, %v1232
      %v1234 = vrot.slane %v1233, 1
      %v1235 = vadd.f32 %v1233, %v1234
      %v1236 = vadd.f32 %v1206, %v1235
      %vm1237 = vcmask 1040384
      %v1238 = vsel %vm1237, %v1117, %v1236
      %vm1239 = vcmask 17408
      %1240 = vst.msk [vmem:[%s299] sm:$0x3] %vm1239, %v1238
      %v1249 = vcombine.high %v604, %v604
      %v1251 = vunpack.c.l.s4 1966171168
      %v1252 = vunpack.c.0.s8 %v1251
      %v1253 = vlaneseq
      %v1254 = vshrl.u32 %v1253, 7
      %v1255 = vsub.s32 %v1252, %v1254
      %v1256 = vrot.slane %v604, %v1255
      %v1258 = vunpack.c.l.s4 1966171168
      %v1259 = vunpack.c.0.s8 %v1258
      %v1260 = vlaneseq
      %v1261 = vshrl.u32 %v1260, 7
      %v1262 = vsub.s32 %v1259, %v1261
      %v1263 = vrot.slane %v1249, %v1262
      %v1264 = vcombine.high %v1256, %v1256
      %v1265 = vcombine.high %v1263, %v1263
      %v1267 = vunpack.c.l.s4 1966171168
      %v1268 = vunpack.c.0.s8 %v1267
      %v1269 = vlaneseq
      %v1270 = vshrl.u32 %v1269, 7
      %v1271 = vsub.s32 %v1268, %v1270
      %v1272 = vrot.slane %v1256, %v1271
      %v1274 = vunpack.c.l.s4 1966171168
      %v1275 = vunpack.c.0.s8 %v1274
      %v1276 = vlaneseq
      %v1277 = vshrl.u32 %v1276, 7
      %v1278 = vsub.s32 %v1275, %v1277
      %v1279 = vrot.slane %v1263, %v1278
      %v1281 = vunpack.c.l.s4 1966171168
      %v1282 = vunpack.c.0.s8 %v1281
      %v1283 = vlaneseq
      %v1284 = vshrl.u32 %v1283, 7
      %v1285 = vsub.s32 %v1282, %v1284
      %v1286 = vrot.slane %v1264, %v1285
      %v1288 = vunpack.c.l.s4 1966171168
      %v1289 = vunpack.c.0.s8 %v1288
      %v1290 = vlaneseq
      %v1291 = vshrl.u32 %v1290, 7
      %v1292 = vsub.s32 %v1289, %v1291
      %v1293 = vrot.slane %v1265, %v1292
      %v1294 = vcombine.high %v1272, %v1272
      %v1295 = vcombine.high %v1279, %v1279
      %v1296 = vcombine.high %v1286, %v1286
      %v1297 = vcombine.high %v1293, %v1293
      %v1298 = vcombine.high %v609, %v609
      %v1300 = vunpack.c.l.s4 1966171168
      %v1301 = vunpack.c.0.s8 %v1300
      %v1302 = vlaneseq
      %v1303 = vshrl.u32 %v1302, 7
      %v1304 = vsub.s32 %v1301, %v1303
      %v1305 = vrot.slane %v609, %v1304
      %v1307 = vunpack.c.l.s4 1966171168
      %v1308 = vunpack.c.0.s8 %v1307
      %v1309 = vlaneseq
      %v1310 = vshrl.u32 %v1309, 7
      %v1311 = vsub.s32 %v1308, %v1310
      %v1312 = vrot.slane %v1298, %v1311
      %v1313 = vcombine.high %v1305, %v1305
      %v1314 = vcombine.high %v1312, %v1312
      %v1316 = vunpack.c.l.s4 1966171168
      %v1317 = vunpack.c.0.s8 %v1316
      %v1318 = vlaneseq
      %v1319 = vshrl.u32 %v1318, 7
      %v1320 = vsub.s32 %v1317, %v1319
      %v1321 = vrot.slane %v1305, %v1320
      %v1323 = vunpack.c.l.s4 1966171168
      %v1324 = vunpack.c.0.s8 %v1323
      %v1325 = vlaneseq
      %v1326 = vshrl.u32 %v1325, 7
      %v1327 = vsub.s32 %v1324, %v1326
      %v1328 = vrot.slane %v1312, %v1327
      %v1330 = vunpack.c.l.s4 1966171168
      %v1331 = vunpack.c.0.s8 %v1330
      %v1332 = vlaneseq
      %v1333 = vshrl.u32 %v1332, 7
      %v1334 = vsub.s32 %v1331, %v1333
      %v1335 = vrot.slane %v1313, %v1334
      %v1337 = vunpack.c.l.s4 1966171168
      %v1338 = vunpack.c.0.s8 %v1337
      %v1339 = vlaneseq
      %v1340 = vshrl.u32 %v1339, 7
      %v1341 = vsub.s32 %v1338, %v1340
      %v1342 = vrot.slane %v1314, %v1341
      %v1343 = vcombine.high %v1321, %v1321
      %v1344 = vcombine.high %v1328, %v1328
      %v1345 = vcombine.high %v1335, %v1335
      %v1346 = vcombine.high %v1342, %v1342
      %v1347 = vcombine.high %v614, %v614
      %v1349 = vunpack.c.l.s4 1966171168
      %v1350 = vunpack.c.0.s8 %v1349
      %v1351 = vlaneseq
      %v1352 = vshrl.u32 %v1351, 7
      %v1353 = vsub.s32 %v1350, %v1352
      %v1354 = vrot.slane %v614, %v1353
      %v1356 = vunpack.c.l.s4 1966171168
      %v1357 = vunpack.c.0.s8 %v1356
      %v1358 = vlaneseq
      %v1359 = vshrl.u32 %v1358, 7
      %v1360 = vsub.s32 %v1357, %v1359
      %v1361 = vrot.slane %v1347, %v1360
      %v1362 = vcombine.high %v1354, %v1354
      %v1363 = vcombine.high %v1361, %v1361
      %v1365 = vunpack.c.l.s4 1966171168
      %v1366 = vunpack.c.0.s8 %v1365
      %v1367 = vlaneseq
      %v1368 = vshrl.u32 %v1367, 7
      %v1369 = vsub.s32 %v1366, %v1368
      %v1370 = vrot.slane %v1354, %v1369
      %v1372 = vunpack.c.l.s4 1966171168
      %v1373 = vunpack.c.0.s8 %v1372
      %v1374 = vlaneseq
      %v1375 = vshrl.u32 %v1374, 7
      %v1376 = vsub.s32 %v1373, %v1375
      %v1377 = vrot.slane %v1361, %v1376
      %v1379 = vunpack.c.l.s4 1966171168
      %v1380 = vunpack.c.0.s8 %v1379
      %v1381 = vlaneseq
      %v1382 = vshrl.u32 %v1381, 7
      %v1383 = vsub.s32 %v1380, %v1382
      %v1384 = vrot.slane %v1362, %v1383
      %v1386 = vunpack.c.l.s4 1966171168
      %v1387 = vunpack.c.0.s8 %v1386
      %v1388 = vlaneseq
      %v1389 = vshrl.u32 %v1388, 7
      %v1390 = vsub.s32 %v1387, %v1389
      %v1391 = vrot.slane %v1363, %v1390
      %v1392 = vcombine.high %v1370, %v1370
      %v1393 = vcombine.high %v1377, %v1377
      %v1394 = vcombine.high %v1384, %v1384
      %v1395 = vcombine.high %v1391, %v1391
      %v1396 = vcombine.high %v619, %v619
      %v1398 = vunpack.c.l.s4 1966171168
      %v1399 = vunpack.c.0.s8 %v1398
      %v1400 = vlaneseq
      %v1401 = vshrl.u32 %v1400, 7
      %v1402 = vsub.s32 %v1399, %v1401
      %v1403 = vrot.slane %v619, %v1402
      %v1405 = vunpack.c.l.s4 1966171168
      %v1406 = vunpack.c.0.s8 %v1405
      %v1407 = vlaneseq
      %v1408 = vshrl.u32 %v1407, 7
      %v1409 = vsub.s32 %v1406, %v1408
      %v1410 = vrot.slane %v1396, %v1409
      %v1411 = vcombine.high %v1403, %v1403
      %v1412 = vcombine.high %v1410, %v1410
      %v1414 = vunpack.c.l.s4 1966171168
      %v1415 = vunpack.c.0.s8 %v1414
      %v1416 = vlaneseq
      %v1417 = vshrl.u32 %v1416, 7
      %v1418 = vsub.s32 %v1415, %v1417
      %v1419 = vrot.slane %v1403, %v1418
      %v1421 = vunpack.c.l.s4 1966171168
      %v1422 = vunpack.c.0.s8 %v1421
      %v1423 = vlaneseq
      %v1424 = vshrl.u32 %v1423, 7
      %v1425 = vsub.s32 %v1422, %v1424
      %v1426 = vrot.slane %v1410, %v1425
      %v1428 = vunpack.c.l.s4 1966171168
      %v1429 = vunpack.c.0.s8 %v1428
      %v1430 = vlaneseq
      %v1431 = vshrl.u32 %v1430, 7
      %v1432 = vsub.s32 %v1429, %v1431
      %v1433 = vrot.slane %v1411, %v1432
      %v1435 = vunpack.c.l.s4 1966171168
      %v1436 = vunpack.c.0.s8 %v1435
      %v1437 = vlaneseq
      %v1438 = vshrl.u32 %v1437, 7
      %v1439 = vsub.s32 %v1436, %v1438
      %v1440 = vrot.slane %v1412, %v1439
      %v1441 = vcombine.high %v1419, %v1419
      %v1442 = vcombine.high %v1426, %v1426
      %v1443 = vcombine.high %v1433, %v1433
      %v1444 = vcombine.high %v1440, %v1440
      %v1445 = vcombine.high %v624, %v624
      %v1447 = vunpack.c.l.s4 1966171168
      %v1448 = vunpack.c.0.s8 %v1447
      %v1449 = vlaneseq
      %v1450 = vshrl.u32 %v1449, 7
      %v1451 = vsub.s32 %v1448, %v1450
      %v1452 = vrot.slane %v624, %v1451
      %v1454 = vunpack.c.l.s4 1966171168
      %v1455 = vunpack.c.0.s8 %v1454
      %v1456 = vlaneseq
      %v1457 = vshrl.u32 %v1456, 7
      %v1458 = vsub.s32 %v1455, %v1457
      %v1459 = vrot.slane %v1445, %v1458
      %v1460 = vcombine.high %v1452, %v1452
      %v1461 = vcombine.high %v1459, %v1459
      %v1463 = vunpack.c.l.s4 1966171168
      %v1464 = vunpack.c.0.s8 %v1463
      %v1465 = vlaneseq
      %v1466 = vshrl.u32 %v1465, 7
      %v1467 = vsub.s32 %v1464, %v1466
      %v1468 = vrot.slane %v1452, %v1467
      %v1470 = vunpack.c.l.s4 1966171168
      %v1471 = vunpack.c.0.s8 %v1470
      %v1472 = vlaneseq
      %v1473 = vshrl.u32 %v1472, 7
      %v1474 = vsub.s32 %v1471, %v1473
      %v1475 = vrot.slane %v1459, %v1474
      %v1477 = vunpack.c.l.s4 1966171168
      %v1478 = vunpack.c.0.s8 %v1477
      %v1479 = vlaneseq
      %v1480 = vshrl.u32 %v1479, 7
      %v1481 = vsub.s32 %v1478, %v1480
      %v1482 = vrot.slane %v1460, %v1481
      %v1484 = vunpack.c.l.s4 1966171168
      %v1485 = vunpack.c.0.s8 %v1484
      %v1486 = vlaneseq
      %v1487 = vshrl.u32 %v1486, 7
      %v1488 = vsub.s32 %v1485, %v1487
      %v1489 = vrot.slane %v1461, %v1488
      %v1490 = vcombine.high %v1468, %v1468
      %v1491 = vcombine.high %v1475, %v1475
      %v1492 = vcombine.high %v1482, %v1482
      %v1493 = vcombine.high %v1489, %v1489
      %v1494 = vcombine.high %v629, %v629
      %v1496 = vunpack.c.l.s4 1966171168
      %v1497 = vunpack.c.0.s8 %v1496
      %v1498 = vlaneseq
      %v1499 = vshrl.u32 %v1498, 7
      %v1500 = vsub.s32 %v1497, %v1499
      %v1501 = vrot.slane %v629, %v1500
      %v1503 = vunpack.c.l.s4 1966171168
      %v1504 = vunpack.c.0.s8 %v1503
      %v1505 = vlaneseq
      %v1506 = vshrl.u32 %v1505, 7
      %v1507 = vsub.s32 %v1504, %v1506
      %v1508 = vrot.slane %v1494, %v1507
      %v1509 = vcombine.high %v1501, %v1501
      %v1510 = vcombine.high %v1508, %v1508
      %v1512 = vunpack.c.l.s4 1966171168
      %v1513 = vunpack.c.0.s8 %v1512
      %v1514 = vlaneseq
      %v1515 = vshrl.u32 %v1514, 7
      %v1516 = vsub.s32 %v1513, %v1515
      %v1517 = vrot.slane %v1501, %v1516
      %v1519 = vunpack.c.l.s4 1966171168
      %v1520 = vunpack.c.0.s8 %v1519
      %v1521 = vlaneseq
      %v1522 = vshrl.u32 %v1521, 7
      %v1523 = vsub.s32 %v1520, %v1522
      %v1524 = vrot.slane %v1508, %v1523
      %v1526 = vunpack.c.l.s4 1966171168
      %v1527 = vunpack.c.0.s8 %v1526
      %v1528 = vlaneseq
      %v1529 = vshrl.u32 %v1528, 7
      %v1530 = vsub.s32 %v1527, %v1529
      %v1531 = vrot.slane %v1509, %v1530
      %v1533 = vunpack.c.l.s4 1966171168
      %v1534 = vunpack.c.0.s8 %v1533
      %v1535 = vlaneseq
      %v1536 = vshrl.u32 %v1535, 7
      %v1537 = vsub.s32 %v1534, %v1536
      %v1538 = vrot.slane %v1510, %v1537
      %v1539 = vcombine.high %v1517, %v1517
      %v1540 = vcombine.high %v1524, %v1524
      %v1541 = vcombine.high %v1531, %v1531
      %v1542 = vcombine.high %v1538, %v1538
      %v1543 = vcombine.high %v634, %v634
      %v1545 = vunpack.c.l.s4 1966171168
      %v1546 = vunpack.c.0.s8 %v1545
      %v1547 = vlaneseq
      %v1548 = vshrl.u32 %v1547, 7
      %v1549 = vsub.s32 %v1546, %v1548
      %v1550 = vrot.slane %v634, %v1549
      %v1552 = vunpack.c.l.s4 1966171168
      %v1553 = vunpack.c.0.s8 %v1552
      %v1554 = vlaneseq
      %v1555 = vshrl.u32 %v1554, 7
      %v1556 = vsub.s32 %v1553, %v1555
      %v1557 = vrot.slane %v1543, %v1556
      %v1558 = vcombine.high %v1550, %v1550
      %v1559 = vcombine.high %v1557, %v1557
      %v1561 = vunpack.c.l.s4 1966171168
      %v1562 = vunpack.c.0.s8 %v1561
      %v1563 = vlaneseq
      %v1564 = vshrl.u32 %v1563, 7
      %v1565 = vsub.s32 %v1562, %v1564
      %v1566 = vrot.slane %v1550, %v1565
      %v1568 = vunpack.c.l.s4 1966171168
      %v1569 = vunpack.c.0.s8 %v1568
      %v1570 = vlaneseq
      %v1571 = vshrl.u32 %v1570, 7
      %v1572 = vsub.s32 %v1569, %v1571
      %v1573 = vrot.slane %v1557, %v1572
      %v1575 = vunpack.c.l.s4 1966171168
      %v1576 = vunpack.c.0.s8 %v1575
      %v1577 = vlaneseq
      %v1578 = vshrl.u32 %v1577, 7
      %v1579 = vsub.s32 %v1576, %v1578
      %v1580 = vrot.slane %v1558, %v1579
      %v1582 = vunpack.c.l.s4 1966171168
      %v1583 = vunpack.c.0.s8 %v1582
      %v1584 = vlaneseq
      %v1585 = vshrl.u32 %v1584, 7
      %v1586 = vsub.s32 %v1583, %v1585
      %v1587 = vrot.slane %v1559, %v1586
      %v1588 = vcombine.high %v1566, %v1566
      %v1589 = vcombine.high %v1573, %v1573
      %v1590 = vcombine.high %v1580, %v1580
      %v1591 = vcombine.high %v1587, %v1587
      %v1592 = vcombine.high %v639, %v639
      %v1594 = vunpack.c.l.s4 1966171168
      %v1595 = vunpack.c.0.s8 %v1594
      %v1596 = vlaneseq
      %v1597 = vshrl.u32 %v1596, 7
      %v1598 = vsub.s32 %v1595, %v1597
      %v1599 = vrot.slane %v639, %v1598
      %v1601 = vunpack.c.l.s4 1966171168
      %v1602 = vunpack.c.0.s8 %v1601
      %v1603 = vlaneseq
      %v1604 = vshrl.u32 %v1603, 7
      %v1605 = vsub.s32 %v1602, %v1604
      %v1606 = vrot.slane %v1592, %v1605
      %v1607 = vcombine.high %v1599, %v1599
      %v1608 = vcombine.high %v1606, %v1606
      %v1610 = vunpack.c.l.s4 1966171168
      %v1611 = vunpack.c.0.s8 %v1610
      %v1612 = vlaneseq
      %v1613 = vshrl.u32 %v1612, 7
      %v1614 = vsub.s32 %v1611, %v1613
      %v1615 = vrot.slane %v1599, %v1614
      %v1617 = vunpack.c.l.s4 1966171168
      %v1618 = vunpack.c.0.s8 %v1617
      %v1619 = vlaneseq
      %v1620 = vshrl.u32 %v1619, 7
      %v1621 = vsub.s32 %v1618, %v1620
      %v1622 = vrot.slane %v1606, %v1621
      %v1624 = vunpack.c.l.s4 1966171168
      %v1625 = vunpack.c.0.s8 %v1624
      %v1626 = vlaneseq
      %v1627 = vshrl.u32 %v1626, 7
      %v1628 = vsub.s32 %v1625, %v1627
      %v1629 = vrot.slane %v1607, %v1628
      %v1631 = vunpack.c.l.s4 1966171168
      %v1632 = vunpack.c.0.s8 %v1631
      %v1633 = vlaneseq
      %v1634 = vshrl.u32 %v1633, 7
      %v1635 = vsub.s32 %v1632, %v1634
      %v1636 = vrot.slane %v1608, %v1635
      %v1637 = vcombine.high %v1615, %v1615
      %v1638 = vcombine.high %v1622, %v1622
      %v1639 = vcombine.high %v1629, %v1629
      %v1640 = vcombine.high %v1636, %v1636
      %v1713 = vcombine.high %v870, %v870
      %v1715 = vunpack.c.l.s4 1966171168
      %v1716 = vunpack.c.0.s8 %v1715
      %v1717 = vlaneseq
      %v1718 = vshrl.u32 %v1717, 7
      %v1719 = vsub.s32 %v1716, %v1718
      %v1720 = vrot.slane %v870, %v1719
      %v1722 = vunpack.c.l.s4 1966171168
      %v1723 = vunpack.c.0.s8 %v1722
      %v1724 = vlaneseq
      %v1725 = vshrl.u32 %v1724, 7
      %v1726 = vsub.s32 %v1723, %v1725
      %v1727 = vrot.slane %v1713, %v1726
      %v1728 = vcombine.high %v1720, %v1720
      %v1729 = vcombine.high %v1727, %v1727
      %v1731 = vunpack.c.l.s4 1966171168
      %v1732 = vunpack.c.0.s8 %v1731
      %v1733 = vlaneseq
      %v1734 = vshrl.u32 %v1733, 7
      %v1735 = vsub.s32 %v1732, %v1734
      %v1736 = vrot.slane %v1720, %v1735
      %v1738 = vunpack.c.l.s4 1966171168
      %v1739 = vunpack.c.0.s8 %v1738
      %v1740 = vlaneseq
      %v1741 = vshrl.u32 %v1740, 7
      %v1742 = vsub.s32 %v1739, %v1741
      %v1743 = vrot.slane %v1727, %v1742
      %v1745 = vunpack.c.l.s4 1966171168
      %v1746 = vunpack.c.0.s8 %v1745
      %v1747 = vlaneseq
      %v1748 = vshrl.u32 %v1747, 7
      %v1749 = vsub.s32 %v1746, %v1748
      %v1750 = vrot.slane %v1728, %v1749
      %v1752 = vunpack.c.l.s4 1966171168
      %v1753 = vunpack.c.0.s8 %v1752
      %v1754 = vlaneseq
      %v1755 = vshrl.u32 %v1754, 7
      %v1756 = vsub.s32 %v1753, %v1755
      %v1757 = vrot.slane %v1729, %v1756
      %v1758 = vcombine.high %v1736, %v1736
      %v1759 = vcombine.high %v1743, %v1743
      %v1760 = vcombine.high %v1750, %v1750
      %v1761 = vcombine.high %v1757, %v1757
      %v1762 = vcombine.high %v875, %v875
      %v1764 = vunpack.c.l.s4 1966171168
      %v1765 = vunpack.c.0.s8 %v1764
      %v1766 = vlaneseq
      %v1767 = vshrl.u32 %v1766, 7
      %v1768 = vsub.s32 %v1765, %v1767
      %v1769 = vrot.slane %v875, %v1768
      %v1771 = vunpack.c.l.s4 1966171168
      %v1772 = vunpack.c.0.s8 %v1771
      %v1773 = vlaneseq
      %v1774 = vshrl.u32 %v1773, 7
      %v1775 = vsub.s32 %v1772, %v1774
      %v1776 = vrot.slane %v1762, %v1775
      %v1777 = vcombine.high %v1769, %v1769
      %v1778 = vcombine.high %v1776, %v1776
      %v1780 = vunpack.c.l.s4 1966171168
      %v1781 = vunpack.c.0.s8 %v1780
      %v1782 = vlaneseq
      %v1783 = vshrl.u32 %v1782, 7
      %v1784 = vsub.s32 %v1781, %v1783
      %v1785 = vrot.slane %v1769, %v1784
      %v1787 = vunpack.c.l.s4 1966171168
      %v1788 = vunpack.c.0.s8 %v1787
      %v1789 = vlaneseq
      %v1790 = vshrl.u32 %v1789, 7
      %v1791 = vsub.s32 %v1788, %v1790
      %v1792 = vrot.slane %v1776, %v1791
      %v1794 = vunpack.c.l.s4 1966171168
      %v1795 = vunpack.c.0.s8 %v1794
      %v1796 = vlaneseq
      %v1797 = vshrl.u32 %v1796, 7
      %v1798 = vsub.s32 %v1795, %v1797
      %v1799 = vrot.slane %v1777, %v1798
      %v1801 = vunpack.c.l.s4 1966171168
      %v1802 = vunpack.c.0.s8 %v1801
      %v1803 = vlaneseq
      %v1804 = vshrl.u32 %v1803, 7
      %v1805 = vsub.s32 %v1802, %v1804
      %v1806 = vrot.slane %v1778, %v1805
      %v1807 = vcombine.high %v1785, %v1785
      %v1808 = vcombine.high %v1792, %v1792
      %v1809 = vcombine.high %v1799, %v1799
      %v1810 = vcombine.high %v1806, %v1806
      %v1811 = vcombine.high %v880, %v880
      %v1813 = vunpack.c.l.s4 1966171168
      %v1814 = vunpack.c.0.s8 %v1813
      %v1815 = vlaneseq
      %v1816 = vshrl.u32 %v1815, 7
      %v1817 = vsub.s32 %v1814, %v1816
      %v1818 = vrot.slane %v880, %v1817
      %v1820 = vunpack.c.l.s4 1966171168
      %v1821 = vunpack.c.0.s8 %v1820
      %v1822 = vlaneseq
      %v1823 = vshrl.u32 %v1822, 7
      %v1824 = vsub.s32 %v1821, %v1823
      %v1825 = vrot.slane %v1811, %v1824
      %v1826 = vcombine.high %v1818, %v1818
      %v1827 = vcombine.high %v1825, %v1825
      %v1829 = vunpack.c.l.s4 1966171168
      %v1830 = vunpack.c.0.s8 %v1829
      %v1831 = vlaneseq
      %v1832 = vshrl.u32 %v1831, 7
      %v1833 = vsub.s32 %v1830, %v1832
      %v1834 = vrot.slane %v1818, %v1833
      %v1836 = vunpack.c.l.s4 1966171168
      %v1837 = vunpack.c.0.s8 %v1836
      %v1838 = vlaneseq
      %v1839 = vshrl.u32 %v1838, 7
      %v1840 = vsub.s32 %v1837, %v1839
      %v1841 = vrot.slane %v1825, %v1840
      %v1843 = vunpack.c.l.s4 1966171168
      %v1844 = vunpack.c.0.s8 %v1843
      %v1845 = vlaneseq
      %v1846 = vshrl.u32 %v1845, 7
      %v1847 = vsub.s32 %v1844, %v1846
      %v1848 = vrot.slane %v1826, %v1847
      %v1850 = vunpack.c.l.s4 1966171168
      %v1851 = vunpack.c.0.s8 %v1850
      %v1852 = vlaneseq
      %v1853 = vshrl.u32 %v1852, 7
      %v1854 = vsub.s32 %v1851, %v1853
      %v1855 = vrot.slane %v1827, %v1854
      %v1856 = vcombine.high %v1834, %v1834
      %v1857 = vcombine.high %v1841, %v1841
      %v1858 = vcombine.high %v1848, %v1848
      %v1859 = vcombine.high %v1855, %v1855
      %v1860 = vcombine.high %v885, %v885
      %v1862 = vunpack.c.l.s4 1966171168
      %v1863 = vunpack.c.0.s8 %v1862
      %v1864 = vlaneseq
      %v1865 = vshrl.u32 %v1864, 7
      %v1866 = vsub.s32 %v1863, %v1865
      %v1867 = vrot.slane %v885, %v1866
      %v1869 = vunpack.c.l.s4 1966171168
      %v1870 = vunpack.c.0.s8 %v1869
      %v1871 = vlaneseq
      %v1872 = vshrl.u32 %v1871, 7
      %v1873 = vsub.s32 %v1870, %v1872
      %v1874 = vrot.slane %v1860, %v1873
      %v1875 = vcombine.high %v1867, %v1867
      %v1876 = vcombine.high %v1874, %v1874
      %v1878 = vunpack.c.l.s4 1966171168
      %v1879 = vunpack.c.0.s8 %v1878
      %v1880 = vlaneseq
      %v1881 = vshrl.u32 %v1880, 7
      %v1882 = vsub.s32 %v1879, %v1881
      %v1883 = vrot.slane %v1867, %v1882
      %v1885 = vunpack.c.l.s4 1966171168
      %v1886 = vunpack.c.0.s8 %v1885
      %v1887 = vlaneseq
      %v1888 = vshrl.u32 %v1887, 7
      %v1889 = vsub.s32 %v1886, %v1888
      %v1890 = vrot.slane %v1874, %v1889
      %v1892 = vunpack.c.l.s4 1966171168
      %v1893 = vunpack.c.0.s8 %v1892
      %v1894 = vlaneseq
      %v1895 = vshrl.u32 %v1894, 7
      %v1896 = vsub.s32 %v1893, %v1895
      %v1897 = vrot.slane %v1875, %v1896
      %v1899 = vunpack.c.l.s4 1966171168
      %v1900 = vunpack.c.0.s8 %v1899
      %v1901 = vlaneseq
      %v1902 = vshrl.u32 %v1901, 7
      %v1903 = vsub.s32 %v1900, %v1902
      %v1904 = vrot.slane %v1876, %v1903
      %v1905 = vcombine.high %v1883, %v1883
      %v1906 = vcombine.high %v1890, %v1890
      %v1907 = vcombine.high %v1897, %v1897
      %v1908 = vcombine.high %v1904, %v1904
      %v1909 = vcombine.high %v890, %v890
      %v1911 = vunpack.c.l.s4 1966171168
      %v1912 = vunpack.c.0.s8 %v1911
      %v1913 = vlaneseq
      %v1914 = vshrl.u32 %v1913, 7
      %v1915 = vsub.s32 %v1912, %v1914
      %v1916 = vrot.slane %v890, %v1915
      %v1918 = vunpack.c.l.s4 1966171168
      %v1919 = vunpack.c.0.s8 %v1918
      %v1920 = vlaneseq
      %v1921 = vshrl.u32 %v1920, 7
      %v1922 = vsub.s32 %v1919, %v1921
      %v1923 = vrot.slane %v1909, %v1922
      %v1924 = vcombine.high %v1916, %v1916
      %v1925 = vcombine.high %v1923, %v1923
      %v1927 = vunpack.c.l.s4 1966171168
      %v1928 = vunpack.c.0.s8 %v1927
      %v1929 = vlaneseq
      %v1930 = vshrl.u32 %v1929, 7
      %v1931 = vsub.s32 %v1928, %v1930
      %v1932 = vrot.slane %v1916, %v1931
      %v1934 = vunpack.c.l.s4 1966171168
      %v1935 = vunpack.c.0.s8 %v1934
      %v1936 = vlaneseq
      %v1937 = vshrl.u32 %v1936, 7
      %v1938 = vsub.s32 %v1935, %v1937
      %v1939 = vrot.slane %v1923, %v1938
      %v1941 = vunpack.c.l.s4 1966171168
      %v1942 = vunpack.c.0.s8 %v1941
      %v1943 = vlaneseq
      %v1944 = vshrl.u32 %v1943, 7
      %v1945 = vsub.s32 %v1942, %v1944
      %v1946 = vrot.slane %v1924, %v1945
      %v1948 = vunpack.c.l.s4 1966171168
      %v1949 = vunpack.c.0.s8 %v1948
      %v1950 = vlaneseq
      %v1951 = vshrl.u32 %v1950, 7
      %v1952 = vsub.s32 %v1949, %v1951
      %v1953 = vrot.slane %v1925, %v1952
      %v1954 = vcombine.high %v1932, %v1932
      %v1955 = vcombine.high %v1939, %v1939
      %v1956 = vcombine.high %v1946, %v1946
      %v1957 = vcombine.high %v1953, %v1953
      %v1958 = vcombine.high %v895, %v895
      %v1960 = vunpack.c.l.s4 1966171168
      %v1961 = vunpack.c.0.s8 %v1960
      %v1962 = vlaneseq
      %v1963 = vshrl.u32 %v1962, 7
      %v1964 = vsub.s32 %v1961, %v1963
      %v1965 = vrot.slane %v895, %v1964
      %v1967 = vunpack.c.l.s4 1966171168
      %v1968 = vunpack.c.0.s8 %v1967
      %v1969 = vlaneseq
      %v1970 = vshrl.u32 %v1969, 7
      %v1971 = vsub.s32 %v1968, %v1970
      %v1972 = vrot.slane %v1958, %v1971
      %v1973 = vcombine.high %v1965, %v1965
      %v1974 = vcombine.high %v1972, %v1972
      %v1976 = vunpack.c.l.s4 1966171168
      %v1977 = vunpack.c.0.s8 %v1976
      %v1978 = vlaneseq
      %v1979 = vshrl.u32 %v1978, 7
      %v1980 = vsub.s32 %v1977, %v1979
      %v1981 = vrot.slane %v1965, %v1980
      %v1983 = vunpack.c.l.s4 1966171168
      %v1984 = vunpack.c.0.s8 %v1983
      %v1985 = vlaneseq
      %v1986 = vshrl.u32 %v1985, 7
      %v1987 = vsub.s32 %v1984, %v1986
      %v1988 = vrot.slane %v1972, %v1987
      %v1990 = vunpack.c.l.s4 1966171168
      %v1991 = vunpack.c.0.s8 %v1990
      %v1992 = vlaneseq
      %v1993 = vshrl.u32 %v1992, 7
      %v1994 = vsub.s32 %v1991, %v1993
      %v1995 = vrot.slane %v1973, %v1994
      %v1997 = vunpack.c.l.s4 1966171168
      %v1998 = vunpack.c.0.s8 %v1997
      %v1999 = vlaneseq
      %v2000 = vshrl.u32 %v1999, 7
      %v2001 = vsub.s32 %v1998, %v2000
      %v2002 = vrot.slane %v1974, %v2001
      %v2003 = vcombine.high %v1981, %v1981
      %v2004 = vcombine.high %v1988, %v1988
      %v2005 = vcombine.high %v1995, %v1995
      %v2006 = vcombine.high %v2002, %v2002
      %v2007 = vcombine.high %v900, %v900
      %v2009 = vunpack.c.l.s4 1966171168
      %v2010 = vunpack.c.0.s8 %v2009
      %v2011 = vlaneseq
      %v2012 = vshrl.u32 %v2011, 7
      %v2013 = vsub.s32 %v2010, %v2012
      %v2014 = vrot.slane %v900, %v2013
      %v2016 = vunpack.c.l.s4 1966171168
      %v2017 = vunpack.c.0.s8 %v2016
      %v2018 = vlaneseq
      %v2019 = vshrl.u32 %v2018, 7
      %v2020 = vsub.s32 %v2017, %v2019
      %v2021 = vrot.slane %v2007, %v2020
      %v2022 = vcombine.high %v2014, %v2014
      %v2023 = vcombine.high %v2021, %v2021
      %v2025 = vunpack.c.l.s4 1966171168
      %v2026 = vunpack.c.0.s8 %v2025
      %v2027 = vlaneseq
      %v2028 = vshrl.u32 %v2027, 7
      %v2029 = vsub.s32 %v2026, %v2028
      %v2030 = vrot.slane %v2014, %v2029
      %v2032 = vunpack.c.l.s4 1966171168
      %v2033 = vunpack.c.0.s8 %v2032
      %v2034 = vlaneseq
      %v2035 = vshrl.u32 %v2034, 7
      %v2036 = vsub.s32 %v2033, %v2035
      %v2037 = vrot.slane %v2021, %v2036
      %v2039 = vunpack.c.l.s4 1966171168
      %v2040 = vunpack.c.0.s8 %v2039
      %v2041 = vlaneseq
      %v2042 = vshrl.u32 %v2041, 7
      %v2043 = vsub.s32 %v2040, %v2042
      %v2044 = vrot.slane %v2022, %v2043
      %v2046 = vunpack.c.l.s4 1966171168
      %v2047 = vunpack.c.0.s8 %v2046
      %v2048 = vlaneseq
      %v2049 = vshrl.u32 %v2048, 7
      %v2050 = vsub.s32 %v2047, %v2049
      %v2051 = vrot.slane %v2023, %v2050
      %v2052 = vcombine.high %v2030, %v2030
      %v2053 = vcombine.high %v2037, %v2037
      %v2054 = vcombine.high %v2044, %v2044
      %v2055 = vcombine.high %v2051, %v2051
      %v2056 = vcombine.high %v905, %v905
      %v2058 = vunpack.c.l.s4 1966171168
      %v2059 = vunpack.c.0.s8 %v2058
      %v2060 = vlaneseq
      %v2061 = vshrl.u32 %v2060, 7
      %v2062 = vsub.s32 %v2059, %v2061
      %v2063 = vrot.slane %v905, %v2062
      %v2065 = vunpack.c.l.s4 1966171168
      %v2066 = vunpack.c.0.s8 %v2065
      %v2067 = vlaneseq
      %v2068 = vshrl.u32 %v2067, 7
      %v2069 = vsub.s32 %v2066, %v2068
      %v2070 = vrot.slane %v2056, %v2069
      %v2071 = vcombine.high %v2063, %v2063
      %v2072 = vcombine.high %v2070, %v2070
      %v2074 = vunpack.c.l.s4 1966171168
      %v2075 = vunpack.c.0.s8 %v2074
      %v2076 = vlaneseq
      %v2077 = vshrl.u32 %v2076, 7
      %v2078 = vsub.s32 %v2075, %v2077
      %v2079 = vrot.slane %v2063, %v2078
      %v2081 = vunpack.c.l.s4 1966171168
      %v2082 = vunpack.c.0.s8 %v2081
      %v2083 = vlaneseq
      %v2084 = vshrl.u32 %v2083, 7
      %v2085 = vsub.s32 %v2082, %v2084
      %v2086 = vrot.slane %v2070, %v2085
      %v2088 = vunpack.c.l.s4 1966171168
      %v2089 = vunpack.c.0.s8 %v2088
      %v2090 = vlaneseq
      %v2091 = vshrl.u32 %v2090, 7
      %v2092 = vsub.s32 %v2089, %v2091
      %v2093 = vrot.slane %v2071, %v2092
      %v2095 = vunpack.c.l.s4 1966171168
      %v2096 = vunpack.c.0.s8 %v2095
      %v2097 = vlaneseq
      %v2098 = vshrl.u32 %v2097, 7
      %v2099 = vsub.s32 %v2096, %v2098
      %v2100 = vrot.slane %v2072, %v2099
      %v2101 = vcombine.high %v2079, %v2079
      %v2102 = vcombine.high %v2086, %v2086
      %v2103 = vcombine.high %v2093, %v2093
      %v2104 = vcombine.high %v2100, %v2100
      %v2105 = vlaneseq
      %v2106 = vshrl.u32 %v2105, 7
      %v2107 = vsub.s32 0, %v2106
      %v2108 = vrot.slane %v1736, %v2107
      %v2109 = vlaneseq
      %v2110 = vshrl.u32 %v2109, 7
      %v2111 = vsub.s32 0, %v2110
      %v2112 = vrot.slane %v1750, %v2111
      %v2113 = vlaneseq
      %v2114 = vshrl.u32 %v2113, 7
      %v2115 = vsub.s32 0, %v2114
      %v2116 = vrot.slane %v1758, %v2115
      %v2117 = vlaneseq
      %v2118 = vshrl.u32 %v2117, 7
      %v2119 = vsub.s32 0, %v2118
      %v2120 = vrot.slane %v1760, %v2119
      %v2121 = vlaneseq
      %v2122 = vshrl.u32 %v2121, 7
      %v2123 = vsub.s32 0, %v2122
      %v2124 = vrot.slane %v1743, %v2123
      %v2125 = vlaneseq
      %v2126 = vshrl.u32 %v2125, 7
      %v2127 = vsub.s32 0, %v2126
      %v2128 = vrot.slane %v1757, %v2127
      %v2129 = vlaneseq
      %v2130 = vshrl.u32 %v2129, 7
      %v2131 = vsub.s32 0, %v2130
      %v2132 = vrot.slane %v1759, %v2131
      %v2133 = vlaneseq
      %v2134 = vshrl.u32 %v2133, 7
      %v2135 = vsub.s32 0, %v2134
      %v2136 = vrot.slane %v1761, %v2135
      %v2137 = vlaneseq
      %v2138 = vshrl.u32 %v2137, 7
      %v2139 = vsub.s32 0, %v2138
      %v2140 = vrot.slane %v1785, %v2139
      %v2141 = vlaneseq
      %v2142 = vshrl.u32 %v2141, 7
      %v2143 = vsub.s32 0, %v2142
      %v2144 = vrot.slane %v1799, %v2143
      %v2145 = vlaneseq
      %v2146 = vshrl.u32 %v2145, 7
      %v2147 = vsub.s32 0, %v2146
      %v2148 = vrot.slane %v1807, %v2147
      %v2149 = vlaneseq
      %v2150 = vshrl.u32 %v2149, 7
      %v2151 = vsub.s32 0, %v2150
      %v2152 = vrot.slane %v1809, %v2151
      %v2153 = vlaneseq
      %v2154 = vshrl.u32 %v2153, 7
      %v2155 = vsub.s32 0, %v2154
      %v2156 = vrot.slane %v1792, %v2155
      %v2157 = vlaneseq
      %v2158 = vshrl.u32 %v2157, 7
      %v2159 = vsub.s32 0, %v2158
      %v2160 = vrot.slane %v1806, %v2159
      %v2161 = vlaneseq
      %v2162 = vshrl.u32 %v2161, 7
      %v2163 = vsub.s32 0, %v2162
      %v2164 = vrot.slane %v1808, %v2163
      %v2165 = vlaneseq
      %v2166 = vshrl.u32 %v2165, 7
      %v2167 = vsub.s32 0, %v2166
      %v2168 = vrot.slane %v1810, %v2167
      %v2169 = vlaneseq
      %v2170 = vshrl.u32 %v2169, 7
      %v2171 = vsub.s32 0, %v2170
      %v2172 = vrot.slane %v1834, %v2171
      %v2173 = vlaneseq
      %v2174 = vshrl.u32 %v2173, 7
      %v2175 = vsub.s32 0, %v2174
      %v2176 = vrot.slane %v1848, %v2175
      %v2177 = vlaneseq
      %v2178 = vshrl.u32 %v2177, 7
      %v2179 = vsub.s32 0, %v2178
      %v2180 = vrot.slane %v1856, %v2179
      %v2181 = vlaneseq
      %v2182 = vshrl.u32 %v2181, 7
      %v2183 = vsub.s32 0, %v2182
      %v2184 = vrot.slane %v1858, %v2183
      %v2185 = vlaneseq
      %v2186 = vshrl.u32 %v2185, 7
      %v2187 = vsub.s32 0, %v2186
      %v2188 = vrot.slane %v1841, %v2187
      %v2189 = vlaneseq
      %v2190 = vshrl.u32 %v2189, 7
      %v2191 = vsub.s32 0, %v2190
      %v2192 = vrot.slane %v1855, %v2191
      %v2193 = vlaneseq
      %v2194 = vshrl.u32 %v2193, 7
      %v2195 = vsub.s32 0, %v2194
      %v2196 = vrot.slane %v1857, %v2195
      %v2197 = vlaneseq
      %v2198 = vshrl.u32 %v2197, 7
      %v2199 = vsub.s32 0, %v2198
      %v2200 = vrot.slane %v1859, %v2199
      %v2201 = vlaneseq
      %v2202 = vshrl.u32 %v2201, 7
      %v2203 = vsub.s32 0, %v2202
      %v2204 = vrot.slane %v1883, %v2203
      %v2205 = vlaneseq
      %v2206 = vshrl.u32 %v2205, 7
      %v2207 = vsub.s32 0, %v2206
      %v2208 = vrot.slane %v1897, %v2207
      %v2209 = vlaneseq
      %v2210 = vshrl.u32 %v2209, 7
      %v2211 = vsub.s32 0, %v2210
      %v2212 = vrot.slane %v1905, %v2211
      %v2213 = vlaneseq
      %v2214 = vshrl.u32 %v2213, 7
      %v2215 = vsub.s32 0, %v2214
      %v2216 = vrot.slane %v1907, %v2215
      %v2217 = vlaneseq
      %v2218 = vshrl.u32 %v2217, 7
      %v2219 = vsub.s32 0, %v2218
      %v2220 = vrot.slane %v1890, %v2219
      %v2221 = vlaneseq
      %v2222 = vshrl.u32 %v2221, 7
      %v2223 = vsub.s32 0, %v2222
      %v2224 = vrot.slane %v1904, %v2223
      %v2225 = vlaneseq
      %v2226 = vshrl.u32 %v2225, 7
      %v2227 = vsub.s32 0, %v2226
      %v2228 = vrot.slane %v1906, %v2227
      %v2229 = vlaneseq
      %v2230 = vshrl.u32 %v2229, 7
      %v2231 = vsub.s32 0, %v2230
      %v2232 = vrot.slane %v1908, %v2231
      %v2233 = vlaneseq
      %v2234 = vshrl.u32 %v2233, 7
      %v2235 = vsub.s32 0, %v2234
      %v2236 = vrot.slane %v1932, %v2235
      %v2237 = vlaneseq
      %v2238 = vshrl.u32 %v2237, 7
      %v2239 = vsub.s32 0, %v2238
      %v2240 = vrot.slane %v1946, %v2239
      %v2241 = vlaneseq
      %v2242 = vshrl.u32 %v2241, 7
      %v2243 = vsub.s32 0, %v2242
      %v2244 = vrot.slane %v1954, %v2243
      %v2245 = vlaneseq
      %v2246 = vshrl.u32 %v2245, 7
      %v2247 = vsub.s32 0, %v2246
      %v2248 = vrot.slane %v1956, %v2247
      %v2249 = vlaneseq
      %v2250 = vshrl.u32 %v2249, 7
      %v2251 = vsub.s32 0, %v2250
      %v2252 = vrot.slane %v1939, %v2251
      %v2253 = vlaneseq
      %v2254 = vshrl.u32 %v2253, 7
      %v2255 = vsub.s32 0, %v2254
      %v2256 = vrot.slane %v1953, %v2255
      %v2257 = vlaneseq
      %v2258 = vshrl.u32 %v2257, 7
      %v2259 = vsub.s32 0, %v2258
      %v2260 = vrot.slane %v1955, %v2259
      %v2261 = vlaneseq
      %v2262 = vshrl.u32 %v2261, 7
      %v2263 = vsub.s32 0, %v2262
      %v2264 = vrot.slane %v1957, %v2263
      %v2265 = vlaneseq
      %v2266 = vshrl.u32 %v2265, 7
      %v2267 = vsub.s32 0, %v2266
      %v2268 = vrot.slane %v1981, %v2267
      %v2269 = vlaneseq
      %v2270 = vshrl.u32 %v2269, 7
      %v2271 = vsub.s32 0, %v2270
      %v2272 = vrot.slane %v1995, %v2271
      %v2273 = vlaneseq
      %v2274 = vshrl.u32 %v2273, 7
      %v2275 = vsub.s32 0, %v2274
      %v2276 = vrot.slane %v2003, %v2275
      %v2277 = vlaneseq
      %v2278 = vshrl.u32 %v2277, 7
      %v2279 = vsub.s32 0, %v2278
      %v2280 = vrot.slane %v2005, %v2279
      %v2281 = vlaneseq
      %v2282 = vshrl.u32 %v2281, 7
      %v2283 = vsub.s32 0, %v2282
      %v2284 = vrot.slane %v1988, %v2283
      %v2285 = vlaneseq
      %v2286 = vshrl.u32 %v2285, 7
      %v2287 = vsub.s32 0, %v2286
      %v2288 = vrot.slane %v2002, %v2287
      %v2289 = vlaneseq
      %v2290 = vshrl.u32 %v2289, 7
      %v2291 = vsub.s32 0, %v2290
      %v2292 = vrot.slane %v2004, %v2291
      %v2293 = vlaneseq
      %v2294 = vshrl.u32 %v2293, 7
      %v2295 = vsub.s32 0, %v2294
      %v2296 = vrot.slane %v2006, %v2295
      %v2297 = vlaneseq
      %v2298 = vshrl.u32 %v2297, 7
      %v2299 = vsub.s32 0, %v2298
      %v2300 = vrot.slane %v2030, %v2299
      %v2301 = vlaneseq
      %v2302 = vshrl.u32 %v2301, 7
      %v2303 = vsub.s32 0, %v2302
      %v2304 = vrot.slane %v2044, %v2303
      %v2305 = vlaneseq
      %v2306 = vshrl.u32 %v2305, 7
      %v2307 = vsub.s32 0, %v2306
      %v2308 = vrot.slane %v2052, %v2307
      %v2309 = vlaneseq
      %v2310 = vshrl.u32 %v2309, 7
      %v2311 = vsub.s32 0, %v2310
      %v2312 = vrot.slane %v2054, %v2311
      %v2313 = vlaneseq
      %v2314 = vshrl.u32 %v2313, 7
      %v2315 = vsub.s32 0, %v2314
      %v2316 = vrot.slane %v2037, %v2315
      %v2317 = vlaneseq
      %v2318 = vshrl.u32 %v2317, 7
      %v2319 = vsub.s32 0, %v2318
      %v2320 = vrot.slane %v2051, %v2319
      %v2321 = vlaneseq
      %v2322 = vshrl.u32 %v2321, 7
      %v2323 = vsub.s32 0, %v2322
      %v2324 = vrot.slane %v2053, %v2323
      %v2325 = vlaneseq
      %v2326 = vshrl.u32 %v2325, 7
      %v2327 = vsub.s32 0, %v2326
      %v2328 = vrot.slane %v2055, %v2327
      %v2329 = vlaneseq
      %v2330 = vshrl.u32 %v2329, 7
      %v2331 = vsub.s32 0, %v2330
      %v2332 = vrot.slane %v2079, %v2331
      %v2333 = vlaneseq
      %v2334 = vshrl.u32 %v2333, 7
      %v2335 = vsub.s32 0, %v2334
      %v2336 = vrot.slane %v2093, %v2335
      %v2337 = vlaneseq
      %v2338 = vshrl.u32 %v2337, 7
      %v2339 = vsub.s32 0, %v2338
      %v2340 = vrot.slane %v2101, %v2339
      %v2341 = vlaneseq
      %v2342 = vshrl.u32 %v2341, 7
      %v2343 = vsub.s32 0, %v2342
      %v2344 = vrot.slane %v2103, %v2343
      %v2345 = vlaneseq
      %v2346 = vshrl.u32 %v2345, 7
      %v2347 = vsub.s32 0, %v2346
      %v2348 = vrot.slane %v2086, %v2347
      %v2349 = vlaneseq
      %v2350 = vshrl.u32 %v2349, 7
      %v2351 = vsub.s32 0, %v2350
      %v2352 = vrot.slane %v2100, %v2351
      %v2353 = vlaneseq
      %v2354 = vshrl.u32 %v2353, 7
      %v2355 = vsub.s32 0, %v2354
      %v2356 = vrot.slane %v2102, %v2355
      %v2357 = vlaneseq
      %v2358 = vshrl.u32 %v2357, 7
      %v2359 = vsub.s32 0, %v2358
      %v2360 = vrot.slane %v2104, %v2359
      %v2425 = vsel %vm1237, %v1272, %v2108
      %v2426 = vsel %vm1237, %v1286, %v2112
      %v2427 = vsel %vm1237, %v1294, %v2116
      %v2428 = vsel %vm1237, %v1296, %v2120
      %v2429 = vsel %vm1237, %v1279, %v2124
      %v2430 = vsel %vm1237, %v1293, %v2128
      %v2431 = vsel %vm1237, %v1295, %v2132
      %v2432 = vsel %vm1237, %v1297, %v2136
      %v2433 = vsel %vm1237, %v1321, %v2140
      %v2434 = vsel %vm1237, %v1335, %v2144
      %v2435 = vsel %vm1237, %v1343, %v2148
      %v2436 = vsel %vm1237, %v1345, %v2152
      %v2437 = vsel %vm1237, %v1328, %v2156
      %v2438 = vsel %vm1237, %v1342, %v2160
      %v2439 = vsel %vm1237, %v1344, %v2164
      %v2440 = vsel %vm1237, %v1346, %v2168
      %v2441 = vsel %vm1237, %v1370, %v2172
      %v2442 = vsel %vm1237, %v1384, %v2176
      %v2443 = vsel %vm1237, %v1392, %v2180
      %v2444 = vsel %vm1237, %v1394, %v2184
      %v2445 = vsel %vm1237, %v1377, %v2188
      %v2446 = vsel %vm1237, %v1391, %v2192
      %v2447 = vsel %vm1237, %v1393, %v2196
      %v2448 = vsel %vm1237, %v1395, %v2200
      %v2449 = vsel %vm1237, %v1419, %v2204
      %v2450 = vsel %vm1237, %v1433, %v2208
      %v2451 = vsel %vm1237, %v1441, %v2212
      %v2452 = vsel %vm1237, %v1443, %v2216
      %v2453 = vsel %vm1237, %v1426, %v2220
      %v2454 = vsel %vm1237, %v1440, %v2224
      %v2455 = vsel %vm1237, %v1442, %v2228
      %v2456 = vsel %vm1237, %v1444, %v2232
      %v2457 = vsel %vm1237, %v1468, %v2236
      %v2458 = vsel %vm1237, %v1482, %v2240
      %v2459 = vsel %vm1237, %v1490, %v2244
      %v2460 = vsel %vm1237, %v1492, %v2248
      %v2461 = vsel %vm1237, %v1475, %v2252
      %v2462 = vsel %vm1237, %v1489, %v2256
      %v2463 = vsel %vm1237, %v1491, %v2260
      %v2464 = vsel %vm1237, %v1493, %v2264
      %v2465 = vsel %vm1237, %v1517, %v2268
      %v2466 = vsel %vm1237, %v1531, %v2272
      %v2467 = vsel %vm1237, %v1539, %v2276
      %v2468 = vsel %vm1237, %v1541, %v2280
      %v2469 = vsel %vm1237, %v1524, %v2284
      %v2470 = vsel %vm1237, %v1538, %v2288
      %v2471 = vsel %vm1237, %v1540, %v2292
      %v2472 = vsel %vm1237, %v1542, %v2296
      %v2473 = vsel %vm1237, %v1566, %v2300
      %v2474 = vsel %vm1237, %v1580, %v2304
      %v2475 = vsel %vm1237, %v1588, %v2308
      %v2476 = vsel %vm1237, %v1590, %v2312
      %v2477 = vsel %vm1237, %v1573, %v2316
      %v2478 = vsel %vm1237, %v1587, %v2320
      %v2479 = vsel %vm1237, %v1589, %v2324
      %v2480 = vsel %vm1237, %v1591, %v2328
      %v2481 = vsel %vm1237, %v1615, %v2332
      %v2482 = vsel %vm1237, %v1629, %v2336
      %v2483 = vsel %vm1237, %v1637, %v2340
      %v2484 = vsel %vm1237, %v1639, %v2344
      %v2485 = vsel %vm1237, %v1622, %v2348
      %v2486 = vsel %vm1237, %v1636, %v2352
      %v2487 = vsel %vm1237, %v1638, %v2356
      %v2488 = vsel %vm1237, %v1640, %v2360
      %v2497 = vcombine.high %v733, %v733
      %v2499 = vunpack.c.l.s4 1966171168
      %v2500 = vunpack.c.0.s8 %v2499
      %v2501 = vlaneseq
      %v2502 = vshrl.u32 %v2501, 7
      %v2503 = vsub.s32 %v2500, %v2502
      %v2504 = vrot.slane %v733, %v2503
      %v2506 = vunpack.c.l.s4 1966171168
      %v2507 = vunpack.c.0.s8 %v2506
      %v2508 = vlaneseq
      %v2509 = vshrl.u32 %v2508, 7
      %v2510 = vsub.s32 %v2507, %v2509
      %v2511 = vrot.slane %v2497, %v2510
      %v2512 = vcombine.high %v2504, %v2504
      %v2513 = vcombine.high %v2511, %v2511
      %v2515 = vunpack.c.l.s4 1966171168
      %v2516 = vunpack.c.0.s8 %v2515
      %v2517 = vlaneseq
      %v2518 = vshrl.u32 %v2517, 7
      %v2519 = vsub.s32 %v2516, %v2518
      %v2520 = vrot.slane %v2504, %v2519
      %v2522 = vunpack.c.l.s4 1966171168
      %v2523 = vunpack.c.0.s8 %v2522
      %v2524 = vlaneseq
      %v2525 = vshrl.u32 %v2524, 7
      %v2526 = vsub.s32 %v2523, %v2525
      %v2527 = vrot.slane %v2511, %v2526
      %v2529 = vunpack.c.l.s4 1966171168
      %v2530 = vunpack.c.0.s8 %v2529
      %v2531 = vlaneseq
      %v2532 = vshrl.u32 %v2531, 7
      %v2533 = vsub.s32 %v2530, %v2532
      %v2534 = vrot.slane %v2512, %v2533
      %v2536 = vunpack.c.l.s4 1966171168
      %v2537 = vunpack.c.0.s8 %v2536
      %v2538 = vlaneseq
      %v2539 = vshrl.u32 %v2538, 7
      %v2540 = vsub.s32 %v2537, %v2539
      %v2541 = vrot.slane %v2513, %v2540
      %v2542 = vcombine.high %v2520, %v2520
      %v2543 = vcombine.high %v2527, %v2527
      %v2544 = vcombine.high %v2534, %v2534
      %v2545 = vcombine.high %v2541, %v2541
      %v2546 = vcombine.high %v738, %v738
      %v2548 = vunpack.c.l.s4 1966171168
      %v2549 = vunpack.c.0.s8 %v2548
      %v2550 = vlaneseq
      %v2551 = vshrl.u32 %v2550, 7
      %v2552 = vsub.s32 %v2549, %v2551
      %v2553 = vrot.slane %v738, %v2552
      %v2555 = vunpack.c.l.s4 1966171168
      %v2556 = vunpack.c.0.s8 %v2555
      %v2557 = vlaneseq
      %v2558 = vshrl.u32 %v2557, 7
      %v2559 = vsub.s32 %v2556, %v2558
      %v2560 = vrot.slane %v2546, %v2559
      %v2561 = vcombine.high %v2553, %v2553
      %v2562 = vcombine.high %v2560, %v2560
      %v2564 = vunpack.c.l.s4 1966171168
      %v2565 = vunpack.c.0.s8 %v2564
      %v2566 = vlaneseq
      %v2567 = vshrl.u32 %v2566, 7
      %v2568 = vsub.s32 %v2565, %v2567
      %v2569 = vrot.slane %v2553, %v2568
      %v2571 = vunpack.c.l.s4 1966171168
      %v2572 = vunpack.c.0.s8 %v2571
      %v2573 = vlaneseq
      %v2574 = vshrl.u32 %v2573, 7
      %v2575 = vsub.s32 %v2572, %v2574
      %v2576 = vrot.slane %v2560, %v2575
      %v2578 = vunpack.c.l.s4 1966171168
      %v2579 = vunpack.c.0.s8 %v2578
      %v2580 = vlaneseq
      %v2581 = vshrl.u32 %v2580, 7
      %v2582 = vsub.s32 %v2579, %v2581
      %v2583 = vrot.slane %v2561, %v2582
      %v2585 = vunpack.c.l.s4 1966171168
      %v2586 = vunpack.c.0.s8 %v2585
      %v2587 = vlaneseq
      %v2588 = vshrl.u32 %v2587, 7
      %v2589 = vsub.s32 %v2586, %v2588
      %v2590 = vrot.slane %v2562, %v2589
      %v2591 = vcombine.high %v2569, %v2569
      %v2592 = vcombine.high %v2576, %v2576
      %v2593 = vcombine.high %v2583, %v2583
      %v2594 = vcombine.high %v2590, %v2590
      %v2595 = vcombine.high %v743, %v743
      %v2597 = vunpack.c.l.s4 1966171168
      %v2598 = vunpack.c.0.s8 %v2597
      %v2599 = vlaneseq
      %v2600 = vshrl.u32 %v2599, 7
      %v2601 = vsub.s32 %v2598, %v2600
      %v2602 = vrot.slane %v743, %v2601
      %v2604 = vunpack.c.l.s4 1966171168
      %v2605 = vunpack.c.0.s8 %v2604
      %v2606 = vlaneseq
      %v2607 = vshrl.u32 %v2606, 7
      %v2608 = vsub.s32 %v2605, %v2607
      %v2609 = vrot.slane %v2595, %v2608
      %v2610 = vcombine.high %v2602, %v2602
      %v2611 = vcombine.high %v2609, %v2609
      %v2613 = vunpack.c.l.s4 1966171168
      %v2614 = vunpack.c.0.s8 %v2613
      %v2615 = vlaneseq
      %v2616 = vshrl.u32 %v2615, 7
      %v2617 = vsub.s32 %v2614, %v2616
      %v2618 = vrot.slane %v2602, %v2617
      %v2620 = vunpack.c.l.s4 1966171168
      %v2621 = vunpack.c.0.s8 %v2620
      %v2622 = vlaneseq
      %v2623 = vshrl.u32 %v2622, 7
      %v2624 = vsub.s32 %v2621, %v2623
      %v2625 = vrot.slane %v2609, %v2624
      %v2627 = vunpack.c.l.s4 1966171168
      %v2628 = vunpack.c.0.s8 %v2627
      %v2629 = vlaneseq
      %v2630 = vshrl.u32 %v2629, 7
      %v2631 = vsub.s32 %v2628, %v2630
      %v2632 = vrot.slane %v2610, %v2631
      %v2634 = vunpack.c.l.s4 1966171168
      %v2635 = vunpack.c.0.s8 %v2634
      %v2636 = vlaneseq
      %v2637 = vshrl.u32 %v2636, 7
      %v2638 = vsub.s32 %v2635, %v2637
      %v2639 = vrot.slane %v2611, %v2638
      %v2640 = vcombine.high %v2618, %v2618
      %v2641 = vcombine.high %v2625, %v2625
      %v2642 = vcombine.high %v2632, %v2632
      %v2643 = vcombine.high %v2639, %v2639
      %v2644 = vcombine.high %v748, %v748
      %v2646 = vunpack.c.l.s4 1966171168
      %v2647 = vunpack.c.0.s8 %v2646
      %v2648 = vlaneseq
      %v2649 = vshrl.u32 %v2648, 7
      %v2650 = vsub.s32 %v2647, %v2649
      %v2651 = vrot.slane %v748, %v2650
      %v2653 = vunpack.c.l.s4 1966171168
      %v2654 = vunpack.c.0.s8 %v2653
      %v2655 = vlaneseq
      %v2656 = vshrl.u32 %v2655, 7
      %v2657 = vsub.s32 %v2654, %v2656
      %v2658 = vrot.slane %v2644, %v2657
      %v2659 = vcombine.high %v2651, %v2651
      %v2660 = vcombine.high %v2658, %v2658
      %v2662 = vunpack.c.l.s4 1966171168
      %v2663 = vunpack.c.0.s8 %v2662
      %v2664 = vlaneseq
      %v2665 = vshrl.u32 %v2664, 7
      %v2666 = vsub.s32 %v2663, %v2665
      %v2667 = vrot.slane %v2651, %v2666
      %v2669 = vunpack.c.l.s4 1966171168
      %v2670 = vunpack.c.0.s8 %v2669
      %v2671 = vlaneseq
      %v2672 = vshrl.u32 %v2671, 7
      %v2673 = vsub.s32 %v2670, %v2672
      %v2674 = vrot.slane %v2658, %v2673
      %v2676 = vunpack.c.l.s4 1966171168
      %v2677 = vunpack.c.0.s8 %v2676
      %v2678 = vlaneseq
      %v2679 = vshrl.u32 %v2678, 7
      %v2680 = vsub.s32 %v2677, %v2679
      %v2681 = vrot.slane %v2659, %v2680
      %v2683 = vunpack.c.l.s4 1966171168
      %v2684 = vunpack.c.0.s8 %v2683
      %v2685 = vlaneseq
      %v2686 = vshrl.u32 %v2685, 7
      %v2687 = vsub.s32 %v2684, %v2686
      %v2688 = vrot.slane %v2660, %v2687
      %v2689 = vcombine.high %v2667, %v2667
      %v2690 = vcombine.high %v2674, %v2674
      %v2691 = vcombine.high %v2681, %v2681
      %v2692 = vcombine.high %v2688, %v2688
      %v2693 = vcombine.high %v753, %v753
      %v2695 = vunpack.c.l.s4 1966171168
      %v2696 = vunpack.c.0.s8 %v2695
      %v2697 = vlaneseq
      %v2698 = vshrl.u32 %v2697, 7
      %v2699 = vsub.s32 %v2696, %v2698
      %v2700 = vrot.slane %v753, %v2699
      %v2702 = vunpack.c.l.s4 1966171168
      %v2703 = vunpack.c.0.s8 %v2702
      %v2704 = vlaneseq
      %v2705 = vshrl.u32 %v2704, 7
      %v2706 = vsub.s32 %v2703, %v2705
      %v2707 = vrot.slane %v2693, %v2706
      %v2708 = vcombine.high %v2700, %v2700
      %v2709 = vcombine.high %v2707, %v2707
      %v2711 = vunpack.c.l.s4 1966171168
      %v2712 = vunpack.c.0.s8 %v2711
      %v2713 = vlaneseq
      %v2714 = vshrl.u32 %v2713, 7
      %v2715 = vsub.s32 %v2712, %v2714
      %v2716 = vrot.slane %v2700, %v2715
      %v2718 = vunpack.c.l.s4 1966171168
      %v2719 = vunpack.c.0.s8 %v2718
      %v2720 = vlaneseq
      %v2721 = vshrl.u32 %v2720, 7
      %v2722 = vsub.s32 %v2719, %v2721
      %v2723 = vrot.slane %v2707, %v2722
      %v2725 = vunpack.c.l.s4 1966171168
      %v2726 = vunpack.c.0.s8 %v2725
      %v2727 = vlaneseq
      %v2728 = vshrl.u32 %v2727, 7
      %v2729 = vsub.s32 %v2726, %v2728
      %v2730 = vrot.slane %v2708, %v2729
      %v2732 = vunpack.c.l.s4 1966171168
      %v2733 = vunpack.c.0.s8 %v2732
      %v2734 = vlaneseq
      %v2735 = vshrl.u32 %v2734, 7
      %v2736 = vsub.s32 %v2733, %v2735
      %v2737 = vrot.slane %v2709, %v2736
      %v2738 = vcombine.high %v2716, %v2716
      %v2739 = vcombine.high %v2723, %v2723
      %v2740 = vcombine.high %v2730, %v2730
      %v2741 = vcombine.high %v2737, %v2737
      %v2742 = vcombine.high %v758, %v758
      %v2744 = vunpack.c.l.s4 1966171168
      %v2745 = vunpack.c.0.s8 %v2744
      %v2746 = vlaneseq
      %v2747 = vshrl.u32 %v2746, 7
      %v2748 = vsub.s32 %v2745, %v2747
      %v2749 = vrot.slane %v758, %v2748
      %v2751 = vunpack.c.l.s4 1966171168
      %v2752 = vunpack.c.0.s8 %v2751
      %v2753 = vlaneseq
      %v2754 = vshrl.u32 %v2753, 7
      %v2755 = vsub.s32 %v2752, %v2754
      %v2756 = vrot.slane %v2742, %v2755
      %v2757 = vcombine.high %v2749, %v2749
      %v2758 = vcombine.high %v2756, %v2756
      %v2760 = vunpack.c.l.s4 1966171168
      %v2761 = vunpack.c.0.s8 %v2760
      %v2762 = vlaneseq
      %v2763 = vshrl.u32 %v2762, 7
      %v2764 = vsub.s32 %v2761, %v2763
      %v2765 = vrot.slane %v2749, %v2764
      %v2767 = vunpack.c.l.s4 1966171168
      %v2768 = vunpack.c.0.s8 %v2767
      %v2769 = vlaneseq
      %v2770 = vshrl.u32 %v2769, 7
      %v2771 = vsub.s32 %v2768, %v2770
      %v2772 = vrot.slane %v2756, %v2771
      %v2774 = vunpack.c.l.s4 1966171168
      %v2775 = vunpack.c.0.s8 %v2774
      %v2776 = vlaneseq
      %v2777 = vshrl.u32 %v2776, 7
      %v2778 = vsub.s32 %v2775, %v2777
      %v2779 = vrot.slane %v2757, %v2778
      %v2781 = vunpack.c.l.s4 1966171168
      %v2782 = vunpack.c.0.s8 %v2781
      %v2783 = vlaneseq
      %v2784 = vshrl.u32 %v2783, 7
      %v2785 = vsub.s32 %v2782, %v2784
      %v2786 = vrot.slane %v2758, %v2785
      %v2787 = vcombine.high %v2765, %v2765
      %v2788 = vcombine.high %v2772, %v2772
      %v2789 = vcombine.high %v2779, %v2779
      %v2790 = vcombine.high %v2786, %v2786
      %v2791 = vcombine.high %v763, %v763
      %v2793 = vunpack.c.l.s4 1966171168
      %v2794 = vunpack.c.0.s8 %v2793
      %v2795 = vlaneseq
      %v2796 = vshrl.u32 %v2795, 7
      %v2797 = vsub.s32 %v2794, %v2796
      %v2798 = vrot.slane %v763, %v2797
      %v2800 = vunpack.c.l.s4 1966171168
      %v2801 = vunpack.c.0.s8 %v2800
      %v2802 = vlaneseq
      %v2803 = vshrl.u32 %v2802, 7
      %v2804 = vsub.s32 %v2801, %v2803
      %v2805 = vrot.slane %v2791, %v2804
      %v2806 = vcombine.high %v2798, %v2798
      %v2807 = vcombine.high %v2805, %v2805
      %v2809 = vunpack.c.l.s4 1966171168
      %v2810 = vunpack.c.0.s8 %v2809
      %v2811 = vlaneseq
      %v2812 = vshrl.u32 %v2811, 7
      %v2813 = vsub.s32 %v2810, %v2812
      %v2814 = vrot.slane %v2798, %v2813
      %v2816 = vunpack.c.l.s4 1966171168
      %v2817 = vunpack.c.0.s8 %v2816
      %v2818 = vlaneseq
      %v2819 = vshrl.u32 %v2818, 7
      %v2820 = vsub.s32 %v2817, %v2819
      %v2821 = vrot.slane %v2805, %v2820
      %v2823 = vunpack.c.l.s4 1966171168
      %v2824 = vunpack.c.0.s8 %v2823
      %v2825 = vlaneseq
      %v2826 = vshrl.u32 %v2825, 7
      %v2827 = vsub.s32 %v2824, %v2826
      %v2828 = vrot.slane %v2806, %v2827
      %v2830 = vunpack.c.l.s4 1966171168
      %v2831 = vunpack.c.0.s8 %v2830
      %v2832 = vlaneseq
      %v2833 = vshrl.u32 %v2832, 7
      %v2834 = vsub.s32 %v2831, %v2833
      %v2835 = vrot.slane %v2807, %v2834
      %v2836 = vcombine.high %v2814, %v2814
      %v2837 = vcombine.high %v2821, %v2821
      %v2838 = vcombine.high %v2828, %v2828
      %v2839 = vcombine.high %v2835, %v2835
      %v2840 = vcombine.high %v768, %v768
      %v2842 = vunpack.c.l.s4 1966171168
      %v2843 = vunpack.c.0.s8 %v2842
      %v2844 = vlaneseq
      %v2845 = vshrl.u32 %v2844, 7
      %v2846 = vsub.s32 %v2843, %v2845
      %v2847 = vrot.slane %v768, %v2846
      %v2849 = vunpack.c.l.s4 1966171168
      %v2850 = vunpack.c.0.s8 %v2849
      %v2851 = vlaneseq
      %v2852 = vshrl.u32 %v2851, 7
      %v2853 = vsub.s32 %v2850, %v2852
      %v2854 = vrot.slane %v2840, %v2853
      %v2855 = vcombine.high %v2847, %v2847
      %v2856 = vcombine.high %v2854, %v2854
      %v2858 = vunpack.c.l.s4 1966171168
      %v2859 = vunpack.c.0.s8 %v2858
      %v2860 = vlaneseq
      %v2861 = vshrl.u32 %v2860, 7
      %v2862 = vsub.s32 %v2859, %v2861
      %v2863 = vrot.slane %v2847, %v2862
      %v2865 = vunpack.c.l.s4 1966171168
      %v2866 = vunpack.c.0.s8 %v2865
      %v2867 = vlaneseq
      %v2868 = vshrl.u32 %v2867, 7
      %v2869 = vsub.s32 %v2866, %v2868
      %v2870 = vrot.slane %v2854, %v2869
      %v2872 = vunpack.c.l.s4 1966171168
      %v2873 = vunpack.c.0.s8 %v2872
      %v2874 = vlaneseq
      %v2875 = vshrl.u32 %v2874, 7
      %v2876 = vsub.s32 %v2873, %v2875
      %v2877 = vrot.slane %v2855, %v2876
      %v2879 = vunpack.c.l.s4 1966171168
      %v2880 = vunpack.c.0.s8 %v2879
      %v2881 = vlaneseq
      %v2882 = vshrl.u32 %v2881, 7
      %v2883 = vsub.s32 %v2880, %v2882
      %v2884 = vrot.slane %v2856, %v2883
      %v2885 = vcombine.high %v2863, %v2863
      %v2886 = vcombine.high %v2870, %v2870
      %v2887 = vcombine.high %v2877, %v2877
      %v2888 = vcombine.high %v2884, %v2884
      %v2961 = vcombine.high %v992, %v992
      %v2963 = vunpack.c.l.s4 1966171168
      %v2964 = vunpack.c.0.s8 %v2963
      %v2965 = vlaneseq
      %v2966 = vshrl.u32 %v2965, 7
      %v2967 = vsub.s32 %v2964, %v2966
      %v2968 = vrot.slane %v992, %v2967
      %v2970 = vunpack.c.l.s4 1966171168
      %v2971 = vunpack.c.0.s8 %v2970
      %v2972 = vlaneseq
      %v2973 = vshrl.u32 %v2972, 7
      %v2974 = vsub.s32 %v2971, %v2973
      %v2975 = vrot.slane %v2961, %v2974
      %v2976 = vcombine.high %v2968, %v2968
      %v2977 = vcombine.high %v2975, %v2975
      %v2979 = vunpack.c.l.s4 1966171168
      %v2980 = vunpack.c.0.s8 %v2979
      %v2981 = vlaneseq
      %v2982 = vshrl.u32 %v2981, 7
      %v2983 = vsub.s32 %v2980, %v2982
      %v2984 = vrot.slane %v2968, %v2983
      %v2986 = vunpack.c.l.s4 1966171168
      %v2987 = vunpack.c.0.s8 %v2986
      %v2988 = vlaneseq
      %v2989 = vshrl.u32 %v2988, 7
      %v2990 = vsub.s32 %v2987, %v2989
      %v2991 = vrot.slane %v2975, %v2990
      %v2993 = vunpack.c.l.s4 1966171168
      %v2994 = vunpack.c.0.s8 %v2993
      %v2995 = vlaneseq
      %v2996 = vshrl.u32 %v2995, 7
      %v2997 = vsub.s32 %v2994, %v2996
      %v2998 = vrot.slane %v2976, %v2997
      %v3000 = vunpack.c.l.s4 1966171168
      %v3001 = vunpack.c.0.s8 %v3000
      %v3002 = vlaneseq
      %v3003 = vshrl.u32 %v3002, 7
      %v3004 = vsub.s32 %v3001, %v3003
      %v3005 = vrot.slane %v2977, %v3004
      %v3006 = vcombine.high %v2984, %v2984
      %v3007 = vcombine.high %v2991, %v2991
      %v3008 = vcombine.high %v2998, %v2998
      %v3009 = vcombine.high %v3005, %v3005
      %v3010 = vcombine.high %v997, %v997
      %v3012 = vunpack.c.l.s4 1966171168
      %v3013 = vunpack.c.0.s8 %v3012
      %v3014 = vlaneseq
      %v3015 = vshrl.u32 %v3014, 7
      %v3016 = vsub.s32 %v3013, %v3015
      %v3017 = vrot.slane %v997, %v3016
      %v3019 = vunpack.c.l.s4 1966171168
      %v3020 = vunpack.c.0.s8 %v3019
      %v3021 = vlaneseq
      %v3022 = vshrl.u32 %v3021, 7
      %v3023 = vsub.s32 %v3020, %v3022
      %v3024 = vrot.slane %v3010, %v3023
      %v3025 = vcombine.high %v3017, %v3017
      %v3026 = vcombine.high %v3024, %v3024
      %v3028 = vunpack.c.l.s4 1966171168
      %v3029 = vunpack.c.0.s8 %v3028
      %v3030 = vlaneseq
      %v3031 = vshrl.u32 %v3030, 7
      %v3032 = vsub.s32 %v3029, %v3031
      %v3033 = vrot.slane %v3017, %v3032
      %v3035 = vunpack.c.l.s4 1966171168
      %v3036 = vunpack.c.0.s8 %v3035
      %v3037 = vlaneseq
      %v3038 = vshrl.u32 %v3037, 7
      %v3039 = vsub.s32 %v3036, %v3038
      %v3040 = vrot.slane %v3024, %v3039
      %v3042 = vunpack.c.l.s4 1966171168
      %v3043 = vunpack.c.0.s8 %v3042
      %v3044 = vlaneseq
      %v3045 = vshrl.u32 %v3044, 7
      %v3046 = vsub.s32 %v3043, %v3045
      %v3047 = vrot.slane %v3025, %v3046
      %v3049 = vunpack.c.l.s4 1966171168
      %v3050 = vunpack.c.0.s8 %v3049
      %v3051 = vlaneseq
      %v3052 = vshrl.u32 %v3051, 7
      %v3053 = vsub.s32 %v3050, %v3052
      %v3054 = vrot.slane %v3026, %v3053
      %v3055 = vcombine.high %v3033, %v3033
      %v3056 = vcombine.high %v3040, %v3040
      %v3057 = vcombine.high %v3047, %v3047
      %v3058 = vcombine.high %v3054, %v3054
      %v3059 = vcombine.high %v1002, %v1002
      %v3061 = vunpack.c.l.s4 1966171168
      %v3062 = vunpack.c.0.s8 %v3061
      %v3063 = vlaneseq
      %v3064 = vshrl.u32 %v3063, 7
      %v3065 = vsub.s32 %v3062, %v3064
      %v3066 = vrot.slane %v1002, %v3065
      %v3068 = vunpack.c.l.s4 1966171168
      %v3069 = vunpack.c.0.s8 %v3068
      %v3070 = vlaneseq
      %v3071 = vshrl.u32 %v3070, 7
      %v3072 = vsub.s32 %v3069, %v3071
      %v3073 = vrot.slane %v3059, %v3072
      %v3074 = vcombine.high %v3066, %v3066
      %v3075 = vcombine.high %v3073, %v3073
      %v3077 = vunpack.c.l.s4 1966171168
      %v3078 = vunpack.c.0.s8 %v3077
      %v3079 = vlaneseq
      %v3080 = vshrl.u32 %v3079, 7
      %v3081 = vsub.s32 %v3078, %v3080
      %v3082 = vrot.slane %v3066, %v3081
      %v3084 = vunpack.c.l.s4 1966171168
      %v3085 = vunpack.c.0.s8 %v3084
      %v3086 = vlaneseq
      %v3087 = vshrl.u32 %v3086, 7
      %v3088 = vsub.s32 %v3085, %v3087
      %v3089 = vrot.slane %v3073, %v3088
      %v3091 = vunpack.c.l.s4 1966171168
      %v3092 = vunpack.c.0.s8 %v3091
      %v3093 = vlaneseq
      %v3094 = vshrl.u32 %v3093, 7
      %v3095 = vsub.s32 %v3092, %v3094
      %v3096 = vrot.slane %v3074, %v3095
      %v3098 = vunpack.c.l.s4 1966171168
      %v3099 = vunpack.c.0.s8 %v3098
      %v3100 = vlaneseq
      %v3101 = vshrl.u32 %v3100, 7
      %v3102 = vsub.s32 %v3099, %v3101
      %v3103 = vrot.slane %v3075, %v3102
      %v3104 = vcombine.high %v3082, %v3082
      %v3105 = vcombine.high %v3089, %v3089
      %v3106 = vcombine.high %v3096, %v3096
      %v3107 = vcombine.high %v3103, %v3103
      %v3108 = vcombine.high %v1007, %v1007
      %v3110 = vunpack.c.l.s4 1966171168
      %v3111 = vunpack.c.0.s8 %v3110
      %v3112 = vlaneseq
      %v3113 = vshrl.u32 %v3112, 7
      %v3114 = vsub.s32 %v3111, %v3113
      %v3115 = vrot.slane %v1007, %v3114
      %v3117 = vunpack.c.l.s4 1966171168
      %v3118 = vunpack.c.0.s8 %v3117
      %v3119 = vlaneseq
      %v3120 = vshrl.u32 %v3119, 7
      %v3121 = vsub.s32 %v3118, %v3120
      %v3122 = vrot.slane %v3108, %v3121
      %v3123 = vcombine.high %v3115, %v3115
      %v3124 = vcombine.high %v3122, %v3122
      %v3126 = vunpack.c.l.s4 1966171168
      %v3127 = vunpack.c.0.s8 %v3126
      %v3128 = vlaneseq
      %v3129 = vshrl.u32 %v3128, 7
      %v3130 = vsub.s32 %v3127, %v3129
      %v3131 = vrot.slane %v3115, %v3130
      %v3133 = vunpack.c.l.s4 1966171168
      %v3134 = vunpack.c.0.s8 %v3133
      %v3135 = vlaneseq
      %v3136 = vshrl.u32 %v3135, 7
      %v3137 = vsub.s32 %v3134, %v3136
      %v3138 = vrot.slane %v3122, %v3137
      %v3140 = vunpack.c.l.s4 1966171168
      %v3141 = vunpack.c.0.s8 %v3140
      %v3142 = vlaneseq
      %v3143 = vshrl.u32 %v3142, 7
      %v3144 = vsub.s32 %v3141, %v3143
      %v3145 = vrot.slane %v3123, %v3144
      %v3147 = vunpack.c.l.s4 1966171168
      %v3148 = vunpack.c.0.s8 %v3147
      %v3149 = vlaneseq
      %v3150 = vshrl.u32 %v3149, 7
      %v3151 = vsub.s32 %v3148, %v3150
      %v3152 = vrot.slane %v3124, %v3151
      %v3153 = vcombine.high %v3131, %v3131
      %v3154 = vcombine.high %v3138, %v3138
      %v3155 = vcombine.high %v3145, %v3145
      %v3156 = vcombine.high %v3152, %v3152
      %v3157 = vcombine.high %v1012, %v1012
      %v3159 = vunpack.c.l.s4 1966171168
      %v3160 = vunpack.c.0.s8 %v3159
      %v3161 = vlaneseq
      %v3162 = vshrl.u32 %v3161, 7
      %v3163 = vsub.s32 %v3160, %v3162
      %v3164 = vrot.slane %v1012, %v3163
      %v3166 = vunpack.c.l.s4 1966171168
      %v3167 = vunpack.c.0.s8 %v3166
      %v3168 = vlaneseq
      %v3169 = vshrl.u32 %v3168, 7
      %v3170 = vsub.s32 %v3167, %v3169
      %v3171 = vrot.slane %v3157, %v3170
      %v3172 = vcombine.high %v3164, %v3164
      %v3173 = vcombine.high %v3171, %v3171
      %v3175 = vunpack.c.l.s4 1966171168
      %v3176 = vunpack.c.0.s8 %v3175
      %v3177 = vlaneseq
      %v3178 = vshrl.u32 %v3177, 7
      %v3179 = vsub.s32 %v3176, %v3178
      %v3180 = vrot.slane %v3164, %v3179
      %v3182 = vunpack.c.l.s4 1966171168
      %v3183 = vunpack.c.0.s8 %v3182
      %v3184 = vlaneseq
      %v3185 = vshrl.u32 %v3184, 7
      %v3186 = vsub.s32 %v3183, %v3185
      %v3187 = vrot.slane %v3171, %v3186
      %v3189 = vunpack.c.l.s4 1966171168
      %v3190 = vunpack.c.0.s8 %v3189
      %v3191 = vlaneseq
      %v3192 = vshrl.u32 %v3191, 7
      %v3193 = vsub.s32 %v3190, %v3192
      %v3194 = vrot.slane %v3172, %v3193
      %v3196 = vunpack.c.l.s4 1966171168
      %v3197 = vunpack.c.0.s8 %v3196
      %v3198 = vlaneseq
      %v3199 = vshrl.u32 %v3198, 7
      %v3200 = vsub.s32 %v3197, %v3199
      %v3201 = vrot.slane %v3173, %v3200
      %v3202 = vcombine.high %v3180, %v3180
      %v3203 = vcombine.high %v3187, %v3187
      %v3204 = vcombine.high %v3194, %v3194
      %v3205 = vcombine.high %v3201, %v3201
      %v3206 = vcombine.high %v1017, %v1017
      %v3208 = vunpack.c.l.s4 1966171168
      %v3209 = vunpack.c.0.s8 %v3208
      %v3210 = vlaneseq
      %v3211 = vshrl.u32 %v3210, 7
      %v3212 = vsub.s32 %v3209, %v3211
      %v3213 = vrot.slane %v1017, %v3212
      %v3215 = vunpack.c.l.s4 1966171168
      %v3216 = vunpack.c.0.s8 %v3215
      %v3217 = vlaneseq
      %v3218 = vshrl.u32 %v3217, 7
      %v3219 = vsub.s32 %v3216, %v3218
      %v3220 = vrot.slane %v3206, %v3219
      %v3221 = vcombine.high %v3213, %v3213
      %v3222 = vcombine.high %v3220, %v3220
      %v3224 = vunpack.c.l.s4 1966171168
      %v3225 = vunpack.c.0.s8 %v3224
      %v3226 = vlaneseq
      %v3227 = vshrl.u32 %v3226, 7
      %v3228 = vsub.s32 %v3225, %v3227
      %v3229 = vrot.slane %v3213, %v3228
      %v3231 = vunpack.c.l.s4 1966171168
      %v3232 = vunpack.c.0.s8 %v3231
      %v3233 = vlaneseq
      %v3234 = vshrl.u32 %v3233, 7
      %v3235 = vsub.s32 %v3232, %v3234
      %v3236 = vrot.slane %v3220, %v3235
      %v3238 = vunpack.c.l.s4 1966171168
      %v3239 = vunpack.c.0.s8 %v3238
      %v3240 = vlaneseq
      %v3241 = vshrl.u32 %v3240, 7
      %v3242 = vsub.s32 %v3239, %v3241
      %v3243 = vrot.slane %v3221, %v3242
      %v3245 = vunpack.c.l.s4 1966171168
      %v3246 = vunpack.c.0.s8 %v3245
      %v3247 = vlaneseq
      %v3248 = vshrl.u32 %v3247, 7
      %v3249 = vsub.s32 %v3246, %v3248
      %v3250 = vrot.slane %v3222, %v3249
      %v3251 = vcombine.high %v3229, %v3229
      %v3252 = vcombine.high %v3236, %v3236
      %v3253 = vcombine.high %v3243, %v3243
      %v3254 = vcombine.high %v3250, %v3250
      %v3255 = vcombine.high %v1022, %v1022
      %v3257 = vunpack.c.l.s4 1966171168
      %v3258 = vunpack.c.0.s8 %v3257
      %v3259 = vlaneseq
      %v3260 = vshrl.u32 %v3259, 7
      %v3261 = vsub.s32 %v3258, %v3260
      %v3262 = vrot.slane %v1022, %v3261
      %v3264 = vunpack.c.l.s4 1966171168
      %v3265 = vunpack.c.0.s8 %v3264
      %v3266 = vlaneseq
      %v3267 = vshrl.u32 %v3266, 7
      %v3268 = vsub.s32 %v3265, %v3267
      %v3269 = vrot.slane %v3255, %v3268
      %v3270 = vcombine.high %v3262, %v3262
      %v3271 = vcombine.high %v3269, %v3269
      %v3273 = vunpack.c.l.s4 1966171168
      %v3274 = vunpack.c.0.s8 %v3273
      %v3275 = vlaneseq
      %v3276 = vshrl.u32 %v3275, 7
      %v3277 = vsub.s32 %v3274, %v3276
      %v3278 = vrot.slane %v3262, %v3277
      %v3280 = vunpack.c.l.s4 1966171168
      %v3281 = vunpack.c.0.s8 %v3280
      %v3282 = vlaneseq
      %v3283 = vshrl.u32 %v3282, 7
      %v3284 = vsub.s32 %v3281, %v3283
      %v3285 = vrot.slane %v3269, %v3284
      %v3287 = vunpack.c.l.s4 1966171168
      %v3288 = vunpack.c.0.s8 %v3287
      %v3289 = vlaneseq
      %v3290 = vshrl.u32 %v3289, 7
      %v3291 = vsub.s32 %v3288, %v3290
      %v3292 = vrot.slane %v3270, %v3291
      %v3294 = vunpack.c.l.s4 1966171168
      %v3295 = vunpack.c.0.s8 %v3294
      %v3296 = vlaneseq
      %v3297 = vshrl.u32 %v3296, 7
      %v3298 = vsub.s32 %v3295, %v3297
      %v3299 = vrot.slane %v3271, %v3298
      %v3300 = vcombine.high %v3278, %v3278
      %v3301 = vcombine.high %v3285, %v3285
      %v3302 = vcombine.high %v3292, %v3292
      %v3303 = vcombine.high %v3299, %v3299
      %v3304 = vcombine.high %v1027, %v1027
      %v3306 = vunpack.c.l.s4 1966171168
      %v3307 = vunpack.c.0.s8 %v3306
      %v3308 = vlaneseq
      %v3309 = vshrl.u32 %v3308, 7
      %v3310 = vsub.s32 %v3307, %v3309
      %v3311 = vrot.slane %v1027, %v3310
      %v3313 = vunpack.c.l.s4 1966171168
      %v3314 = vunpack.c.0.s8 %v3313
      %v3315 = vlaneseq
      %v3316 = vshrl.u32 %v3315, 7
      %v3317 = vsub.s32 %v3314, %v3316
      %v3318 = vrot.slane %v3304, %v3317
      %v3319 = vcombine.high %v3311, %v3311
      %v3320 = vcombine.high %v3318, %v3318
      %v3322 = vunpack.c.l.s4 1966171168
      %v3323 = vunpack.c.0.s8 %v3322
      %v3324 = vlaneseq
      %v3325 = vshrl.u32 %v3324, 7
      %v3326 = vsub.s32 %v3323, %v3325
      %v3327 = vrot.slane %v3311, %v3326
      %v3329 = vunpack.c.l.s4 1966171168
      %v3330 = vunpack.c.0.s8 %v3329
      %v3331 = vlaneseq
      %v3332 = vshrl.u32 %v3331, 7
      %v3333 = vsub.s32 %v3330, %v3332
      %v3334 = vrot.slane %v3318, %v3333
      %v3336 = vunpack.c.l.s4 1966171168
      %v3337 = vunpack.c.0.s8 %v3336
      %v3338 = vlaneseq
      %v3339 = vshrl.u32 %v3338, 7
      %v3340 = vsub.s32 %v3337, %v3339
      %v3341 = vrot.slane %v3319, %v3340
      %v3343 = vunpack.c.l.s4 1966171168
      %v3344 = vunpack.c.0.s8 %v3343
      %v3345 = vlaneseq
      %v3346 = vshrl.u32 %v3345, 7
      %v3347 = vsub.s32 %v3344, %v3346
      %v3348 = vrot.slane %v3320, %v3347
      %v3349 = vcombine.high %v3327, %v3327
      %v3350 = vcombine.high %v3334, %v3334
      %v3351 = vcombine.high %v3341, %v3341
      %v3352 = vcombine.high %v3348, %v3348
      %v3353 = vlaneseq
      %v3354 = vshrl.u32 %v3353, 7
      %v3355 = vsub.s32 0, %v3354
      %v3356 = vrot.slane %v2984, %v3355
      %v3357 = vlaneseq
      %v3358 = vshrl.u32 %v3357, 7
      %v3359 = vsub.s32 0, %v3358
      %v3360 = vrot.slane %v2998, %v3359
      %v3361 = vlaneseq
      %v3362 = vshrl.u32 %v3361, 7
      %v3363 = vsub.s32 0, %v3362
      %v3364 = vrot.slane %v3006, %v3363
      %v3365 = vlaneseq
      %v3366 = vshrl.u32 %v3365, 7
      %v3367 = vsub.s32 0, %v3366
      %v3368 = vrot.slane %v3008, %v3367
      %v3369 = vlaneseq
      %v3370 = vshrl.u32 %v3369, 7
      %v3371 = vsub.s32 0, %v3370
      %v3372 = vrot.slane %v2991, %v3371
      %v3373 = vlaneseq
      %v3374 = vshrl.u32 %v3373, 7
      %v3375 = vsub.s32 0, %v3374
      %v3376 = vrot.slane %v3005, %v3375
      %v3377 = vlaneseq
      %v3378 = vshrl.u32 %v3377, 7
      %v3379 = vsub.s32 0, %v3378
      %v3380 = vrot.slane %v3007, %v3379
      %v3381 = vlaneseq
      %v3382 = vshrl.u32 %v3381, 7
      %v3383 = vsub.s32 0, %v3382
      %v3384 = vrot.slane %v3009, %v3383
      %v3385 = vlaneseq
      %v3386 = vshrl.u32 %v3385, 7
      %v3387 = vsub.s32 0, %v3386
      %v3388 = vrot.slane %v3033, %v3387
      %v3389 = vlaneseq
      %v3390 = vshrl.u32 %v3389, 7
      %v3391 = vsub.s32 0, %v3390
      %v3392 = vrot.slane %v3047, %v3391
      %v3393 = vlaneseq
      %v3394 = vshrl.u32 %v3393, 7
      %v3395 = vsub.s32 0, %v3394
      %v3396 = vrot.slane %v3055, %v3395
      %v3397 = vlaneseq
      %v3398 = vshrl.u32 %v3397, 7
      %v3399 = vsub.s32 0, %v3398
      %v3400 = vrot.slane %v3057, %v3399
      %v3401 = vlaneseq
      %v3402 = vshrl.u32 %v3401, 7
      %v3403 = vsub.s32 0, %v3402
      %v3404 = vrot.slane %v3040, %v3403
      %v3405 = vlaneseq
      %v3406 = vshrl.u32 %v3405, 7
      %v3407 = vsub.s32 0, %v3406
      %v3408 = vrot.slane %v3054, %v3407
      %v3409 = vlaneseq
      %v3410 = vshrl.u32 %v3409, 7
      %v3411 = vsub.s32 0, %v3410
      %v3412 = vrot.slane %v3056, %v3411
      %v3413 = vlaneseq
      %v3414 = vshrl.u32 %v3413, 7
      %v3415 = vsub.s32 0, %v3414
      %v3416 = vrot.slane %v3058, %v3415
      %v3417 = vlaneseq
      %v3418 = vshrl.u32 %v3417, 7
      %v3419 = vsub.s32 0, %v3418
      %v3420 = vrot.slane %v3082, %v3419
      %v3421 = vlaneseq
      %v3422 = vshrl.u32 %v3421, 7
      %v3423 = vsub.s32 0, %v3422
      %v3424 = vrot.slane %v3096, %v3423
      %v3425 = vlaneseq
      %v3426 = vshrl.u32 %v3425, 7
      %v3427 = vsub.s32 0, %v3426
      %v3428 = vrot.slane %v3104, %v3427
      %v3429 = vlaneseq
      %v3430 = vshrl.u32 %v3429, 7
      %v3431 = vsub.s32 0, %v3430
      %v3432 = vrot.slane %v3106, %v3431
      %v3433 = vlaneseq
      %v3434 = vshrl.u32 %v3433, 7
      %v3435 = vsub.s32 0, %v3434
      %v3436 = vrot.slane %v3089, %v3435
      %v3437 = vlaneseq
      %v3438 = vshrl.u32 %v3437, 7
      %v3439 = vsub.s32 0, %v3438
      %v3440 = vrot.slane %v3103, %v3439
      %v3441 = vlaneseq
      %v3442 = vshrl.u32 %v3441, 7
      %v3443 = vsub.s32 0, %v3442
      %v3444 = vrot.slane %v3105, %v3443
      %v3445 = vlaneseq
      %v3446 = vshrl.u32 %v3445, 7
      %v3447 = vsub.s32 0, %v3446
      %v3448 = vrot.slane %v3107, %v3447
      %v3449 = vlaneseq
      %v3450 = vshrl.u32 %v3449, 7
      %v3451 = vsub.s32 0, %v3450
      %v3452 = vrot.slane %v3131, %v3451
      %v3453 = vlaneseq
      %v3454 = vshrl.u32 %v3453, 7
      %v3455 = vsub.s32 0, %v3454
      %v3456 = vrot.slane %v3145, %v3455
      %v3457 = vlaneseq
      %v3458 = vshrl.u32 %v3457, 7
      %v3459 = vsub.s32 0, %v3458
      %v3460 = vrot.slane %v3153, %v3459
      %v3461 = vlaneseq
      %v3462 = vshrl.u32 %v3461, 7
      %v3463 = vsub.s32 0, %v3462
      %v3464 = vrot.slane %v3155, %v3463
      %v3465 = vlaneseq
      %v3466 = vshrl.u32 %v3465, 7
      %v3467 = vsub.s32 0, %v3466
      %v3468 = vrot.slane %v3138, %v3467
      %v3469 = vlaneseq
      %v3470 = vshrl.u32 %v3469, 7
      %v3471 = vsub.s32 0, %v3470
      %v3472 = vrot.slane %v3152, %v3471
      %v3473 = vlaneseq
      %v3474 = vshrl.u32 %v3473, 7
      %v3475 = vsub.s32 0, %v3474
      %v3476 = vrot.slane %v3154, %v3475
      %v3477 = vlaneseq
      %v3478 = vshrl.u32 %v3477, 7
      %v3479 = vsub.s32 0, %v3478
      %v3480 = vrot.slane %v3156, %v3479
      %v3481 = vlaneseq
      %v3482 = vshrl.u32 %v3481, 7
      %v3483 = vsub.s32 0, %v3482
      %v3484 = vrot.slane %v3180, %v3483
      %v3485 = vlaneseq
      %v3486 = vshrl.u32 %v3485, 7
      %v3487 = vsub.s32 0, %v3486
      %v3488 = vrot.slane %v3194, %v3487
      %v3489 = vlaneseq
      %v3490 = vshrl.u32 %v3489, 7
      %v3491 = vsub.s32 0, %v3490
      %v3492 = vrot.slane %v3202, %v3491
      %v3493 = vlaneseq
      %v3494 = vshrl.u32 %v3493, 7
      %v3495 = vsub.s32 0, %v3494
      %v3496 = vrot.slane %v3204, %v3495
      %v3497 = vlaneseq
      %v3498 = vshrl.u32 %v3497, 7
      %v3499 = vsub.s32 0, %v3498
      %v3500 = vrot.slane %v3187, %v3499
      %v3501 = vlaneseq
      %v3502 = vshrl.u32 %v3501, 7
      %v3503 = vsub.s32 0, %v3502
      %v3504 = vrot.slane %v3201, %v3503
      %v3505 = vlaneseq
      %v3506 = vshrl.u32 %v3505, 7
      %v3507 = vsub.s32 0, %v3506
      %v3508 = vrot.slane %v3203, %v3507
      %v3509 = vlaneseq
      %v3510 = vshrl.u32 %v3509, 7
      %v3511 = vsub.s32 0, %v3510
      %v3512 = vrot.slane %v3205, %v3511
      %v3513 = vlaneseq
      %v3514 = vshrl.u32 %v3513, 7
      %v3515 = vsub.s32 0, %v3514
      %v3516 = vrot.slane %v3229, %v3515
      %v3517 = vlaneseq
      %v3518 = vshrl.u32 %v3517, 7
      %v3519 = vsub.s32 0, %v3518
      %v3520 = vrot.slane %v3243, %v3519
      %v3521 = vlaneseq
      %v3522 = vshrl.u32 %v3521, 7
      %v3523 = vsub.s32 0, %v3522
      %v3524 = vrot.slane %v3251, %v3523
      %v3525 = vlaneseq
      %v3526 = vshrl.u32 %v3525, 7
      %v3527 = vsub.s32 0, %v3526
      %v3528 = vrot.slane %v3253, %v3527
      %v3529 = vlaneseq
      %v3530 = vshrl.u32 %v3529, 7
      %v3531 = vsub.s32 0, %v3530
      %v3532 = vrot.slane %v3236, %v3531
      %v3533 = vlaneseq
      %v3534 = vshrl.u32 %v3533, 7
      %v3535 = vsub.s32 0, %v3534
      %v3536 = vrot.slane %v3250, %v3535
      %v3537 = vlaneseq
      %v3538 = vshrl.u32 %v3537, 7
      %v3539 = vsub.s32 0, %v3538
      %v3540 = vrot.slane %v3252, %v3539
      %v3541 = vlaneseq
      %v3542 = vshrl.u32 %v3541, 7
      %v3543 = vsub.s32 0, %v3542
      %v3544 = vrot.slane %v3254, %v3543
      %v3545 = vlaneseq
      %v3546 = vshrl.u32 %v3545, 7
      %v3547 = vsub.s32 0, %v3546
      %v3548 = vrot.slane %v3278, %v3547
      %v3549 = vlaneseq
      %v3550 = vshrl.u32 %v3549, 7
      %v3551 = vsub.s32 0, %v3550
      %v3552 = vrot.slane %v3292, %v3551
      %v3553 = vlaneseq
      %v3554 = vshrl.u32 %v3553, 7
      %v3555 = vsub.s32 0, %v3554
      %v3556 = vrot.slane %v3300, %v3555
      %v3557 = vlaneseq
      %v3558 = vshrl.u32 %v3557, 7
      %v3559 = vsub.s32 0, %v3558
      %v3560 = vrot.slane %v3302, %v3559
      %v3561 = vlaneseq
      %v3562 = vshrl.u32 %v3561, 7
      %v3563 = vsub.s32 0, %v3562
      %v3564 = vrot.slane %v3285, %v3563
      %v3565 = vlaneseq
      %v3566 = vshrl.u32 %v3565, 7
      %v3567 = vsub.s32 0, %v3566
      %v3568 = vrot.slane %v3299, %v3567
      %v3569 = vlaneseq
      %v3570 = vshrl.u32 %v3569, 7
      %v3571 = vsub.s32 0, %v3570
      %v3572 = vrot.slane %v3301, %v3571
      %v3573 = vlaneseq
      %v3574 = vshrl.u32 %v3573, 7
      %v3575 = vsub.s32 0, %v3574
      %v3576 = vrot.slane %v3303, %v3575
      %v3577 = vlaneseq
      %v3578 = vshrl.u32 %v3577, 7
      %v3579 = vsub.s32 0, %v3578
      %v3580 = vrot.slane %v3327, %v3579
      %v3581 = vlaneseq
      %v3582 = vshrl.u32 %v3581, 7
      %v3583 = vsub.s32 0, %v3582
      %v3584 = vrot.slane %v3341, %v3583
      %v3585 = vlaneseq
      %v3586 = vshrl.u32 %v3585, 7
      %v3587 = vsub.s32 0, %v3586
      %v3588 = vrot.slane %v3349, %v3587
      %v3589 = vlaneseq
      %v3590 = vshrl.u32 %v3589, 7
      %v3591 = vsub.s32 0, %v3590
      %v3592 = vrot.slane %v3351, %v3591
      %v3593 = vlaneseq
      %v3594 = vshrl.u32 %v3593, 7
      %v3595 = vsub.s32 0, %v3594
      %v3596 = vrot.slane %v3334, %v3595
      %v3597 = vlaneseq
      %v3598 = vshrl.u32 %v3597, 7
      %v3599 = vsub.s32 0, %v3598
      %v3600 = vrot.slane %v3348, %v3599
      %v3601 = vlaneseq
      %v3602 = vshrl.u32 %v3601, 7
      %v3603 = vsub.s32 0, %v3602
      %v3604 = vrot.slane %v3350, %v3603
      %v3605 = vlaneseq
      %v3606 = vshrl.u32 %v3605, 7
      %v3607 = vsub.s32 0, %v3606
      %v3608 = vrot.slane %v3352, %v3607
      %v3673 = vsel %vm1237, %v2520, %v3356
      %v3674 = vsel %vm1237, %v2534, %v3360
      %v3675 = vsel %vm1237, %v2542, %v3364
      %v3676 = vsel %vm1237, %v2544, %v3368
      %v3677 = vsel %vm1237, %v2527, %v3372
      %v3678 = vsel %vm1237, %v2541, %v3376
      %v3679 = vsel %vm1237, %v2543, %v3380
      %v3680 = vsel %vm1237, %v2545, %v3384
      %v3681 = vsel %vm1237, %v2569, %v3388
      %v3682 = vsel %vm1237, %v2583, %v3392
      %v3683 = vsel %vm1237, %v2591, %v3396
      %v3684 = vsel %vm1237, %v2593, %v3400
      %v3685 = vsel %vm1237, %v2576, %v3404
      %v3686 = vsel %vm1237, %v2590, %v3408
      %v3687 = vsel %vm1237, %v2592, %v3412
      %v3688 = vsel %vm1237, %v2594, %v3416
      %v3689 = vsel %vm1237, %v2618, %v3420
      %v3690 = vsel %vm1237, %v2632, %v3424
      %v3691 = vsel %vm1237, %v2640, %v3428
      %v3692 = vsel %vm1237, %v2642, %v3432
      %v3693 = vsel %vm1237, %v2625, %v3436
      %v3694 = vsel %vm1237, %v2639, %v3440
      %v3695 = vsel %vm1237, %v2641, %v3444
      %v3696 = vsel %vm1237, %v2643, %v3448
      %v3697 = vsel %vm1237, %v2667, %v3452
      %v3698 = vsel %vm1237, %v2681, %v3456
      %v3699 = vsel %vm1237, %v2689, %v3460
      %v3700 = vsel %vm1237, %v2691, %v3464
      %v3701 = vsel %vm1237, %v2674, %v3468
      %v3702 = vsel %vm1237, %v2688, %v3472
      %v3703 = vsel %vm1237, %v2690, %v3476
      %v3704 = vsel %vm1237, %v2692, %v3480
      %v3705 = vsel %vm1237, %v2716, %v3484
      %v3706 = vsel %vm1237, %v2730, %v3488
      %v3707 = vsel %vm1237, %v2738, %v3492
      %v3708 = vsel %vm1237, %v2740, %v3496
      %v3709 = vsel %vm1237, %v2723, %v3500
      %v3710 = vsel %vm1237, %v2737, %v3504
      %v3711 = vsel %vm1237, %v2739, %v3508
      %v3712 = vsel %vm1237, %v2741, %v3512
      %v3713 = vsel %vm1237, %v2765, %v3516
      %v3714 = vsel %vm1237, %v2779, %v3520
      %v3715 = vsel %vm1237, %v2787, %v3524
      %v3716 = vsel %vm1237, %v2789, %v3528
      %v3717 = vsel %vm1237, %v2772, %v3532
      %v3718 = vsel %vm1237, %v2786, %v3536
      %v3719 = vsel %vm1237, %v2788, %v3540
      %v3720 = vsel %vm1237, %v2790, %v3544
      %v3721 = vsel %vm1237, %v2814, %v3548
      %v3722 = vsel %vm1237, %v2828, %v3552
      %v3723 = vsel %vm1237, %v2836, %v3556
      %v3724 = vsel %vm1237, %v2838, %v3560
      %v3725 = vsel %vm1237, %v2821, %v3564
      %v3726 = vsel %vm1237, %v2835, %v3568
      %v3727 = vsel %vm1237, %v2837, %v3572
      %v3728 = vsel %vm1237, %v2839, %v3576
      %v3729 = vsel %vm1237, %v2863, %v3580
      %v3730 = vsel %vm1237, %v2877, %v3584
      %v3731 = vsel %vm1237, %v2885, %v3588
      %v3732 = vsel %vm1237, %v2887, %v3592
      %v3733 = vsel %vm1237, %v2870, %v3596
      %v3734 = vsel %vm1237, %v2884, %v3600
      %v3735 = vsel %vm1237, %v2886, %v3604
      %v3736 = vsel %vm1237, %v2888, %v3608
      %v3865 = vcombine.low %v2425, %v2426
      %v3866 = vcombine.low %v2427, %v2428
      %v3868 = vunpack.c.l.s4 1983009808
      %v3869 = vunpack.c.0.s8 %v3868
      %v3870 = vlaneseq
      %v3871 = vshrl.u32 %v3870, 7
      %v3872 = vsub.s32 %v3869, %v3871
      %v3873 = vrot.slane %v3865, %v3872
      %v3875 = vunpack.c.l.s4 1983009808
      %v3876 = vunpack.c.0.s8 %v3875
      %v3877 = vlaneseq
      %v3878 = vshrl.u32 %v3877, 7
      %v3879 = vsub.s32 %v3876, %v3878
      %v3880 = vrot.slane %v3866, %v3879
      %v3881 = vcombine.low %v3873, %v3880
      %v3882 = vcombine.low %v2429, %v2430
      %v3883 = vcombine.low %v2431, %v2432
      %v3885 = vunpack.c.l.s4 1983009808
      %v3886 = vunpack.c.0.s8 %v3885
      %v3887 = vlaneseq
      %v3888 = vshrl.u32 %v3887, 7
      %v3889 = vsub.s32 %v3886, %v3888
      %v3890 = vrot.slane %v3882, %v3889
      %v3892 = vunpack.c.l.s4 1983009808
      %v3893 = vunpack.c.0.s8 %v3892
      %v3894 = vlaneseq
      %v3895 = vshrl.u32 %v3894, 7
      %v3896 = vsub.s32 %v3893, %v3895
      %v3897 = vrot.slane %v3883, %v3896
      %v3898 = vcombine.low %v3890, %v3897
      %v3899 = vcombine.low %v3673, %v3674
      %v3900 = vcombine.low %v3675, %v3676
      %v3902 = vunpack.c.l.s4 1983009808
      %v3903 = vunpack.c.0.s8 %v3902
      %v3904 = vlaneseq
      %v3905 = vshrl.u32 %v3904, 7
      %v3906 = vsub.s32 %v3903, %v3905
      %v3907 = vrot.slane %v3899, %v3906
      %v3909 = vunpack.c.l.s4 1983009808
      %v3910 = vunpack.c.0.s8 %v3909
      %v3911 = vlaneseq
      %v3912 = vshrl.u32 %v3911, 7
      %v3913 = vsub.s32 %v3910, %v3912
      %v3914 = vrot.slane %v3900, %v3913
      %v3915 = vcombine.low %v3907, %v3914
      %v3916 = vcombine.low %v3677, %v3678
      %v3917 = vcombine.low %v3679, %v3680
      %v3919 = vunpack.c.l.s4 1983009808
      %v3920 = vunpack.c.0.s8 %v3919
      %v3921 = vlaneseq
      %v3922 = vshrl.u32 %v3921, 7
      %v3923 = vsub.s32 %v3920, %v3922
      %v3924 = vrot.slane %v3916, %v3923
      %v3926 = vunpack.c.l.s4 1983009808
      %v3927 = vunpack.c.0.s8 %v3926
      %v3928 = vlaneseq
      %v3929 = vshrl.u32 %v3928, 7
      %v3930 = vsub.s32 %v3927, %v3929
      %v3931 = vrot.slane %v3917, %v3930
      %v3932 = vcombine.low %v3924, %v3931
      %v3933 = vcombine.low %v2433, %v2434
      %v3934 = vcombine.low %v2435, %v2436
      %v3936 = vunpack.c.l.s4 1983009808
      %v3937 = vunpack.c.0.s8 %v3936
      %v3938 = vlaneseq
      %v3939 = vshrl.u32 %v3938, 7
      %v3940 = vsub.s32 %v3937, %v3939
      %v3941 = vrot.slane %v3933, %v3940
      %v3943 = vunpack.c.l.s4 1983009808
      %v3944 = vunpack.c.0.s8 %v3943
      %v3945 = vlaneseq
      %v3946 = vshrl.u32 %v3945, 7
      %v3947 = vsub.s32 %v3944, %v3946
      %v3948 = vrot.slane %v3934, %v3947
      %v3949 = vcombine.low %v3941, %v3948
      %v3950 = vcombine.low %v2437, %v2438
      %v3951 = vcombine.low %v2439, %v2440
      %v3953 = vunpack.c.l.s4 1983009808
      %v3954 = vunpack.c.0.s8 %v3953
      %v3955 = vlaneseq
      %v3956 = vshrl.u32 %v3955, 7
      %v3957 = vsub.s32 %v3954, %v3956
      %v3958 = vrot.slane %v3950, %v3957
      %v3960 = vunpack.c.l.s4 1983009808
      %v3961 = vunpack.c.0.s8 %v3960
      %v3962 = vlaneseq
      %v3963 = vshrl.u32 %v3962, 7
      %v3964 = vsub.s32 %v3961, %v3963
      %v3965 = vrot.slane %v3951, %v3964
      %v3966 = vcombine.low %v3958, %v3965
      %v3967 = vcombine.low %v3681, %v3682
      %v3968 = vcombine.low %v3683, %v3684
      %v3970 = vunpack.c.l.s4 1983009808
      %v3971 = vunpack.c.0.s8 %v3970
      %v3972 = vlaneseq
      %v3973 = vshrl.u32 %v3972, 7
      %v3974 = vsub.s32 %v3971, %v3973
      %v3975 = vrot.slane %v3967, %v3974
      %v3977 = vunpack.c.l.s4 1983009808
      %v3978 = vunpack.c.0.s8 %v3977
      %v3979 = vlaneseq
      %v3980 = vshrl.u32 %v3979, 7
      %v3981 = vsub.s32 %v3978, %v3980
      %v3982 = vrot.slane %v3968, %v3981
      %v3983 = vcombine.low %v3975, %v3982
      %v3984 = vcombine.low %v3685, %v3686
      %v3985 = vcombine.low %v3687, %v3688
      %v3987 = vunpack.c.l.s4 1983009808
      %v3988 = vunpack.c.0.s8 %v3987
      %v3989 = vlaneseq
      %v3990 = vshrl.u32 %v3989, 7
      %v3991 = vsub.s32 %v3988, %v3990
      %v3992 = vrot.slane %v3984, %v3991
      %v3994 = vunpack.c.l.s4 1983009808
      %v3995 = vunpack.c.0.s8 %v3994
      %v3996 = vlaneseq
      %v3997 = vshrl.u32 %v3996, 7
      %v3998 = vsub.s32 %v3995, %v3997
      %v3999 = vrot.slane %v3985, %v3998
      %v4000 = vcombine.low %v3992, %v3999
      %v4001 = vcombine.low %v2441, %v2442
      %v4002 = vcombine.low %v2443, %v2444
      %v4004 = vunpack.c.l.s4 1983009808
      %v4005 = vunpack.c.0.s8 %v4004
      %v4006 = vlaneseq
      %v4007 = vshrl.u32 %v4006, 7
      %v4008 = vsub.s32 %v4005, %v4007
      %v4009 = vrot.slane %v4001, %v4008
      %v4011 = vunpack.c.l.s4 1983009808
      %v4012 = vunpack.c.0.s8 %v4011
      %v4013 = vlaneseq
      %v4014 = vshrl.u32 %v4013, 7
      %v4015 = vsub.s32 %v4012, %v4014
      %v4016 = vrot.slane %v4002, %v4015
      %v4017 = vcombine.low %v4009, %v4016
      %v4018 = vcombine.low %v2445, %v2446
      %v4019 = vcombine.low %v2447, %v2448
      %v4021 = vunpack.c.l.s4 1983009808
      %v4022 = vunpack.c.0.s8 %v4021
      %v4023 = vlaneseq
      %v4024 = vshrl.u32 %v4023, 7
      %v4025 = vsub.s32 %v4022, %v4024
      %v4026 = vrot.slane %v4018, %v4025
      %v4028 = vunpack.c.l.s4 1983009808
      %v4029 = vunpack.c.0.s8 %v4028
      %v4030 = vlaneseq
      %v4031 = vshrl.u32 %v4030, 7
      %v4032 = vsub.s32 %v4029, %v4031
      %v4033 = vrot.slane %v4019, %v4032
      %v4034 = vcombine.low %v4026, %v4033
      %v4035 = vcombine.low %v3689, %v3690
      %v4036 = vcombine.low %v3691, %v3692
      %v4038 = vunpack.c.l.s4 1983009808
      %v4039 = vunpack.c.0.s8 %v4038
      %v4040 = vlaneseq
      %v4041 = vshrl.u32 %v4040, 7
      %v4042 = vsub.s32 %v4039, %v4041
      %v4043 = vrot.slane %v4035, %v4042
      %v4045 = vunpack.c.l.s4 1983009808
      %v4046 = vunpack.c.0.s8 %v4045
      %v4047 = vlaneseq
      %v4048 = vshrl.u32 %v4047, 7
      %v4049 = vsub.s32 %v4046, %v4048
      %v4050 = vrot.slane %v4036, %v4049
      %v4051 = vcombine.low %v4043, %v4050
      %v4052 = vcombine.low %v3693, %v3694
      %v4053 = vcombine.low %v3695, %v3696
      %v4055 = vunpack.c.l.s4 1983009808
      %v4056 = vunpack.c.0.s8 %v4055
      %v4057 = vlaneseq
      %v4058 = vshrl.u32 %v4057, 7
      %v4059 = vsub.s32 %v4056, %v4058
      %v4060 = vrot.slane %v4052, %v4059
      %v4062 = vunpack.c.l.s4 1983009808
      %v4063 = vunpack.c.0.s8 %v4062
      %v4064 = vlaneseq
      %v4065 = vshrl.u32 %v4064, 7
      %v4066 = vsub.s32 %v4063, %v4065
      %v4067 = vrot.slane %v4053, %v4066
      %v4068 = vcombine.low %v4060, %v4067
      %v4069 = vcombine.low %v2449, %v2450
      %v4070 = vcombine.low %v2451, %v2452
      %v4072 = vunpack.c.l.s4 1983009808
      %v4073 = vunpack.c.0.s8 %v4072
      %v4074 = vlaneseq
      %v4075 = vshrl.u32 %v4074, 7
      %v4076 = vsub.s32 %v4073, %v4075
      %v4077 = vrot.slane %v4069, %v4076
      %v4079 = vunpack.c.l.s4 1983009808
      %v4080 = vunpack.c.0.s8 %v4079
      %v4081 = vlaneseq
      %v4082 = vshrl.u32 %v4081, 7
      %v4083 = vsub.s32 %v4080, %v4082
      %v4084 = vrot.slane %v4070, %v4083
      %v4085 = vcombine.low %v4077, %v4084
      %v4086 = vcombine.low %v2453, %v2454
      %v4087 = vcombine.low %v2455, %v2456
      %v4089 = vunpack.c.l.s4 1983009808
      %v4090 = vunpack.c.0.s8 %v4089
      %v4091 = vlaneseq
      %v4092 = vshrl.u32 %v4091, 7
      %v4093 = vsub.s32 %v4090, %v4092
      %v4094 = vrot.slane %v4086, %v4093
      %v4096 = vunpack.c.l.s4 1983009808
      %v4097 = vunpack.c.0.s8 %v4096
      %v4098 = vlaneseq
      %v4099 = vshrl.u32 %v4098, 7
      %v4100 = vsub.s32 %v4097, %v4099
      %v4101 = vrot.slane %v4087, %v4100
      %v4102 = vcombine.low %v4094, %v4101
      %v4103 = vcombine.low %v3697, %v3698
      %v4104 = vcombine.low %v3699, %v3700
      %v4106 = vunpack.c.l.s4 1983009808
      %v4107 = vunpack.c.0.s8 %v4106
      %v4108 = vlaneseq
      %v4109 = vshrl.u32 %v4108, 7
      %v4110 = vsub.s32 %v4107, %v4109
      %v4111 = vrot.slane %v4103, %v4110
      %v4113 = vunpack.c.l.s4 1983009808
      %v4114 = vunpack.c.0.s8 %v4113
      %v4115 = vlaneseq
      %v4116 = vshrl.u32 %v4115, 7
      %v4117 = vsub.s32 %v4114, %v4116
      %v4118 = vrot.slane %v4104, %v4117
      %v4119 = vcombine.low %v4111, %v4118
      %v4120 = vcombine.low %v3701, %v3702
      %v4121 = vcombine.low %v3703, %v3704
      %v4123 = vunpack.c.l.s4 1983009808
      %v4124 = vunpack.c.0.s8 %v4123
      %v4125 = vlaneseq
      %v4126 = vshrl.u32 %v4125, 7
      %v4127 = vsub.s32 %v4124, %v4126
      %v4128 = vrot.slane %v4120, %v4127
      %v4130 = vunpack.c.l.s4 1983009808
      %v4131 = vunpack.c.0.s8 %v4130
      %v4132 = vlaneseq
      %v4133 = vshrl.u32 %v4132, 7
      %v4134 = vsub.s32 %v4131, %v4133
      %v4135 = vrot.slane %v4121, %v4134
      %v4136 = vcombine.low %v4128, %v4135
      %v4137 = vcombine.low %v2457, %v2458
      %v4138 = vcombine.low %v2459, %v2460
      %v4140 = vunpack.c.l.s4 1983009808
      %v4141 = vunpack.c.0.s8 %v4140
      %v4142 = vlaneseq
      %v4143 = vshrl.u32 %v4142, 7
      %v4144 = vsub.s32 %v4141, %v4143
      %v4145 = vrot.slane %v4137, %v4144
      %v4147 = vunpack.c.l.s4 1983009808
      %v4148 = vunpack.c.0.s8 %v4147
      %v4149 = vlaneseq
      %v4150 = vshrl.u32 %v4149, 7
      %v4151 = vsub.s32 %v4148, %v4150
      %v4152 = vrot.slane %v4138, %v4151
      %v4153 = vcombine.low %v4145, %v4152
      %v4154 = vcombine.low %v2461, %v2462
      %v4155 = vcombine.low %v2463, %v2464
      %v4157 = vunpack.c.l.s4 1983009808
      %v4158 = vunpack.c.0.s8 %v4157
      %v4159 = vlaneseq
      %v4160 = vshrl.u32 %v4159, 7
      %v4161 = vsub.s32 %v4158, %v4160
      %v4162 = vrot.slane %v4154, %v4161
      %v4164 = vunpack.c.l.s4 1983009808
      %v4165 = vunpack.c.0.s8 %v4164
      %v4166 = vlaneseq
      %v4167 = vshrl.u32 %v4166, 7
      %v4168 = vsub.s32 %v4165, %v4167
      %v4169 = vrot.slane %v4155, %v4168
      %v4170 = vcombine.low %v4162, %v4169
      %v4171 = vcombine.low %v3705, %v3706
      %v4172 = vcombine.low %v3707, %v3708
      %v4174 = vunpack.c.l.s4 1983009808
      %v4175 = vunpack.c.0.s8 %v4174
      %v4176 = vlaneseq
      %v4177 = vshrl.u32 %v4176, 7
      %v4178 = vsub.s32 %v4175, %v4177
      %v4179 = vrot.slane %v4171, %v4178
      %v4181 = vunpack.c.l.s4 1983009808
      %v4182 = vunpack.c.0.s8 %v4181
      %v4183 = vlaneseq
      %v4184 = vshrl.u32 %v4183, 7
      %v4185 = vsub.s32 %v4182, %v4184
      %v4186 = vrot.slane %v4172, %v4185
      %v4187 = vcombine.low %v4179, %v4186
      %v4188 = vcombine.low %v3709, %v3710
      %v4189 = vcombine.low %v3711, %v3712
      %v4191 = vunpack.c.l.s4 1983009808
      %v4192 = vunpack.c.0.s8 %v4191
      %v4193 = vlaneseq
      %v4194 = vshrl.u32 %v4193, 7
      %v4195 = vsub.s32 %v4192, %v4194
      %v4196 = vrot.slane %v4188, %v4195
      %v4198 = vunpack.c.l.s4 1983009808
      %v4199 = vunpack.c.0.s8 %v4198
      %v4200 = vlaneseq
      %v4201 = vshrl.u32 %v4200, 7
      %v4202 = vsub.s32 %v4199, %v4201
      %v4203 = vrot.slane %v4189, %v4202
      %v4204 = vcombine.low %v4196, %v4203
      %v4205 = vcombine.low %v2465, %v2466
      %v4206 = vcombine.low %v2467, %v2468
      %v4208 = vunpack.c.l.s4 1983009808
      %v4209 = vunpack.c.0.s8 %v4208
      %v4210 = vlaneseq
      %v4211 = vshrl.u32 %v4210, 7
      %v4212 = vsub.s32 %v4209, %v4211
      %v4213 = vrot.slane %v4205, %v4212
      %v4215 = vunpack.c.l.s4 1983009808
      %v4216 = vunpack.c.0.s8 %v4215
      %v4217 = vlaneseq
      %v4218 = vshrl.u32 %v4217, 7
      %v4219 = vsub.s32 %v4216, %v4218
      %v4220 = vrot.slane %v4206, %v4219
      %v4221 = vcombine.low %v4213, %v4220
      %v4222 = vcombine.low %v2469, %v2470
      %v4223 = vcombine.low %v2471, %v2472
      %v4225 = vunpack.c.l.s4 1983009808
      %v4226 = vunpack.c.0.s8 %v4225
      %v4227 = vlaneseq
      %v4228 = vshrl.u32 %v4227, 7
      %v4229 = vsub.s32 %v4226, %v4228
      %v4230 = vrot.slane %v4222, %v4229
      %v4232 = vunpack.c.l.s4 1983009808
      %v4233 = vunpack.c.0.s8 %v4232
      %v4234 = vlaneseq
      %v4235 = vshrl.u32 %v4234, 7
      %v4236 = vsub.s32 %v4233, %v4235
      %v4237 = vrot.slane %v4223, %v4236
      %v4238 = vcombine.low %v4230, %v4237
      %v4239 = vcombine.low %v3713, %v3714
      %v4240 = vcombine.low %v3715, %v3716
      %v4242 = vunpack.c.l.s4 1983009808
      %v4243 = vunpack.c.0.s8 %v4242
      %v4244 = vlaneseq
      %v4245 = vshrl.u32 %v4244, 7
      %v4246 = vsub.s32 %v4243, %v4245
      %v4247 = vrot.slane %v4239, %v4246
      %v4249 = vunpack.c.l.s4 1983009808
      %v4250 = vunpack.c.0.s8 %v4249
      %v4251 = vlaneseq
      %v4252 = vshrl.u32 %v4251, 7
      %v4253 = vsub.s32 %v4250, %v4252
      %v4254 = vrot.slane %v4240, %v4253
      %v4255 = vcombine.low %v4247, %v4254
      %v4256 = vcombine.low %v3717, %v3718
      %v4257 = vcombine.low %v3719, %v3720
      %v4259 = vunpack.c.l.s4 1983009808
      %v4260 = vunpack.c.0.s8 %v4259
      %v4261 = vlaneseq
      %v4262 = vshrl.u32 %v4261, 7
      %v4263 = vsub.s32 %v4260, %v4262
      %v4264 = vrot.slane %v4256, %v4263
      %v4266 = vunpack.c.l.s4 1983009808
      %v4267 = vunpack.c.0.s8 %v4266
      %v4268 = vlaneseq
      %v4269 = vshrl.u32 %v4268, 7
      %v4270 = vsub.s32 %v4267, %v4269
      %v4271 = vrot.slane %v4257, %v4270
      %v4272 = vcombine.low %v4264, %v4271
      %v4273 = vcombine.low %v2473, %v2474
      %v4274 = vcombine.low %v2475, %v2476
      %v4276 = vunpack.c.l.s4 1983009808
      %v4277 = vunpack.c.0.s8 %v4276
      %v4278 = vlaneseq
      %v4279 = vshrl.u32 %v4278, 7
      %v4280 = vsub.s32 %v4277, %v4279
      %v4281 = vrot.slane %v4273, %v4280
      %v4283 = vunpack.c.l.s4 1983009808
      %v4284 = vunpack.c.0.s8 %v4283
      %v4285 = vlaneseq
      %v4286 = vshrl.u32 %v4285, 7
      %v4287 = vsub.s32 %v4284, %v4286
      %v4288 = vrot.slane %v4274, %v4287
      %v4289 = vcombine.low %v4281, %v4288
      %v4290 = vcombine.low %v2477, %v2478
      %v4291 = vcombine.low %v2479, %v2480
      %v4293 = vunpack.c.l.s4 1983009808
      %v4294 = vunpack.c.0.s8 %v4293
      %v4295 = vlaneseq
      %v4296 = vshrl.u32 %v4295, 7
      %v4297 = vsub.s32 %v4294, %v4296
      %v4298 = vrot.slane %v4290, %v4297
      %v4300 = vunpack.c.l.s4 1983009808
      %v4301 = vunpack.c.0.s8 %v4300
      %v4302 = vlaneseq
      %v4303 = vshrl.u32 %v4302, 7
      %v4304 = vsub.s32 %v4301, %v4303
      %v4305 = vrot.slane %v4291, %v4304
      %v4306 = vcombine.low %v4298, %v4305
      %v4307 = vcombine.low %v3721, %v3722
      %v4308 = vcombine.low %v3723, %v3724
      %v4310 = vunpack.c.l.s4 1983009808
      %v4311 = vunpack.c.0.s8 %v4310
      %v4312 = vlaneseq
      %v4313 = vshrl.u32 %v4312, 7
      %v4314 = vsub.s32 %v4311, %v4313
      %v4315 = vrot.slane %v4307, %v4314
      %v4317 = vunpack.c.l.s4 1983009808
      %v4318 = vunpack.c.0.s8 %v4317
      %v4319 = vlaneseq
      %v4320 = vshrl.u32 %v4319, 7
      %v4321 = vsub.s32 %v4318, %v4320
      %v4322 = vrot.slane %v4308, %v4321
      %v4323 = vcombine.low %v4315, %v4322
      %v4324 = vcombine.low %v3725, %v3726
      %v4325 = vcombine.low %v3727, %v3728
      %v4327 = vunpack.c.l.s4 1983009808
      %v4328 = vunpack.c.0.s8 %v4327
      %v4329 = vlaneseq
      %v4330 = vshrl.u32 %v4329, 7
      %v4331 = vsub.s32 %v4328, %v4330
      %v4332 = vrot.slane %v4324, %v4331
      %v4334 = vunpack.c.l.s4 1983009808
      %v4335 = vunpack.c.0.s8 %v4334
      %v4336 = vlaneseq
      %v4337 = vshrl.u32 %v4336, 7
      %v4338 = vsub.s32 %v4335, %v4337
      %v4339 = vrot.slane %v4325, %v4338
      %v4340 = vcombine.low %v4332, %v4339
      %v4341 = vcombine.low %v2481, %v2482
      %v4342 = vcombine.low %v2483, %v2484
      %v4344 = vunpack.c.l.s4 1983009808
      %v4345 = vunpack.c.0.s8 %v4344
      %v4346 = vlaneseq
      %v4347 = vshrl.u32 %v4346, 7
      %v4348 = vsub.s32 %v4345, %v4347
      %v4349 = vrot.slane %v4341, %v4348
      %v4351 = vunpack.c.l.s4 1983009808
      %v4352 = vunpack.c.0.s8 %v4351
      %v4353 = vlaneseq
      %v4354 = vshrl.u32 %v4353, 7
      %v4355 = vsub.s32 %v4352, %v4354
      %v4356 = vrot.slane %v4342, %v4355
      %v4357 = vcombine.low %v4349, %v4356
      %v4358 = vcombine.low %v2485, %v2486
      %v4359 = vcombine.low %v2487, %v2488
      %v4361 = vunpack.c.l.s4 1983009808
      %v4362 = vunpack.c.0.s8 %v4361
      %v4363 = vlaneseq
      %v4364 = vshrl.u32 %v4363, 7
      %v4365 = vsub.s32 %v4362, %v4364
      %v4366 = vrot.slane %v4358, %v4365
      %v4368 = vunpack.c.l.s4 1983009808
      %v4369 = vunpack.c.0.s8 %v4368
      %v4370 = vlaneseq
      %v4371 = vshrl.u32 %v4370, 7
      %v4372 = vsub.s32 %v4369, %v4371
      %v4373 = vrot.slane %v4359, %v4372
      %v4374 = vcombine.low %v4366, %v4373
      %v4375 = vcombine.low %v3729, %v3730
      %v4376 = vcombine.low %v3731, %v3732
      %v4378 = vunpack.c.l.s4 1983009808
      %v4379 = vunpack.c.0.s8 %v4378
      %v4380 = vlaneseq
      %v4381 = vshrl.u32 %v4380, 7
      %v4382 = vsub.s32 %v4379, %v4381
      %v4383 = vrot.slane %v4375, %v4382
      %v4385 = vunpack.c.l.s4 1983009808
      %v4386 = vunpack.c.0.s8 %v4385
      %v4387 = vlaneseq
      %v4388 = vshrl.u32 %v4387, 7
      %v4389 = vsub.s32 %v4386, %v4388
      %v4390 = vrot.slane %v4376, %v4389
      %v4391 = vcombine.low %v4383, %v4390
      %v4392 = vcombine.low %v3733, %v3734
      %v4393 = vcombine.low %v3735, %v3736
      %v4395 = vunpack.c.l.s4 1983009808
      %v4396 = vunpack.c.0.s8 %v4395
      %v4397 = vlaneseq
      %v4398 = vshrl.u32 %v4397, 7
      %v4399 = vsub.s32 %v4396, %v4398
      %v4400 = vrot.slane %v4392, %v4399
      %v4402 = vunpack.c.l.s4 1983009808
      %v4403 = vunpack.c.0.s8 %v4402
      %v4404 = vlaneseq
      %v4405 = vshrl.u32 %v4404, 7
      %v4406 = vsub.s32 %v4403, %v4405
      %v4407 = vrot.slane %v4393, %v4406
      %v4408 = vcombine.low %v4400, %v4407
      %4441 = vst.msk [vmem:[%s291] sm:$0xff] %vm1030, %v3881
      %4442 = vst.msk [vmem:[%s291 + $0x8] sm:$0xff] %vm1030, %v3898
      %4443 = vst.msk [vmem:[%s291 + $0x10] sm:$0xff] %vm1030, %v3915
      %4444 = vst.msk [vmem:[%s291 + $0x18] sm:$0xff] %vm1030, %v3932
      %4445 = vst.msk [vmem:[%s291 + $0x20] sm:$0xff] %vm1030, %v3949
      %4446 = vst.msk [vmem:[%s291 + $0x28] sm:$0xff] %vm1030, %v3966
      %4447 = vst.msk [vmem:[%s291 + $0x30] sm:$0xff] %vm1030, %v3983
      %4448 = vst.msk [vmem:[%s291 + $0x38] sm:$0xff] %vm1030, %v4000
      %4449 = vst.msk [vmem:[%s291 + $0x40] sm:$0xff] %vm1030, %v4017
      %4450 = vst.msk [vmem:[%s291 + $0x48] sm:$0xff] %vm1030, %v4034
      %4451 = vst.msk [vmem:[%s291 + $0x50] sm:$0xff] %vm1030, %v4051
      %4452 = vst.msk [vmem:[%s291 + $0x58] sm:$0xff] %vm1030, %v4068
      %4453 = vst.msk [vmem:[%s291 + $0x60] sm:$0xff] %vm1030, %v4085
      %4454 = vst.msk [vmem:[%s291 + $0x68] sm:$0xff] %vm1030, %v4102
      %4455 = vst.msk [vmem:[%s291 + $0x70] sm:$0xff] %vm1030, %v4119
      %4456 = vst.msk [vmem:[%s291 + $0x78] sm:$0xff] %vm1030, %v4136
      %4457 = vst.msk [vmem:[%s291 + $0x80] sm:$0xff] %vm1030, %v4153
      %4458 = vst.msk [vmem:[%s291 + $0x88] sm:$0xff] %vm1030, %v4170
      %4459 = vst.msk [vmem:[%s291 + $0x90] sm:$0xff] %vm1030, %v4187
      %4460 = vst.msk [vmem:[%s291 + $0x98] sm:$0xff] %vm1030, %v4204
      %4461 = vst.msk [vmem:[%s291 + $0xa0] sm:$0xff] %vm1030, %v4221
      %4462 = vst.msk [vmem:[%s291 + $0xa8] sm:$0xff] %vm1030, %v4238
      %4463 = vst.msk [vmem:[%s291 + $0xb0] sm:$0xff] %vm1030, %v4255
      %4464 = vst.msk [vmem:[%s291 + $0xb8] sm:$0xff] %vm1030, %v4272
      %4465 = vst.msk [vmem:[%s291 + $0xc0] sm:$0xff] %vm1030, %v4289
      %4466 = vst.msk [vmem:[%s291 + $0xc8] sm:$0xff] %vm1030, %v4306
      %4467 = vst.msk [vmem:[%s291 + $0xd0] sm:$0xff] %vm1030, %v4323
      %4468 = vst.msk [vmem:[%s291 + $0xd8] sm:$0xff] %vm1030, %v4340
      %4469 = vst.msk [vmem:[%s291 + $0xe0] sm:$0xff] %vm1030, %v4357
      %4470 = vst.msk [vmem:[%s291 + $0xe8] sm:$0xff] %vm1030, %v4374
      %4471 = vst.msk [vmem:[%s291 + $0xf0] sm:$0xff] %vm1030, %v4391
      %4472 = vst.msk [vmem:[%s291 + $0xf8] sm:$0xff] %vm1030, %v4408
      %s4473 = smul.u32 16, %s21
      %p4474 = scmp.lt.s32.totalorder %s20, 1
      %s4475 = scalar_select %p4474, %s20, 1
      %p4476 = scmp.lt.s32.totalorder %s4473, 15
      %s4477 = scalar_select %p4476, %s4473, 15
      %s4478 = smul.addr %s4477, 2
      %s4479 = smul.addr %s4475, 32
      %s4480 = sadd.s32 %s4478, %s4479
      %s4481 = smul.addr %s4480, 8
      %s4482 = scalar_lea.vmem %s3, %s4481
      %p4483 = scmp.lt.s32.totalorder %s20, 1
      %s4484 = scalar_select %p4483, %s20, 1
      %p4485 = scmp.lt.s32.totalorder %s21, 0
      %s4486 = scalar_select %p4485, %s21, 0
      %s4487 = sadd.s32 %s4486, %s4484
      %s4488 = smul.addr %s4487, 2
      %s4489 = scalar_lea.vmem %s4, %s4488
      // Predicated region
      $region33: #{a_call__.14} parent=31 // pred_check
        %p4490 = pneg %p125
      $region34: #{a_call__.14} parent=31 // pred_check_branch
        %4492 = sbr.rel (%p4490) target = $region36
      $region35: #{a_call__.14} parent=31 // pred_region
        %s4493 = smul.u32 16, %s21
      $region36: #{a_call__.14} parent=31 // pred_fallthru
        _
      // Predicated region
      $region37: #{a_call__.14} parent=31 // pred_check
        %p4494 = pneg %p153
      $region38: #{a_call__.14} parent=31 // pred_check_branch
        %4496 = sbr.rel (%p4494) target = $region40
      $region39: #{a_call__.14} parent=31 // pred_region
        _
      $region40: #{a_call__.14} parent=31 // pred_fallthru
        _
    $region32: #{a_call__.14} parent=5 // pred_fallthru
      _
    %p4497 = scmp.le.s32.totalorder 2, %s11
    // Predicated region
    $region41: #{a_call__.14} parent=5 // pred_check
      %p4498 = pneg %p4497
    $region42: #{a_call__.14} parent=5 // pred_check_branch
      %4500 = sbr.rel (%p4498) target = $region44
    $region43: #{a_call__.14} parent=5 // pred_region
      %s4501 = ssub.s32 %s11, 2
      // Predicated region
      $region45: #{a_call__.14} parent=43 // pred_check
        %p4502 = pneg %p131
      $region46: #{a_call__.14} parent=43 // pred_check_branch
        %4504 = sbr.rel (%p4502) target = $region48
      $region47: #{a_call__.14} parent=43 // pred_region
        %s4505 = smul.u32 16, %s23
        %p4506 = scmp.lt.s32.totalorder %s22, 1
        %s4507 = scalar_select %p4506, %s22, 1
        %p4508 = scmp.lt.s32.totalorder %s4505, 15
        %s4509 = scalar_select %p4508, %s4505, 15
        %s4510 = smul.addr %s4509, 2
        %s4511 = smul.addr %s4507, 32
        %s4512 = sadd.s32 %s4510, %s4511
        %s4513 = smul.addr %s4512, 8
        %s4514 = scalar_lea.vmem %s3, %s4513
      $region48: #{a_call__.14} parent=43 // pred_fallthru
        _
      // Predicated region
      $region49: #{a_call__.14} parent=43 // pred_check
        %p4515 = pneg %p159
      $region50: #{a_call__.14} parent=43 // pred_check_branch
        %4517 = sbr.rel (%p4515) target = $region52
      $region51: #{a_call__.14} parent=43 // pred_region
        %p4518 = scmp.lt.s32.totalorder %s22, 1
        %s4519 = scalar_select %p4518, %s22, 1
        %p4520 = scmp.lt.s32.totalorder %s23, 0
        %s4521 = scalar_select %p4520, %s23, 0
        %s4522 = sadd.s32 %s4521, %s4519
        %s4523 = smul.addr %s4522, 2
        %s4524 = scalar_lea.vmem %s4, %s4523
      $region52: #{a_call__.14} parent=43 // pred_fallthru
        _
    $region44: #{a_call__.14} parent=5 // pred_fallthru
      _
  $region6: #{a_call__.14} parent=0 // loop_footer
    %s15 = sadd.s32 1, %s11
  $region7: #{a_call__.14} parent=0 // loop_footer_branch
    %10 = sbr.rel target = $region3
  $region8: #{a_call__.14} parent=0 // loop_exit
    _

</llo_original>
